<compile_context>
chip_gen: v7x
topology: tpu7x:2x2x1
jax: 0.10.0
libtpu: 0.0.40
codegen_flags: <defaults>
</compile_context>

<pallas_src>
import functools

import jax
import jax.numpy as jnp
from jax import lax
from jax.experimental import pallas as pl
from jax.experimental.pallas import tpu as pltpu
import numpy as np

HIDDEN = 128          # hidden_dim in the torch module
CATT = 2 * HIDDEN     # 256 = channels of cat([h, x])

_TARGET_TILE_PIXELS = 1024            # spatial pixels per block (VMEM budget)
_VMEM_LIMIT_BYTES = 48 * 1024 * 1024  # fits v7x (64 MiB phys) with headroom


# --------------------------------------------------------------------------
# Pallas kernel: one GRU pass (fused z+r conv, separate q conv)
# --------------------------------------------------------------------------
def _gru_pass_kernel(h_ref, x_ref, wzr_h_ref, wzr_x_ref, bzr_ref,
                     wq_h_ref, wq_x_ref, bq_ref, o_ref, *, conv_axis):
    """One separable-conv GRU pass on an NHWC block.

    h_ref/x_ref/o_ref : (1, BH, BW, 128)
    wzr_h_ref/wzr_x_ref : (3, 128, 256) bf16  (z|r fused along Cout, split by
                          h-/x-input half along Cin)
    bzr_ref : (1, 256) f32
    wq_h_ref/wq_x_ref : (3, 128, 128) bf16    (q weight, split by input half)
    bq_ref  : (1, 128) f32
    conv_axis : 2 -> conv along W ((1,3) conv), 1 -> conv along H ((3,1) conv)
    """
    _, bh, bw, c = h_ref.shape
    n = bh * bw
    ax = conv_axis - 1            # shift axis in the (BH, BW, Cout) view

    # Flatten spatial dims for the MXU; channels stay on lanes (layout no-op).
    h = h_ref[...].reshape(n, c).astype(jnp.float32)
    h_bf = h.astype(jnp.bfloat16)
    x_bf = x_ref[...].reshape(n, c).astype(jnp.bfloat16)

    def shift_sum(y0, y1, y2, b_ref):
        # out[j] = y0[j-1] + y1[j] + y2[j+1]  (zero boundaries) + bias.
        cout = y1.shape[-1]
        y0 = y0.reshape(bh, bw, cout)
        y2 = y2.reshape(bh, bw, cout)
        m = y0.shape[ax]
        zpad = jnp.zeros_like(lax.slice_in_dim(y0, 0, 1, axis=ax))
        y0s = jnp.concatenate(
            [zpad, lax.slice_in_dim(y0, 0, m - 1, axis=ax)], axis=ax)
        y2s = jnp.concatenate(
            [lax.slice_in_dim(y2, 1, m, axis=ax), zpad], axis=ax)
        return y1 + b_ref[...] + (y0s + y2s).reshape(n, cout)

    def conv3(a_bf, b_bf, wa_ref, wb_ref, bias_ref):
        # Three un-shifted taps, each tap = h-half matmul + x-half matmul
        # (bf16 x bf16 -> f32 on the MXU); shift narrower outputs afterwards.
        ys = [jnp.dot(a_bf, wa_ref[k], preferred_element_type=jnp.float32)
              + jnp.dot(b_bf, wb_ref[k], preferred_element_type=jnp.float32)
              for k in range(3)]
        return shift_sum(ys[0], ys[1], ys[2], bias_ref)

    # Fused z/r conv: one 256-wide output, sliced on vreg-aligned boundaries.
    zr = conv3(h_bf, x_bf, wzr_h_ref, wzr_x_ref, bzr_ref)     # (n, 256) f32
    z = jax.nn.sigmoid(zr[:, :c])
    r = jax.nn.sigmoid(zr[:, c:])

    rh_bf = (r * h).astype(jnp.bfloat16)
    q = jnp.tanh(conv3(rh_bf, x_bf, wq_h_ref, wq_x_ref, bq_ref))  # (n,128) f32

    h_new = h + z * (q - h)          # == (1 - z) * h + z * q, one fewer VPU op
    o_ref[...] = h_new.reshape(1, bh, bw, c).astype(o_ref.dtype)


# --------------------------------------------------------------------------
# Wrapper
# --------------------------------------------------------------------------
def _pick_tile(dim, other, sublane_multiple):
    """Largest divisor t of `dim` (t == dim or t % sublane_multiple == 0)
    with t * other <= _TARGET_TILE_PIXELS; falls back to smallest legal."""
    candidates = [t for t in range(1, dim + 1)
                  if dim % t == 0 and (t == dim or t % sublane_multiple == 0)]
    fitting = [t for t in candidates if t * other <= _TARGET_TILE_PIXELS]
    return max(fitting) if fitting else min(candidates)


def _run_pass(h, x, weights, conv_axis):
    wzr_h, wzr_x, bzr, wq_h, wq_x, bq = weights
    B, H, W, C = h.shape

    if conv_axis == 2:                       # (1,3): conv along W, tile over H
        th = _pick_tile(H, W, sublane_multiple=1)
        blk = (1, th, W, C)
        idx = lambda b, s: (b, s, 0, 0)
        grid = (B, H // th)
    else:                                    # (3,1): conv along H, tile over W
        tw = _pick_tile(W, H, sublane_multiple=8)
        blk = (1, H, tw, C)
        idx = lambda b, s: (b, 0, s, 0)
        grid = (B, W // tw)

    tile_spec = pl.BlockSpec(blk, idx)
    kernel = functools.partial(_gru_pass_kernel, conv_axis=conv_axis)

    return pl.pallas_call(
        kernel,
        out_shape=jax.ShapeDtypeStruct(h.shape, h.dtype),
        grid=grid,
        in_specs=[
            tile_spec,                                          # h
            tile_spec,                                          # x
            pl.BlockSpec(wzr_h.shape, lambda b, s: (0, 0, 0)),  # z/r weight, h-half
            pl.BlockSpec(wzr_x.shape, lambda b, s: (0, 0, 0)),  # z/r weight, x-half
            pl.BlockSpec(bzr.shape, lambda b, s: (0, 0)),       # z/r bias
            pl.BlockSpec(wq_h.shape, lambda b, s: (0, 0, 0)),   # q weight, rh-half
            pl.BlockSpec(wq_x.shape, lambda b, s: (0, 0, 0)),   # q weight, x-half
            pl.BlockSpec(bq.shape, lambda b, s: (0, 0)),        # q bias
        ],
        out_specs=tile_spec,
        input_output_aliases={0: 0},          # update hidden state in place
        compiler_params=pltpu.CompilerParams(
            dimension_semantics=("parallel", "parallel"),
            vmem_limit_bytes=_VMEM_LIMIT_BYTES),
    )(h, x, wzr_h, wzr_x, bzr, wq_h, wq_x, bq)


def _to_kernel_weight(w_torch, horizontal):
    # torch conv weight [oc, ic, kh, kw] -> [3, ic, oc]; w[k] pairs with
    # input offset k-1 along the conv axis.
    w = jnp.squeeze(w_torch, axis=2 if horizontal else 3)    # [oc, ic, 3]
    return jnp.transpose(w, (2, 1, 0))                       # [3, ic, oc]


def _prep_pass_weights(params, suffix, horizontal):
    wz = _to_kernel_weight(params["wz" + suffix], horizontal)
    wr = _to_kernel_weight(params["wr" + suffix], horizontal)
    wq = _to_kernel_weight(params["wq" + suffix], horizontal)
    wzr = jnp.concatenate([wz, wr], axis=-1).astype(jnp.bfloat16)  # [3,256,256]
    wq = wq.astype(jnp.bfloat16)                                   # [3,256,128]
    # Split along input channels: first 128 pair with h (or r*h), last 128
    # with x — matches torch.cat([h, x], dim=1) / cat([r*h, x], dim=1).
    wzr_h, wzr_x = wzr[:, :HIDDEN, :], wzr[:, HIDDEN:, :]          # [3,128,256]
    wq_h, wq_x = wq[:, :HIDDEN, :], wq[:, HIDDEN:, :]              # [3,128,128]
    bzr = jnp.concatenate([params["bz" + suffix], params["br" + suffix]]
                          ).reshape(1, CATT).astype(jnp.float32)
    bq = params["bq" + suffix].reshape(1, HIDDEN).astype(jnp.float32)
    return wzr_h, wzr_x, bzr, wq_h, wq_x, bq


def _forward_nhwc(h, x, params):
    assert h.shape[-1] == HIDDEN and x.shape[-1] == HIDDEN
    w1 = _prep_pass_weights(params, "1", horizontal=True)
    w2 = _prep_pass_weights(params, "2", horizontal=False)
    h = _run_pass(h, x, w1, conv_axis=2)   # horizontal pass, (1,3) conv
    h = _run_pass(h, x, w2, conv_axis=1)   # vertical pass,   (3,1) conv
    return h


# NHWC entry point: use this in iterative (RAFT-style) loops and keep h/x in
# NHWC across iterations to avoid per-step layout transposes.
sepconvgru_forward_nhwc = jax.jit(_forward_nhwc)


@jax.jit
def sepconvgru_forward(h_nchw, x_nchw, params):
    """PyTorch-compatible NCHW interface."""
    h = jnp.transpose(h_nchw, (0, 2, 3, 1))   # -> NHWC
    x = jnp.transpose(x_nchw, (0, 2, 3, 1))
    out = _forward_nhwc(h, x, params)
    return jnp.transpose(out, (0, 3, 1, 2))   # -> NCHW


# --------------------------------------------------------------------------
# Pure-JAX reference (NCHW, torch-layout weights, f32 HIGHEST) for checking
# --------------------------------------------------------------------------
def _ref_conv(x, w, b, padding):
    out = lax.conv_general_dilated(
        x, w, window_strides=(1, 1), padding=padding,
        dimension_numbers=("NCHW", "OIHW", "NCHW"),
        precision=lax.Precision.HIGHEST)
    return out + b[None, :, None, None]


def sepconvgru_reference(h, x, p):
    hx = jnp.concatenate([h, x], axis=1)
    z = jax.nn.sigmoid(_ref_conv(hx, p["wz1"], p["bz1"], ((0, 0), (1, 1))))
    r = jax.nn.sigmoid(_ref_conv(hx, p["wr1"], p["br1"], ((0, 0), (1, 1))))
    q = jnp.tanh(_ref_conv(jnp.concatenate([r * h, x], axis=1),
                           p["wq1"], p["bq1"], ((0, 0), (1, 1))))
    h = (1 - z) * h + z * q
    hx = jnp.concatenate([h, x], axis=1)
    z = jax.nn.sigmoid(_ref_conv(hx, p["wz2"], p["bz2"], ((1, 1), (0, 0))))
    r = jax.nn.sigmoid(_ref_conv(hx, p["wr2"], p["br2"], ((1, 1), (0, 0))))
    q = jnp.tanh(_ref_conv(jnp.concatenate([r * h, x], axis=1),
                           p["wq2"], p["bq2"], ((1, 1), (0, 0))))
    h = (1 - z) * h + z * q
    return h


# --------------------------------------------------------------------------
def init_params(key):
    # PyTorch default Conv2d init: U(-k, k), k = 1/sqrt(fan_in), fan_in = 256*3
    k = 1.0 / np.sqrt(CATT * 3)
    params = {}
    names = ["z1", "r1", "q1", "z2", "r2", "q2"]
    keys = jax.random.split(key, 2 * len(names))
    for i, name in enumerate(names):
        horizontal = name.endswith("1")
        wshape = (HIDDEN, CATT, 1, 3) if horizontal else (HIDDEN, CATT, 3, 1)
        params["w" + name] = jax.random.uniform(
            keys[2 * i], wshape, jnp.float32, -k, k)
        params["b" + name] = jax.random.uniform(
            keys[2 * i + 1], (HIDDEN,), jnp.float32, -k, k)
    return params


if __name__ == "__main__":
    key = jax.random.PRNGKey(0)
    k_h, k_x, k_p = jax.random.split(key, 3)

    B, Hs, Ws = 2, 16, 16
    h0 = jax.random.normal(k_h, (B, HIDDEN, Hs, Ws), jnp.float32) * 0.5
    x0 = jax.random.normal(k_x, (B, HIDDEN, Hs, Ws), jnp.float32) * 0.5
    params = init_params(k_p)

    out = jax.block_until_ready(sepconvgru_forward(h0, x0, params))
    ref = jax.block_until_ready(sepconvgru_reference(h0, x0, params))

    # bf16 matmul operands vs. f32-HIGHEST reference: ~1e-3 level differences.
    np.testing.assert_allclose(np.asarray(out), np.asarray(ref),
                               atol=1e-2, rtol=1e-2)

    print("KERNEL_OK")
</pallas_src>

<mosaic_0001>
module attributes {stable_mosaic.version = 11 : i64} {
  func.func @_gru_pass_kernel(%arg0: i32, %arg1: i32, %arg2: memref<1x16x16x128xf32, #tpu.memory_space<vmem>>, %arg3: memref<1x16x16x128xf32, #tpu.memory_space<vmem>>, %arg4: memref<3x128x256xbf16, #tpu.memory_space<vmem>>, %arg5: memref<3x128x256xbf16, #tpu.memory_space<vmem>>, %arg6: memref<1x256xf32, #tpu.memory_space<vmem>>, %arg7: memref<3x128x128xbf16, #tpu.memory_space<vmem>>, %arg8: memref<3x128x128xbf16, #tpu.memory_space<vmem>>, %arg9: memref<1x128xf32, #tpu.memory_space<vmem>>, %arg10: memref<1x16x16x128xf32, #tpu.memory_space<vmem>>) attributes {dimension_semantics = [#tpu.dimension_semantics<parallel>, #tpu.dimension_semantics<parallel>], iteration_bounds = array<i64: 2, 1>, scalar_prefetch = 0 : i64, scratch_operands = 0 : i64, tpu.core_type = #tpu.core_type<tc>, window_params = [{transform_indices = @transform_0, window_bounds = array<i64: 1, 16, 16, 128>}, {transform_indices = @transform_1, window_bounds = array<i64: 1, 16, 16, 128>}, {pipeline_mode = #tpu.pipeline_mode<synchronous>, transform_indices = @transform_2, window_bounds = array<i64: 3, 128, 256>}, {pipeline_mode = #tpu.pipeline_mode<synchronous>, transform_indices = @transform_3, window_bounds = array<i64: 3, 128, 256>}, {pipeline_mode = #tpu.pipeline_mode<synchronous>, transform_indices = @transform_4, window_bounds = array<i64: 1, 256>}, {pipeline_mode = #tpu.pipeline_mode<synchronous>, transform_indices = @transform_5, window_bounds = array<i64: 3, 128, 128>}, {pipeline_mode = #tpu.pipeline_mode<synchronous>, transform_indices = @transform_6, window_bounds = array<i64: 3, 128, 128>}, {pipeline_mode = #tpu.pipeline_mode<synchronous>, transform_indices = @transform_7, window_bounds = array<i64: 1, 128>}, {transform_indices = @transform_8, window_bounds = array<i64: 1, 16, 16, 128>}]} {
    %c0 = arith.constant 0 : index
    %c0_0 = arith.constant 0 : index
    %c0_1 = arith.constant 0 : index
    %c0_2 = arith.constant 0 : index
    %0 = vector.load %arg2[%c0, %c0_0, %c0_1, %c0_2] : memref<1x16x16x128xf32, #tpu.memory_space<vmem>>, vector<1x16x16x128xf32>
    %1 = vector.shape_cast %0 : vector<1x16x16x128xf32> to vector<256x128xf32>
    %2 = arith.truncf %1 : vector<256x128xf32> to vector<256x128xbf16>
    %c0_3 = arith.constant 0 : index
    %c0_4 = arith.constant 0 : index
    %c0_5 = arith.constant 0 : index
    %c0_6 = arith.constant 0 : index
    %3 = vector.load %arg3[%c0_3, %c0_4, %c0_5, %c0_6] : memref<1x16x16x128xf32, #tpu.memory_space<vmem>>, vector<1x16x16x128xf32>
    %4 = vector.shape_cast %3 : vector<1x16x16x128xf32> to vector<256x128xf32>
    %5 = arith.truncf %4 : vector<256x128xf32> to vector<256x128xbf16>
    %c0_7 = arith.constant 0 : index
    %c0_8 = arith.constant 0 : index
    %c0_9 = arith.constant 0 : index
    %6 = vector.load %arg4[%c0_7, %c0_8, %c0_9] : memref<3x128x256xbf16, #tpu.memory_space<vmem>>, vector<1x128x256xbf16>
    %7 = vector.shape_cast %6 : vector<1x128x256xbf16> to vector<128x256xbf16>
    %cst = arith.constant dense<0.000000e+00> : vector<256x256xf32>
    %8 = tpu.matmul %2, %7, %cst {dimension_numbers = #tpu.dot_dimension_numbers<[1], [0], [0], [1], [0, 0, 1, 1], [], []>} : vector<256x128xbf16>, vector<128x256xbf16>, vector<256x256xf32> -> vector<256x256xf32>
    %c0_10 = arith.constant 0 : index
    %c0_11 = arith.constant 0 : index
    %c0_12 = arith.constant 0 : index
    %9 = vector.load %arg5[%c0_10, %c0_11, %c0_12] : memref<3x128x256xbf16, #tpu.memory_space<vmem>>, vector<1x128x256xbf16>
    %10 = vector.shape_cast %9 : vector<1x128x256xbf16> to vector<128x256xbf16>
    %cst_13 = arith.constant dense<0.000000e+00> : vector<256x256xf32>
    %11 = tpu.matmul %5, %10, %cst_13 {dimension_numbers = #tpu.dot_dimension_numbers<[1], [0], [0], [1], [0, 0, 1, 1], [], []>} : vector<256x128xbf16>, vector<128x256xbf16>, vector<256x256xf32> -> vector<256x256xf32>
    %12 = arith.addf %8, %11 : vector<256x256xf32>
    %c1 = arith.constant 1 : index
    %c0_14 = arith.constant 0 : index
    %c0_15 = arith.constant 0 : index
    %13 = vector.load %arg4[%c1, %c0_14, %c0_15] : memref<3x128x256xbf16, #tpu.memory_space<vmem>>, vector<1x128x256xbf16>
    %14 = vector.shape_cast %13 : vector<1x128x256xbf16> to vector<128x256xbf16>
    %cst_16 = arith.constant dense<0.000000e+00> : vector<256x256xf32>
    %15 = tpu.matmul %2, %14, %cst_16 {dimension_numbers = #tpu.dot_dimension_numbers<[1], [0], [0], [1], [0, 0, 1, 1], [], []>} : vector<256x128xbf16>, vector<128x256xbf16>, vector<256x256xf32> -> vector<256x256xf32>
    %c1_17 = arith.constant 1 : index
    %c0_18 = arith.constant 0 : index
    %c0_19 = arith.constant 0 : index
    %16 = vector.load %arg5[%c1_17, %c0_18, %c0_19] : memref<3x128x256xbf16, #tpu.memory_space<vmem>>, vector<1x128x256xbf16>
    %17 = vector.shape_cast %16 : vector<1x128x256xbf16> to vector<128x256xbf16>
    %cst_20 = arith.constant dense<0.000000e+00> : vector<256x256xf32>
    %18 = tpu.matmul %5, %17, %cst_20 {dimension_numbers = #tpu.dot_dimension_numbers<[1], [0], [0], [1], [0, 0, 1, 1], [], []>} : vector<256x128xbf16>, vector<128x256xbf16>, vector<256x256xf32> -> vector<256x256xf32>
    %19 = arith.addf %15, %18 : vector<256x256xf32>
    %c2 = arith.constant 2 : index
    %c0_21 = arith.constant 0 : index
    %c0_22 = arith.constant 0 : index
    %20 = vector.load %arg4[%c2, %c0_21, %c0_22] : memref<3x128x256xbf16, #tpu.memory_space<vmem>>, vector<1x128x256xbf16>
    %21 = vector.shape_cast %20 : vector<1x128x256xbf16> to vector<128x256xbf16>
    %cst_23 = arith.constant dense<0.000000e+00> : vector<256x256xf32>
    %22 = tpu.matmul %2, %21, %cst_23 {dimension_numbers = #tpu.dot_dimension_numbers<[1], [0], [0], [1], [0, 0, 1, 1], [], []>} : vector<256x128xbf16>, vector<128x256xbf16>, vector<256x256xf32> -> vector<256x256xf32>
    %c2_24 = arith.constant 2 : index
    %c0_25 = arith.constant 0 : index
    %c0_26 = arith.constant 0 : index
    %23 = vector.load %arg5[%c2_24, %c0_25, %c0_26] : memref<3x128x256xbf16, #tpu.memory_space<vmem>>, vector<1x128x256xbf16>
    %24 = vector.shape_cast %23 : vector<1x128x256xbf16> to vector<128x256xbf16>
    %cst_27 = arith.constant dense<0.000000e+00> : vector<256x256xf32>
    %25 = tpu.matmul %5, %24, %cst_27 {dimension_numbers = #tpu.dot_dimension_numbers<[1], [0], [0], [1], [0, 0, 1, 1], [], []>} : vector<256x128xbf16>, vector<128x256xbf16>, vector<256x256xf32> -> vector<256x256xf32>
    %26 = arith.addf %22, %25 : vector<256x256xf32>
    %27 = vector.shape_cast %12 : vector<256x256xf32> to vector<16x16x256xf32>
    %28 = vector.shape_cast %26 : vector<256x256xf32> to vector<16x16x256xf32>
    %cst_28 = arith.constant 0.000000e+00 : f32
    %29 = vector.broadcast %cst_28 : f32 to vector<1x16x256xf32>
    %30 = vector.extract_strided_slice %27 {offsets = [0, 0, 0], sizes = [15, 16, 256], strides = [1, 1, 1]} : vector<16x16x256xf32> to vector<15x16x256xf32>
    %31 = tpu.concatenate %29, %30 in 0 : vector<1x16x256xf32>, vector<15x16x256xf32> -> vector<16x16x256xf32>
    %32 = vector.extract_strided_slice %28 {offsets = [1, 0, 0], sizes = [15, 16, 256], strides = [1, 1, 1]} : vector<16x16x256xf32> to vector<15x16x256xf32>
    %33 = tpu.concatenate %32, %29 in 0 : vector<15x16x256xf32>, vector<1x16x256xf32> -> vector<16x16x256xf32>
    %c0_29 = arith.constant 0 : index
    %c0_30 = arith.constant 0 : index
    %34 = vector.load %arg6[%c0_29, %c0_30] : memref<1x256xf32, #tpu.memory_space<vmem>>, vector<1x256xf32>
    %35 = vector.broadcast %34 : vector<1x256xf32> to vector<256x256xf32>
    %36 = arith.addf %19, %35 : vector<256x256xf32>
    %37 = arith.addf %31, %33 : vector<16x16x256xf32>
    %38 = vector.shape_cast %37 : vector<16x16x256xf32> to vector<256x256xf32>
    %39 = arith.addf %36, %38 : vector<256x256xf32>
    %40 = vector.extract_strided_slice %39 {offsets = [0, 0], sizes = [256, 128], strides = [1, 1]} : vector<256x256xf32> to vector<256x128xf32>
    %41 = arith.negf %40 : vector<256x128xf32>
    %42 = math.exp %41 : vector<256x128xf32>
    %cst_31 = arith.constant 1.000000e+00 : f32
    %43 = vector.broadcast %cst_31 : f32 to vector<256x128xf32>
    %44 = arith.addf %43, %42 : vector<256x128xf32>
    %45 = arith.divf %43, %44 : vector<256x128xf32>
    %46 = vector.extract_strided_slice %39 {offsets = [0, 128], sizes = [256, 128], strides = [1, 1]} : vector<256x256xf32> to vector<256x128xf32>
    %47 = arith.negf %46 : vector<256x128xf32>
    %48 = math.exp %47 : vector<256x128xf32>
    %cst_32 = arith.constant 1.000000e+00 : f32
    %49 = vector.broadcast %cst_32 : f32 to vector<256x128xf32>
    %50 = arith.addf %49, %48 : vector<256x128xf32>
    %51 = arith.divf %49, %50 : vector<256x128xf32>
    %52 = arith.mulf %51, %1 : vector<256x128xf32>
    %53 = arith.truncf %52 : vector<256x128xf32> to vector<256x128xbf16>
    %c0_33 = arith.constant 0 : index
    %c0_34 = arith.constant 0 : index
    %c0_35 = arith.constant 0 : index
    %54 = vector.load %arg7[%c0_33, %c0_34, %c0_35] : memref<3x128x128xbf16, #tpu.memory_space<vmem>>, vector<1x128x128xbf16>
    %55 = vector.shape_cast %54 : vector<1x128x128xbf16> to vector<128x128xbf16>
    %cst_36 = arith.constant dense<0.000000e+00> : vector<256x128xf32>
    %56 = tpu.matmul %53, %55, %cst_36 {dimension_numbers = #tpu.dot_dimension_numbers<[1], [0], [0], [1], [0, 0, 1, 1], [], []>} : vector<256x128xbf16>, vector<128x128xbf16>, vector<256x128xf32> -> vector<256x128xf32>
    %c0_37 = arith.constant 0 : index
    %c0_38 = arith.constant 0 : index
    %c0_39 = arith.constant 0 : index
    %57 = vector.load %arg8[%c0_37, %c0_38, %c0_39] : memref<3x128x128xbf16, #tpu.memory_space<vmem>>, vector<1x128x128xbf16>
    %58 = vector.shape_cast %57 : vector<1x128x128xbf16> to vector<128x128xbf16>
    %cst_40 = arith.constant dense<0.000000e+00> : vector<256x128xf32>
    %59 = tpu.matmul %5, %58, %cst_40 {dimension_numbers = #tpu.dot_dimension_numbers<[1], [0], [0], [1], [0, 0, 1, 1], [], []>} : vector<256x128xbf16>, vector<128x128xbf16>, vector<256x128xf32> -> vector<256x128xf32>
    %60 = arith.addf %56, %59 : vector<256x128xf32>
    %c1_41 = arith.constant 1 : index
    %c0_42 = arith.constant 0 : index
    %c0_43 = arith.constant 0 : index
    %61 = vector.load %arg7[%c1_41, %c0_42, %c0_43] : memref<3x128x128xbf16, #tpu.memory_space<vmem>>, vector<1x128x128xbf16>
    %62 = vector.shape_cast %61 : vector<1x128x128xbf16> to vector<128x128xbf16>
    %cst_44 = arith.constant dense<0.000000e+00> : vector<256x128xf32>
    %63 = tpu.matmul %53, %62, %cst_44 {dimension_numbers = #tpu.dot_dimension_numbers<[1], [0], [0], [1], [0, 0, 1, 1], [], []>} : vector<256x128xbf16>, vector<128x128xbf16>, vector<256x128xf32> -> vector<256x128xf32>
    %c1_45 = arith.constant 1 : index
    %c0_46 = arith.constant 0 : index
    %c0_47 = arith.constant 0 : index
    %64 = vector.load %arg8[%c1_45, %c0_46, %c0_47] : memref<3x128x128xbf16, #tpu.memory_space<vmem>>, vector<1x128x128xbf16>
    %65 = vector.shape_cast %64 : vector<1x128x128xbf16> to vector<128x128xbf16>
    %cst_48 = arith.constant dense<0.000000e+00> : vector<256x128xf32>
    %66 = tpu.matmul %5, %65, %cst_48 {dimension_numbers = #tpu.dot_dimension_numbers<[1], [0], [0], [1], [0, 0, 1, 1], [], []>} : vector<256x128xbf16>, vector<128x128xbf16>, vector<256x128xf32> -> vector<256x128xf32>
    %67 = arith.addf %63, %66 : vector<256x128xf32>
    %c2_49 = arith.constant 2 : index
    %c0_50 = arith.constant 0 : index
    %c0_51 = arith.constant 0 : index
    %68 = vector.load %arg7[%c2_49, %c0_50, %c0_51] : memref<3x128x128xbf16, #tpu.memory_space<vmem>>, vector<1x128x128xbf16>
    %69 = vector.shape_cast %68 : vector<1x128x128xbf16> to vector<128x128xbf16>
    %cst_52 = arith.constant dense<0.000000e+00> : vector<256x128xf32>
    %70 = tpu.matmul %53, %69, %cst_52 {dimension_numbers = #tpu.dot_dimension_numbers<[1], [0], [0], [1], [0, 0, 1, 1], [], []>} : vector<256x128xbf16>, vector<128x128xbf16>, vector<256x128xf32> -> vector<256x128xf32>
    %c2_53 = arith.constant 2 : index
    %c0_54 = arith.constant 0 : index
    %c0_55 = arith.constant 0 : index
    %71 = vector.load %arg8[%c2_53, %c0_54, %c0_55] : memref<3x128x128xbf16, #tpu.memory_space<vmem>>, vector<1x128x128xbf16>
    %72 = vector.shape_cast %71 : vector<1x128x128xbf16> to vector<128x128xbf16>
    %cst_56 = arith.constant dense<0.000000e+00> : vector<256x128xf32>
    %73 = tpu.matmul %5, %72, %cst_56 {dimension_numbers = #tpu.dot_dimension_numbers<[1], [0], [0], [1], [0, 0, 1, 1], [], []>} : vector<256x128xbf16>, vector<128x128xbf16>, vector<256x128xf32> -> vector<256x128xf32>
    %74 = arith.addf %70, %73 : vector<256x128xf32>
    %75 = vector.shape_cast %60 : vector<256x128xf32> to vector<16x16x128xf32>
    %76 = vector.shape_cast %74 : vector<256x128xf32> to vector<16x16x128xf32>
    %cst_57 = arith.constant 0.000000e+00 : f32
    %77 = vector.broadcast %cst_57 : f32 to vector<1x16x128xf32>
    %78 = vector.extract_strided_slice %75 {offsets = [0, 0, 0], sizes = [15, 16, 128], strides = [1, 1, 1]} : vector<16x16x128xf32> to vector<15x16x128xf32>
    %79 = tpu.concatenate %77, %78 in 0 : vector<1x16x128xf32>, vector<15x16x128xf32> -> vector<16x16x128xf32>
    %80 = vector.extract_strided_slice %76 {offsets = [1, 0, 0], sizes = [15, 16, 128], strides = [1, 1, 1]} : vector<16x16x128xf32> to vector<15x16x128xf32>
    %81 = tpu.concatenate %80, %77 in 0 : vector<15x16x128xf32>, vector<1x16x128xf32> -> vector<16x16x128xf32>
    %c0_58 = arith.constant 0 : index
    %c0_59 = arith.constant 0 : index
    %82 = vector.load %arg9[%c0_58, %c0_59] : memref<1x128xf32, #tpu.memory_space<vmem>>, vector<1x128xf32>
    %83 = vector.broadcast %82 : vector<1x128xf32> to vector<256x128xf32>
    %84 = arith.addf %67, %83 : vector<256x128xf32>
    %85 = arith.addf %79, %81 : vector<16x16x128xf32>
    %86 = vector.shape_cast %85 : vector<16x16x128xf32> to vector<256x128xf32>
    %87 = arith.addf %84, %86 : vector<256x128xf32>
    %88 = math.tanh %87 : vector<256x128xf32>
    %89 = arith.subf %88, %1 : vector<256x128xf32>
    %90 = arith.mulf %45, %89 : vector<256x128xf32>
    %91 = arith.addf %1, %90 : vector<256x128xf32>
    %92 = vector.shape_cast %91 : vector<256x128xf32> to vector<1x16x16x128xf32>
    %c0_60 = arith.constant 0 : index
    %c0_61 = arith.constant 0 : index
    %c0_62 = arith.constant 0 : index
    %c0_63 = arith.constant 0 : index
    %93 = vector.load %arg10[%c0_60, %c0_61, %c0_62, %c0_63] : memref<1x16x16x128xf32, #tpu.memory_space<vmem>>, vector<1x16x16x128xf32>
    tpu.vector_store %arg10[%c0_60, %c0_61, %c0_62, %c0_63], %92 {strides = array<i32>} : memref<1x16x16x128xf32, #tpu.memory_space<vmem>>, vector<1x16x16x128xf32>,
    return
  }
  func.func @transform_0(%arg0: i32, %arg1: i32) -> (i32, i32, i32, i32) {
    %c0_i32 = arith.constant 0 : i32
    %c0_i32_0 = arith.constant 0 : i32
    %c0_i32_1 = arith.constant 0 : i32
    return %arg0, %c0_i32, %arg1, %c0_i32_0 : i32, i32, i32, i32
  }
  func.func @transform_1(%arg0: i32, %arg1: i32) -> (i32, i32, i32, i32) {
    %c0_i32 = arith.constant 0 : i32
    %c0_i32_0 = arith.constant 0 : i32
    %c0_i32_1 = arith.constant 0 : i32
    return %arg0, %c0_i32, %arg1, %c0_i32_0 : i32, i32, i32, i32
  }
  func.func @transform_2(%arg0: i32, %arg1: i32) -> (i32, i32, i32) {
    %c0_i32 = arith.constant 0 : i32
    %c0_i32_0 = arith.constant 0 : i32
    %c0_i32_1 = arith.constant 0 : i32
    %c0_i32_2 = arith.constant 0 : i32
    return %c0_i32, %c0_i32_0, %c0_i32_1 : i32, i32, i32
  }
  func.func @transform_3(%arg0: i32, %arg1: i32) -> (i32, i32, i32) {
    %c0_i32 = arith.constant 0 : i32
    %c0_i32_0 = arith.constant 0 : i32
    %c0_i32_1 = arith.constant 0 : i32
    %c0_i32_2 = arith.constant 0 : i32
    return %c0_i32, %c0_i32_0, %c0_i32_1 : i32, i32, i32
  }
  func.func @transform_4(%arg0: i32, %arg1: i32) -> (i32, i32) {
    %c0_i32 = arith.constant 0 : i32
    %c0_i32_0 = arith.constant 0 : i32
    %c0_i32_1 = arith.constant 0 : i32
    return %c0_i32, %c0_i32_0 : i32, i32
  }
  func.func @transform_5(%arg0: i32, %arg1: i32) -> (i32, i32, i32) {
    %c0_i32 = arith.constant 0 : i32
    %c0_i32_0 = arith.constant 0 : i32
    %c0_i32_1 = arith.constant 0 : i32
    %c0_i32_2 = arith.constant 0 : i32
    return %c0_i32, %c0_i32_0, %c0_i32_1 : i32, i32, i32
  }
  func.func @transform_6(%arg0: i32, %arg1: i32) -> (i32, i32, i32) {
    %c0_i32 = arith.constant 0 : i32
    %c0_i32_0 = arith.constant 0 : i32
    %c0_i32_1 = arith.constant 0 : i32
    %c0_i32_2 = arith.constant 0 : i32
    return %c0_i32, %c0_i32_0, %c0_i32_1 : i32, i32, i32
  }
  func.func @transform_7(%arg0: i32, %arg1: i32) -> (i32, i32) {
    %c0_i32 = arith.constant 0 : i32
    %c0_i32_0 = arith.constant 0 : i32
    %c0_i32_1 = arith.constant 0 : i32
    return %c0_i32, %c0_i32_0 : i32, i32
  }
  func.func @transform_8(%arg0: i32, %arg1: i32) -> (i32, i32, i32, i32) {
    %c0_i32 = arith.constant 0 : i32
    %c0_i32_0 = arith.constant 0 : i32
    %c0_i32_1 = arith.constant 0 : i32
    return %arg0, %c0_i32, %arg1, %c0_i32_0 : i32, i32, i32, i32
  }
}

module attributes {stable_mosaic.version = 11 : i64} {
  func.func @_gru_pass_kernel(%arg0: i32, %arg1: i32, %arg2: memref<1x16x16x128xf32, #tpu.memory_space<vmem>>, %arg3: memref<1x16x16x128xf32, #tpu.memory_space<vmem>>, %arg4: memref<3x128x256xbf16, #tpu.memory_space<vmem>>, %arg5: memref<3x128x256xbf16, #tpu.memory_space<vmem>>, %arg6: memref<1x256xf32, #tpu.memory_space<vmem>>, %arg7: memref<3x128x128xbf16, #tpu.memory_space<vmem>>, %arg8: memref<3x128x128xbf16, #tpu.memory_space<vmem>>, %arg9: memref<1x128xf32, #tpu.memory_space<vmem>>, %arg10: memref<1x16x16x128xf32, #tpu.memory_space<vmem>>) attributes {dimension_semantics = [#tpu.dimension_semantics<parallel>, #tpu.dimension_semantics<parallel>], iteration_bounds = array<i64: 2, 1>, scalar_prefetch = 0 : i64, scratch_operands = 0 : i64, tpu.core_type = #tpu.core_type<tc>, window_params = [{transform_indices = @transform_0, window_bounds = array<i64: 1, 16, 16, 128>}, {transform_indices = @transform_1, window_bounds = array<i64: 1, 16, 16, 128>}, {pipeline_mode = #tpu.pipeline_mode<synchronous>, transform_indices = @transform_2, window_bounds = array<i64: 3, 128, 256>}, {pipeline_mode = #tpu.pipeline_mode<synchronous>, transform_indices = @transform_3, window_bounds = array<i64: 3, 128, 256>}, {pipeline_mode = #tpu.pipeline_mode<synchronous>, transform_indices = @transform_4, window_bounds = array<i64: 1, 256>}, {pipeline_mode = #tpu.pipeline_mode<synchronous>, transform_indices = @transform_5, window_bounds = array<i64: 3, 128, 128>}, {pipeline_mode = #tpu.pipeline_mode<synchronous>, transform_indices = @transform_6, window_bounds = array<i64: 3, 128, 128>}, {pipeline_mode = #tpu.pipeline_mode<synchronous>, transform_indices = @transform_7, window_bounds = array<i64: 1, 128>}, {transform_indices = @transform_8, window_bounds = array<i64: 1, 16, 16, 128>}]} {
    %c0 = arith.constant 0 : index
    %c0_0 = arith.constant 0 : index
    %c0_1 = arith.constant 0 : index
    %c0_2 = arith.constant 0 : index
    %0 = vector.load %arg2[%c0, %c0_0, %c0_1, %c0_2] : memref<1x16x16x128xf32, #tpu.memory_space<vmem>>, vector<1x16x16x128xf32>
    %1 = vector.shape_cast %0 : vector<1x16x16x128xf32> to vector<256x128xf32>
    %2 = arith.truncf %1 : vector<256x128xf32> to vector<256x128xbf16>
    %c0_3 = arith.constant 0 : index
    %c0_4 = arith.constant 0 : index
    %c0_5 = arith.constant 0 : index
    %c0_6 = arith.constant 0 : index
    %3 = vector.load %arg3[%c0_3, %c0_4, %c0_5, %c0_6] : memref<1x16x16x128xf32, #tpu.memory_space<vmem>>, vector<1x16x16x128xf32>
    %4 = vector.shape_cast %3 : vector<1x16x16x128xf32> to vector<256x128xf32>
    %5 = arith.truncf %4 : vector<256x128xf32> to vector<256x128xbf16>
    %c0_7 = arith.constant 0 : index
    %c0_8 = arith.constant 0 : index
    %c0_9 = arith.constant 0 : index
    %6 = vector.load %arg4[%c0_7, %c0_8, %c0_9] : memref<3x128x256xbf16, #tpu.memory_space<vmem>>, vector<1x128x256xbf16>
    %7 = vector.shape_cast %6 : vector<1x128x256xbf16> to vector<128x256xbf16>
    %cst = arith.constant dense<0.000000e+00> : vector<256x256xf32>
    %8 = tpu.matmul %2, %7, %cst {dimension_numbers = #tpu.dot_dimension_numbers<[1], [0], [0], [1], [0, 0, 1, 1], [], []>} : vector<256x128xbf16>, vector<128x256xbf16>, vector<256x256xf32> -> vector<256x256xf32>
    %c0_10 = arith.constant 0 : index
    %c0_11 = arith.constant 0 : index
    %c0_12 = arith.constant 0 : index
    %9 = vector.load %arg5[%c0_10, %c0_11, %c0_12] : memref<3x128x256xbf16, #tpu.memory_space<vmem>>, vector<1x128x256xbf16>
    %10 = vector.shape_cast %9 : vector<1x128x256xbf16> to vector<128x256xbf16>
    %cst_13 = arith.constant dense<0.000000e+00> : vector<256x256xf32>
    %11 = tpu.matmul %5, %10, %cst_13 {dimension_numbers = #tpu.dot_dimension_numbers<[1], [0], [0], [1], [0, 0, 1, 1], [], []>} : vector<256x128xbf16>, vector<128x256xbf16>, vector<256x256xf32> -> vector<256x256xf32>
    %12 = arith.addf %8, %11 : vector<256x256xf32>
    %c1 = arith.constant 1 : index
    %c0_14 = arith.constant 0 : index
    %c0_15 = arith.constant 0 : index
    %13 = vector.load %arg4[%c1, %c0_14, %c0_15] : memref<3x128x256xbf16, #tpu.memory_space<vmem>>, vector<1x128x256xbf16>
    %14 = vector.shape_cast %13 : vector<1x128x256xbf16> to vector<128x256xbf16>
    %cst_16 = arith.constant dense<0.000000e+00> : vector<256x256xf32>
    %15 = tpu.matmul %2, %14, %cst_16 {dimension_numbers = #tpu.dot_dimension_numbers<[1], [0], [0], [1], [0, 0, 1, 1], [], []>} : vector<256x128xbf16>, vector<128x256xbf16>, vector<256x256xf32> -> vector<256x256xf32>
    %c1_17 = arith.constant 1 : index
    %c0_18 = arith.constant 0 : index
    %c0_19 = arith.constant 0 : index
    %16 = vector.load %arg5[%c1_17, %c0_18, %c0_19] : memref<3x128x256xbf16, #tpu.memory_space<vmem>>, vector<1x128x256xbf16>
    %17 = vector.shape_cast %16 : vector<1x128x256xbf16> to vector<128x256xbf16>
    %cst_20 = arith.constant dense<0.000000e+00> : vector<256x256xf32>
    %18 = tpu.matmul %5, %17, %cst_20 {dimension_numbers = #tpu.dot_dimension_numbers<[1], [0], [0], [1], [0, 0, 1, 1], [], []>} : vector<256x128xbf16>, vector<128x256xbf16>, vector<256x256xf32> -> vector<256x256xf32>
    %19 = arith.addf %15, %18 : vector<256x256xf32>
    %c2 = arith.constant 2 : index
    %c0_21 = arith.constant 0 : index
    %c0_22 = arith.constant 0 : index
    %20 = vector.load %arg4[%c2, %c0_21, %c0_22] : memref<3x128x256xbf16, #tpu.memory_space<vmem>>, vector<1x128x256xbf16>
    %21 = vector.shape_cast %20 : vector<1x128x256xbf16> to vector<128x256xbf16>
    %cst_23 = arith.constant dense<0.000000e+00> : vector<256x256xf32>
    %22 = tpu.matmul %2, %21, %cst_23 {dimension_numbers = #tpu.dot_dimension_numbers<[1], [0], [0], [1], [0, 0, 1, 1], [], []>} : vector<256x128xbf16>, vector<128x256xbf16>, vector<256x256xf32> -> vector<256x256xf32>
    %c2_24 = arith.constant 2 : index
    %c0_25 = arith.constant 0 : index
    %c0_26 = arith.constant 0 : index
    %23 = vector.load %arg5[%c2_24, %c0_25, %c0_26] : memref<3x128x256xbf16, #tpu.memory_space<vmem>>, vector<1x128x256xbf16>
    %24 = vector.shape_cast %23 : vector<1x128x256xbf16> to vector<128x256xbf16>
    %cst_27 = arith.constant dense<0.000000e+00> : vector<256x256xf32>
    %25 = tpu.matmul %5, %24, %cst_27 {dimension_numbers = #tpu.dot_dimension_numbers<[1], [0], [0], [1], [0, 0, 1, 1], [], []>} : vector<256x128xbf16>, vector<128x256xbf16>, vector<256x256xf32> -> vector<256x256xf32>
    %26 = arith.addf %22, %25 : vector<256x256xf32>
    %27 = vector.shape_cast %12 : vector<256x256xf32> to vector<16x16x256xf32>
    %28 = vector.shape_cast %26 : vector<256x256xf32> to vector<16x16x256xf32>
    %cst_28 = arith.constant 0.000000e+00 : f32
    %29 = vector.broadcast %cst_28 : f32 to vector<16x1x256xf32>
    %30 = vector.extract_strided_slice %27 {offsets = [0, 0, 0], sizes = [16, 15, 256], strides = [1, 1, 1]} : vector<16x16x256xf32> to vector<16x15x256xf32>
    %31 = tpu.concatenate %29, %30 in 1 : vector<16x1x256xf32>, vector<16x15x256xf32> -> vector<16x16x256xf32>
    %32 = vector.extract_strided_slice %28 {offsets = [0, 1, 0], sizes = [16, 15, 256], strides = [1, 1, 1]} : vector<16x16x256xf32> to vector<16x15x256xf32>
    %33 = tpu.concatenate %32, %29 in 1 : vector<16x15x256xf32>, vector<16x1x256xf32> -> vector<16x16x256xf32>
    %c0_29 = arith.constant 0 : index
    %c0_30 = arith.constant 0 : index
    %34 = vector.load %arg6[%c0_29, %c0_30] : memref<1x256xf32, #tpu.memory_space<vmem>>, vector<1x256xf32>
    %35 = vector.broadcast %34 : vector<1x256xf32> to vector<256x256xf32>
    %36 = arith.addf %19, %35 : vector<256x256xf32>
    %37 = arith.addf %31, %33 : vector<16x16x256xf32>
    %38 = vector.shape_cast %37 : vector<16x16x256xf32> to vector<256x256xf32>
    %39 = arith.addf %36, %38 : vector<256x256xf32>
    %40 = vector.extract_strided_slice %39 {offsets = [0, 0], sizes = [256, 128], strides = [1, 1]} : vector<256x256xf32> to vector<256x128xf32>
    %41 = arith.negf %40 : vector<256x128xf32>
    %42 = math.exp %41 : vector<256x128xf32>
    %cst_31 = arith.constant 1.000000e+00 : f32
    %43 = vector.broadcast %cst_31 : f32 to vector<256x128xf32>
    %44 = arith.addf %43, %42 : vector<256x128xf32>
    %45 = arith.divf %43, %44 : vector<256x128xf32>
    %46 = vector.extract_strided_slice %39 {offsets = [0, 128], sizes = [256, 128], strides = [1, 1]} : vector<256x256xf32> to vector<256x128xf32>
    %47 = arith.negf %46 : vector<256x128xf32>
    %48 = math.exp %47 : vector<256x128xf32>
    %cst_32 = arith.constant 1.000000e+00 : f32
    %49 = vector.broadcast %cst_32 : f32 to vector<256x128xf32>
    %50 = arith.addf %49, %48 : vector<256x128xf32>
    %51 = arith.divf %49, %50 : vector<256x128xf32>
    %52 = arith.mulf %51, %1 : vector<256x128xf32>
    %53 = arith.truncf %52 : vector<256x128xf32> to vector<256x128xbf16>
    %c0_33 = arith.constant 0 : index
    %c0_34 = arith.constant 0 : index
    %c0_35 = arith.constant 0 : index
    %54 = vector.load %arg7[%c0_33, %c0_34, %c0_35] : memref<3x128x128xbf16, #tpu.memory_space<vmem>>, vector<1x128x128xbf16>
    %55 = vector.shape_cast %54 : vector<1x128x128xbf16> to vector<128x128xbf16>
    %cst_36 = arith.constant dense<0.000000e+00> : vector<256x128xf32>
    %56 = tpu.matmul %53, %55, %cst_36 {dimension_numbers = #tpu.dot_dimension_numbers<[1], [0], [0], [1], [0, 0, 1, 1], [], []>} : vector<256x128xbf16>, vector<128x128xbf16>, vector<256x128xf32> -> vector<256x128xf32>
    %c0_37 = arith.constant 0 : index
    %c0_38 = arith.constant 0 : index
    %c0_39 = arith.constant 0 : index
    %57 = vector.load %arg8[%c0_37, %c0_38, %c0_39] : memref<3x128x128xbf16, #tpu.memory_space<vmem>>, vector<1x128x128xbf16>
    %58 = vector.shape_cast %57 : vector<1x128x128xbf16> to vector<128x128xbf16>
    %cst_40 = arith.constant dense<0.000000e+00> : vector<256x128xf32>
    %59 = tpu.matmul %5, %58, %cst_40 {dimension_numbers = #tpu.dot_dimension_numbers<[1], [0], [0], [1], [0, 0, 1, 1], [], []>} : vector<256x128xbf16>, vector<128x128xbf16>, vector<256x128xf32> -> vector<256x128xf32>
    %60 = arith.addf %56, %59 : vector<256x128xf32>
    %c1_41 = arith.constant 1 : index
    %c0_42 = arith.constant 0 : index
    %c0_43 = arith.constant 0 : index
    %61 = vector.load %arg7[%c1_41, %c0_42, %c0_43] : memref<3x128x128xbf16, #tpu.memory_space<vmem>>, vector<1x128x128xbf16>
    %62 = vector.shape_cast %61 : vector<1x128x128xbf16> to vector<128x128xbf16>
    %cst_44 = arith.constant dense<0.000000e+00> : vector<256x128xf32>
    %63 = tpu.matmul %53, %62, %cst_44 {dimension_numbers = #tpu.dot_dimension_numbers<[1], [0], [0], [1], [0, 0, 1, 1], [], []>} : vector<256x128xbf16>, vector<128x128xbf16>, vector<256x128xf32> -> vector<256x128xf32>
    %c1_45 = arith.constant 1 : index
    %c0_46 = arith.constant 0 : index
    %c0_47 = arith.constant 0 : index
    %64 = vector.load %arg8[%c1_45, %c0_46, %c0_47] : memref<3x128x128xbf16, #tpu.memory_space<vmem>>, vector<1x128x128xbf16>
    %65 = vector.shape_cast %64 : vector<1x128x128xbf16> to vector<128x128xbf16>
    %cst_48 = arith.constant dense<0.000000e+00> : vector<256x128xf32>
    %66 = tpu.matmul %5, %65, %cst_48 {dimension_numbers = #tpu.dot_dimension_numbers<[1], [0], [0], [1], [0, 0, 1, 1], [], []>} : vector<256x128xbf16>, vector<128x128xbf16>, vector<256x128xf32> -> vector<256x128xf32>
    %67 = arith.addf %63, %66 : vector<256x128xf32>
    %c2_49 = arith.constant 2 : index
    %c0_50 = arith.constant 0 : index
    %c0_51 = arith.constant 0 : index
    %68 = vector.load %arg7[%c2_49, %c0_50, %c0_51] : memref<3x128x128xbf16, #tpu.memory_space<vmem>>, vector<1x128x128xbf16>
    %69 = vector.shape_cast %68 : vector<1x128x128xbf16> to vector<128x128xbf16>
    %cst_52 = arith.constant dense<0.000000e+00> : vector<256x128xf32>
    %70 = tpu.matmul %53, %69, %cst_52 {dimension_numbers = #tpu.dot_dimension_numbers<[1], [0], [0], [1], [0, 0, 1, 1], [], []>} : vector<256x128xbf16>, vector<128x128xbf16>, vector<256x128xf32> -> vector<256x128xf32>
    %c2_53 = arith.constant 2 : index
    %c0_54 = arith.constant 0 : index
    %c0_55 = arith.constant 0 : index
    %71 = vector.load %arg8[%c2_53, %c0_54, %c0_55] : memref<3x128x128xbf16, #tpu.memory_space<vmem>>, vector<1x128x128xbf16>
    %72 = vector.shape_cast %71 : vector<1x128x128xbf16> to vector<128x128xbf16>
    %cst_56 = arith.constant dense<0.000000e+00> : vector<256x128xf32>
    %73 = tpu.matmul %5, %72, %cst_56 {dimension_numbers = #tpu.dot_dimension_numbers<[1], [0], [0], [1], [0, 0, 1, 1], [], []>} : vector<256x128xbf16>, vector<128x128xbf16>, vector<256x128xf32> -> vector<256x128xf32>
    %74 = arith.addf %70, %73 : vector<256x128xf32>
    %75 = vector.shape_cast %60 : vector<256x128xf32> to vector<16x16x128xf32>
    %76 = vector.shape_cast %74 : vector<256x128xf32> to vector<16x16x128xf32>
    %cst_57 = arith.constant 0.000000e+00 : f32
    %77 = vector.broadcast %cst_57 : f32 to vector<16x1x128xf32>
    %78 = vector.extract_strided_slice %75 {offsets = [0, 0, 0], sizes = [16, 15, 128], strides = [1, 1, 1]} : vector<16x16x128xf32> to vector<16x15x128xf32>
    %79 = tpu.concatenate %77, %78 in 1 : vector<16x1x128xf32>, vector<16x15x128xf32> -> vector<16x16x128xf32>
    %80 = vector.extract_strided_slice %76 {offsets = [0, 1, 0], sizes = [16, 15, 128], strides = [1, 1, 1]} : vector<16x16x128xf32> to vector<16x15x128xf32>
    %81 = tpu.concatenate %80, %77 in 1 : vector<16x15x128xf32>, vector<16x1x128xf32> -> vector<16x16x128xf32>
    %c0_58 = arith.constant 0 : index
    %c0_59 = arith.constant 0 : index
    %82 = vector.load %arg9[%c0_58, %c0_59] : memref<1x128xf32, #tpu.memory_space<vmem>>, vector<1x128xf32>
    %83 = vector.broadcast %82 : vector<1x128xf32> to vector<256x128xf32>
    %84 = arith.addf %67, %83 : vector<256x128xf32>
    %85 = arith.addf %79, %81 : vector<16x16x128xf32>
    %86 = vector.shape_cast %85 : vector<16x16x128xf32> to vector<256x128xf32>
    %87 = arith.addf %84, %86 : vector<256x128xf32>
    %88 = math.tanh %87 : vector<256x128xf32>
    %89 = arith.subf %88, %1 : vector<256x128xf32>
    %90 = arith.mulf %45, %89 : vector<256x128xf32>
    %91 = arith.addf %1, %90 : vector<256x128xf32>
    %92 = vector.shape_cast %91 : vector<256x128xf32> to vector<1x16x16x128xf32>
    %c0_60 = arith.constant 0 : index
    %c0_61 = arith.constant 0 : index
    %c0_62 = arith.constant 0 : index
    %c0_63 = arith.constant 0 : index
    %93 = vector.load %arg10[%c0_60, %c0_61, %c0_62, %c0_63] : memref<1x16x16x128xf32, #tpu.memory_space<vmem>>, vector<1x16x16x128xf32>
    tpu.vector_store %arg10[%c0_60, %c0_61, %c0_62, %c0_63], %92 {strides = array<i32>} : memref<1x16x16x128xf32, #tpu.memory_space<vmem>>, vector<1x16x16x128xf32>,
    return
  }
  func.func @transform_0(%arg0: i32, %arg1: i32) -> (i32, i32, i32, i32) {
    %c0_i32 = arith.constant 0 : i32
    %c0_i32_0 = arith.constant 0 : i32
    %c0_i32_1 = arith.constant 0 : i32
    return %arg0, %arg1, %c0_i32, %c0_i32_0 : i32, i32, i32, i32
  }
  func.func @transform_1(%arg0: i32, %arg1: i32) -> (i32, i32, i32, i32) {
    %c0_i32 = arith.constant 0 : i32
    %c0_i32_0 = arith.constant 0 : i32
    %c0_i32_1 = arith.constant 0 : i32
    return %arg0, %arg1, %c0_i32, %c0_i32_0 : i32, i32, i32, i32
  }
  func.func @transform_2(%arg0: i32, %arg1: i32) -> (i32, i32, i32) {
    %c0_i32 = arith.constant 0 : i32
    %c0_i32_0 = arith.constant 0 : i32
    %c0_i32_1 = arith.constant 0 : i32
    %c0_i32_2 = arith.constant 0 : i32
    return %c0_i32, %c0_i32_0, %c0_i32_1 : i32, i32, i32
  }
  func.func @transform_3(%arg0: i32, %arg1: i32) -> (i32, i32, i32) {
    %c0_i32 = arith.constant 0 : i32
    %c0_i32_0 = arith.constant 0 : i32
    %c0_i32_1 = arith.constant 0 : i32
    %c0_i32_2 = arith.constant 0 : i32
    return %c0_i32, %c0_i32_0, %c0_i32_1 : i32, i32, i32
  }
  func.func @transform_4(%arg0: i32, %arg1: i32) -> (i32, i32) {
    %c0_i32 = arith.constant 0 : i32
    %c0_i32_0 = arith.constant 0 : i32
    %c0_i32_1 = arith.constant 0 : i32
    return %c0_i32, %c0_i32_0 : i32, i32
  }
  func.func @transform_5(%arg0: i32, %arg1: i32) -> (i32, i32, i32) {
    %c0_i32 = arith.constant 0 : i32
    %c0_i32_0 = arith.constant 0 : i32
    %c0_i32_1 = arith.constant 0 : i32
    %c0_i32_2 = arith.constant 0 : i32
    return %c0_i32, %c0_i32_0, %c0_i32_1 : i32, i32, i32
  }
  func.func @transform_6(%arg0: i32, %arg1: i32) -> (i32, i32, i32) {
    %c0_i32 = arith.constant 0 : i32
    %c0_i32_0 = arith.constant 0 : i32
    %c0_i32_1 = arith.constant 0 : i32
    %c0_i32_2 = arith.constant 0 : i32
    return %c0_i32, %c0_i32_0, %c0_i32_1 : i32, i32, i32
  }
  func.func @transform_7(%arg0: i32, %arg1: i32) -> (i32, i32) {
    %c0_i32 = arith.constant 0 : i32
    %c0_i32_0 = arith.constant 0 : i32
    %c0_i32_1 = arith.constant 0 : i32
    return %c0_i32, %c0_i32_0 : i32, i32
  }
  func.func @transform_8(%arg0: i32, %arg1: i32) -> (i32, i32, i32, i32) {
    %c0_i32 = arith.constant 0 : i32
    %c0_i32_0 = arith.constant 0 : i32
    %c0_i32_1 = arith.constant 0 : i32
    return %arg0, %arg1, %c0_i32, %c0_i32_0 : i32, i32, i32, i32
  }
}

</mosaic_0001>

<llo_original>
// kernel: sepconvgru_forward.3
$region0: #{sepconvgru_forward.3}
  #allocation0 [shape = 'u32[]', space=smem, size = 0x4, offset = 0x4, fixed_abs, tag = 'smem constant byte address 0x4 - core index']
  #allocation1 [shape = 'u32[144,128]{1,0:T(1,128)}', space=vmem, size = 0x12000, scoped, tag = 'internal scratch']
  %s0 = inlined_call_operand.vmem [shape: f32[2,16,16,128], index: 0, kind: input, shape index: {}, may-alias: {0,8}]
  %s1 = inlined_call_operand.vmem [shape: f32[2,16,16,128], index: 1, kind: input, shape index: {}]
  %s2 = inlined_call_operand.vmem [shape: bf16[3,128,256], index: 2, kind: input, shape index: {}]
  %s3 = inlined_call_operand.vmem [shape: bf16[3,128,256], index: 3, kind: input, shape index: {}]
  %s4 = inlined_call_operand.vmem [shape: f32[1,256], index: 4, kind: input, shape index: {}]
  %s5 = inlined_call_operand.vmem [shape: bf16[3,128,128], index: 5, kind: input, shape index: {}]
  %s6 = inlined_call_operand.vmem [shape: bf16[3,128,128], index: 6, kind: input, shape index: {}]
  %s7 = inlined_call_operand.vmem [shape: f32[1,128], index: 7, kind: input, shape index: {}]
  %s8 = inlined_call_operand.vmem [shape: f32[2,16,16,128], index: 8, kind: output, shape index: {}, may-alias: {0,8}]
  %s9 = sld [smem:[#allocation0]]
  $region65: #{sepconvgru_forward.3} parent=0
    _
  %s11 = ssub.s32 1, %s9
  %s12 = scalar_select 0, %s11, %s9
  loop: start=0, step=1, limit=4
  $region2: #{sepconvgru_forward.3} parent=0 // loop_pre_header
    _
  $region3: #{sepconvgru_forward.3} parent=0 // loop_header
    %s14 = sphi 0, %s18
    %p15 = scmp.ge.s32.totalorder %s14, 4
    %s21 = sphi 0, %s33
    %s22 = sphi 0, %s29
    %s23 = sphi 0, %s21
    %s24 = sphi 0, %s22
    %s25 = sphi 0, %s23
    %s26 = sphi 0, %s24
    %s38 = sphi 0, %s40
    %s41 = sphi 0, %s38
    %s42 = sphi 0, %s41
    %s58 = sphi 0, %s42
    %s66 = sphi 0, %s68
    %s69 = sphi 0, %s66
    %s70 = sphi 0, %s69
    %s86 = sphi 0, %s70
    %s90 = sphi 0, %s90
    %s92 = sphi 0, %s90
    %s93 = sphi 0, %s92
    %s107 = sphi 0, %s93
    %s111 = sphi 0, %s111
    %s113 = sphi 0, %s111
    %s114 = sphi 0, %s113
    %s128 = sphi 0, %s114
    %s132 = sphi 0, %s132
    %s134 = sphi 0, %s132
    %s135 = sphi 0, %s134
    %s149 = sphi 0, %s135
    %s153 = sphi 0, %s153
    %s155 = sphi 0, %s153
    %s156 = sphi 0, %s155
    %s170 = sphi 0, %s156
    %s174 = sphi 0, %s174
    %s176 = sphi 0, %s174
    %s177 = sphi 0, %s176
    %s191 = sphi 0, %s177
    %s195 = sphi 0, %s195
    %s197 = sphi 0, %s195
    %s198 = sphi 0, %s197
    %s212 = sphi 0, %s198
    %s220 = sphi 0, %s222
    %s223 = sphi 0, %s220
    %s224 = sphi 0, %s223
    %s240 = sphi 0, %s224
  $region4: #{sepconvgru_forward.3} parent=0 // loop_header_branch
    %17 = sbr.rel (%p15) target = $region8
  $region5: #{sepconvgru_forward.3} parent=0 // loop_body
    %s19 = ssub.s32 %s14, 1
    %s20 = ssub.s32 %s14, 2
    %s27 = sadd.s32 1, %s22
    %p28 = scmp.ge.s32.totalorder %s27, 1
    %s29 = scalar_select %p28, 0, %s27
    %s30 = sadd.s32 1, %s21
    %s31 = scalar_select %p28, %s30, %s21
    %p32 = scmp.ge.s32.totalorder %s31, 2
    %s33 = scalar_select %p32, 0, %s31
    %s34 = ssub.s32 %s21, %s33
    %s35 = ssub.s32 %s22, %s29
    %s36 = sor.u32 %s34, %s35
    %p37 = scmp.eq.s32.totalorder %s36, 0
    %s39 = sadd.s32 %s38, 1
    %s40 = scalar_select %p37, %s38, %s39
    %p43 = pneg %p37
    %p44 = scmp.eq.s32.totalorder %s14, 1
    %p45 = por %p43, %p44
    %p46 = scmp.ne.s32.totalorder %s38, %s41
    %p47 = scmp.eq.s32.totalorder %s14, 0
    %p48 = por %p46, %p47
    %p49 = scmp.ne.s32.totalorder %s38, %s41
    %p50 = scmp.eq.s32.totalorder %s19, 1
    %p51 = por %p49, %p50
    %p52 = scmp.ne.s32.totalorder %s41, %s42
    %p53 = scmp.eq.s32.totalorder %s19, 0
    %p54 = por %p52, %p53
    %p55 = scmp.ne.s32.totalorder %s41, %s42
    %p56 = scmp.eq.s32.totalorder %s20, 1
    %p57 = por %p55, %p56
    %p59 = scmp.ne.s32.totalorder %s42, %s58
    %p60 = scmp.eq.s32.totalorder %s20, 0
    %p61 = por %p59, %p60
    %s62 = ssub.s32 %s21, %s33
    %s63 = ssub.s32 %s22, %s29
    %s64 = sor.u32 %s62, %s63
    %p65 = scmp.eq.s32.totalorder %s64, 0
    %s67 = sadd.s32 %s66, 1
    %s68 = scalar_select %p65, %s66, %s67
    %p71 = pneg %p65
    %p72 = scmp.eq.s32.totalorder %s14, 1
    %p73 = por %p71, %p72
    %p74 = scmp.ne.s32.totalorder %s66, %s69
    %p75 = scmp.eq.s32.totalorder %s14, 0
    %p76 = por %p74, %p75
    %p77 = scmp.ne.s32.totalorder %s66, %s69
    %p78 = scmp.eq.s32.totalorder %s19, 1
    %p79 = por %p77, %p78
    %p80 = scmp.ne.s32.totalorder %s69, %s70
    %p81 = scmp.eq.s32.totalorder %s19, 0
    %p82 = por %p80, %p81
    %p83 = scmp.ne.s32.totalorder %s69, %s70
    %p84 = scmp.eq.s32.totalorder %s20, 1
    %p85 = por %p83, %p84
    %p87 = scmp.ne.s32.totalorder %s70, %s86
    %p88 = scmp.eq.s32.totalorder %s20, 0
    %p89 = por %p87, %p88
    %s91 = sadd.s32 %s90, 1
    %p94 = scmp.eq.s32.totalorder %s14, 1
    %p95 = scmp.ne.s32.totalorder %s90, %s92
    %p96 = scmp.eq.s32.totalorder %s14, 0
    %p97 = por %p95, %p96
    %p98 = scmp.ne.s32.totalorder %s90, %s92
    %p99 = scmp.eq.s32.totalorder %s19, 1
    %p100 = por %p98, %p99
    %p101 = scmp.ne.s32.totalorder %s92, %s93
    %p102 = scmp.eq.s32.totalorder %s19, 0
    %p103 = por %p101, %p102
    %p104 = scmp.ne.s32.totalorder %s92, %s93
    %p105 = scmp.eq.s32.totalorder %s20, 1
    %p106 = por %p104, %p105
    %p108 = scmp.ne.s32.totalorder %s93, %s107
    %p109 = scmp.eq.s32.totalorder %s20, 0
    %p110 = por %p108, %p109
    %s112 = sadd.s32 %s111, 1
    %p115 = scmp.eq.s32.totalorder %s14, 1
    %p116 = scmp.ne.s32.totalorder %s111, %s113
    %p117 = scmp.eq.s32.totalorder %s14, 0
    %p118 = por %p116, %p117
    %p119 = scmp.ne.s32.totalorder %s111, %s113
    %p120 = scmp.eq.s32.totalorder %s19, 1
    %p121 = por %p119, %p120
    %p122 = scmp.ne.s32.totalorder %s113, %s114
    %p123 = scmp.eq.s32.totalorder %s19, 0
    %p124 = por %p122, %p123
    %p125 = scmp.ne.s32.totalorder %s113, %s114
    %p126 = scmp.eq.s32.totalorder %s20, 1
    %p127 = por %p125, %p126
    %p129 = scmp.ne.s32.totalorder %s114, %s128
    %p130 = scmp.eq.s32.totalorder %s20, 0
    %p131 = por %p129, %p130
    %s133 = sadd.s32 %s132, 1
    %p136 = scmp.eq.s32.totalorder %s14, 1
    %p137 = scmp.ne.s32.totalorder %s132, %s134
    %p138 = scmp.eq.s32.totalorder %s14, 0
    %p139 = por %p137, %p138
    %p140 = scmp.ne.s32.totalorder %s132, %s134
    %p141 = scmp.eq.s32.totalorder %s19, 1
    %p142 = por %p140, %p141
    %p143 = scmp.ne.s32.totalorder %s134, %s135
    %p144 = scmp.eq.s32.totalorder %s19, 0
    %p145 = por %p143, %p144
    %p146 = scmp.ne.s32.totalorder %s134, %s135
    %p147 = scmp.eq.s32.totalorder %s20, 1
    %p148 = por %p146, %p147
    %p150 = scmp.ne.s32.totalorder %s135, %s149
    %p151 = scmp.eq.s32.totalorder %s20, 0
    %p152 = por %p150, %p151
    %s154 = sadd.s32 %s153, 1
    %p157 = scmp.eq.s32.totalorder %s14, 1
    %p158 = scmp.ne.s32.totalorder %s153, %s155
    %p159 = scmp.eq.s32.totalorder %s14, 0
    %p160 = por %p158, %p159
    %p161 = scmp.ne.s32.totalorder %s153, %s155
    %p162 = scmp.eq.s32.totalorder %s19, 1
    %p163 = por %p161, %p162
    %p164 = scmp.ne.s32.totalorder %s155, %s156
    %p165 = scmp.eq.s32.totalorder %s19, 0
    %p166 = por %p164, %p165
    %p167 = scmp.ne.s32.totalorder %s155, %s156
    %p168 = scmp.eq.s32.totalorder %s20, 1
    %p169 = por %p167, %p168
    %p171 = scmp.ne.s32.totalorder %s156, %s170
    %p172 = scmp.eq.s32.totalorder %s20, 0
    %p173 = por %p171, %p172
    %s175 = sadd.s32 %s174, 1
    %p178 = scmp.eq.s32.totalorder %s14, 1
    %p179 = scmp.ne.s32.totalorder %s174, %s176
    %p180 = scmp.eq.s32.totalorder %s14, 0
    %p181 = por %p179, %p180
    %p182 = scmp.ne.s32.totalorder %s174, %s176
    %p183 = scmp.eq.s32.totalorder %s19, 1
    %p184 = por %p182, %p183
    %p185 = scmp.ne.s32.totalorder %s176, %s177
    %p186 = scmp.eq.s32.totalorder %s19, 0
    %p187 = por %p185, %p186
    %p188 = scmp.ne.s32.totalorder %s176, %s177
    %p189 = scmp.eq.s32.totalorder %s20, 1
    %p190 = por %p188, %p189
    %p192 = scmp.ne.s32.totalorder %s177, %s191
    %p193 = scmp.eq.s32.totalorder %s20, 0
    %p194 = por %p192, %p193
    %s196 = sadd.s32 %s195, 1
    %p199 = scmp.eq.s32.totalorder %s14, 1
    %p200 = scmp.ne.s32.totalorder %s195, %s197
    %p201 = scmp.eq.s32.totalorder %s14, 0
    %p202 = por %p200, %p201
    %p203 = scmp.ne.s32.totalorder %s195, %s197
    %p204 = scmp.eq.s32.totalorder %s19, 1
    %p205 = por %p203, %p204
    %p206 = scmp.ne.s32.totalorder %s197, %s198
    %p207 = scmp.eq.s32.totalorder %s19, 0
    %p208 = por %p206, %p207
    %p209 = scmp.ne.s32.totalorder %s197, %s198
    %p210 = scmp.eq.s32.totalorder %s20, 1
    %p211 = por %p209, %p210
    %p213 = scmp.ne.s32.totalorder %s198, %s212
    %p214 = scmp.eq.s32.totalorder %s20, 0
    %p215 = por %p213, %p214
    %s216 = ssub.s32 %s21, %s33
    %s217 = ssub.s32 %s22, %s29
    %s218 = sor.u32 %s216, %s217
    %p219 = scmp.eq.s32.totalorder %s218, 0
    %s221 = sadd.s32 %s220, 1
    %s222 = scalar_select %p219, %s220, %s221
    %p225 = pneg %p219
    %p226 = scmp.eq.s32.totalorder %s14, 1
    %p227 = por %p225, %p226
    %p228 = scmp.ne.s32.totalorder %s220, %s223
    %p229 = scmp.eq.s32.totalorder %s14, 0
    %p230 = por %p228, %p229
    %p231 = scmp.ne.s32.totalorder %s220, %s223
    %p232 = scmp.eq.s32.totalorder %s19, 1
    %p233 = por %p231, %p232
    %p234 = scmp.ne.s32.totalorder %s223, %s224
    %p235 = scmp.eq.s32.totalorder %s19, 0
    %p236 = por %p234, %p235
    %p237 = scmp.ne.s32.totalorder %s223, %s224
    %p238 = scmp.eq.s32.totalorder %s20, 1
    %p239 = por %p237, %p238
    %p241 = scmp.ne.s32.totalorder %s224, %s240
    %p242 = scmp.eq.s32.totalorder %s20, 0
    %p243 = por %p241, %p242
    %p244 = scmp.le.s32.totalorder 1, %s14
    %p245 = scmp.lt.s32.totalorder %s14, 3
    %p246 = pnand %p244, %p245
    %p247 = pneg %p246
    // Predicated region
    $region9: #{sepconvgru_forward.3} parent=5 // pred_check
      _
    $region10: #{sepconvgru_forward.3} parent=5 // pred_check_branch
      %249 = sbr.rel (%p246) target = $region12
    $region11: #{sepconvgru_forward.3} parent=5 // pred_region
      %s250 = ssub.s32 %s14, 1
      // Predicated region
      $region13: #{sepconvgru_forward.3} parent=11 // pred_check
        %p251 = pneg %p103
      $region14: #{sepconvgru_forward.3} parent=11 // pred_check_branch
        %253 = sbr.rel (%p251) target = $region16
      $region15: #{sepconvgru_forward.3} parent=11 // pred_region
        _
      $region16: #{sepconvgru_forward.3} parent=11 // pred_fallthru
        _
      // Predicated region
      $region17: #{sepconvgru_forward.3} parent=11 // pred_check
        %p254 = pneg %p124
      $region18: #{sepconvgru_forward.3} parent=11 // pred_check_branch
        %256 = sbr.rel (%p254) target = $region20
      $region19: #{sepconvgru_forward.3} parent=11 // pred_region
        _
      $region20: #{sepconvgru_forward.3} parent=11 // pred_fallthru
        _
      // Predicated region
      $region21: #{sepconvgru_forward.3} parent=11 // pred_check
        %p257 = pneg %p145
      $region22: #{sepconvgru_forward.3} parent=11 // pred_check_branch
        %259 = sbr.rel (%p257) target = $region24
      $region23: #{sepconvgru_forward.3} parent=11 // pred_region
        _
      $region24: #{sepconvgru_forward.3} parent=11 // pred_fallthru
        _
      // Predicated region
      $region25: #{sepconvgru_forward.3} parent=11 // pred_check
        %p260 = pneg %p166
      $region26: #{sepconvgru_forward.3} parent=11 // pred_check_branch
        %262 = sbr.rel (%p260) target = $region28
      $region27: #{sepconvgru_forward.3} parent=11 // pred_region
        _
      $region28: #{sepconvgru_forward.3} parent=11 // pred_fallthru
        _
      // Predicated region
      $region29: #{sepconvgru_forward.3} parent=11 // pred_check
        %p263 = pneg %p187
      $region30: #{sepconvgru_forward.3} parent=11 // pred_check_branch
        %265 = sbr.rel (%p263) target = $region32
      $region31: #{sepconvgru_forward.3} parent=11 // pred_region
        _
      $region32: #{sepconvgru_forward.3} parent=11 // pred_fallthru
        _
      // Predicated region
      $region33: #{sepconvgru_forward.3} parent=11 // pred_check
        %p266 = pneg %p208
      $region34: #{sepconvgru_forward.3} parent=11 // pred_check_branch
        %268 = sbr.rel (%p266) target = $region36
      $region35: #{sepconvgru_forward.3} parent=11 // pred_region
        _
      $region36: #{sepconvgru_forward.3} parent=11 // pred_fallthru
        _
    $region12: #{sepconvgru_forward.3} parent=5 // pred_fallthru
      _
    %p269 = scmp.lt.s32.totalorder %s14, 2
    // Predicated region
    $region37: #{sepconvgru_forward.3} parent=5 // pred_check
      %p270 = pneg %p269
    $region38: #{sepconvgru_forward.3} parent=5 // pred_check_branch
      %272 = sbr.rel (%p270) target = $region40
    $region39: #{sepconvgru_forward.3} parent=5 // pred_region
      // Predicated region
      $region41: #{sepconvgru_forward.3} parent=39 // pred_check
        %p273 = pneg %p48
      $region42: #{sepconvgru_forward.3} parent=39 // pred_check_branch
        %275 = sbr.rel (%p273) target = $region44
      $region43: #{sepconvgru_forward.3} parent=39 // pred_region
        %s276 = smul.u32 2, %s22
        %p277 = scmp.lt.s32.totalorder %s21, 1
        %s278 = scalar_select %p277, %s21, 1
        %p279 = scmp.lt.s32.totalorder %s276, 1
        %s280 = scalar_select %p279, %s276, 1
        %s281 = smul.addr %s278, 32
        %s282 = sadd.s32 %s280, %s281
        %s283 = smul.addr %s282, 8
        %s284 = scalar_lea.vmem %s0, %s283
        %s285 = smul.u32 2, %s22
      $region44: #{sepconvgru_forward.3} parent=39 // pred_fallthru
        _
      // Predicated region
      $region45: #{sepconvgru_forward.3} parent=39 // pred_check
        %p286 = pneg %p76
      $region46: #{sepconvgru_forward.3} parent=39 // pred_check_branch
        %288 = sbr.rel (%p286) target = $region48
      $region47: #{sepconvgru_forward.3} parent=39 // pred_region
        %s289 = smul.u32 2, %s22
        %p290 = scmp.lt.s32.totalorder %s21, 1
        %s291 = scalar_select %p290, %s21, 1
        %p292 = scmp.lt.s32.totalorder %s289, 1
        %s293 = scalar_select %p292, %s289, 1
        %s294 = smul.addr %s291, 32
        %s295 = sadd.s32 %s293, %s294
        %s296 = smul.addr %s295, 8
        %s297 = scalar_lea.vmem %s1, %s296
        %s298 = smul.u32 2, %s22
      $region48: #{sepconvgru_forward.3} parent=39 // pred_fallthru
        _
    $region40: #{sepconvgru_forward.3} parent=5 // pred_fallthru
      _
    %p299 = scmp.le.s32.totalorder 1, %s14
    %p300 = scmp.lt.s32.totalorder %s14, 3
    %p301 = pnand %p299, %p300
    %p302 = pneg %p301
    // Predicated region
    $region49: #{sepconvgru_forward.3} parent=5 // pred_check
      _
    $region50: #{sepconvgru_forward.3} parent=5 // pred_check_branch
      %304 = sbr.rel (%p301) target = $region52
    $region51: #{sepconvgru_forward.3} parent=5 // pred_region
      %s305 = ssub.s32 %s14, 1
      %s306 = smul.u32 2, %s24
      %p307 = scmp.lt.s32.totalorder %s23, 1
      %s308 = scalar_select %p307, %s23, 1
      %p309 = scmp.lt.s32.totalorder %s306, 1
      %s310 = scalar_select %p309, %s306, 1
      %s311 = smul.addr %s308, 32
      %s312 = sadd.s32 %s310, %s311
      %s313 = smul.addr %s312, 8
      %s314 = scalar_lea.vmem %s0, %s313
      %p315 = pneg %p54
      %p316 = pneg %p51
      %s317 = smul.u32 2, %s24
      %p318 = scmp.lt.s32.totalorder %s23, 1
      %s319 = scalar_select %p318, %s23, 1
      %p320 = scmp.lt.s32.totalorder %s317, 1
      %s321 = scalar_select %p320, %s317, 1
      %s322 = smul.addr %s319, 32
      %s323 = sadd.s32 %s321, %s322
      %s324 = smul.addr %s323, 8
      %s325 = scalar_lea.vmem %s1, %s324
      %p326 = pneg %p82
      %p327 = pneg %p79
      %p328 = pneg %p103
      %p329 = pneg %p100
      %p330 = pneg %p124
      %p331 = pneg %p121
      %p332 = pneg %p145
      %p333 = pneg %p142
      %p334 = pneg %p166
      %p335 = pneg %p163
      %p336 = pneg %p187
      %p337 = pneg %p184
      %p338 = pneg %p208
      %p339 = pneg %p205
      %p340 = pneg %p236
      %p341 = pneg %p233
      %s342 = smul.u32 2, %s24
      %p343 = scmp.lt.s32.totalorder %s23, 1
      %s344 = scalar_select %p343, %s23, 1
      %p345 = scmp.lt.s32.totalorder %s342, 1
      %s346 = scalar_select %p345, %s342, 1
      %s347 = smul.addr %s344, 32
      %s348 = sadd.s32 %s346, %s347
      %s349 = smul.addr %s348, 8
      %s350 = scalar_lea.vmem %s8, %s349
      %s351 = smul.u32 2, %s24
      %p352 = scmp.lt.s32.totalorder %s23, 1
      %s353 = scalar_select %p352, %s23, 1
      %p354 = scmp.lt.s32.totalorder %s351, 1
      %s355 = scalar_select %p354, %s351, 1
      %s356 = smul.addr %s353, 32
      %s357 = sadd.s32 %s355, %s356
      %s358 = smul.addr %s357, 8
      %s359 = scalar_lea.vmem %s0, %s358
      %s360 = smul.u32 2, %s24
      %s361 = smul.u32 2, %s24
      %p362 = scmp.lt.s32.totalorder %s23, 1
      %s363 = scalar_select %p362, %s23, 1
      %p364 = scmp.lt.s32.totalorder %s361, 1
      %s365 = scalar_select %p364, %s361, 1
      %s366 = smul.addr %s363, 32
      %s367 = sadd.s32 %s365, %s366
      %s368 = smul.addr %s367, 8
      %s369 = scalar_lea.vmem %s1, %s368
      %s370 = smul.u32 2, %s24
      %s371 = smul.u32 2, %s24
      %p372 = scmp.lt.s32.totalorder %s23, 1
      %s373 = scalar_select %p372, %s23, 1
      %p374 = scmp.lt.s32.totalorder %s371, 1
      %s375 = scalar_select %p374, %s371, 1
      %s376 = smul.addr %s373, 32
      %s377 = sadd.s32 %s375, %s376
      %s378 = smul.addr %s377, 8
      %s379 = scalar_lea.vmem %s8, %s378
      %s380 = smul.u32 2, %s24
      %v382 = vld [vmem:[%s359] sm:$0xff]
      %v383 = vld [vmem:[%s359 + $0x8] sm:$0xff]
      %v384 = vld [vmem:[%s359 + $0x10] sm:$0xff]
      %v385 = vld [vmem:[%s359 + $0x18] sm:$0xff]
      %v386 = vld [vmem:[%s359 + $0x20] sm:$0xff]
      %v387 = vld [vmem:[%s359 + $0x28] sm:$0xff]
      %v388 = vld [vmem:[%s359 + $0x30] sm:$0xff]
      %v389 = vld [vmem:[%s359 + $0x38] sm:$0xff]
      %v390 = vld [vmem:[%s359 + $0x40] sm:$0xff]
      %v391 = vld [vmem:[%s359 + $0x48] sm:$0xff]
      %v392 = vld [vmem:[%s359 + $0x50] sm:$0xff]
      %v393 = vld [vmem:[%s359 + $0x58] sm:$0xff]
      %v394 = vld [vmem:[%s359 + $0x60] sm:$0xff]
      %v395 = vld [vmem:[%s359 + $0x68] sm:$0xff]
      %v396 = vld [vmem:[%s359 + $0x70] sm:$0xff]
      %v397 = vld [vmem:[%s359 + $0x78] sm:$0xff]
      %v398 = vld [vmem:[%s359 + $0x80] sm:$0xff]
      %v399 = vld [vmem:[%s359 + $0x88] sm:$0xff]
      %v400 = vld [vmem:[%s359 + $0x90] sm:$0xff]
      %v401 = vld [vmem:[%s359 + $0x98] sm:$0xff]
      %v402 = vld [vmem:[%s359 + $0xa0] sm:$0xff]
      %v403 = vld [vmem:[%s359 + $0xa8] sm:$0xff]
      %v404 = vld [vmem:[%s359 + $0xb0] sm:$0xff]
      %v405 = vld [vmem:[%s359 + $0xb8] sm:$0xff]
      %v406 = vld [vmem:[%s359 + $0xc0] sm:$0xff]
      %v407 = vld [vmem:[%s359 + $0xc8] sm:$0xff]
      %v408 = vld [vmem:[%s359 + $0xd0] sm:$0xff]
      %v409 = vld [vmem:[%s359 + $0xd8] sm:$0xff]
      %v410 = vld [vmem:[%s359 + $0xe0] sm:$0xff]
      %v411 = vld [vmem:[%s359 + $0xe8] sm:$0xff]
      %v412 = vld [vmem:[%s359 + $0xf0] sm:$0xff]
      %v413 = vld [vmem:[%s359 + $0xf8] sm:$0xff]
      %v414 = vpack.c.bf16 %v383, %v382
      %v415 = vpack.c.bf16 %v385, %v384
      %v416 = vpack.c.bf16 %v387, %v386
      %v417 = vpack.c.bf16 %v389, %v388
      %v418 = vpack.c.bf16 %v391, %v390
      %v419 = vpack.c.bf16 %v393, %v392
      %v420 = vpack.c.bf16 %v395, %v394
      %v421 = vpack.c.bf16 %v397, %v396
      %v422 = vpack.c.bf16 %v399, %v398
      %v423 = vpack.c.bf16 %v401, %v400
      %v424 = vpack.c.bf16 %v403, %v402
      %v425 = vpack.c.bf16 %v405, %v404
      %v426 = vpack.c.bf16 %v407, %v406
      %v427 = vpack.c.bf16 %v409, %v408
      %v428 = vpack.c.bf16 %v411, %v410
      %v429 = vpack.c.bf16 %v413, %v412
      %v430 = vld [vmem:[%s369] sm:$0xff]
      %v431 = vld [vmem:[%s369 + $0x8] sm:$0xff]
      %v432 = vld [vmem:[%s369 + $0x10] sm:$0xff]
      %v433 = vld [vmem:[%s369 + $0x18] sm:$0xff]
      %v434 = vld [vmem:[%s369 + $0x20] sm:$0xff]
      %v435 = vld [vmem:[%s369 + $0x28] sm:$0xff]
      %v436 = vld [vmem:[%s369 + $0x30] sm:$0xff]
      %v437 = vld [vmem:[%s369 + $0x38] sm:$0xff]
      %v438 = vld [vmem:[%s369 + $0x40] sm:$0xff]
      %v439 = vld [vmem:[%s369 + $0x48] sm:$0xff]
      %v440 = vld [vmem:[%s369 + $0x50] sm:$0xff]
      %v441 = vld [vmem:[%s369 + $0x58] sm:$0xff]
      %v442 = vld [vmem:[%s369 + $0x60] sm:$0xff]
      %v443 = vld [vmem:[%s369 + $0x68] sm:$0xff]
      %v444 = vld [vmem:[%s369 + $0x70] sm:$0xff]
      %v445 = vld [vmem:[%s369 + $0x78] sm:$0xff]
      %v446 = vld [vmem:[%s369 + $0x80] sm:$0xff]
      %v447 = vld [vmem:[%s369 + $0x88] sm:$0xff]
      %v448 = vld [vmem:[%s369 + $0x90] sm:$0xff]
      %v449 = vld [vmem:[%s369 + $0x98] sm:$0xff]
      %v450 = vld [vmem:[%s369 + $0xa0] sm:$0xff]
      %v451 = vld [vmem:[%s369 + $0xa8] sm:$0xff]
      %v452 = vld [vmem:[%s369 + $0xb0] sm:$0xff]
      %v453 = vld [vmem:[%s369 + $0xb8] sm:$0xff]
      %v454 = vld [vmem:[%s369 + $0xc0] sm:$0xff]
      %v455 = vld [vmem:[%s369 + $0xc8] sm:$0xff]
      %v456 = vld [vmem:[%s369 + $0xd0] sm:$0xff]
      %v457 = vld [vmem:[%s369 + $0xd8] sm:$0xff]
      %v458 = vld [vmem:[%s369 + $0xe0] sm:$0xff]
      %v459 = vld [vmem:[%s369 + $0xe8] sm:$0xff]
      %v460 = vld [vmem:[%s369 + $0xf0] sm:$0xff]
      %v461 = vld [vmem:[%s369 + $0xf8] sm:$0xff]
      %v462 = vpack.c.bf16 %v431, %v430
      %v463 = vpack.c.bf16 %v433, %v432
      %v464 = vpack.c.bf16 %v435, %v434
      %v465 = vpack.c.bf16 %v437, %v436
      %v466 = vpack.c.bf16 %v439, %v438
      %v467 = vpack.c.bf16 %v441, %v440
      %v468 = vpack.c.bf16 %v443, %v442
      %v469 = vpack.c.bf16 %v445, %v444
      %v470 = vpack.c.bf16 %v447, %v446
      %v471 = vpack.c.bf16 %v449, %v448
      %v472 = vpack.c.bf16 %v451, %v450
      %v473 = vpack.c.bf16 %v453, %v452
      %v474 = vpack.c.bf16 %v455, %v454
      %v475 = vpack.c.bf16 %v457, %v456
      %v476 = vpack.c.bf16 %v459, %v458
      %v477 = vpack.c.bf16 %v461, %v460
      %v478 = vld [vmem:[%s2] sm:$0xff]
      %v479 = vld [vmem:[%s2 + $0x8] sm:$0xff]
      %v480 = vld [vmem:[%s2 + $0x10] sm:$0xff]
      %v481 = vld [vmem:[%s2 + $0x18] sm:$0xff]
      %v482 = vld [vmem:[%s2 + $0x20] sm:$0xff]
      %v483 = vld [vmem:[%s2 + $0x28] sm:$0xff]
      %v484 = vld [vmem:[%s2 + $0x30] sm:$0xff]
      %v485 = vld [vmem:[%s2 + $0x38] sm:$0xff]
      %v486 = vld [vmem:[%s2 + $0x40] sm:$0xff]
      %v487 = vld [vmem:[%s2 + $0x48] sm:$0xff]
      %v488 = vld [vmem:[%s2 + $0x50] sm:$0xff]
      %v489 = vld [vmem:[%s2 + $0x58] sm:$0xff]
      %v490 = vld [vmem:[%s2 + $0x60] sm:$0xff]
      %v491 = vld [vmem:[%s2 + $0x68] sm:$0xff]
      %v492 = vld [vmem:[%s2 + $0x70] sm:$0xff]
      %v493 = vld [vmem:[%s2 + $0x78] sm:$0xff]
      %v494 = vld [vmem:[%s3] sm:$0xff]
      %v495 = vld [vmem:[%s3 + $0x8] sm:$0xff]
      %v496 = vld [vmem:[%s3 + $0x10] sm:$0xff]
      %v497 = vld [vmem:[%s3 + $0x18] sm:$0xff]
      %v498 = vld [vmem:[%s3 + $0x20] sm:$0xff]
      %v499 = vld [vmem:[%s3 + $0x28] sm:$0xff]
      %v500 = vld [vmem:[%s3 + $0x30] sm:$0xff]
      %v501 = vld [vmem:[%s3 + $0x38] sm:$0xff]
      %v502 = vld [vmem:[%s3 + $0x40] sm:$0xff]
      %v503 = vld [vmem:[%s3 + $0x48] sm:$0xff]
      %v504 = vld [vmem:[%s3 + $0x50] sm:$0xff]
      %v505 = vld [vmem:[%s3 + $0x58] sm:$0xff]
      %v506 = vld [vmem:[%s3 + $0x60] sm:$0xff]
      %v507 = vld [vmem:[%s3 + $0x68] sm:$0xff]
      %v508 = vld [vmem:[%s3 + $0x70] sm:$0xff]
      %v509 = vld [vmem:[%s3 + $0x78] sm:$0xff]
      %v526 = vunpack.c.l.b16 %v494
      %v527 = vunpack.c.h.b16 %v494
      %v528 = vunpack.c.l.b16 %v495
      %v529 = vunpack.c.h.b16 %v495
      %v530 = vunpack.c.l.b16 %v496
      %v531 = vunpack.c.h.b16 %v496
      %v532 = vunpack.c.l.b16 %v497
      %v533 = vunpack.c.h.b16 %v497
      %v534 = vunpack.c.l.b16 %v498
      %v535 = vunpack.c.h.b16 %v498
      %v536 = vunpack.c.l.b16 %v499
      %v537 = vunpack.c.h.b16 %v499
      %v538 = vunpack.c.l.b16 %v500
      %v539 = vunpack.c.h.b16 %v500
      %v540 = vunpack.c.l.b16 %v501
      %v541 = vunpack.c.h.b16 %v501
      %v542 = vunpack.c.l.b16 %v502
      %v543 = vunpack.c.h.b16 %v502
      %v544 = vunpack.c.l.b16 %v503
      %v545 = vunpack.c.h.b16 %v503
      %v546 = vunpack.c.l.b16 %v504
      %v547 = vunpack.c.h.b16 %v504
      %v548 = vunpack.c.l.b16 %v505
      %v549 = vunpack.c.h.b16 %v505
      %v550 = vunpack.c.l.b16 %v506
      %v551 = vunpack.c.h.b16 %v506
      %v552 = vunpack.c.l.b16 %v507
      %v553 = vunpack.c.h.b16 %v507
      %v554 = vunpack.c.l.b16 %v508
      %v555 = vunpack.c.h.b16 %v508
      %v556 = vunpack.c.l.b16 %v509
      %v557 = vunpack.c.h.b16 %v509
      %v558 = vpack.c.b16 %v528, %v526
      %v559 = vpack.c.b16 %v529, %v527
      %v560 = vpack.c.b16 %v532, %v530
      %v561 = vpack.c.b16 %v533, %v531
      %v562 = vpack.c.b16 %v536, %v534
      %v563 = vpack.c.b16 %v537, %v535
      %v564 = vpack.c.b16 %v540, %v538
      %v565 = vpack.c.b16 %v541, %v539
      %v566 = vpack.c.b16 %v544, %v542
      %v567 = vpack.c.b16 %v545, %v543
      %v568 = vpack.c.b16 %v548, %v546
      %v569 = vpack.c.b16 %v549, %v547
      %v570 = vpack.c.b16 %v552, %v550
      %v571 = vpack.c.b16 %v553, %v551
      %v572 = vpack.c.b16 %v556, %v554
      %v573 = vpack.c.b16 %v557, %v555
      %590 = vmatprep.subr.bf16.mxu0 %v559
      %591 = vmatpush1.bf16.msra.mxu0 %v558
      %592 = vmatprep.subr.bf16.mxu0 %v561
      %593 = vmatpush1.bf16.msra.mxu0 %v560
      %594 = vmatprep.subr.bf16.mxu0 %v563
      %595 = vmatpush1.bf16.msra.mxu0 %v562
      %596 = vmatprep.subr.bf16.mxu0 %v565
      %597 = vmatpush1.bf16.msra.mxu0 %v564
      %598 = vmatprep.subr.bf16.mxu0 %v567
      %599 = vmatpush1.bf16.msra.mxu0 %v566
      %600 = vmatprep.subr.bf16.mxu0 %v569
      %601 = vmatpush1.bf16.msra.mxu0 %v568
      %602 = vmatprep.subr.bf16.mxu0 %v571
      %603 = vmatpush1.bf16.msra.mxu0 %v570
      %604 = vmatprep.subr.bf16.mxu0 %v573
      %605 = vmatpush1.bf16.msra.mxu0 %v572
      %606 = vmatprep.subr.bf16.mxu0 0
      %607 = vmatpush1.bf16.msra.mxu0 0
      %608 = vmatprep.subr.bf16.mxu0 0
      %609 = vmatpush1.bf16.msra.mxu0 0
      %610 = vmatprep.subr.bf16.mxu0 0
      %611 = vmatpush1.bf16.msra.mxu0 0
      %612 = vmatprep.subr.bf16.mxu0 0
      %613 = vmatpush1.bf16.msra.mxu0 0
      %614 = vmatprep.subr.bf16.mxu0 0
      %615 = vmatpush1.bf16.msra.mxu0 0
      %616 = vmatprep.subr.bf16.mxu0 0
      %617 = vmatpush1.bf16.msra.mxu0 0
      %618 = vmatprep.subr.bf16.mxu0 0
      %619 = vmatpush1.bf16.msra.mxu0 0
      %620 = vmatprep.subr.bf16.mxu0 0
      %621 = vmatpush1.bf16.msra.mxu0 0
      %622 = vmatprep.mubr.bf16.mxu0 0
      %623 = vmatmul.mubr.bf16.gmra.mrb[0].mxu0 %v462
      %v624 = vpop.f32.mrb[0].mxu0
      %v625 = vadd.f32 0.0, %v624
      %v626 = vpop.f32.mrb[0].mxu0
      %v627 = vadd.f32 0.0, %v626
      %v628 = vpop.f32.mrb[0].mxu0
      %v629 = vadd.f32 0.0, %v628
      %v630 = vpop.f32.mrb[0].mxu0
      %v631 = vadd.f32 0.0, %v630
      %632 = vmatprep.mubr.bf16.mxu0 0
      %633 = vmatmul.mubr.bf16.gmra.mrb[0].mxu0 %v463
      %v634 = vpop.f32.mrb[0].mxu0
      %v635 = vadd.f32 0.0, %v634
      %v636 = vpop.f32.mrb[0].mxu0
      %v637 = vadd.f32 0.0, %v636
      %v638 = vpop.f32.mrb[0].mxu0
      %v639 = vadd.f32 0.0, %v638
      %v640 = vpop.f32.mrb[0].mxu0
      %v641 = vadd.f32 0.0, %v640
      %642 = vmatprep.mubr.bf16.mxu0 0
      %643 = vmatmul.mubr.bf16.gmra.mrb[0].mxu0 %v464
      %v644 = vpop.f32.mrb[0].mxu0
      %v645 = vadd.f32 0.0, %v644
      %v646 = vpop.f32.mrb[0].mxu0
      %v647 = vadd.f32 0.0, %v646
      %v648 = vpop.f32.mrb[0].mxu0
      %v649 = vadd.f32 0.0, %v648
      %v650 = vpop.f32.mrb[0].mxu0
      %v651 = vadd.f32 0.0, %v650
      %652 = vmatprep.mubr.bf16.mxu0 0
      %653 = vmatmul.mubr.bf16.gmra.mrb[0].mxu0 %v465
      %v654 = vpop.f32.mrb[0].mxu0
      %v655 = vadd.f32 0.0, %v654
      %v656 = vpop.f32.mrb[0].mxu0
      %v657 = vadd.f32 0.0, %v656
      %v658 = vpop.f32.mrb[0].mxu0
      %v659 = vadd.f32 0.0, %v658
      %v660 = vpop.f32.mrb[0].mxu0
      %v661 = vadd.f32 0.0, %v660
      %662 = vmatprep.mubr.bf16.mxu0 0
      %663 = vmatmul.mubr.bf16.gmra.mrb[0].mxu0 %v466
      %v664 = vpop.f32.mrb[0].mxu0
      %v665 = vadd.f32 0.0, %v664
      %v666 = vpop.f32.mrb[0].mxu0
      %v667 = vadd.f32 0.0, %v666
      %v668 = vpop.f32.mrb[0].mxu0
      %v669 = vadd.f32 0.0, %v668
      %v670 = vpop.f32.mrb[0].mxu0
      %v671 = vadd.f32 0.0, %v670
      %672 = vmatprep.mubr.bf16.mxu0 0
      %673 = vmatmul.mubr.bf16.gmra.mrb[0].mxu0 %v467
      %v674 = vpop.f32.mrb[0].mxu0
      %v675 = vadd.f32 0.0, %v674
      %v676 = vpop.f32.mrb[0].mxu0
      %v677 = vadd.f32 0.0, %v676
      %v678 = vpop.f32.mrb[0].mxu0
      %v679 = vadd.f32 0.0, %v678
      %v680 = vpop.f32.mrb[0].mxu0
      %v681 = vadd.f32 0.0, %v680
      %682 = vmatprep.mubr.bf16.mxu0 0
      %683 = vmatmul.mubr.bf16.gmra.mrb[0].mxu0 %v468
      %v684 = vpop.f32.mrb[0].mxu0
      %v685 = vadd.f32 0.0, %v684
      %v686 = vpop.f32.mrb[0].mxu0
      %v687 = vadd.f32 0.0, %v686
      %v688 = vpop.f32.mrb[0].mxu0
      %v689 = vadd.f32 0.0, %v688
      %v690 = vpop.f32.mrb[0].mxu0
      %v691 = vadd.f32 0.0, %v690
      %692 = vmatprep.mubr.bf16.mxu0 0
      %693 = vmatmul.mubr.bf16.gmra.mrb[0].mxu0 %v469
      %v694 = vpop.f32.mrb[0].mxu0
      %v695 = vadd.f32 0.0, %v694
      %v696 = vpop.f32.mrb[0].mxu0
      %v697 = vadd.f32 0.0, %v696
      %v698 = vpop.f32.mrb[0].mxu0
      %v699 = vadd.f32 0.0, %v698
      %v700 = vpop.f32.mrb[0].mxu0
      %v701 = vadd.f32 0.0, %v700
      %702 = vmatprep.mubr.bf16.mxu0 0
      %703 = vmatmul.mubr.bf16.gmra.mrb[0].mxu0 %v470
      %v704 = vpop.f32.mrb[0].mxu0
      %v705 = vadd.f32 0.0, %v704
      %v706 = vpop.f32.mrb[0].mxu0
      %v707 = vadd.f32 0.0, %v706
      %v708 = vpop.f32.mrb[0].mxu0
      %v709 = vadd.f32 0.0, %v708
      %v710 = vpop.f32.mrb[0].mxu0
      %v711 = vadd.f32 0.0, %v710
      %712 = vmatprep.mubr.bf16.mxu0 0
      %713 = vmatmul.mubr.bf16.gmra.mrb[0].mxu0 %v471
      %v714 = vpop.f32.mrb[0].mxu0
      %v715 = vadd.f32 0.0, %v714
      %v716 = vpop.f32.mrb[0].mxu0
      %v717 = vadd.f32 0.0, %v716
      %v718 = vpop.f32.mrb[0].mxu0
      %v719 = vadd.f32 0.0, %v718
      %v720 = vpop.f32.mrb[0].mxu0
      %v721 = vadd.f32 0.0, %v720
      %722 = vmatprep.mubr.bf16.mxu0 0
      %723 = vmatmul.mubr.bf16.gmra.mrb[0].mxu0 %v472
      %v724 = vpop.f32.mrb[0].mxu0
      %v725 = vadd.f32 0.0, %v724
      %v726 = vpop.f32.mrb[0].mxu0
      %v727 = vadd.f32 0.0, %v726
      %v728 = vpop.f32.mrb[0].mxu0
      %v729 = vadd.f32 0.0, %v728
      %v730 = vpop.f32.mrb[0].mxu0
      %v731 = vadd.f32 0.0, %v730
      %732 = vmatprep.mubr.bf16.mxu0 0
      %733 = vmatmul.mubr.bf16.gmra.mrb[0].mxu0 %v473
      %v734 = vpop.f32.mrb[0].mxu0
      %v735 = vadd.f32 0.0, %v734
      %v736 = vpop.f32.mrb[0].mxu0
      %v737 = vadd.f32 0.0, %v736
      %v738 = vpop.f32.mrb[0].mxu0
      %v739 = vadd.f32 0.0, %v738
      %v740 = vpop.f32.mrb[0].mxu0
      %v741 = vadd.f32 0.0, %v740
      %742 = vmatprep.mubr.bf16.mxu0 0
      %743 = vmatmul.mubr.bf16.gmra.mrb[0].mxu0 %v474
      %v744 = vpop.f32.mrb[0].mxu0
      %v745 = vadd.f32 0.0, %v744
      %v746 = vpop.f32.mrb[0].mxu0
      %v747 = vadd.f32 0.0, %v746
      %v748 = vpop.f32.mrb[0].mxu0
      %v749 = vadd.f32 0.0, %v748
      %v750 = vpop.f32.mrb[0].mxu0
      %v751 = vadd.f32 0.0, %v750
      %752 = vmatprep.mubr.bf16.mxu0 0
      %753 = vmatmul.mubr.bf16.gmra.mrb[0].mxu0 %v475
      %v754 = vpop.f32.mrb[0].mxu0
      %v755 = vadd.f32 0.0, %v754
      %v756 = vpop.f32.mrb[0].mxu0
      %v757 = vadd.f32 0.0, %v756
      %v758 = vpop.f32.mrb[0].mxu0
      %v759 = vadd.f32 0.0, %v758
      %v760 = vpop.f32.mrb[0].mxu0
      %v761 = vadd.f32 0.0, %v760
      %762 = vmatprep.mubr.bf16.mxu0 0
      %763 = vmatmul.mubr.bf16.gmra.mrb[0].mxu0 %v476
      %v764 = vpop.f32.mrb[0].mxu0
      %v765 = vadd.f32 0.0, %v764
      %v766 = vpop.f32.mrb[0].mxu0
      %v767 = vadd.f32 0.0, %v766
      %v768 = vpop.f32.mrb[0].mxu0
      %v769 = vadd.f32 0.0, %v768
      %v770 = vpop.f32.mrb[0].mxu0
      %v771 = vadd.f32 0.0, %v770
      %772 = vmatprep.mubr.bf16.mxu0 0
      %773 = vmatmul.mubr.bf16.gmra.mrb[0].mxu0 %v477
      %v774 = vpop.f32.mrb[0].mxu0
      %v775 = vpop.f32.mrb[0].mxu0
      %v776 = vpop.f32.mrb[0].mxu0
      %v777 = vpop.f32.mrb[0].mxu0
      %778 = vdwg.mxu0
      %v795 = vunpack.c.l.b16 %v478
      %v796 = vunpack.c.h.b16 %v478
      %v797 = vunpack.c.l.b16 %v479
      %v798 = vunpack.c.h.b16 %v479
      %v799 = vunpack.c.l.b16 %v480
      %v800 = vunpack.c.h.b16 %v480
      %v801 = vunpack.c.l.b16 %v481
      %v802 = vunpack.c.h.b16 %v481
      %v803 = vunpack.c.l.b16 %v482
      %v804 = vunpack.c.h.b16 %v482
      %v805 = vunpack.c.l.b16 %v483
      %v806 = vunpack.c.h.b16 %v483
      %v807 = vunpack.c.l.b16 %v484
      %v808 = vunpack.c.h.b16 %v484
      %v809 = vunpack.c.l.b16 %v485
      %v810 = vunpack.c.h.b16 %v485
      %v811 = vunpack.c.l.b16 %v486
      %v812 = vunpack.c.h.b16 %v486
      %v813 = vunpack.c.l.b16 %v487
      %v814 = vunpack.c.h.b16 %v487
      %v815 = vunpack.c.l.b16 %v488
      %v816 = vunpack.c.h.b16 %v488
      %v817 = vunpack.c.l.b16 %v489
      %v818 = vunpack.c.h.b16 %v489
      %v819 = vunpack.c.l.b16 %v490
      %v820 = vunpack.c.h.b16 %v490
      %v821 = vunpack.c.l.b16 %v491
      %v822 = vunpack.c.h.b16 %v491
      %v823 = vunpack.c.l.b16 %v492
      %v824 = vunpack.c.h.b16 %v492
      %v825 = vunpack.c.l.b16 %v493
      %v826 = vunpack.c.h.b16 %v493
      %v827 = vpack.c.b16 %v797, %v795
      %v828 = vpack.c.b16 %v798, %v796
      %v829 = vpack.c.b16 %v801, %v799
      %v830 = vpack.c.b16 %v802, %v800
      %v831 = vpack.c.b16 %v805, %v803
      %v832 = vpack.c.b16 %v806, %v804
      %v833 = vpack.c.b16 %v809, %v807
      %v834 = vpack.c.b16 %v810, %v808
      %v835 = vpack.c.b16 %v813, %v811
      %v836 = vpack.c.b16 %v814, %v812
      %v837 = vpack.c.b16 %v817, %v815
      %v838 = vpack.c.b16 %v818, %v816
      %v839 = vpack.c.b16 %v821, %v819
      %v840 = vpack.c.b16 %v822, %v820
      %v841 = vpack.c.b16 %v825, %v823
      %v842 = vpack.c.b16 %v826, %v824
      %859 = vmatprep.subr.bf16.mxu0 %v828
      %860 = vmatpush1.bf16.msra.mxu0 %v827
      %861 = vmatprep.subr.bf16.mxu0 %v830
      %862 = vmatpush1.bf16.msra.mxu0 %v829
      %863 = vmatprep.subr.bf16.mxu0 %v832
      %864 = vmatpush1.bf16.msra.mxu0 %v831
      %865 = vmatprep.subr.bf16.mxu0 %v834
      %866 = vmatpush1.bf16.msra.mxu0 %v833
      %867 = vmatprep.subr.bf16.mxu0 %v836
      %868 = vmatpush1.bf16.msra.mxu0 %v835
      %869 = vmatprep.subr.bf16.mxu0 %v838
      %870 = vmatpush1.bf16.msra.mxu0 %v837
      %871 = vmatprep.subr.bf16.mxu0 %v840
      %872 = vmatpush1.bf16.msra.mxu0 %v839
      %873 = vmatprep.subr.bf16.mxu0 %v842
      %874 = vmatpush1.bf16.msra.mxu0 %v841
      %875 = vmatprep.subr.bf16.mxu0 0
      %876 = vmatpush1.bf16.msra.mxu0 0
      %877 = vmatprep.subr.bf16.mxu0 0
      %878 = vmatpush1.bf16.msra.mxu0 0
      %879 = vmatprep.subr.bf16.mxu0 0
      %880 = vmatpush1.bf16.msra.mxu0 0
      %881 = vmatprep.subr.bf16.mxu0 0
      %882 = vmatpush1.bf16.msra.mxu0 0
      %883 = vmatprep.subr.bf16.mxu0 0
      %884 = vmatpush1.bf16.msra.mxu0 0
      %885 = vmatprep.subr.bf16.mxu0 0
      %886 = vmatpush1.bf16.msra.mxu0 0
      %887 = vmatprep.subr.bf16.mxu0 0
      %888 = vmatpush1.bf16.msra.mxu0 0
      %889 = vmatprep.subr.bf16.mxu0 0
      %890 = vmatpush1.bf16.msra.mxu0 0
      %891 = vmatprep.mubr.bf16.mxu0 0
      %892 = vmatmul.mubr.bf16.gmra.mrb[0].mxu0 %v414
      %v893 = vpop.f32.mrb[0].mxu0
      %v894 = vadd.f32 %v625, %v893
      %v895 = vpop.f32.mrb[0].mxu0
      %v896 = vadd.f32 %v627, %v895
      %v897 = vpop.f32.mrb[0].mxu0
      %v898 = vadd.f32 %v629, %v897
      %v899 = vpop.f32.mrb[0].mxu0
      %v900 = vadd.f32 %v631, %v899
      %901 = vmatprep.mubr.bf16.mxu0 0
      %902 = vmatmul.mubr.bf16.gmra.mrb[0].mxu0 %v415
      %v903 = vpop.f32.mrb[0].mxu0
      %v904 = vadd.f32 %v635, %v903
      %v905 = vpop.f32.mrb[0].mxu0
      %v906 = vadd.f32 %v637, %v905
      %v907 = vpop.f32.mrb[0].mxu0
      %v908 = vadd.f32 %v639, %v907
      %v909 = vpop.f32.mrb[0].mxu0
      %v910 = vadd.f32 %v641, %v909
      %911 = vmatprep.mubr.bf16.mxu0 0
      %912 = vmatmul.mubr.bf16.gmra.mrb[0].mxu0 %v416
      %v913 = vpop.f32.mrb[0].mxu0
      %v914 = vadd.f32 %v645, %v913
      %v915 = vpop.f32.mrb[0].mxu0
      %v916 = vadd.f32 %v647, %v915
      %v917 = vpop.f32.mrb[0].mxu0
      %v918 = vadd.f32 %v649, %v917
      %v919 = vpop.f32.mrb[0].mxu0
      %v920 = vadd.f32 %v651, %v919
      %921 = vmatprep.mubr.bf16.mxu0 0
      %922 = vmatmul.mubr.bf16.gmra.mrb[0].mxu0 %v417
      %v923 = vpop.f32.mrb[0].mxu0
      %v924 = vadd.f32 %v655, %v923
      %v925 = vpop.f32.mrb[0].mxu0
      %v926 = vadd.f32 %v657, %v925
      %v927 = vpop.f32.mrb[0].mxu0
      %v928 = vadd.f32 %v659, %v927
      %v929 = vpop.f32.mrb[0].mxu0
      %v930 = vadd.f32 %v661, %v929
      %931 = vmatprep.mubr.bf16.mxu0 0
      %932 = vmatmul.mubr.bf16.gmra.mrb[0].mxu0 %v418
      %v933 = vpop.f32.mrb[0].mxu0
      %v934 = vadd.f32 %v665, %v933
      %v935 = vpop.f32.mrb[0].mxu0
      %v936 = vadd.f32 %v667, %v935
      %v937 = vpop.f32.mrb[0].mxu0
      %v938 = vadd.f32 %v669, %v937
      %v939 = vpop.f32.mrb[0].mxu0
      %v940 = vadd.f32 %v671, %v939
      %941 = vmatprep.mubr.bf16.mxu0 0
      %942 = vmatmul.mubr.bf16.gmra.mrb[0].mxu0 %v419
      %v943 = vpop.f32.mrb[0].mxu0
      %v944 = vadd.f32 %v675, %v943
      %v945 = vpop.f32.mrb[0].mxu0
      %v946 = vadd.f32 %v677, %v945
      %v947 = vpop.f32.mrb[0].mxu0
      %v948 = vadd.f32 %v679, %v947
      %v949 = vpop.f32.mrb[0].mxu0
      %v950 = vadd.f32 %v681, %v949
      %951 = vmatprep.mubr.bf16.mxu0 0
      %952 = vmatmul.mubr.bf16.gmra.mrb[0].mxu0 %v420
      %v953 = vpop.f32.mrb[0].mxu0
      %v954 = vadd.f32 %v685, %v953
      %v955 = vpop.f32.mrb[0].mxu0
      %v956 = vadd.f32 %v687, %v955
      %v957 = vpop.f32.mrb[0].mxu0
      %v958 = vadd.f32 %v689, %v957
      %v959 = vpop.f32.mrb[0].mxu0
      %v960 = vadd.f32 %v691, %v959
      %961 = vmatprep.mubr.bf16.mxu0 0
      %962 = vmatmul.mubr.bf16.gmra.mrb[0].mxu0 %v421
      %v963 = vpop.f32.mrb[0].mxu0
      %v964 = vadd.f32 %v695, %v963
      %v965 = vpop.f32.mrb[0].mxu0
      %v966 = vadd.f32 %v697, %v965
      %v967 = vpop.f32.mrb[0].mxu0
      %v968 = vadd.f32 %v699, %v967
      %v969 = vpop.f32.mrb[0].mxu0
      %v970 = vadd.f32 %v701, %v969
      %971 = vmatprep.mubr.bf16.mxu0 0
      %972 = vmatmul.mubr.bf16.gmra.mrb[0].mxu0 %v422
      %v973 = vpop.f32.mrb[0].mxu0
      %v974 = vadd.f32 %v705, %v973
      %v975 = vpop.f32.mrb[0].mxu0
      %v976 = vadd.f32 %v707, %v975
      %v977 = vpop.f32.mrb[0].mxu0
      %v978 = vadd.f32 %v709, %v977
      %v979 = vpop.f32.mrb[0].mxu0
      %v980 = vadd.f32 %v711, %v979
      %981 = vmatprep.mubr.bf16.mxu0 0
      %982 = vmatmul.mubr.bf16.gmra.mrb[0].mxu0 %v423
      %v983 = vpop.f32.mrb[0].mxu0
      %v984 = vadd.f32 %v715, %v983
      %v985 = vpop.f32.mrb[0].mxu0
      %v986 = vadd.f32 %v717, %v985
      %v987 = vpop.f32.mrb[0].mxu0
      %v988 = vadd.f32 %v719, %v987
      %v989 = vpop.f32.mrb[0].mxu0
      %v990 = vadd.f32 %v721, %v989
      %991 = vmatprep.mubr.bf16.mxu0 0
      %992 = vmatmul.mubr.bf16.gmra.mrb[0].mxu0 %v424
      %v993 = vpop.f32.mrb[0].mxu0
      %v994 = vadd.f32 %v725, %v993
      %v995 = vpop.f32.mrb[0].mxu0
      %v996 = vadd.f32 %v727, %v995
      %v997 = vpop.f32.mrb[0].mxu0
      %v998 = vadd.f32 %v729, %v997
      %v999 = vpop.f32.mrb[0].mxu0
      %v1000 = vadd.f32 %v731, %v999
      %1001 = vmatprep.mubr.bf16.mxu0 0
      %1002 = vmatmul.mubr.bf16.gmra.mrb[0].mxu0 %v425
      %v1003 = vpop.f32.mrb[0].mxu0
      %v1004 = vadd.f32 %v735, %v1003
      %v1005 = vpop.f32.mrb[0].mxu0
      %v1006 = vadd.f32 %v737, %v1005
      %v1007 = vpop.f32.mrb[0].mxu0
      %v1008 = vadd.f32 %v739, %v1007
      %v1009 = vpop.f32.mrb[0].mxu0
      %v1010 = vadd.f32 %v741, %v1009
      %1011 = vmatprep.mubr.bf16.mxu0 0
      %1012 = vmatmul.mubr.bf16.gmra.mrb[0].mxu0 %v426
      %v1013 = vpop.f32.mrb[0].mxu0
      %v1014 = vadd.f32 %v745, %v1013
      %v1015 = vpop.f32.mrb[0].mxu0
      %v1016 = vadd.f32 %v747, %v1015
      %v1017 = vpop.f32.mrb[0].mxu0
      %v1018 = vadd.f32 %v749, %v1017
      %v1019 = vpop.f32.mrb[0].mxu0
      %v1020 = vadd.f32 %v751, %v1019
      %1021 = vmatprep.mubr.bf16.mxu0 0
      %1022 = vmatmul.mubr.bf16.gmra.mrb[0].mxu0 %v427
      %v1023 = vpop.f32.mrb[0].mxu0
      %v1024 = vadd.f32 %v755, %v1023
      %v1025 = vpop.f32.mrb[0].mxu0
      %v1026 = vadd.f32 %v757, %v1025
      %v1027 = vpop.f32.mrb[0].mxu0
      %v1028 = vadd.f32 %v759, %v1027
      %v1029 = vpop.f32.mrb[0].mxu0
      %v1030 = vadd.f32 %v761, %v1029
      %1031 = vmatprep.mubr.bf16.mxu0 0
      %1032 = vmatmul.mubr.bf16.gmra.mrb[0].mxu0 %v428
      %v1033 = vpop.f32.mrb[0].mxu0
      %v1034 = vadd.f32 %v765, %v1033
      %v1035 = vpop.f32.mrb[0].mxu0
      %v1036 = vadd.f32 %v767, %v1035
      %v1037 = vpop.f32.mrb[0].mxu0
      %v1038 = vadd.f32 %v769, %v1037
      %v1039 = vpop.f32.mrb[0].mxu0
      %v1040 = vadd.f32 %v771, %v1039
      %1041 = vmatprep.mubr.bf16.mxu0 0
      %1042 = vmatmul.mubr.bf16.gmra.mrb[0].mxu0 %v429
      %v1043 = vpop.f32.mrb[0].mxu0
      %v1044 = vpop.f32.mrb[0].mxu0
      %v1045 = vpop.f32.mrb[0].mxu0
      %v1046 = vpop.f32.mrb[0].mxu0
      %1047 = vdwg.mxu0
      %s1048 = scalar_lea.vmem %s2, 128
      %v1049 = vld [vmem:[%s1048] sm:$0xff]
      %v1050 = vld [vmem:[%s1048 + $0x8] sm:$0xff]
      %v1051 = vld [vmem:[%s1048 + $0x10] sm:$0xff]
      %v1052 = vld [vmem:[%s1048 + $0x18] sm:$0xff]
      %v1053 = vld [vmem:[%s1048 + $0x20] sm:$0xff]
      %v1054 = vld [vmem:[%s1048 + $0x28] sm:$0xff]
      %v1055 = vld [vmem:[%s1048 + $0x30] sm:$0xff]
      %v1056 = vld [vmem:[%s1048 + $0x38] sm:$0xff]
      %v1057 = vld [vmem:[%s1048 + $0x40] sm:$0xff]
      %v1058 = vld [vmem:[%s1048 + $0x48] sm:$0xff]
      %v1059 = vld [vmem:[%s1048 + $0x50] sm:$0xff]
      %v1060 = vld [vmem:[%s1048 + $0x58] sm:$0xff]
      %v1061 = vld [vmem:[%s1048 + $0x60] sm:$0xff]
      %v1062 = vld [vmem:[%s1048 + $0x68] sm:$0xff]
      %v1063 = vld [vmem:[%s1048 + $0x70] sm:$0xff]
      %v1064 = vld [vmem:[%s1048 + $0x78] sm:$0xff]
      %s1065 = scalar_lea.vmem %s3, 128
      %v1066 = vld [vmem:[%s1065] sm:$0xff]
      %v1067 = vld [vmem:[%s1065 + $0x8] sm:$0xff]
      %v1068 = vld [vmem:[%s1065 + $0x10] sm:$0xff]
      %v1069 = vld [vmem:[%s1065 + $0x18] sm:$0xff]
      %v1070 = vld [vmem:[%s1065 + $0x20] sm:$0xff]
      %v1071 = vld [vmem:[%s1065 + $0x28] sm:$0xff]
      %v1072 = vld [vmem:[%s1065 + $0x30] sm:$0xff]
      %v1073 = vld [vmem:[%s1065 + $0x38] sm:$0xff]
      %v1074 = vld [vmem:[%s1065 + $0x40] sm:$0xff]
      %v1075 = vld [vmem:[%s1065 + $0x48] sm:$0xff]
      %v1076 = vld [vmem:[%s1065 + $0x50] sm:$0xff]
      %v1077 = vld [vmem:[%s1065 + $0x58] sm:$0xff]
      %v1078 = vld [vmem:[%s1065 + $0x60] sm:$0xff]
      %v1079 = vld [vmem:[%s1065 + $0x68] sm:$0xff]
      %v1080 = vld [vmem:[%s1065 + $0x70] sm:$0xff]
      %v1081 = vld [vmem:[%s1065 + $0x78] sm:$0xff]
      %v1098 = vunpack.c.l.b16 %v1066
      %v1099 = vunpack.c.h.b16 %v1066
      %v1100 = vunpack.c.l.b16 %v1067
      %v1101 = vunpack.c.h.b16 %v1067
      %v1102 = vunpack.c.l.b16 %v1068
      %v1103 = vunpack.c.h.b16 %v1068
      %v1104 = vunpack.c.l.b16 %v1069
      %v1105 = vunpack.c.h.b16 %v1069
      %v1106 = vunpack.c.l.b16 %v1070
      %v1107 = vunpack.c.h.b16 %v1070
      %v1108 = vunpack.c.l.b16 %v1071
      %v1109 = vunpack.c.h.b16 %v1071
      %v1110 = vunpack.c.l.b16 %v1072
      %v1111 = vunpack.c.h.b16 %v1072
      %v1112 = vunpack.c.l.b16 %v1073
      %v1113 = vunpack.c.h.b16 %v1073
      %v1114 = vunpack.c.l.b16 %v1074
      %v1115 = vunpack.c.h.b16 %v1074
      %v1116 = vunpack.c.l.b16 %v1075
      %v1117 = vunpack.c.h.b16 %v1075
      %v1118 = vunpack.c.l.b16 %v1076
      %v1119 = vunpack.c.h.b16 %v1076
      %v1120 = vunpack.c.l.b16 %v1077
      %v1121 = vunpack.c.h.b16 %v1077
      %v1122 = vunpack.c.l.b16 %v1078
      %v1123 = vunpack.c.h.b16 %v1078
      %v1124 = vunpack.c.l.b16 %v1079
      %v1125 = vunpack.c.h.b16 %v1079
      %v1126 = vunpack.c.l.b16 %v1080
      %v1127 = vunpack.c.h.b16 %v1080
      %v1128 = vunpack.c.l.b16 %v1081
      %v1129 = vunpack.c.h.b16 %v1081
      %v1130 = vpack.c.b16 %v1100, %v1098
      %v1131 = vpack.c.b16 %v1101, %v1099
      %v1132 = vpack.c.b16 %v1104, %v1102
      %v1133 = vpack.c.b16 %v1105, %v1103
      %v1134 = vpack.c.b16 %v1108, %v1106
      %v1135 = vpack.c.b16 %v1109, %v1107
      %v1136 = vpack.c.b16 %v1112, %v1110
      %v1137 = vpack.c.b16 %v1113, %v1111
      %v1138 = vpack.c.b16 %v1116, %v1114
      %v1139 = vpack.c.b16 %v1117, %v1115
      %v1140 = vpack.c.b16 %v1120, %v1118
      %v1141 = vpack.c.b16 %v1121, %v1119
      %v1142 = vpack.c.b16 %v1124, %v1122
      %v1143 = vpack.c.b16 %v1125, %v1123
      %v1144 = vpack.c.b16 %v1128, %v1126
      %v1145 = vpack.c.b16 %v1129, %v1127
      %1162 = vmatprep.subr.bf16.mxu0 %v1131
      %1163 = vmatpush1.bf16.msra.mxu0 %v1130
      %1164 = vmatprep.subr.bf16.mxu0 %v1133
      %1165 = vmatpush1.bf16.msra.mxu0 %v1132
      %1166 = vmatprep.subr.bf16.mxu0 %v1135
      %1167 = vmatpush1.bf16.msra.mxu0 %v1134
      %1168 = vmatprep.subr.bf16.mxu0 %v1137
      %1169 = vmatpush1.bf16.msra.mxu0 %v1136
      %1170 = vmatprep.subr.bf16.mxu0 %v1139
      %1171 = vmatpush1.bf16.msra.mxu0 %v1138
      %1172 = vmatprep.subr.bf16.mxu0 %v1141
      %1173 = vmatpush1.bf16.msra.mxu0 %v1140
      %1174 = vmatprep.subr.bf16.mxu0 %v1143
      %1175 = vmatpush1.bf16.msra.mxu0 %v1142
      %1176 = vmatprep.subr.bf16.mxu0 %v1145
      %1177 = vmatpush1.bf16.msra.mxu0 %v1144
      %1178 = vmatprep.subr.bf16.mxu0 0
      %1179 = vmatpush1.bf16.msra.mxu0 0
      %1180 = vmatprep.subr.bf16.mxu0 0
      %1181 = vmatpush1.bf16.msra.mxu0 0
      %1182 = vmatprep.subr.bf16.mxu0 0
      %1183 = vmatpush1.bf16.msra.mxu0 0
      %1184 = vmatprep.subr.bf16.mxu0 0
      %1185 = vmatpush1.bf16.msra.mxu0 0
      %1186 = vmatprep.subr.bf16.mxu0 0
      %1187 = vmatpush1.bf16.msra.mxu0 0
      %1188 = vmatprep.subr.bf16.mxu0 0
      %1189 = vmatpush1.bf16.msra.mxu0 0
      %1190 = vmatprep.subr.bf16.mxu0 0
      %1191 = vmatpush1.bf16.msra.mxu0 0
      %1192 = vmatprep.subr.bf16.mxu0 0
      %1193 = vmatpush1.bf16.msra.mxu0 0
      %1194 = vmatprep.mubr.bf16.mxu0 0
      %1195 = vmatmul.mubr.bf16.gmra.mrb[0].mxu0 %v462
      %v1196 = vpop.f32.mrb[0].mxu0
      %v1197 = vadd.f32 0.0, %v1196
      %v1198 = vpop.f32.mrb[0].mxu0
      %v1199 = vadd.f32 0.0, %v1198
      %v1200 = vpop.f32.mrb[0].mxu0
      %v1201 = vadd.f32 0.0, %v1200
      %v1202 = vpop.f32.mrb[0].mxu0
      %v1203 = vadd.f32 0.0, %v1202
      %1204 = vmatprep.mubr.bf16.mxu0 0
      %1205 = vmatmul.mubr.bf16.gmra.mrb[0].mxu0 %v463
      %v1206 = vpop.f32.mrb[0].mxu0
      %v1207 = vadd.f32 0.0, %v1206
      %v1208 = vpop.f32.mrb[0].mxu0
      %v1209 = vadd.f32 0.0, %v1208
      %v1210 = vpop.f32.mrb[0].mxu0
      %v1211 = vadd.f32 0.0, %v1210
      %v1212 = vpop.f32.mrb[0].mxu0
      %v1213 = vadd.f32 0.0, %v1212
      %1214 = vmatprep.mubr.bf16.mxu0 0
      %1215 = vmatmul.mubr.bf16.gmra.mrb[0].mxu0 %v464
      %v1216 = vpop.f32.mrb[0].mxu0
      %v1217 = vadd.f32 0.0, %v1216
      %v1218 = vpop.f32.mrb[0].mxu0
      %v1219 = vadd.f32 0.0, %v1218
      %v1220 = vpop.f32.mrb[0].mxu0
      %v1221 = vadd.f32 0.0, %v1220
      %v1222 = vpop.f32.mrb[0].mxu0
      %v1223 = vadd.f32 0.0, %v1222
      %1224 = vmatprep.mubr.bf16.mxu0 0
      %1225 = vmatmul.mubr.bf16.gmra.mrb[0].mxu0 %v465
      %v1226 = vpop.f32.mrb[0].mxu0
      %v1227 = vadd.f32 0.0, %v1226
      %v1228 = vpop.f32.mrb[0].mxu0
      %v1229 = vadd.f32 0.0, %v1228
      %v1230 = vpop.f32.mrb[0].mxu0
      %v1231 = vadd.f32 0.0, %v1230
      %v1232 = vpop.f32.mrb[0].mxu0
      %v1233 = vadd.f32 0.0, %v1232
      %1234 = vmatprep.mubr.bf16.mxu0 0
      %1235 = vmatmul.mubr.bf16.gmra.mrb[0].mxu0 %v466
      %v1236 = vpop.f32.mrb[0].mxu0
      %v1237 = vadd.f32 0.0, %v1236
      %v1238 = vpop.f32.mrb[0].mxu0
      %v1239 = vadd.f32 0.0, %v1238
      %v1240 = vpop.f32.mrb[0].mxu0
      %v1241 = vadd.f32 0.0, %v1240
      %v1242 = vpop.f32.mrb[0].mxu0
      %v1243 = vadd.f32 0.0, %v1242
      %1244 = vmatprep.mubr.bf16.mxu0 0
      %1245 = vmatmul.mubr.bf16.gmra.mrb[0].mxu0 %v467
      %v1246 = vpop.f32.mrb[0].mxu0
      %v1247 = vadd.f32 0.0, %v1246
      %v1248 = vpop.f32.mrb[0].mxu0
      %v1249 = vadd.f32 0.0, %v1248
      %v1250 = vpop.f32.mrb[0].mxu0
      %v1251 = vadd.f32 0.0, %v1250
      %v1252 = vpop.f32.mrb[0].mxu0
      %v1253 = vadd.f32 0.0, %v1252
      %1254 = vmatprep.mubr.bf16.mxu0 0
      %1255 = vmatmul.mubr.bf16.gmra.mrb[0].mxu0 %v468
      %v1256 = vpop.f32.mrb[0].mxu0
      %v1257 = vadd.f32 0.0, %v1256
      %v1258 = vpop.f32.mrb[0].mxu0
      %v1259 = vadd.f32 0.0, %v1258
      %v1260 = vpop.f32.mrb[0].mxu0
      %v1261 = vadd.f32 0.0, %v1260
      %v1262 = vpop.f32.mrb[0].mxu0
      %v1263 = vadd.f32 0.0, %v1262
      %1264 = vmatprep.mubr.bf16.mxu0 0
      %1265 = vmatmul.mubr.bf16.gmra.mrb[0].mxu0 %v469
      %v1266 = vpop.f32.mrb[0].mxu0
      %v1267 = vadd.f32 0.0, %v1266
      %v1268 = vpop.f32.mrb[0].mxu0
      %v1269 = vadd.f32 0.0, %v1268
      %v1270 = vpop.f32.mrb[0].mxu0
      %v1271 = vadd.f32 0.0, %v1270
      %v1272 = vpop.f32.mrb[0].mxu0
      %v1273 = vadd.f32 0.0, %v1272
      %1274 = vmatprep.mubr.bf16.mxu0 0
      %1275 = vmatmul.mubr.bf16.gmra.mrb[0].mxu0 %v470
      %v1276 = vpop.f32.mrb[0].mxu0
      %v1277 = vadd.f32 0.0, %v1276
      %v1278 = vpop.f32.mrb[0].mxu0
      %v1279 = vadd.f32 0.0, %v1278
      %v1280 = vpop.f32.mrb[0].mxu0
      %v1281 = vadd.f32 0.0, %v1280
      %v1282 = vpop.f32.mrb[0].mxu0
      %v1283 = vadd.f32 0.0, %v1282
      %1284 = vmatprep.mubr.bf16.mxu0 0
      %1285 = vmatmul.mubr.bf16.gmra.mrb[0].mxu0 %v471
      %v1286 = vpop.f32.mrb[0].mxu0
      %v1287 = vadd.f32 0.0, %v1286
      %v1288 = vpop.f32.mrb[0].mxu0
      %v1289 = vadd.f32 0.0, %v1288
      %v1290 = vpop.f32.mrb[0].mxu0
      %v1291 = vadd.f32 0.0, %v1290
      %v1292 = vpop.f32.mrb[0].mxu0
      %v1293 = vadd.f32 0.0, %v1292
      %1294 = vmatprep.mubr.bf16.mxu0 0
      %1295 = vmatmul.mubr.bf16.gmra.mrb[0].mxu0 %v472
      %v1296 = vpop.f32.mrb[0].mxu0
      %v1297 = vadd.f32 0.0, %v1296
      %v1298 = vpop.f32.mrb[0].mxu0
      %v1299 = vadd.f32 0.0, %v1298
      %v1300 = vpop.f32.mrb[0].mxu0
      %v1301 = vadd.f32 0.0, %v1300
      %v1302 = vpop.f32.mrb[0].mxu0
      %v1303 = vadd.f32 0.0, %v1302
      %1304 = vmatprep.mubr.bf16.mxu0 0
      %1305 = vmatmul.mubr.bf16.gmra.mrb[0].mxu0 %v473
      %v1306 = vpop.f32.mrb[0].mxu0
      %v1307 = vadd.f32 0.0, %v1306
      %v1308 = vpop.f32.mrb[0].mxu0
      %v1309 = vadd.f32 0.0, %v1308
      %v1310 = vpop.f32.mrb[0].mxu0
      %v1311 = vadd.f32 0.0, %v1310
      %v1312 = vpop.f32.mrb[0].mxu0
      %v1313 = vadd.f32 0.0, %v1312
      %1314 = vmatprep.mubr.bf16.mxu0 0
      %1315 = vmatmul.mubr.bf16.gmra.mrb[0].mxu0 %v474
      %v1316 = vpop.f32.mrb[0].mxu0
      %v1317 = vadd.f32 0.0, %v1316
      %v1318 = vpop.f32.mrb[0].mxu0
      %v1319 = vadd.f32 0.0, %v1318
      %v1320 = vpop.f32.mrb[0].mxu0
      %v1321 = vadd.f32 0.0, %v1320
      %v1322 = vpop.f32.mrb[0].mxu0
      %v1323 = vadd.f32 0.0, %v1322
      %1324 = vmatprep.mubr.bf16.mxu0 0
      %1325 = vmatmul.mubr.bf16.gmra.mrb[0].mxu0 %v475
      %v1326 = vpop.f32.mrb[0].mxu0
      %v1327 = vadd.f32 0.0, %v1326
      %v1328 = vpop.f32.mrb[0].mxu0
      %v1329 = vadd.f32 0.0, %v1328
      %v1330 = vpop.f32.mrb[0].mxu0
      %v1331 = vadd.f32 0.0, %v1330
      %v1332 = vpop.f32.mrb[0].mxu0
      %v1333 = vadd.f32 0.0, %v1332
      %1334 = vmatprep.mubr.bf16.mxu0 0
      %1335 = vmatmul.mubr.bf16.gmra.mrb[0].mxu0 %v476
      %v1336 = vpop.f32.mrb[0].mxu0
      %v1337 = vadd.f32 0.0, %v1336
      %v1338 = vpop.f32.mrb[0].mxu0
      %v1339 = vadd.f32 0.0, %v1338
      %v1340 = vpop.f32.mrb[0].mxu0
      %v1341 = vadd.f32 0.0, %v1340
      %v1342 = vpop.f32.mrb[0].mxu0
      %v1343 = vadd.f32 0.0, %v1342
      %1344 = vmatprep.mubr.bf16.mxu0 0
      %1345 = vmatmul.mubr.bf16.gmra.mrb[0].mxu0 %v477
      %v1346 = vpop.f32.mrb[0].mxu0
      %v1347 = vadd.f32 0.0, %v1346
      %v1348 = vpop.f32.mrb[0].mxu0
      %v1349 = vadd.f32 0.0, %v1348
      %v1350 = vpop.f32.mrb[0].mxu0
      %v1351 = vadd.f32 0.0, %v1350
      %v1352 = vpop.f32.mrb[0].mxu0
      %v1353 = vadd.f32 0.0, %v1352
      %1354 = vdwg.mxu0
      %v1371 = vunpack.c.l.b16 %v1049
      %v1372 = vunpack.c.h.b16 %v1049
      %v1373 = vunpack.c.l.b16 %v1050
      %v1374 = vunpack.c.h.b16 %v1050
      %v1375 = vunpack.c.l.b16 %v1051
      %v1376 = vunpack.c.h.b16 %v1051
      %v1377 = vunpack.c.l.b16 %v1052
      %v1378 = vunpack.c.h.b16 %v1052
      %v1379 = vunpack.c.l.b16 %v1053
      %v1380 = vunpack.c.h.b16 %v1053
      %v1381 = vunpack.c.l.b16 %v1054
      %v1382 = vunpack.c.h.b16 %v1054
      %v1383 = vunpack.c.l.b16 %v1055
      %v1384 = vunpack.c.h.b16 %v1055
      %v1385 = vunpack.c.l.b16 %v1056
      %v1386 = vunpack.c.h.b16 %v1056
      %v1387 = vunpack.c.l.b16 %v1057
      %v1388 = vunpack.c.h.b16 %v1057
      %v1389 = vunpack.c.l.b16 %v1058
      %v1390 = vunpack.c.h.b16 %v1058
      %v1391 = vunpack.c.l.b16 %v1059
      %v1392 = vunpack.c.h.b16 %v1059
      %v1393 = vunpack.c.l.b16 %v1060
      %v1394 = vunpack.c.h.b16 %v1060
      %v1395 = vunpack.c.l.b16 %v1061
      %v1396 = vunpack.c.h.b16 %v1061
      %v1397 = vunpack.c.l.b16 %v1062
      %v1398 = vunpack.c.h.b16 %v1062
      %v1399 = vunpack.c.l.b16 %v1063
      %v1400 = vunpack.c.h.b16 %v1063
      %v1401 = vunpack.c.l.b16 %v1064
      %v1402 = vunpack.c.h.b16 %v1064
      %v1403 = vpack.c.b16 %v1373, %v1371
      %v1404 = vpack.c.b16 %v1374, %v1372
      %v1405 = vpack.c.b16 %v1377, %v1375
      %v1406 = vpack.c.b16 %v1378, %v1376
      %v1407 = vpack.c.b16 %v1381, %v1379
      %v1408 = vpack.c.b16 %v1382, %v1380
      %v1409 = vpack.c.b16 %v1385, %v1383
      %v1410 = vpack.c.b16 %v1386, %v1384
      %v1411 = vpack.c.b16 %v1389, %v1387
      %v1412 = vpack.c.b16 %v1390, %v1388
      %v1413 = vpack.c.b16 %v1393, %v1391
      %v1414 = vpack.c.b16 %v1394, %v1392
      %v1415 = vpack.c.b16 %v1397, %v1395
      %v1416 = vpack.c.b16 %v1398, %v1396
      %v1417 = vpack.c.b16 %v1401, %v1399
      %v1418 = vpack.c.b16 %v1402, %v1400
      %1435 = vmatprep.subr.bf16.mxu0 %v1404
      %1436 = vmatpush1.bf16.msra.mxu0 %v1403
      %1437 = vmatprep.subr.bf16.mxu0 %v1406
      %1438 = vmatpush1.bf16.msra.mxu0 %v1405
      %1439 = vmatprep.subr.bf16.mxu0 %v1408
      %1440 = vmatpush1.bf16.msra.mxu0 %v1407
      %1441 = vmatprep.subr.bf16.mxu0 %v1410
      %1442 = vmatpush1.bf16.msra.mxu0 %v1409
      %1443 = vmatprep.subr.bf16.mxu0 %v1412
      %1444 = vmatpush1.bf16.msra.mxu0 %v1411
      %1445 = vmatprep.subr.bf16.mxu0 %v1414
      %1446 = vmatpush1.bf16.msra.mxu0 %v1413
      %1447 = vmatprep.subr.bf16.mxu0 %v1416
      %1448 = vmatpush1.bf16.msra.mxu0 %v1415
      %1449 = vmatprep.subr.bf16.mxu0 %v1418
      %1450 = vmatpush1.bf16.msra.mxu0 %v1417
      %1451 = vmatprep.subr.bf16.mxu0 0
      %1452 = vmatpush1.bf16.msra.mxu0 0
      %1453 = vmatprep.subr.bf16.mxu0 0
      %1454 = vmatpush1.bf16.msra.mxu0 0
      %1455 = vmatprep.subr.bf16.mxu0 0
      %1456 = vmatpush1.bf16.msra.mxu0 0
      %1457 = vmatprep.subr.bf16.mxu0 0
      %1458 = vmatpush1.bf16.msra.mxu0 0
      %1459 = vmatprep.subr.bf16.mxu0 0
      %1460 = vmatpush1.bf16.msra.mxu0 0
      %1461 = vmatprep.subr.bf16.mxu0 0
      %1462 = vmatpush1.bf16.msra.mxu0 0
      %1463 = vmatprep.subr.bf16.mxu0 0
      %1464 = vmatpush1.bf16.msra.mxu0 0
      %1465 = vmatprep.subr.bf16.mxu0 0
      %1466 = vmatpush1.bf16.msra.mxu0 0
      %1467 = vmatprep.mubr.bf16.mxu0 0
      %1468 = vmatmul.mubr.bf16.gmra.mrb[0].mxu0 %v414
      %v1469 = vpop.f32.mrb[0].mxu0
      %v1470 = vadd.f32 %v1197, %v1469
      %v1471 = vpop.f32.mrb[0].mxu0
      %v1472 = vadd.f32 %v1199, %v1471
      %v1473 = vpop.f32.mrb[0].mxu0
      %v1474 = vadd.f32 %v1201, %v1473
      %v1475 = vpop.f32.mrb[0].mxu0
      %v1476 = vadd.f32 %v1203, %v1475
      %1477 = vmatprep.mubr.bf16.mxu0 0
      %1478 = vmatmul.mubr.bf16.gmra.mrb[0].mxu0 %v415
      %v1479 = vpop.f32.mrb[0].mxu0
      %v1480 = vadd.f32 %v1207, %v1479
      %v1481 = vpop.f32.mrb[0].mxu0
      %v1482 = vadd.f32 %v1209, %v1481
      %v1483 = vpop.f32.mrb[0].mxu0
      %v1484 = vadd.f32 %v1211, %v1483
      %v1485 = vpop.f32.mrb[0].mxu0
      %v1486 = vadd.f32 %v1213, %v1485
      %1487 = vmatprep.mubr.bf16.mxu0 0
      %1488 = vmatmul.mubr.bf16.gmra.mrb[0].mxu0 %v416
      %v1489 = vpop.f32.mrb[0].mxu0
      %v1490 = vadd.f32 %v1217, %v1489
      %v1491 = vpop.f32.mrb[0].mxu0
      %v1492 = vadd.f32 %v1219, %v1491
      %v1493 = vpop.f32.mrb[0].mxu0
      %v1494 = vadd.f32 %v1221, %v1493
      %v1495 = vpop.f32.mrb[0].mxu0
      %v1496 = vadd.f32 %v1223, %v1495
      %1497 = vmatprep.mubr.bf16.mxu0 0
      %1498 = vmatmul.mubr.bf16.gmra.mrb[0].mxu0 %v417
      %v1499 = vpop.f32.mrb[0].mxu0
      %v1500 = vadd.f32 %v1227, %v1499
      %v1501 = vpop.f32.mrb[0].mxu0
      %v1502 = vadd.f32 %v1229, %v1501
      %v1503 = vpop.f32.mrb[0].mxu0
      %v1504 = vadd.f32 %v1231, %v1503
      %v1505 = vpop.f32.mrb[0].mxu0
      %v1506 = vadd.f32 %v1233, %v1505
      %1507 = vmatprep.mubr.bf16.mxu0 0
      %1508 = vmatmul.mubr.bf16.gmra.mrb[0].mxu0 %v418
      %v1509 = vpop.f32.mrb[0].mxu0
      %v1510 = vadd.f32 %v1237, %v1509
      %v1511 = vpop.f32.mrb[0].mxu0
      %v1512 = vadd.f32 %v1239, %v1511
      %v1513 = vpop.f32.mrb[0].mxu0
      %v1514 = vadd.f32 %v1241, %v1513
      %v1515 = vpop.f32.mrb[0].mxu0
      %v1516 = vadd.f32 %v1243, %v1515
      %1517 = vmatprep.mubr.bf16.mxu0 0
      %1518 = vmatmul.mubr.bf16.gmra.mrb[0].mxu0 %v419
      %v1519 = vpop.f32.mrb[0].mxu0
      %v1520 = vadd.f32 %v1247, %v1519
      %v1521 = vpop.f32.mrb[0].mxu0
      %v1522 = vadd.f32 %v1249, %v1521
      %v1523 = vpop.f32.mrb[0].mxu0
      %v1524 = vadd.f32 %v1251, %v1523
      %v1525 = vpop.f32.mrb[0].mxu0
      %v1526 = vadd.f32 %v1253, %v1525
      %1527 = vmatprep.mubr.bf16.mxu0 0
      %1528 = vmatmul.mubr.bf16.gmra.mrb[0].mxu0 %v420
      %v1529 = vpop.f32.mrb[0].mxu0
      %v1530 = vadd.f32 %v1257, %v1529
      %v1531 = vpop.f32.mrb[0].mxu0
      %v1532 = vadd.f32 %v1259, %v1531
      %v1533 = vpop.f32.mrb[0].mxu0
      %v1534 = vadd.f32 %v1261, %v1533
      %v1535 = vpop.f32.mrb[0].mxu0
      %v1536 = vadd.f32 %v1263, %v1535
      %1537 = vmatprep.mubr.bf16.mxu0 0
      %1538 = vmatmul.mubr.bf16.gmra.mrb[0].mxu0 %v421
      %v1539 = vpop.f32.mrb[0].mxu0
      %v1540 = vadd.f32 %v1267, %v1539
      %v1541 = vpop.f32.mrb[0].mxu0
      %v1542 = vadd.f32 %v1269, %v1541
      %v1543 = vpop.f32.mrb[0].mxu0
      %v1544 = vadd.f32 %v1271, %v1543
      %v1545 = vpop.f32.mrb[0].mxu0
      %v1546 = vadd.f32 %v1273, %v1545
      %1547 = vmatprep.mubr.bf16.mxu0 0
      %1548 = vmatmul.mubr.bf16.gmra.mrb[0].mxu0 %v422
      %v1549 = vpop.f32.mrb[0].mxu0
      %v1550 = vadd.f32 %v1277, %v1549
      %v1551 = vpop.f32.mrb[0].mxu0
      %v1552 = vadd.f32 %v1279, %v1551
      %v1553 = vpop.f32.mrb[0].mxu0
      %v1554 = vadd.f32 %v1281, %v1553
      %v1555 = vpop.f32.mrb[0].mxu0
      %v1556 = vadd.f32 %v1283, %v1555
      %1557 = vmatprep.mubr.bf16.mxu0 0
      %1558 = vmatmul.mubr.bf16.gmra.mrb[0].mxu0 %v423
      %v1559 = vpop.f32.mrb[0].mxu0
      %v1560 = vadd.f32 %v1287, %v1559
      %v1561 = vpop.f32.mrb[0].mxu0
      %v1562 = vadd.f32 %v1289, %v1561
      %v1563 = vpop.f32.mrb[0].mxu0
      %v1564 = vadd.f32 %v1291, %v1563
      %v1565 = vpop.f32.mrb[0].mxu0
      %v1566 = vadd.f32 %v1293, %v1565
      %1567 = vmatprep.mubr.bf16.mxu0 0
      %1568 = vmatmul.mubr.bf16.gmra.mrb[0].mxu0 %v424
      %v1569 = vpop.f32.mrb[0].mxu0
      %v1570 = vadd.f32 %v1297, %v1569
      %v1571 = vpop.f32.mrb[0].mxu0
      %v1572 = vadd.f32 %v1299, %v1571
      %v1573 = vpop.f32.mrb[0].mxu0
      %v1574 = vadd.f32 %v1301, %v1573
      %v1575 = vpop.f32.mrb[0].mxu0
      %v1576 = vadd.f32 %v1303, %v1575
      %1577 = vmatprep.mubr.bf16.mxu0 0
      %1578 = vmatmul.mubr.bf16.gmra.mrb[0].mxu0 %v425
      %v1579 = vpop.f32.mrb[0].mxu0
      %v1580 = vadd.f32 %v1307, %v1579
      %v1581 = vpop.f32.mrb[0].mxu0
      %v1582 = vadd.f32 %v1309, %v1581
      %v1583 = vpop.f32.mrb[0].mxu0
      %v1584 = vadd.f32 %v1311, %v1583
      %v1585 = vpop.f32.mrb[0].mxu0
      %v1586 = vadd.f32 %v1313, %v1585
      %1587 = vmatprep.mubr.bf16.mxu0 0
      %1588 = vmatmul.mubr.bf16.gmra.mrb[0].mxu0 %v426
      %v1589 = vpop.f32.mrb[0].mxu0
      %v1590 = vadd.f32 %v1317, %v1589
      %v1591 = vpop.f32.mrb[0].mxu0
      %v1592 = vadd.f32 %v1319, %v1591
      %v1593 = vpop.f32.mrb[0].mxu0
      %v1594 = vadd.f32 %v1321, %v1593
      %v1595 = vpop.f32.mrb[0].mxu0
      %v1596 = vadd.f32 %v1323, %v1595
      %1597 = vmatprep.mubr.bf16.mxu0 0
      %1598 = vmatmul.mubr.bf16.gmra.mrb[0].mxu0 %v427
      %v1599 = vpop.f32.mrb[0].mxu0
      %v1600 = vadd.f32 %v1327, %v1599
      %v1601 = vpop.f32.mrb[0].mxu0
      %v1602 = vadd.f32 %v1329, %v1601
      %v1603 = vpop.f32.mrb[0].mxu0
      %v1604 = vadd.f32 %v1331, %v1603
      %v1605 = vpop.f32.mrb[0].mxu0
      %v1606 = vadd.f32 %v1333, %v1605
      %1607 = vmatprep.mubr.bf16.mxu0 0
      %1608 = vmatmul.mubr.bf16.gmra.mrb[0].mxu0 %v428
      %v1609 = vpop.f32.mrb[0].mxu0
      %v1610 = vadd.f32 %v1337, %v1609
      %v1611 = vpop.f32.mrb[0].mxu0
      %v1612 = vadd.f32 %v1339, %v1611
      %v1613 = vpop.f32.mrb[0].mxu0
      %v1614 = vadd.f32 %v1341, %v1613
      %v1615 = vpop.f32.mrb[0].mxu0
      %v1616 = vadd.f32 %v1343, %v1615
      %1617 = vmatprep.mubr.bf16.mxu0 0
      %1618 = vmatmul.mubr.bf16.gmra.mrb[0].mxu0 %v429
      %v1619 = vpop.f32.mrb[0].mxu0
      %v1620 = vadd.f32 %v1347, %v1619
      %v1621 = vpop.f32.mrb[0].mxu0
      %v1622 = vadd.f32 %v1349, %v1621
      %v1623 = vpop.f32.mrb[0].mxu0
      %v1624 = vadd.f32 %v1351, %v1623
      %v1625 = vpop.f32.mrb[0].mxu0
      %v1626 = vadd.f32 %v1353, %v1625
      %1627 = vdwg.mxu0
      %s1628 = scalar_lea.vmem %s2, 256
      %v1629 = vld [vmem:[%s1628] sm:$0xff]
      %v1630 = vld [vmem:[%s1628 + $0x8] sm:$0xff]
      %v1631 = vld [vmem:[%s1628 + $0x10] sm:$0xff]
      %v1632 = vld [vmem:[%s1628 + $0x18] sm:$0xff]
      %v1633 = vld [vmem:[%s1628 + $0x20] sm:$0xff]
      %v1634 = vld [vmem:[%s1628 + $0x28] sm:$0xff]
      %v1635 = vld [vmem:[%s1628 + $0x30] sm:$0xff]
      %v1636 = vld [vmem:[%s1628 + $0x38] sm:$0xff]
      %v1637 = vld [vmem:[%s1628 + $0x40] sm:$0xff]
      %v1638 = vld [vmem:[%s1628 + $0x48] sm:$0xff]
      %v1639 = vld [vmem:[%s1628 + $0x50] sm:$0xff]
      %v1640 = vld [vmem:[%s1628 + $0x58] sm:$0xff]
      %v1641 = vld [vmem:[%s1628 + $0x60] sm:$0xff]
      %v1642 = vld [vmem:[%s1628 + $0x68] sm:$0xff]
      %v1643 = vld [vmem:[%s1628 + $0x70] sm:$0xff]
      %v1644 = vld [vmem:[%s1628 + $0x78] sm:$0xff]
      %s1645 = scalar_lea.vmem %s3, 256
      %v1646 = vld [vmem:[%s1645] sm:$0xff]
      %v1647 = vld [vmem:[%s1645 + $0x8] sm:$0xff]
      %v1648 = vld [vmem:[%s1645 + $0x10] sm:$0xff]
      %v1649 = vld [vmem:[%s1645 + $0x18] sm:$0xff]
      %v1650 = vld [vmem:[%s1645 + $0x20] sm:$0xff]
      %v1651 = vld [vmem:[%s1645 + $0x28] sm:$0xff]
      %v1652 = vld [vmem:[%s1645 + $0x30] sm:$0xff]
      %v1653 = vld [vmem:[%s1645 + $0x38] sm:$0xff]
      %v1654 = vld [vmem:[%s1645 + $0x40] sm:$0xff]
      %v1655 = vld [vmem:[%s1645 + $0x48] sm:$0xff]
      %v1656 = vld [vmem:[%s1645 + $0x50] sm:$0xff]
      %v1657 = vld [vmem:[%s1645 + $0x58] sm:$0xff]
      %v1658 = vld [vmem:[%s1645 + $0x60] sm:$0xff]
      %v1659 = vld [vmem:[%s1645 + $0x68] sm:$0xff]
      %v1660 = vld [vmem:[%s1645 + $0x70] sm:$0xff]
      %v1661 = vld [vmem:[%s1645 + $0x78] sm:$0xff]
      %v1678 = vunpack.c.l.b16 %v1646
      %v1679 = vunpack.c.h.b16 %v1646
      %v1680 = vunpack.c.l.b16 %v1647
      %v1681 = vunpack.c.h.b16 %v1647
      %v1682 = vunpack.c.l.b16 %v1648
      %v1683 = vunpack.c.h.b16 %v1648
      %v1684 = vunpack.c.l.b16 %v1649
      %v1685 = vunpack.c.h.b16 %v1649
      %v1686 = vunpack.c.l.b16 %v1650
      %v1687 = vunpack.c.h.b16 %v1650
      %v1688 = vunpack.c.l.b16 %v1651
      %v1689 = vunpack.c.h.b16 %v1651
      %v1690 = vunpack.c.l.b16 %v1652
      %v1691 = vunpack.c.h.b16 %v1652
      %v1692 = vunpack.c.l.b16 %v1653
      %v1693 = vunpack.c.h.b16 %v1653
      %v1694 = vunpack.c.l.b16 %v1654
      %v1695 = vunpack.c.h.b16 %v1654
      %v1696 = vunpack.c.l.b16 %v1655
      %v1697 = vunpack.c.h.b16 %v1655
      %v1698 = vunpack.c.l.b16 %v1656
      %v1699 = vunpack.c.h.b16 %v1656
      %v1700 = vunpack.c.l.b16 %v1657
      %v1701 = vunpack.c.h.b16 %v1657
      %v1702 = vunpack.c.l.b16 %v1658
      %v1703 = vunpack.c.h.b16 %v1658
      %v1704 = vunpack.c.l.b16 %v1659
      %v1705 = vunpack.c.h.b16 %v1659
      %v1706 = vunpack.c.l.b16 %v1660
      %v1707 = vunpack.c.h.b16 %v1660
      %v1708 = vunpack.c.l.b16 %v1661
      %v1709 = vunpack.c.h.b16 %v1661
      %v1710 = vpack.c.b16 %v1680, %v1678
      %v1711 = vpack.c.b16 %v1681, %v1679
      %v1712 = vpack.c.b16 %v1684, %v1682
      %v1713 = vpack.c.b16 %v1685, %v1683
      %v1714 = vpack.c.b16 %v1688, %v1686
      %v1715 = vpack.c.b16 %v1689, %v1687
      %v1716 = vpack.c.b16 %v1692, %v1690
      %v1717 = vpack.c.b16 %v1693, %v1691
      %v1718 = vpack.c.b16 %v1696, %v1694
      %v1719 = vpack.c.b16 %v1697, %v1695
      %v1720 = vpack.c.b16 %v1700, %v1698
      %v1721 = vpack.c.b16 %v1701, %v1699
      %v1722 = vpack.c.b16 %v1704, %v1702
      %v1723 = vpack.c.b16 %v1705, %v1703
      %v1724 = vpack.c.b16 %v1708, %v1706
      %v1725 = vpack.c.b16 %v1709, %v1707
      %1742 = vmatprep.subr.bf16.mxu0 %v1711
      %1743 = vmatpush1.bf16.msra.mxu0 %v1710
      %1744 = vmatprep.subr.bf16.mxu0 %v1713
      %1745 = vmatpush1.bf16.msra.mxu0 %v1712
      %1746 = vmatprep.subr.bf16.mxu0 %v1715
      %1747 = vmatpush1.bf16.msra.mxu0 %v1714
      %1748 = vmatprep.subr.bf16.mxu0 %v1717
      %1749 = vmatpush1.bf16.msra.mxu0 %v1716
      %1750 = vmatprep.subr.bf16.mxu0 %v1719
      %1751 = vmatpush1.bf16.msra.mxu0 %v1718
      %1752 = vmatprep.subr.bf16.mxu0 %v1721
      %1753 = vmatpush1.bf16.msra.mxu0 %v1720
      %1754 = vmatprep.subr.bf16.mxu0 %v1723
      %1755 = vmatpush1.bf16.msra.mxu0 %v1722
      %1756 = vmatprep.subr.bf16.mxu0 %v1725
      %1757 = vmatpush1.bf16.msra.mxu0 %v1724
      %1758 = vmatprep.subr.bf16.mxu0 0
      %1759 = vmatpush1.bf16.msra.mxu0 0
      %1760 = vmatprep.subr.bf16.mxu0 0
      %1761 = vmatpush1.bf16.msra.mxu0 0
      %1762 = vmatprep.subr.bf16.mxu0 0
      %1763 = vmatpush1.bf16.msra.mxu0 0
      %1764 = vmatprep.subr.bf16.mxu0 0
      %1765 = vmatpush1.bf16.msra.mxu0 0
      %1766 = vmatprep.subr.bf16.mxu0 0
      %1767 = vmatpush1.bf16.msra.mxu0 0
      %1768 = vmatprep.subr.bf16.mxu0 0
      %1769 = vmatpush1.bf16.msra.mxu0 0
      %1770 = vmatprep.subr.bf16.mxu0 0
      %1771 = vmatpush1.bf16.msra.mxu0 0
      %1772 = vmatprep.subr.bf16.mxu0 0
      %1773 = vmatpush1.bf16.msra.mxu0 0
      %1774 = vmatprep.mubr.bf16.mxu0 0
      %1775 = vmatmul.mubr.bf16.gmra.mrb[0].mxu0 %v462
      %v1776 = vpop.f32.mrb[0].mxu0
      %v1777 = vpop.f32.mrb[0].mxu0
      %v1778 = vpop.f32.mrb[0].mxu0
      %v1779 = vpop.f32.mrb[0].mxu0
      %1780 = vmatprep.mubr.bf16.mxu0 0
      %1781 = vmatmul.mubr.bf16.gmra.mrb[0].mxu0 %v463
      %v1782 = vpop.f32.mrb[0].mxu0
      %v1783 = vadd.f32 0.0, %v1782
      %v1784 = vpop.f32.mrb[0].mxu0
      %v1785 = vadd.f32 0.0, %v1784
      %v1786 = vpop.f32.mrb[0].mxu0
      %v1787 = vadd.f32 0.0, %v1786
      %v1788 = vpop.f32.mrb[0].mxu0
      %v1789 = vadd.f32 0.0, %v1788
      %1790 = vmatprep.mubr.bf16.mxu0 0
      %1791 = vmatmul.mubr.bf16.gmra.mrb[0].mxu0 %v464
      %v1792 = vpop.f32.mrb[0].mxu0
      %v1793 = vadd.f32 0.0, %v1792
      %v1794 = vpop.f32.mrb[0].mxu0
      %v1795 = vadd.f32 0.0, %v1794
      %v1796 = vpop.f32.mrb[0].mxu0
      %v1797 = vadd.f32 0.0, %v1796
      %v1798 = vpop.f32.mrb[0].mxu0
      %v1799 = vadd.f32 0.0, %v1798
      %1800 = vmatprep.mubr.bf16.mxu0 0
      %1801 = vmatmul.mubr.bf16.gmra.mrb[0].mxu0 %v465
      %v1802 = vpop.f32.mrb[0].mxu0
      %v1803 = vadd.f32 0.0, %v1802
      %v1804 = vpop.f32.mrb[0].mxu0
      %v1805 = vadd.f32 0.0, %v1804
      %v1806 = vpop.f32.mrb[0].mxu0
      %v1807 = vadd.f32 0.0, %v1806
      %v1808 = vpop.f32.mrb[0].mxu0
      %v1809 = vadd.f32 0.0, %v1808
      %1810 = vmatprep.mubr.bf16.mxu0 0
      %1811 = vmatmul.mubr.bf16.gmra.mrb[0].mxu0 %v466
      %v1812 = vpop.f32.mrb[0].mxu0
      %v1813 = vadd.f32 0.0, %v1812
      %v1814 = vpop.f32.mrb[0].mxu0
      %v1815 = vadd.f32 0.0, %v1814
      %v1816 = vpop.f32.mrb[0].mxu0
      %v1817 = vadd.f32 0.0, %v1816
      %v1818 = vpop.f32.mrb[0].mxu0
      %v1819 = vadd.f32 0.0, %v1818
      %1820 = vmatprep.mubr.bf16.mxu0 0
      %1821 = vmatmul.mubr.bf16.gmra.mrb[0].mxu0 %v467
      %v1822 = vpop.f32.mrb[0].mxu0
      %v1823 = vadd.f32 0.0, %v1822
      %v1824 = vpop.f32.mrb[0].mxu0
      %v1825 = vadd.f32 0.0, %v1824
      %v1826 = vpop.f32.mrb[0].mxu0
      %v1827 = vadd.f32 0.0, %v1826
      %v1828 = vpop.f32.mrb[0].mxu0
      %v1829 = vadd.f32 0.0, %v1828
      %1830 = vmatprep.mubr.bf16.mxu0 0
      %1831 = vmatmul.mubr.bf16.gmra.mrb[0].mxu0 %v468
      %v1832 = vpop.f32.mrb[0].mxu0
      %v1833 = vadd.f32 0.0, %v1832
      %v1834 = vpop.f32.mrb[0].mxu0
      %v1835 = vadd.f32 0.0, %v1834
      %v1836 = vpop.f32.mrb[0].mxu0
      %v1837 = vadd.f32 0.0, %v1836
      %v1838 = vpop.f32.mrb[0].mxu0
      %v1839 = vadd.f32 0.0, %v1838
      %1840 = vmatprep.mubr.bf16.mxu0 0
      %1841 = vmatmul.mubr.bf16.gmra.mrb[0].mxu0 %v469
      %v1842 = vpop.f32.mrb[0].mxu0
      %v1843 = vadd.f32 0.0, %v1842
      %v1844 = vpop.f32.mrb[0].mxu0
      %v1845 = vadd.f32 0.0, %v1844
      %v1846 = vpop.f32.mrb[0].mxu0
      %v1847 = vadd.f32 0.0, %v1846
      %v1848 = vpop.f32.mrb[0].mxu0
      %v1849 = vadd.f32 0.0, %v1848
      %1850 = vmatprep.mubr.bf16.mxu0 0
      %1851 = vmatmul.mubr.bf16.gmra.mrb[0].mxu0 %v470
      %v1852 = vpop.f32.mrb[0].mxu0
      %v1853 = vadd.f32 0.0, %v1852
      %v1854 = vpop.f32.mrb[0].mxu0
      %v1855 = vadd.f32 0.0, %v1854
      %v1856 = vpop.f32.mrb[0].mxu0
      %v1857 = vadd.f32 0.0, %v1856
      %v1858 = vpop.f32.mrb[0].mxu0
      %v1859 = vadd.f32 0.0, %v1858
      %1860 = vmatprep.mubr.bf16.mxu0 0
      %1861 = vmatmul.mubr.bf16.gmra.mrb[0].mxu0 %v471
      %v1862 = vpop.f32.mrb[0].mxu0
      %v1863 = vadd.f32 0.0, %v1862
      %v1864 = vpop.f32.mrb[0].mxu0
      %v1865 = vadd.f32 0.0, %v1864
      %v1866 = vpop.f32.mrb[0].mxu0
      %v1867 = vadd.f32 0.0, %v1866
      %v1868 = vpop.f32.mrb[0].mxu0
      %v1869 = vadd.f32 0.0, %v1868
      %1870 = vmatprep.mubr.bf16.mxu0 0
      %1871 = vmatmul.mubr.bf16.gmra.mrb[0].mxu0 %v472
      %v1872 = vpop.f32.mrb[0].mxu0
      %v1873 = vadd.f32 0.0, %v1872
      %v1874 = vpop.f32.mrb[0].mxu0
      %v1875 = vadd.f32 0.0, %v1874
      %v1876 = vpop.f32.mrb[0].mxu0
      %v1877 = vadd.f32 0.0, %v1876
      %v1878 = vpop.f32.mrb[0].mxu0
      %v1879 = vadd.f32 0.0, %v1878
      %1880 = vmatprep.mubr.bf16.mxu0 0
      %1881 = vmatmul.mubr.bf16.gmra.mrb[0].mxu0 %v473
      %v1882 = vpop.f32.mrb[0].mxu0
      %v1883 = vadd.f32 0.0, %v1882
      %v1884 = vpop.f32.mrb[0].mxu0
      %v1885 = vadd.f32 0.0, %v1884
      %v1886 = vpop.f32.mrb[0].mxu0
      %v1887 = vadd.f32 0.0, %v1886
      %v1888 = vpop.f32.mrb[0].mxu0
      %v1889 = vadd.f32 0.0, %v1888
      %1890 = vmatprep.mubr.bf16.mxu0 0
      %1891 = vmatmul.mubr.bf16.gmra.mrb[0].mxu0 %v474
      %v1892 = vpop.f32.mrb[0].mxu0
      %v1893 = vadd.f32 0.0, %v1892
      %v1894 = vpop.f32.mrb[0].mxu0
      %v1895 = vadd.f32 0.0, %v1894
      %v1896 = vpop.f32.mrb[0].mxu0
      %v1897 = vadd.f32 0.0, %v1896
      %v1898 = vpop.f32.mrb[0].mxu0
      %v1899 = vadd.f32 0.0, %v1898
      %1900 = vmatprep.mubr.bf16.mxu0 0
      %1901 = vmatmul.mubr.bf16.gmra.mrb[0].mxu0 %v475
      %v1902 = vpop.f32.mrb[0].mxu0
      %v1903 = vadd.f32 0.0, %v1902
      %v1904 = vpop.f32.mrb[0].mxu0
      %v1905 = vadd.f32 0.0, %v1904
      %v1906 = vpop.f32.mrb[0].mxu0
      %v1907 = vadd.f32 0.0, %v1906
      %v1908 = vpop.f32.mrb[0].mxu0
      %v1909 = vadd.f32 0.0, %v1908
      %1910 = vmatprep.mubr.bf16.mxu0 0
      %1911 = vmatmul.mubr.bf16.gmra.mrb[0].mxu0 %v476
      %v1912 = vpop.f32.mrb[0].mxu0
      %v1913 = vadd.f32 0.0, %v1912
      %v1914 = vpop.f32.mrb[0].mxu0
      %v1915 = vadd.f32 0.0, %v1914
      %v1916 = vpop.f32.mrb[0].mxu0
      %v1917 = vadd.f32 0.0, %v1916
      %v1918 = vpop.f32.mrb[0].mxu0
      %v1919 = vadd.f32 0.0, %v1918
      %1920 = vmatprep.mubr.bf16.mxu0 0
      %1921 = vmatmul.mubr.bf16.gmra.mrb[0].mxu0 %v477
      %v1922 = vpop.f32.mrb[0].mxu0
      %v1923 = vadd.f32 0.0, %v1922
      %v1924 = vpop.f32.mrb[0].mxu0
      %v1925 = vadd.f32 0.0, %v1924
      %v1926 = vpop.f32.mrb[0].mxu0
      %v1927 = vadd.f32 0.0, %v1926
      %v1928 = vpop.f32.mrb[0].mxu0
      %v1929 = vadd.f32 0.0, %v1928
      %1930 = vdwg.mxu0
      %v1947 = vunpack.c.l.b16 %v1629
      %v1948 = vunpack.c.h.b16 %v1629
      %v1949 = vunpack.c.l.b16 %v1630
      %v1950 = vunpack.c.h.b16 %v1630
      %v1951 = vunpack.c.l.b16 %v1631
      %v1952 = vunpack.c.h.b16 %v1631
      %v1953 = vunpack.c.l.b16 %v1632
      %v1954 = vunpack.c.h.b16 %v1632
      %v1955 = vunpack.c.l.b16 %v1633
      %v1956 = vunpack.c.h.b16 %v1633
      %v1957 = vunpack.c.l.b16 %v1634
      %v1958 = vunpack.c.h.b16 %v1634
      %v1959 = vunpack.c.l.b16 %v1635
      %v1960 = vunpack.c.h.b16 %v1635
      %v1961 = vunpack.c.l.b16 %v1636
      %v1962 = vunpack.c.h.b16 %v1636
      %v1963 = vunpack.c.l.b16 %v1637
      %v1964 = vunpack.c.h.b16 %v1637
      %v1965 = vunpack.c.l.b16 %v1638
      %v1966 = vunpack.c.h.b16 %v1638
      %v1967 = vunpack.c.l.b16 %v1639
      %v1968 = vunpack.c.h.b16 %v1639
      %v1969 = vunpack.c.l.b16 %v1640
      %v1970 = vunpack.c.h.b16 %v1640
      %v1971 = vunpack.c.l.b16 %v1641
      %v1972 = vunpack.c.h.b16 %v1641
      %v1973 = vunpack.c.l.b16 %v1642
      %v1974 = vunpack.c.h.b16 %v1642
      %v1975 = vunpack.c.l.b16 %v1643
      %v1976 = vunpack.c.h.b16 %v1643
      %v1977 = vunpack.c.l.b16 %v1644
      %v1978 = vunpack.c.h.b16 %v1644
      %v1979 = vpack.c.b16 %v1949, %v1947
      %v1980 = vpack.c.b16 %v1950, %v1948
      %v1981 = vpack.c.b16 %v1953, %v1951
      %v1982 = vpack.c.b16 %v1954, %v1952
      %v1983 = vpack.c.b16 %v1957, %v1955
      %v1984 = vpack.c.b16 %v1958, %v1956
      %v1985 = vpack.c.b16 %v1961, %v1959
      %v1986 = vpack.c.b16 %v1962, %v1960
      %v1987 = vpack.c.b16 %v1965, %v1963
      %v1988 = vpack.c.b16 %v1966, %v1964
      %v1989 = vpack.c.b16 %v1969, %v1967
      %v1990 = vpack.c.b16 %v1970, %v1968
      %v1991 = vpack.c.b16 %v1973, %v1971
      %v1992 = vpack.c.b16 %v1974, %v1972
      %v1993 = vpack.c.b16 %v1977, %v1975
      %v1994 = vpack.c.b16 %v1978, %v1976
      %2011 = vmatprep.subr.bf16.mxu0 %v1980
      %2012 = vmatpush1.bf16.msra.mxu0 %v1979
      %2013 = vmatprep.subr.bf16.mxu0 %v1982
      %2014 = vmatpush1.bf16.msra.mxu0 %v1981
      %2015 = vmatprep.subr.bf16.mxu0 %v1984
      %2016 = vmatpush1.bf16.msra.mxu0 %v1983
      %2017 = vmatprep.subr.bf16.mxu0 %v1986
      %2018 = vmatpush1.bf16.msra.mxu0 %v1985
      %2019 = vmatprep.subr.bf16.mxu0 %v1988
      %2020 = vmatpush1.bf16.msra.mxu0 %v1987
      %2021 = vmatprep.subr.bf16.mxu0 %v1990
      %2022 = vmatpush1.bf16.msra.mxu0 %v1989
      %2023 = vmatprep.subr.bf16.mxu0 %v1992
      %2024 = vmatpush1.bf16.msra.mxu0 %v1991
      %2025 = vmatprep.subr.bf16.mxu0 %v1994
      %2026 = vmatpush1.bf16.msra.mxu0 %v1993
      %2027 = vmatprep.subr.bf16.mxu0 0
      %2028 = vmatpush1.bf16.msra.mxu0 0
      %2029 = vmatprep.subr.bf16.mxu0 0
      %2030 = vmatpush1.bf16.msra.mxu0 0
      %2031 = vmatprep.subr.bf16.mxu0 0
      %2032 = vmatpush1.bf16.msra.mxu0 0
      %2033 = vmatprep.subr.bf16.mxu0 0
      %2034 = vmatpush1.bf16.msra.mxu0 0
      %2035 = vmatprep.subr.bf16.mxu0 0
      %2036 = vmatpush1.bf16.msra.mxu0 0
      %2037 = vmatprep.subr.bf16.mxu0 0
      %2038 = vmatpush1.bf16.msra.mxu0 0
      %2039 = vmatprep.subr.bf16.mxu0 0
      %2040 = vmatpush1.bf16.msra.mxu0 0
      %2041 = vmatprep.subr.bf16.mxu0 0
      %2042 = vmatpush1.bf16.msra.mxu0 0
      %2043 = vmatprep.mubr.bf16.mxu0 0
      %2044 = vmatmul.mubr.bf16.gmra.mrb[0].mxu0 %v414
      %v2045 = vpop.f32.mrb[0].mxu0
      %v2046 = vpop.f32.mrb[0].mxu0
      %v2047 = vpop.f32.mrb[0].mxu0
      %v2048 = vpop.f32.mrb[0].mxu0
      %2049 = vmatprep.mubr.bf16.mxu0 0
      %2050 = vmatmul.mubr.bf16.gmra.mrb[0].mxu0 %v415
      %v2051 = vpop.f32.mrb[0].mxu0
      %v2052 = vadd.f32 %v1783, %v2051
      %v2053 = vpop.f32.mrb[0].mxu0
      %v2054 = vadd.f32 %v1785, %v2053
      %v2055 = vpop.f32.mrb[0].mxu0
      %v2056 = vadd.f32 %v1787, %v2055
      %v2057 = vpop.f32.mrb[0].mxu0
      %v2058 = vadd.f32 %v1789, %v2057
      %2059 = vmatprep.mubr.bf16.mxu0 0
      %2060 = vmatmul.mubr.bf16.gmra.mrb[0].mxu0 %v416
      %v2061 = vpop.f32.mrb[0].mxu0
      %v2062 = vadd.f32 %v1793, %v2061
      %v2063 = vpop.f32.mrb[0].mxu0
      %v2064 = vadd.f32 %v1795, %v2063
      %v2065 = vpop.f32.mrb[0].mxu0
      %v2066 = vadd.f32 %v1797, %v2065
      %v2067 = vpop.f32.mrb[0].mxu0
      %v2068 = vadd.f32 %v1799, %v2067
      %2069 = vmatprep.mubr.bf16.mxu0 0
      %2070 = vmatmul.mubr.bf16.gmra.mrb[0].mxu0 %v417
      %v2071 = vpop.f32.mrb[0].mxu0
      %v2072 = vadd.f32 %v1803, %v2071
      %v2073 = vpop.f32.mrb[0].mxu0
      %v2074 = vadd.f32 %v1805, %v2073
      %v2075 = vpop.f32.mrb[0].mxu0
      %v2076 = vadd.f32 %v1807, %v2075
      %v2077 = vpop.f32.mrb[0].mxu0
      %v2078 = vadd.f32 %v1809, %v2077
      %2079 = vmatprep.mubr.bf16.mxu0 0
      %2080 = vmatmul.mubr.bf16.gmra.mrb[0].mxu0 %v418
      %v2081 = vpop.f32.mrb[0].mxu0
      %v2082 = vadd.f32 %v1813, %v2081
      %v2083 = vpop.f32.mrb[0].mxu0
      %v2084 = vadd.f32 %v1815, %v2083
      %v2085 = vpop.f32.mrb[0].mxu0
      %v2086 = vadd.f32 %v1817, %v2085
      %v2087 = vpop.f32.mrb[0].mxu0
      %v2088 = vadd.f32 %v1819, %v2087
      %2089 = vmatprep.mubr.bf16.mxu0 0
      %2090 = vmatmul.mubr.bf16.gmra.mrb[0].mxu0 %v419
      %v2091 = vpop.f32.mrb[0].mxu0
      %v2092 = vadd.f32 %v1823, %v2091
      %v2093 = vpop.f32.mrb[0].mxu0
      %v2094 = vadd.f32 %v1825, %v2093
      %v2095 = vpop.f32.mrb[0].mxu0
      %v2096 = vadd.f32 %v1827, %v2095
      %v2097 = vpop.f32.mrb[0].mxu0
      %v2098 = vadd.f32 %v1829, %v2097
      %2099 = vmatprep.mubr.bf16.mxu0 0
      %2100 = vmatmul.mubr.bf16.gmra.mrb[0].mxu0 %v420
      %v2101 = vpop.f32.mrb[0].mxu0
      %v2102 = vadd.f32 %v1833, %v2101
      %v2103 = vpop.f32.mrb[0].mxu0
      %v2104 = vadd.f32 %v1835, %v2103
      %v2105 = vpop.f32.mrb[0].mxu0
      %v2106 = vadd.f32 %v1837, %v2105
      %v2107 = vpop.f32.mrb[0].mxu0
      %v2108 = vadd.f32 %v1839, %v2107
      %2109 = vmatprep.mubr.bf16.mxu0 0
      %2110 = vmatmul.mubr.bf16.gmra.mrb[0].mxu0 %v421
      %v2111 = vpop.f32.mrb[0].mxu0
      %v2112 = vadd.f32 %v1843, %v2111
      %v2113 = vpop.f32.mrb[0].mxu0
      %v2114 = vadd.f32 %v1845, %v2113
      %v2115 = vpop.f32.mrb[0].mxu0
      %v2116 = vadd.f32 %v1847, %v2115
      %v2117 = vpop.f32.mrb[0].mxu0
      %v2118 = vadd.f32 %v1849, %v2117
      %2119 = vmatprep.mubr.bf16.mxu0 0
      %2120 = vmatmul.mubr.bf16.gmra.mrb[0].mxu0 %v422
      %v2121 = vpop.f32.mrb[0].mxu0
      %v2122 = vadd.f32 %v1853, %v2121
      %v2123 = vpop.f32.mrb[0].mxu0
      %v2124 = vadd.f32 %v1855, %v2123
      %v2125 = vpop.f32.mrb[0].mxu0
      %v2126 = vadd.f32 %v1857, %v2125
      %v2127 = vpop.f32.mrb[0].mxu0
      %v2128 = vadd.f32 %v1859, %v2127
      %2129 = vmatprep.mubr.bf16.mxu0 0
      %2130 = vmatmul.mubr.bf16.gmra.mrb[0].mxu0 %v423
      %v2131 = vpop.f32.mrb[0].mxu0
      %v2132 = vadd.f32 %v1863, %v2131
      %v2133 = vpop.f32.mrb[0].mxu0
      %v2134 = vadd.f32 %v1865, %v2133
      %v2135 = vpop.f32.mrb[0].mxu0
      %v2136 = vadd.f32 %v1867, %v2135
      %v2137 = vpop.f32.mrb[0].mxu0
      %v2138 = vadd.f32 %v1869, %v2137
      %2139 = vmatprep.mubr.bf16.mxu0 0
      %2140 = vmatmul.mubr.bf16.gmra.mrb[0].mxu0 %v424
      %v2141 = vpop.f32.mrb[0].mxu0
      %v2142 = vadd.f32 %v1873, %v2141
      %v2143 = vpop.f32.mrb[0].mxu0
      %v2144 = vadd.f32 %v1875, %v2143
      %v2145 = vpop.f32.mrb[0].mxu0
      %v2146 = vadd.f32 %v1877, %v2145
      %v2147 = vpop.f32.mrb[0].mxu0
      %v2148 = vadd.f32 %v1879, %v2147
      %2149 = vmatprep.mubr.bf16.mxu0 0
      %2150 = vmatmul.mubr.bf16.gmra.mrb[0].mxu0 %v425
      %v2151 = vpop.f32.mrb[0].mxu0
      %v2152 = vadd.f32 %v1883, %v2151
      %v2153 = vpop.f32.mrb[0].mxu0
      %v2154 = vadd.f32 %v1885, %v2153
      %v2155 = vpop.f32.mrb[0].mxu0
      %v2156 = vadd.f32 %v1887, %v2155
      %v2157 = vpop.f32.mrb[0].mxu0
      %v2158 = vadd.f32 %v1889, %v2157
      %2159 = vmatprep.mubr.bf16.mxu0 0
      %2160 = vmatmul.mubr.bf16.gmra.mrb[0].mxu0 %v426
      %v2161 = vpop.f32.mrb[0].mxu0
      %v2162 = vadd.f32 %v1893, %v2161
      %v2163 = vpop.f32.mrb[0].mxu0
      %v2164 = vadd.f32 %v1895, %v2163
      %v2165 = vpop.f32.mrb[0].mxu0
      %v2166 = vadd.f32 %v1897, %v2165
      %v2167 = vpop.f32.mrb[0].mxu0
      %v2168 = vadd.f32 %v1899, %v2167
      %2169 = vmatprep.mubr.bf16.mxu0 0
      %2170 = vmatmul.mubr.bf16.gmra.mrb[0].mxu0 %v427
      %v2171 = vpop.f32.mrb[0].mxu0
      %v2172 = vadd.f32 %v1903, %v2171
      %v2173 = vpop.f32.mrb[0].mxu0
      %v2174 = vadd.f32 %v1905, %v2173
      %v2175 = vpop.f32.mrb[0].mxu0
      %v2176 = vadd.f32 %v1907, %v2175
      %v2177 = vpop.f32.mrb[0].mxu0
      %v2178 = vadd.f32 %v1909, %v2177
      %2179 = vmatprep.mubr.bf16.mxu0 0
      %2180 = vmatmul.mubr.bf16.gmra.mrb[0].mxu0 %v428
      %v2181 = vpop.f32.mrb[0].mxu0
      %v2182 = vadd.f32 %v1913, %v2181
      %v2183 = vpop.f32.mrb[0].mxu0
      %v2184 = vadd.f32 %v1915, %v2183
      %v2185 = vpop.f32.mrb[0].mxu0
      %v2186 = vadd.f32 %v1917, %v2185
      %v2187 = vpop.f32.mrb[0].mxu0
      %v2188 = vadd.f32 %v1919, %v2187
      %2189 = vmatprep.mubr.bf16.mxu0 0
      %2190 = vmatmul.mubr.bf16.gmra.mrb[0].mxu0 %v429
      %v2191 = vpop.f32.mrb[0].mxu0
      %v2192 = vadd.f32 %v1923, %v2191
      %v2193 = vpop.f32.mrb[0].mxu0
      %v2194 = vadd.f32 %v1925, %v2193
      %v2195 = vpop.f32.mrb[0].mxu0
      %v2196 = vadd.f32 %v1927, %v2195
      %v2197 = vpop.f32.mrb[0].mxu0
      %v2198 = vadd.f32 %v1929, %v2197
      %2199 = vdwg.mxu0
      %v2200 = vld [vmem:[%s4] sm:$0x3]
      %v2202 = vlaneseq
      %v2203 = vshrl.u32 %v2202, 7
      %v2204 = vsub.s32 0, %v2203
      %v2205 = vrot.slane %v2200, %v2204
      %v2206 = vlaneseq
      %v2207 = vshrl.u32 %v2206, 7
      %v2208 = vsub.s32 1, %v2207
      %v2209 = vrot.slane %v2200, %v2208
      %v2212 = vadd.f32 %v1470, %v2205
      %v2213 = vadd.f32 %v1472, %v2209
      %v2214 = vadd.f32 %v1474, %v2205
      %v2215 = vadd.f32 %v1476, %v2209
      %v2216 = vadd.f32 %v1480, %v2205
      %v2217 = vadd.f32 %v1482, %v2209
      %v2218 = vadd.f32 %v1484, %v2205
      %v2219 = vadd.f32 %v1486, %v2209
      %v2220 = vadd.f32 %v1490, %v2205
      %v2221 = vadd.f32 %v1492, %v2209
      %v2222 = vadd.f32 %v1494, %v2205
      %v2223 = vadd.f32 %v1496, %v2209
      %v2224 = vadd.f32 %v1500, %v2205
      %v2225 = vadd.f32 %v1502, %v2209
      %v2226 = vadd.f32 %v1504, %v2205
      %v2227 = vadd.f32 %v1506, %v2209
      %v2228 = vadd.f32 %v1510, %v2205
      %v2229 = vadd.f32 %v1512, %v2209
      %v2230 = vadd.f32 %v1514, %v2205
      %v2231 = vadd.f32 %v1516, %v2209
      %v2232 = vadd.f32 %v1520, %v2205
      %v2233 = vadd.f32 %v1522, %v2209
      %v2234 = vadd.f32 %v1524, %v2205
      %v2235 = vadd.f32 %v1526, %v2209
      %v2236 = vadd.f32 %v1530, %v2205
      %v2237 = vadd.f32 %v1532, %v2209
      %v2238 = vadd.f32 %v1534, %v2205
      %v2239 = vadd.f32 %v1536, %v2209
      %v2240 = vadd.f32 %v1540, %v2205
      %v2241 = vadd.f32 %v1542, %v2209
      %v2242 = vadd.f32 %v1544, %v2205
      %v2243 = vadd.f32 %v1546, %v2209
      %v2244 = vadd.f32 %v1550, %v2205
      %v2245 = vadd.f32 %v1552, %v2209
      %v2246 = vadd.f32 %v1554, %v2205
      %v2247 = vadd.f32 %v1556, %v2209
      %v2248 = vadd.f32 %v1560, %v2205
      %v2249 = vadd.f32 %v1562, %v2209
      %v2250 = vadd.f32 %v1564, %v2205
      %v2251 = vadd.f32 %v1566, %v2209
      %v2252 = vadd.f32 %v1570, %v2205
      %v2253 = vadd.f32 %v1572, %v2209
      %v2254 = vadd.f32 %v1574, %v2205
      %v2255 = vadd.f32 %v1576, %v2209
      %v2256 = vadd.f32 %v1580, %v2205
      %v2257 = vadd.f32 %v1582, %v2209
      %v2258 = vadd.f32 %v1584, %v2205
      %v2259 = vadd.f32 %v1586, %v2209
      %v2260 = vadd.f32 %v1590, %v2205
      %v2261 = vadd.f32 %v1592, %v2209
      %v2262 = vadd.f32 %v1594, %v2205
      %v2263 = vadd.f32 %v1596, %v2209
      %v2264 = vadd.f32 %v1600, %v2205
      %v2265 = vadd.f32 %v1602, %v2209
      %v2266 = vadd.f32 %v1604, %v2205
      %v2267 = vadd.f32 %v1606, %v2209
      %v2268 = vadd.f32 %v1610, %v2205
      %v2269 = vadd.f32 %v1612, %v2209
      %v2270 = vadd.f32 %v1614, %v2205
      %v2271 = vadd.f32 %v1616, %v2209
      %v2272 = vadd.f32 %v1620, %v2205
      %v2273 = vadd.f32 %v1622, %v2209
      %v2274 = vadd.f32 %v1624, %v2205
      %v2275 = vadd.f32 %v1626, %v2209
      %v2276 = vadd.f32 %v2052, 0.0
      %v2277 = vadd.f32 %v2054, 0.0
      %v2278 = vadd.f32 %v2056, 0.0
      %v2279 = vadd.f32 %v2058, 0.0
      %v2280 = vadd.f32 %v894, %v2062
      %v2281 = vadd.f32 %v896, %v2064
      %v2282 = vadd.f32 %v898, %v2066
      %v2283 = vadd.f32 %v900, %v2068
      %v2284 = vadd.f32 %v904, %v2072
      %v2285 = vadd.f32 %v906, %v2074
      %v2286 = vadd.f32 %v908, %v2076
      %v2287 = vadd.f32 %v910, %v2078
      %v2288 = vadd.f32 %v914, %v2082
      %v2289 = vadd.f32 %v916, %v2084
      %v2290 = vadd.f32 %v918, %v2086
      %v2291 = vadd.f32 %v920, %v2088
      %v2292 = vadd.f32 %v924, %v2092
      %v2293 = vadd.f32 %v926, %v2094
      %v2294 = vadd.f32 %v928, %v2096
      %v2295 = vadd.f32 %v930, %v2098
      %v2296 = vadd.f32 %v934, %v2102
      %v2297 = vadd.f32 %v936, %v2104
      %v2298 = vadd.f32 %v938, %v2106
      %v2299 = vadd.f32 %v940, %v2108
      %v2300 = vadd.f32 %v944, %v2112
      %v2301 = vadd.f32 %v946, %v2114
      %v2302 = vadd.f32 %v948, %v2116
      %v2303 = vadd.f32 %v950, %v2118
      %v2304 = vadd.f32 %v954, %v2122
      %v2305 = vadd.f32 %v956, %v2124
      %v2306 = vadd.f32 %v958, %v2126
      %v2307 = vadd.f32 %v960, %v2128
      %v2308 = vadd.f32 %v964, %v2132
      %v2309 = vadd.f32 %v966, %v2134
      %v2310 = vadd.f32 %v968, %v2136
      %v2311 = vadd.f32 %v970, %v2138
      %v2312 = vadd.f32 %v974, %v2142
      %v2313 = vadd.f32 %v976, %v2144
      %v2314 = vadd.f32 %v978, %v2146
      %v2315 = vadd.f32 %v980, %v2148
      %v2316 = vadd.f32 %v984, %v2152
      %v2317 = vadd.f32 %v986, %v2154
      %v2318 = vadd.f32 %v988, %v2156
      %v2319 = vadd.f32 %v990, %v2158
      %v2320 = vadd.f32 %v994, %v2162
      %v2321 = vadd.f32 %v996, %v2164
      %v2322 = vadd.f32 %v998, %v2166
      %v2323 = vadd.f32 %v1000, %v2168
      %v2324 = vadd.f32 %v1004, %v2172
      %v2325 = vadd.f32 %v1006, %v2174
      %v2326 = vadd.f32 %v1008, %v2176
      %v2327 = vadd.f32 %v1010, %v2178
      %v2328 = vadd.f32 %v1014, %v2182
      %v2329 = vadd.f32 %v1016, %v2184
      %v2330 = vadd.f32 %v1018, %v2186
      %v2331 = vadd.f32 %v1020, %v2188
      %v2332 = vadd.f32 %v1024, %v2192
      %v2333 = vadd.f32 %v1026, %v2194
      %v2334 = vadd.f32 %v1028, %v2196
      %v2335 = vadd.f32 %v1030, %v2198
      %v2336 = vadd.f32 %v1034, 0.0
      %v2337 = vadd.f32 %v1036, 0.0
      %v2338 = vadd.f32 %v1038, 0.0
      %v2339 = vadd.f32 %v1040, 0.0
      %v2340 = vadd.f32 %v2212, %v2276
      %v2341 = vadd.f32 %v2213, %v2277
      %v2342 = vadd.f32 %v2214, %v2278
      %v2343 = vadd.f32 %v2215, %v2279
      %v2344 = vadd.f32 %v2216, %v2280
      %v2345 = vadd.f32 %v2217, %v2281
      %v2346 = vadd.f32 %v2218, %v2282
      %v2347 = vadd.f32 %v2219, %v2283
      %v2348 = vadd.f32 %v2220, %v2284
      %v2349 = vadd.f32 %v2221, %v2285
      %v2350 = vadd.f32 %v2222, %v2286
      %v2351 = vadd.f32 %v2223, %v2287
      %v2352 = vadd.f32 %v2224, %v2288
      %v2353 = vadd.f32 %v2225, %v2289
      %v2354 = vadd.f32 %v2226, %v2290
      %v2355 = vadd.f32 %v2227, %v2291
      %v2356 = vadd.f32 %v2228, %v2292
      %v2357 = vadd.f32 %v2229, %v2293
      %v2358 = vadd.f32 %v2230, %v2294
      %v2359 = vadd.f32 %v2231, %v2295
      %v2360 = vadd.f32 %v2232, %v2296
      %v2361 = vadd.f32 %v2233, %v2297
      %v2362 = vadd.f32 %v2234, %v2298
      %v2363 = vadd.f32 %v2235, %v2299
      %v2364 = vadd.f32 %v2236, %v2300
      %v2365 = vadd.f32 %v2237, %v2301
      %v2366 = vadd.f32 %v2238, %v2302
      %v2367 = vadd.f32 %v2239, %v2303
      %v2368 = vadd.f32 %v2240, %v2304
      %v2369 = vadd.f32 %v2241, %v2305
      %v2370 = vadd.f32 %v2242, %v2306
      %v2371 = vadd.f32 %v2243, %v2307
      %v2372 = vadd.f32 %v2244, %v2308
      %v2373 = vadd.f32 %v2245, %v2309
      %v2374 = vadd.f32 %v2246, %v2310
      %v2375 = vadd.f32 %v2247, %v2311
      %v2376 = vadd.f32 %v2248, %v2312
      %v2377 = vadd.f32 %v2249, %v2313
      %v2378 = vadd.f32 %v2250, %v2314
      %v2379 = vadd.f32 %v2251, %v2315
      %v2380 = vadd.f32 %v2252, %v2316
      %v2381 = vadd.f32 %v2253, %v2317
      %v2382 = vadd.f32 %v2254, %v2318
      %v2383 = vadd.f32 %v2255, %v2319
      %v2384 = vadd.f32 %v2256, %v2320
      %v2385 = vadd.f32 %v2257, %v2321
      %v2386 = vadd.f32 %v2258, %v2322
      %v2387 = vadd.f32 %v2259, %v2323
      %v2388 = vadd.f32 %v2260, %v2324
      %v2389 = vadd.f32 %v2261, %v2325
      %v2390 = vadd.f32 %v2262, %v2326
      %v2391 = vadd.f32 %v2263, %v2327
      %v2392 = vadd.f32 %v2264, %v2328
      %v2393 = vadd.f32 %v2265, %v2329
      %v2394 = vadd.f32 %v2266, %v2330
      %v2395 = vadd.f32 %v2267, %v2331
      %v2396 = vadd.f32 %v2268, %v2332
      %v2397 = vadd.f32 %v2269, %v2333
      %v2398 = vadd.f32 %v2270, %v2334
      %v2399 = vadd.f32 %v2271, %v2335
      %v2400 = vadd.f32 %v2272, %v2336
      %v2401 = vadd.f32 %v2273, %v2337
      %v2402 = vadd.f32 %v2274, %v2338
      %v2403 = vadd.f32 %v2275, %v2339
      %v2404 = vxor.u32 %v2340, 2147483648
      %v2405 = vxor.u32 %v2342, 2147483648
      %v2406 = vxor.u32 %v2344, 2147483648
      %v2407 = vxor.u32 %v2346, 2147483648
      %v2408 = vxor.u32 %v2348, 2147483648
      %v2409 = vxor.u32 %v2350, 2147483648
      %v2410 = vxor.u32 %v2352, 2147483648
      %v2411 = vxor.u32 %v2354, 2147483648
      %v2412 = vxor.u32 %v2356, 2147483648
      %v2413 = vxor.u32 %v2358, 2147483648
      %v2414 = vxor.u32 %v2360, 2147483648
      %v2415 = vxor.u32 %v2362, 2147483648
      %v2416 = vxor.u32 %v2364, 2147483648
      %v2417 = vxor.u32 %v2366, 2147483648
      %v2418 = vxor.u32 %v2368, 2147483648
      %v2419 = vxor.u32 %v2370, 2147483648
      %v2420 = vxor.u32 %v2372, 2147483648
      %v2421 = vxor.u32 %v2374, 2147483648
      %v2422 = vxor.u32 %v2376, 2147483648
      %v2423 = vxor.u32 %v2378, 2147483648
      %v2424 = vxor.u32 %v2380, 2147483648
      %v2425 = vxor.u32 %v2382, 2147483648
      %v2426 = vxor.u32 %v2384, 2147483648
      %v2427 = vxor.u32 %v2386, 2147483648
      %v2428 = vxor.u32 %v2388, 2147483648
      %v2429 = vxor.u32 %v2390, 2147483648
      %v2430 = vxor.u32 %v2392, 2147483648
      %v2431 = vxor.u32 %v2394, 2147483648
      %v2432 = vxor.u32 %v2396, 2147483648
      %v2433 = vxor.u32 %v2398, 2147483648
      %v2434 = vxor.u32 %v2400, 2147483648
      %v2435 = vxor.u32 %v2402, 2147483648
      %v2436 = vmul.f32 %v2404, 1.442695
      %v2437 = vpow.pop %v2436
      %v2438 = vmul.f32 %v2405, 1.442695
      %v2439 = vpow.pop %v2438
      %v2440 = vmul.f32 %v2406, 1.442695
      %v2441 = vpow.pop %v2440
      %v2442 = vmul.f32 %v2407, 1.442695
      %v2443 = vpow.pop %v2442
      %v2444 = vmul.f32 %v2408, 1.442695
      %v2445 = vpow.pop %v2444
      %v2446 = vmul.f32 %v2409, 1.442695
      %v2447 = vpow.pop %v2446
      %v2448 = vmul.f32 %v2410, 1.442695
      %v2449 = vpow.pop %v2448
      %v2450 = vmul.f32 %v2411, 1.442695
      %v2451 = vpow.pop %v2450
      %v2452 = vmul.f32 %v2412, 1.442695
      %v2453 = vpow.pop %v2452
      %v2454 = vmul.f32 %v2413, 1.442695
      %v2455 = vpow.pop %v2454
      %v2456 = vmul.f32 %v2414, 1.442695
      %v2457 = vpow.pop %v2456
      %v2458 = vmul.f32 %v2415, 1.442695
      %v2459 = vpow.pop %v2458
      %v2460 = vmul.f32 %v2416, 1.442695
      %v2461 = vpow.pop %v2460
      %v2462 = vmul.f32 %v2417, 1.442695
      %v2463 = vpow.pop %v2462
      %v2464 = vmul.f32 %v2418, 1.442695
      %v2465 = vpow.pop %v2464
      %v2466 = vmul.f32 %v2419, 1.442695
      %v2467 = vpow.pop %v2466
      %v2468 = vmul.f32 %v2420, 1.442695
      %v2469 = vpow.pop %v2468
      %v2470 = vmul.f32 %v2421, 1.442695
      %v2471 = vpow.pop %v2470
      %v2472 = vmul.f32 %v2422, 1.442695
      %v2473 = vpow.pop %v2472
      %v2474 = vmul.f32 %v2423, 1.442695
      %v2475 = vpow.pop %v2474
      %v2476 = vmul.f32 %v2424, 1.442695
      %v2477 = vpow.pop %v2476
      %v2478 = vmul.f32 %v2425, 1.442695
      %v2479 = vpow.pop %v2478
      %v2480 = vmul.f32 %v2426, 1.442695
      %v2481 = vpow.pop %v2480
      %v2482 = vmul.f32 %v2427, 1.442695
      %v2483 = vpow.pop %v2482
      %v2484 = vmul.f32 %v2428, 1.442695
      %v2485 = vpow.pop %v2484
      %v2486 = vmul.f32 %v2429, 1.442695
      %v2487 = vpow.pop %v2486
      %v2488 = vmul.f32 %v2430, 1.442695
      %v2489 = vpow.pop %v2488
      %v2490 = vmul.f32 %v2431, 1.442695
      %v2491 = vpow.pop %v2490
      %v2492 = vmul.f32 %v2432, 1.442695
      %v2493 = vpow.pop %v2492
      %v2494 = vmul.f32 %v2433, 1.442695
      %v2495 = vpow.pop %v2494
      %v2496 = vmul.f32 %v2434, 1.442695
      %v2497 = vpow.pop %v2496
      %v2498 = vmul.f32 %v2435, 1.442695
      %v2499 = vpow.pop %v2498
      %v2500 = vadd.f32 %v2437, 1.0
      %v2501 = vadd.f32 %v2439, 1.0
      %v2502 = vadd.f32 %v2441, 1.0
      %v2503 = vadd.f32 %v2443, 1.0
      %v2504 = vadd.f32 %v2445, 1.0
      %v2505 = vadd.f32 %v2447, 1.0
      %v2506 = vadd.f32 %v2449, 1.0
      %v2507 = vadd.f32 %v2451, 1.0
      %v2508 = vadd.f32 %v2453, 1.0
      %v2509 = vadd.f32 %v2455, 1.0
      %v2510 = vadd.f32 %v2457, 1.0
      %v2511 = vadd.f32 %v2459, 1.0
      %v2512 = vadd.f32 %v2461, 1.0
      %v2513 = vadd.f32 %v2463, 1.0
      %v2514 = vadd.f32 %v2465, 1.0
      %v2515 = vadd.f32 %v2467, 1.0
      %v2516 = vadd.f32 %v2469, 1.0
      %v2517 = vadd.f32 %v2471, 1.0
      %v2518 = vadd.f32 %v2473, 1.0
      %v2519 = vadd.f32 %v2475, 1.0
      %v2520 = vadd.f32 %v2477, 1.0
      %v2521 = vadd.f32 %v2479, 1.0
      %v2522 = vadd.f32 %v2481, 1.0
      %v2523 = vadd.f32 %v2483, 1.0
      %v2524 = vadd.f32 %v2485, 1.0
      %v2525 = vadd.f32 %v2487, 1.0
      %v2526 = vadd.f32 %v2489, 1.0
      %v2527 = vadd.f32 %v2491, 1.0
      %v2528 = vadd.f32 %v2493, 1.0
      %v2529 = vadd.f32 %v2495, 1.0
      %v2530 = vadd.f32 %v2497, 1.0
      %v2531 = vadd.f32 %v2499, 1.0
      %v2532 = vrcp.pop %v2500
      %v2533 = vmul.f32 1.0, %v2532
      %v2534 = vrcp.pop %v2501
      %v2535 = vmul.f32 1.0, %v2534
      %v2536 = vrcp.pop %v2502
      %v2537 = vmul.f32 1.0, %v2536
      %v2538 = vrcp.pop %v2503
      %v2539 = vmul.f32 1.0, %v2538
      %v2540 = vrcp.pop %v2504
      %v2541 = vmul.f32 1.0, %v2540
      %v2542 = vrcp.pop %v2505
      %v2543 = vmul.f32 1.0, %v2542
      %v2544 = vrcp.pop %v2506
      %v2545 = vmul.f32 1.0, %v2544
      %v2546 = vrcp.pop %v2507
      %v2547 = vmul.f32 1.0, %v2546
      %v2548 = vrcp.pop %v2508
      %v2549 = vmul.f32 1.0, %v2548
      %v2550 = vrcp.pop %v2509
      %v2551 = vmul.f32 1.0, %v2550
      %v2552 = vrcp.pop %v2510
      %v2553 = vmul.f32 1.0, %v2552
      %v2554 = vrcp.pop %v2511
      %v2555 = vmul.f32 1.0, %v2554
      %v2556 = vrcp.pop %v2512
      %v2557 = vmul.f32 1.0, %v2556
      %v2558 = vrcp.pop %v2513
      %v2559 = vmul.f32 1.0, %v2558
      %v2560 = vrcp.pop %v2514
      %v2561 = vmul.f32 1.0, %v2560
      %v2562 = vrcp.pop %v2515
      %v2563 = vmul.f32 1.0, %v2562
      %v2564 = vrcp.pop %v2516
      %v2565 = vmul.f32 1.0, %v2564
      %v2566 = vrcp.pop %v2517
      %v2567 = vmul.f32 1.0, %v2566
      %v2568 = vrcp.pop %v2518
      %v2569 = vmul.f32 1.0, %v2568
      %v2570 = vrcp.pop %v2519
      %v2571 = vmul.f32 1.0, %v2570
      %v2572 = vrcp.pop %v2520
      %v2573 = vmul.f32 1.0, %v2572
      %v2574 = vrcp.pop %v2521
      %v2575 = vmul.f32 1.0, %v2574
      %v2576 = vrcp.pop %v2522
      %v2577 = vmul.f32 1.0, %v2576
      %v2578 = vrcp.pop %v2523
      %v2579 = vmul.f32 1.0, %v2578
      %v2580 = vrcp.pop %v2524
      %v2581 = vmul.f32 1.0, %v2580
      %v2582 = vrcp.pop %v2525
      %v2583 = vmul.f32 1.0, %v2582
      %v2584 = vrcp.pop %v2526
      %v2585 = vmul.f32 1.0, %v2584
      %v2586 = vrcp.pop %v2527
      %v2587 = vmul.f32 1.0, %v2586
      %v2588 = vrcp.pop %v2528
      %v2589 = vmul.f32 1.0, %v2588
      %v2590 = vrcp.pop %v2529
      %v2591 = vmul.f32 1.0, %v2590
      %v2592 = vrcp.pop %v2530
      %v2593 = vmul.f32 1.0, %v2592
      %v2594 = vrcp.pop %v2531
      %v2595 = vmul.f32 1.0, %v2594
      %v2596 = vxor.u32 %v2341, 2147483648
      %v2597 = vxor.u32 %v2343, 2147483648
      %v2598 = vxor.u32 %v2345, 2147483648
      %v2599 = vxor.u32 %v2347, 2147483648
      %v2600 = vxor.u32 %v2349, 2147483648
      %v2601 = vxor.u32 %v2351, 2147483648
      %v2602 = vxor.u32 %v2353, 2147483648
      %v2603 = vxor.u32 %v2355, 2147483648
      %v2604 = vxor.u32 %v2357, 2147483648
      %v2605 = vxor.u32 %v2359, 2147483648
      %v2606 = vxor.u32 %v2361, 2147483648
      %v2607 = vxor.u32 %v2363, 2147483648
      %v2608 = vxor.u32 %v2365, 2147483648
      %v2609 = vxor.u32 %v2367, 2147483648
      %v2610 = vxor.u32 %v2369, 2147483648
      %v2611 = vxor.u32 %v2371, 2147483648
      %v2612 = vxor.u32 %v2373, 2147483648
      %v2613 = vxor.u32 %v2375, 2147483648
      %v2614 = vxor.u32 %v2377, 2147483648
      %v2615 = vxor.u32 %v2379, 2147483648
      %v2616 = vxor.u32 %v2381, 2147483648
      %v2617 = vxor.u32 %v2383, 2147483648
      %v2618 = vxor.u32 %v2385, 2147483648
      %v2619 = vxor.u32 %v2387, 2147483648
      %v2620 = vxor.u32 %v2389, 2147483648
      %v2621 = vxor.u32 %v2391, 2147483648
      %v2622 = vxor.u32 %v2393, 2147483648
      %v2623 = vxor.u32 %v2395, 2147483648
      %v2624 = vxor.u32 %v2397, 2147483648
      %v2625 = vxor.u32 %v2399, 2147483648
      %v2626 = vxor.u32 %v2401, 2147483648
      %v2627 = vxor.u32 %v2403, 2147483648
      %v2628 = vmul.f32 %v2596, 1.442695
      %v2629 = vpow.pop %v2628
      %v2630 = vmul.f32 %v2597, 1.442695
      %v2631 = vpow.pop %v2630
      %v2632 = vmul.f32 %v2598, 1.442695
      %v2633 = vpow.pop %v2632
      %v2634 = vmul.f32 %v2599, 1.442695
      %v2635 = vpow.pop %v2634
      %v2636 = vmul.f32 %v2600, 1.442695
      %v2637 = vpow.pop %v2636
      %v2638 = vmul.f32 %v2601, 1.442695
      %v2639 = vpow.pop %v2638
      %v2640 = vmul.f32 %v2602, 1.442695
      %v2641 = vpow.pop %v2640
      %v2642 = vmul.f32 %v2603, 1.442695
      %v2643 = vpow.pop %v2642
      %v2644 = vmul.f32 %v2604, 1.442695
      %v2645 = vpow.pop %v2644
      %v2646 = vmul.f32 %v2605, 1.442695
      %v2647 = vpow.pop %v2646
      %v2648 = vmul.f32 %v2606, 1.442695
      %v2649 = vpow.pop %v2648
      %v2650 = vmul.f32 %v2607, 1.442695
      %v2651 = vpow.pop %v2650
      %v2652 = vmul.f32 %v2608, 1.442695
      %v2653 = vpow.pop %v2652
      %v2654 = vmul.f32 %v2609, 1.442695
      %v2655 = vpow.pop %v2654
      %v2656 = vmul.f32 %v2610, 1.442695
      %v2657 = vpow.pop %v2656
      %v2658 = vmul.f32 %v2611, 1.442695
      %v2659 = vpow.pop %v2658
      %v2660 = vmul.f32 %v2612, 1.442695
      %v2661 = vpow.pop %v2660
      %v2662 = vmul.f32 %v2613, 1.442695
      %v2663 = vpow.pop %v2662
      %v2664 = vmul.f32 %v2614, 1.442695
      %v2665 = vpow.pop %v2664
      %v2666 = vmul.f32 %v2615, 1.442695
      %v2667 = vpow.pop %v2666
      %v2668 = vmul.f32 %v2616, 1.442695
      %v2669 = vpow.pop %v2668
      %v2670 = vmul.f32 %v2617, 1.442695
      %v2671 = vpow.pop %v2670
      %v2672 = vmul.f32 %v2618, 1.442695
      %v2673 = vpow.pop %v2672
      %v2674 = vmul.f32 %v2619, 1.442695
      %v2675 = vpow.pop %v2674
      %v2676 = vmul.f32 %v2620, 1.442695
      %v2677 = vpow.pop %v2676
      %v2678 = vmul.f32 %v2621, 1.442695
      %v2679 = vpow.pop %v2678
      %v2680 = vmul.f32 %v2622, 1.442695
      %v2681 = vpow.pop %v2680
      %v2682 = vmul.f32 %v2623, 1.442695
      %v2683 = vpow.pop %v2682
      %v2684 = vmul.f32 %v2624, 1.442695
      %v2685 = vpow.pop %v2684
      %v2686 = vmul.f32 %v2625, 1.442695
      %v2687 = vpow.pop %v2686
      %v2688 = vmul.f32 %v2626, 1.442695
      %v2689 = vpow.pop %v2688
      %v2690 = vmul.f32 %v2627, 1.442695
      %v2691 = vpow.pop %v2690
      %v2692 = vadd.f32 %v2629, 1.0
      %v2693 = vadd.f32 %v2631, 1.0
      %v2694 = vadd.f32 %v2633, 1.0
      %v2695 = vadd.f32 %v2635, 1.0
      %v2696 = vadd.f32 %v2637, 1.0
      %v2697 = vadd.f32 %v2639, 1.0
      %v2698 = vadd.f32 %v2641, 1.0
      %v2699 = vadd.f32 %v2643, 1.0
      %v2700 = vadd.f32 %v2645, 1.0
      %v2701 = vadd.f32 %v2647, 1.0
      %v2702 = vadd.f32 %v2649, 1.0
      %v2703 = vadd.f32 %v2651, 1.0
      %v2704 = vadd.f32 %v2653, 1.0
      %v2705 = vadd.f32 %v2655, 1.0
      %v2706 = vadd.f32 %v2657, 1.0
      %v2707 = vadd.f32 %v2659, 1.0
      %v2708 = vadd.f32 %v2661, 1.0
      %v2709 = vadd.f32 %v2663, 1.0
      %v2710 = vadd.f32 %v2665, 1.0
      %v2711 = vadd.f32 %v2667, 1.0
      %v2712 = vadd.f32 %v2669, 1.0
      %v2713 = vadd.f32 %v2671, 1.0
      %v2714 = vadd.f32 %v2673, 1.0
      %v2715 = vadd.f32 %v2675, 1.0
      %v2716 = vadd.f32 %v2677, 1.0
      %v2717 = vadd.f32 %v2679, 1.0
      %v2718 = vadd.f32 %v2681, 1.0
      %v2719 = vadd.f32 %v2683, 1.0
      %v2720 = vadd.f32 %v2685, 1.0
      %v2721 = vadd.f32 %v2687, 1.0
      %v2722 = vadd.f32 %v2689, 1.0
      %v2723 = vadd.f32 %v2691, 1.0
      %v2724 = vrcp.pop %v2692
      %v2725 = vmul.f32 1.0, %v2724
      %v2726 = vrcp.pop %v2693
      %v2727 = vmul.f32 1.0, %v2726
      %v2728 = vrcp.pop %v2694
      %v2729 = vmul.f32 1.0, %v2728
      %v2730 = vrcp.pop %v2695
      %v2731 = vmul.f32 1.0, %v2730
      %v2732 = vrcp.pop %v2696
      %v2733 = vmul.f32 1.0, %v2732
      %v2734 = vrcp.pop %v2697
      %v2735 = vmul.f32 1.0, %v2734
      %v2736 = vrcp.pop %v2698
      %v2737 = vmul.f32 1.0, %v2736
      %v2738 = vrcp.pop %v2699
      %v2739 = vmul.f32 1.0, %v2738
      %v2740 = vrcp.pop %v2700
      %v2741 = vmul.f32 1.0, %v2740
      %v2742 = vrcp.pop %v2701
      %v2743 = vmul.f32 1.0, %v2742
      %v2744 = vrcp.pop %v2702
      %v2745 = vmul.f32 1.0, %v2744
      %v2746 = vrcp.pop %v2703
      %v2747 = vmul.f32 1.0, %v2746
      %v2748 = vrcp.pop %v2704
      %v2749 = vmul.f32 1.0, %v2748
      %v2750 = vrcp.pop %v2705
      %v2751 = vmul.f32 1.0, %v2750
      %v2752 = vrcp.pop %v2706
      %v2753 = vmul.f32 1.0, %v2752
      %v2754 = vrcp.pop %v2707
      %v2755 = vmul.f32 1.0, %v2754
      %v2756 = vrcp.pop %v2708
      %v2757 = vmul.f32 1.0, %v2756
      %v2758 = vrcp.pop %v2709
      %v2759 = vmul.f32 1.0, %v2758
      %v2760 = vrcp.pop %v2710
      %v2761 = vmul.f32 1.0, %v2760
      %v2762 = vrcp.pop %v2711
      %v2763 = vmul.f32 1.0, %v2762
      %v2764 = vrcp.pop %v2712
      %v2765 = vmul.f32 1.0, %v2764
      %v2766 = vrcp.pop %v2713
      %v2767 = vmul.f32 1.0, %v2766
      %v2768 = vrcp.pop %v2714
      %v2769 = vmul.f32 1.0, %v2768
      %v2770 = vrcp.pop %v2715
      %v2771 = vmul.f32 1.0, %v2770
      %v2772 = vrcp.pop %v2716
      %v2773 = vmul.f32 1.0, %v2772
      %v2774 = vrcp.pop %v2717
      %v2775 = vmul.f32 1.0, %v2774
      %v2776 = vrcp.pop %v2718
      %v2777 = vmul.f32 1.0, %v2776
      %v2778 = vrcp.pop %v2719
      %v2779 = vmul.f32 1.0, %v2778
      %v2780 = vrcp.pop %v2720
      %v2781 = vmul.f32 1.0, %v2780
      %v2782 = vrcp.pop %v2721
      %v2783 = vmul.f32 1.0, %v2782
      %v2784 = vrcp.pop %v2722
      %v2785 = vmul.f32 1.0, %v2784
      %v2786 = vrcp.pop %v2723
      %v2787 = vmul.f32 1.0, %v2786
      %v2788 = vmul.f32 %v2725, %v382
      %v2789 = vmul.f32 %v2727, %v383
      %v2790 = vmul.f32 %v2729, %v384
      %v2791 = vmul.f32 %v2731, %v385
      %v2792 = vmul.f32 %v2733, %v386
      %v2793 = vmul.f32 %v2735, %v387
      %v2794 = vmul.f32 %v2737, %v388
      %v2795 = vmul.f32 %v2739, %v389
      %v2796 = vmul.f32 %v2741, %v390
      %v2797 = vmul.f32 %v2743, %v391
      %v2798 = vmul.f32 %v2745, %v392
      %v2799 = vmul.f32 %v2747, %v393
      %v2800 = vmul.f32 %v2749, %v394
      %v2801 = vmul.f32 %v2751, %v395
      %v2802 = vmul.f32 %v2753, %v396
      %v2803 = vmul.f32 %v2755, %v397
      %v2804 = vmul.f32 %v2757, %v398
      %v2805 = vmul.f32 %v2759, %v399
      %v2806 = vmul.f32 %v2761, %v400
      %v2807 = vmul.f32 %v2763, %v401
      %v2808 = vmul.f32 %v2765, %v402
      %v2809 = vmul.f32 %v2767, %v403
      %v2810 = vmul.f32 %v2769, %v404
      %v2811 = vmul.f32 %v2771, %v405
      %v2812 = vmul.f32 %v2773, %v406
      %v2813 = vmul.f32 %v2775, %v407
      %v2814 = vmul.f32 %v2777, %v408
      %v2815 = vmul.f32 %v2779, %v409
      %v2816 = vmul.f32 %v2781, %v410
      %v2817 = vmul.f32 %v2783, %v411
      %v2818 = vmul.f32 %v2785, %v412
      %v2819 = vmul.f32 %v2787, %v413
      %v2820 = vpack.c.bf16 %v2789, %v2788
      %v2821 = vpack.c.bf16 %v2791, %v2790
      %v2822 = vpack.c.bf16 %v2793, %v2792
      %v2823 = vpack.c.bf16 %v2795, %v2794
      %v2824 = vpack.c.bf16 %v2797, %v2796
      %v2825 = vpack.c.bf16 %v2799, %v2798
      %v2826 = vpack.c.bf16 %v2801, %v2800
      %v2827 = vpack.c.bf16 %v2803, %v2802
      %v2828 = vpack.c.bf16 %v2805, %v2804
      %v2829 = vpack.c.bf16 %v2807, %v2806
      %v2830 = vpack.c.bf16 %v2809, %v2808
      %v2831 = vpack.c.bf16 %v2811, %v2810
      %v2832 = vpack.c.bf16 %v2813, %v2812
      %v2833 = vpack.c.bf16 %v2815, %v2814
      %v2834 = vpack.c.bf16 %v2817, %v2816
      %v2835 = vpack.c.bf16 %v2819, %v2818
      %v2836 = vld [vmem:[%s5] sm:$0xf]
      %v2837 = vld [vmem:[%s5 + $0x4] sm:$0xf]
      %v2838 = vld [vmem:[%s5 + $0x8] sm:$0xf]
      %v2839 = vld [vmem:[%s5 + $0xc] sm:$0xf]
      %v2840 = vld [vmem:[%s5 + $0x10] sm:$0xf]
      %v2841 = vld [vmem:[%s5 + $0x14] sm:$0xf]
      %v2842 = vld [vmem:[%s5 + $0x18] sm:$0xf]
      %v2843 = vld [vmem:[%s5 + $0x1c] sm:$0xf]
      %v2844 = vld [vmem:[%s5 + $0x20] sm:$0xf]
      %v2845 = vld [vmem:[%s5 + $0x24] sm:$0xf]
      %v2846 = vld [vmem:[%s5 + $0x28] sm:$0xf]
      %v2847 = vld [vmem:[%s5 + $0x2c] sm:$0xf]
      %v2848 = vld [vmem:[%s5 + $0x30] sm:$0xf]
      %v2849 = vld [vmem:[%s5 + $0x34] sm:$0xf]
      %v2850 = vld [vmem:[%s5 + $0x38] sm:$0xf]
      %v2851 = vld [vmem:[%s5 + $0x3c] sm:$0xf]
      %v2852 = vld [vmem:[%s6] sm:$0xf]
      %v2853 = vld [vmem:[%s6 + $0x4] sm:$0xf]
      %v2854 = vld [vmem:[%s6 + $0x8] sm:$0xf]
      %v2855 = vld [vmem:[%s6 + $0xc] sm:$0xf]
      %v2856 = vld [vmem:[%s6 + $0x10] sm:$0xf]
      %v2857 = vld [vmem:[%s6 + $0x14] sm:$0xf]
      %v2858 = vld [vmem:[%s6 + $0x18] sm:$0xf]
      %v2859 = vld [vmem:[%s6 + $0x1c] sm:$0xf]
      %v2860 = vld [vmem:[%s6 + $0x20] sm:$0xf]
      %v2861 = vld [vmem:[%s6 + $0x24] sm:$0xf]
      %v2862 = vld [vmem:[%s6 + $0x28] sm:$0xf]
      %v2863 = vld [vmem:[%s6 + $0x2c] sm:$0xf]
      %v2864 = vld [vmem:[%s6 + $0x30] sm:$0xf]
      %v2865 = vld [vmem:[%s6 + $0x34] sm:$0xf]
      %v2866 = vld [vmem:[%s6 + $0x38] sm:$0xf]
      %v2867 = vld [vmem:[%s6 + $0x3c] sm:$0xf]
      %v2884 = vunpack.c.l.b16 %v2852
      %v2885 = vunpack.c.l.b16 %v2853
      %v2886 = vunpack.c.l.b16 %v2854
      %v2887 = vunpack.c.l.b16 %v2855
      %v2888 = vunpack.c.l.b16 %v2856
      %v2889 = vunpack.c.l.b16 %v2857
      %v2890 = vunpack.c.l.b16 %v2858
      %v2891 = vunpack.c.l.b16 %v2859
      %v2892 = vunpack.c.l.b16 %v2860
      %v2893 = vunpack.c.l.b16 %v2861
      %v2894 = vunpack.c.l.b16 %v2862
      %v2895 = vunpack.c.l.b16 %v2863
      %v2896 = vunpack.c.l.b16 %v2864
      %v2897 = vunpack.c.l.b16 %v2865
      %v2898 = vunpack.c.l.b16 %v2866
      %v2899 = vunpack.c.l.b16 %v2867
      %v2900 = vpack.c.b16 %v2885, %v2884
      %v2901 = vpack.c.b16 %v2887, %v2886
      %v2902 = vpack.c.b16 %v2889, %v2888
      %v2903 = vpack.c.b16 %v2891, %v2890
      %v2904 = vpack.c.b16 %v2893, %v2892
      %v2905 = vpack.c.b16 %v2895, %v2894
      %v2906 = vpack.c.b16 %v2897, %v2896
      %v2907 = vpack.c.b16 %v2899, %v2898
      %2916 = vmatprep.subr.bf16.mxu0 0
      %2917 = vmatpush1.bf16.msra.mxu0 %v2900
      %2918 = vmatprep.subr.bf16.mxu0 0
      %2919 = vmatpush1.bf16.msra.mxu0 %v2901
      %2920 = vmatprep.subr.bf16.mxu0 0
      %2921 = vmatpush1.bf16.msra.mxu0 %v2902
      %2922 = vmatprep.subr.bf16.mxu0 0
      %2923 = vmatpush1.bf16.msra.mxu0 %v2903
      %2924 = vmatprep.subr.bf16.mxu0 0
      %2925 = vmatpush1.bf16.msra.mxu0 %v2904
      %2926 = vmatprep.subr.bf16.mxu0 0
      %2927 = vmatpush1.bf16.msra.mxu0 %v2905
      %2928 = vmatprep.subr.bf16.mxu0 0
      %2929 = vmatpush1.bf16.msra.mxu0 %v2906
      %2930 = vmatprep.subr.bf16.mxu0 0
      %2931 = vmatpush1.bf16.msra.mxu0 %v2907
      %2932 = vmatprep.subr.bf16.mxu0 0
      %2933 = vmatpush1.bf16.msra.mxu0 0
      %2934 = vmatprep.subr.bf16.mxu0 0
      %2935 = vmatpush1.bf16.msra.mxu0 0
      %2936 = vmatprep.subr.bf16.mxu0 0
      %2937 = vmatpush1.bf16.msra.mxu0 0
      %2938 = vmatprep.subr.bf16.mxu0 0
      %2939 = vmatpush1.bf16.msra.mxu0 0
      %2940 = vmatprep.subr.bf16.mxu0 0
      %2941 = vmatpush1.bf16.msra.mxu0 0
      %2942 = vmatprep.subr.bf16.mxu0 0
      %2943 = vmatpush1.bf16.msra.mxu0 0
      %2944 = vmatprep.subr.bf16.mxu0 0
      %2945 = vmatpush1.bf16.msra.mxu0 0
      %2946 = vmatprep.subr.bf16.mxu0 0
      %2947 = vmatpush1.bf16.msra.mxu0 0
      %2948 = vmatprep.mubr.bf16.mxu0 0
      %2949 = vmatmul.mubr.bf16.gmra.mrb[0].mxu0 %v462
      %v2950 = vpop.f32.mrb[0].mxu0
      %v2951 = vadd.f32 0.0, %v2950
      %v2952 = vpop.f32.mrb[0].mxu0
      %v2953 = vpop.f32.mrb[0].mxu0
      %v2954 = vadd.f32 0.0, %v2953
      %v2955 = vpop.f32.mrb[0].mxu0
      %2956 = vmatprep.mubr.bf16.mxu0 0
      %2957 = vmatmul.mubr.bf16.gmra.mrb[0].mxu0 %v463
      %v2958 = vpop.f32.mrb[0].mxu0
      %v2959 = vadd.f32 0.0, %v2958
      %v2960 = vpop.f32.mrb[0].mxu0
      %v2961 = vpop.f32.mrb[0].mxu0
      %v2962 = vadd.f32 0.0, %v2961
      %v2963 = vpop.f32.mrb[0].mxu0
      %2964 = vmatprep.mubr.bf16.mxu0 0
      %2965 = vmatmul.mubr.bf16.gmra.mrb[0].mxu0 %v464
      %v2966 = vpop.f32.mrb[0].mxu0
      %v2967 = vadd.f32 0.0, %v2966
      %v2968 = vpop.f32.mrb[0].mxu0
      %v2969 = vpop.f32.mrb[0].mxu0
      %v2970 = vadd.f32 0.0, %v2969
      %v2971 = vpop.f32.mrb[0].mxu0
      %2972 = vmatprep.mubr.bf16.mxu0 0
      %2973 = vmatmul.mubr.bf16.gmra.mrb[0].mxu0 %v465
      %v2974 = vpop.f32.mrb[0].mxu0
      %v2975 = vadd.f32 0.0, %v2974
      %v2976 = vpop.f32.mrb[0].mxu0
      %v2977 = vpop.f32.mrb[0].mxu0
      %v2978 = vadd.f32 0.0, %v2977
      %v2979 = vpop.f32.mrb[0].mxu0
      %2980 = vmatprep.mubr.bf16.mxu0 0
      %2981 = vmatmul.mubr.bf16.gmra.mrb[0].mxu0 %v466
      %v2982 = vpop.f32.mrb[0].mxu0
      %v2983 = vadd.f32 0.0, %v2982
      %v2984 = vpop.f32.mrb[0].mxu0
      %v2985 = vpop.f32.mrb[0].mxu0
      %v2986 = vadd.f32 0.0, %v2985
      %v2987 = vpop.f32.mrb[0].mxu0
      %2988 = vmatprep.mubr.bf16.mxu0 0
      %2989 = vmatmul.mubr.bf16.gmra.mrb[0].mxu0 %v467
      %v2990 = vpop.f32.mrb[0].mxu0
      %v2991 = vadd.f32 0.0, %v2990
      %v2992 = vpop.f32.mrb[0].mxu0
      %v2993 = vpop.f32.mrb[0].mxu0
      %v2994 = vadd.f32 0.0, %v2993
      %v2995 = vpop.f32.mrb[0].mxu0
      %2996 = vmatprep.mubr.bf16.mxu0 0
      %2997 = vmatmul.mubr.bf16.gmra.mrb[0].mxu0 %v468
      %v2998 = vpop.f32.mrb[0].mxu0
      %v2999 = vadd.f32 0.0, %v2998
      %v3000 = vpop.f32.mrb[0].mxu0
      %v3001 = vpop.f32.mrb[0].mxu0
      %v3002 = vadd.f32 0.0, %v3001
      %v3003 = vpop.f32.mrb[0].mxu0
      %3004 = vmatprep.mubr.bf16.mxu0 0
      %3005 = vmatmul.mubr.bf16.gmra.mrb[0].mxu0 %v469
      %v3006 = vpop.f32.mrb[0].mxu0
      %v3007 = vadd.f32 0.0, %v3006
      %v3008 = vpop.f32.mrb[0].mxu0
      %v3009 = vpop.f32.mrb[0].mxu0
      %v3010 = vadd.f32 0.0, %v3009
      %v3011 = vpop.f32.mrb[0].mxu0
      %3012 = vmatprep.mubr.bf16.mxu0 0
      %3013 = vmatmul.mubr.bf16.gmra.mrb[0].mxu0 %v470
      %v3014 = vpop.f32.mrb[0].mxu0
      %v3015 = vadd.f32 0.0, %v3014
      %v3016 = vpop.f32.mrb[0].mxu0
      %v3017 = vpop.f32.mrb[0].mxu0
      %v3018 = vadd.f32 0.0, %v3017
      %v3019 = vpop.f32.mrb[0].mxu0
      %3020 = vmatprep.mubr.bf16.mxu0 0
      %3021 = vmatmul.mubr.bf16.gmra.mrb[0].mxu0 %v471
      %v3022 = vpop.f32.mrb[0].mxu0
      %v3023 = vadd.f32 0.0, %v3022
      %v3024 = vpop.f32.mrb[0].mxu0
      %v3025 = vpop.f32.mrb[0].mxu0
      %v3026 = vadd.f32 0.0, %v3025
      %v3027 = vpop.f32.mrb[0].mxu0
      %3028 = vmatprep.mubr.bf16.mxu0 0
      %3029 = vmatmul.mubr.bf16.gmra.mrb[0].mxu0 %v472
      %v3030 = vpop.f32.mrb[0].mxu0
      %v3031 = vadd.f32 0.0, %v3030
      %v3032 = vpop.f32.mrb[0].mxu0
      %v3033 = vpop.f32.mrb[0].mxu0
      %v3034 = vadd.f32 0.0, %v3033
      %v3035 = vpop.f32.mrb[0].mxu0
      %3036 = vmatprep.mubr.bf16.mxu0 0
      %3037 = vmatmul.mubr.bf16.gmra.mrb[0].mxu0 %v473
      %v3038 = vpop.f32.mrb[0].mxu0
      %v3039 = vadd.f32 0.0, %v3038
      %v3040 = vpop.f32.mrb[0].mxu0
      %v3041 = vpop.f32.mrb[0].mxu0
      %v3042 = vadd.f32 0.0, %v3041
      %v3043 = vpop.f32.mrb[0].mxu0
      %3044 = vmatprep.mubr.bf16.mxu0 0
      %3045 = vmatmul.mubr.bf16.gmra.mrb[0].mxu0 %v474
      %v3046 = vpop.f32.mrb[0].mxu0
      %v3047 = vadd.f32 0.0, %v3046
      %v3048 = vpop.f32.mrb[0].mxu0
      %v3049 = vpop.f32.mrb[0].mxu0
      %v3050 = vadd.f32 0.0, %v3049
      %v3051 = vpop.f32.mrb[0].mxu0
      %3052 = vmatprep.mubr.bf16.mxu0 0
      %3053 = vmatmul.mubr.bf16.gmra.mrb[0].mxu0 %v475
      %v3054 = vpop.f32.mrb[0].mxu0
      %v3055 = vadd.f32 0.0, %v3054
      %v3056 = vpop.f32.mrb[0].mxu0
      %v3057 = vpop.f32.mrb[0].mxu0
      %v3058 = vadd.f32 0.0, %v3057
      %v3059 = vpop.f32.mrb[0].mxu0
      %3060 = vmatprep.mubr.bf16.mxu0 0
      %3061 = vmatmul.mubr.bf16.gmra.mrb[0].mxu0 %v476
      %v3062 = vpop.f32.mrb[0].mxu0
      %v3063 = vadd.f32 0.0, %v3062
      %v3064 = vpop.f32.mrb[0].mxu0
      %v3065 = vpop.f32.mrb[0].mxu0
      %v3066 = vadd.f32 0.0, %v3065
      %v3067 = vpop.f32.mrb[0].mxu0
      %3068 = vmatprep.mubr.bf16.mxu0 0
      %3069 = vmatmul.mubr.bf16.gmra.mrb[0].mxu0 %v477
      %v3070 = vpop.f32.mrb[0].mxu0
      %v3071 = vpop.f32.mrb[0].mxu0
      %v3072 = vpop.f32.mrb[0].mxu0
      %v3073 = vpop.f32.mrb[0].mxu0
      %3074 = vdwg.mxu0
      %v3091 = vunpack.c.l.b16 %v2836
      %v3092 = vunpack.c.l.b16 %v2837
      %v3093 = vunpack.c.l.b16 %v2838
      %v3094 = vunpack.c.l.b16 %v2839
      %v3095 = vunpack.c.l.b16 %v2840
      %v3096 = vunpack.c.l.b16 %v2841
      %v3097 = vunpack.c.l.b16 %v2842
      %v3098 = vunpack.c.l.b16 %v2843
      %v3099 = vunpack.c.l.b16 %v2844
      %v3100 = vunpack.c.l.b16 %v2845
      %v3101 = vunpack.c.l.b16 %v2846
      %v3102 = vunpack.c.l.b16 %v2847
      %v3103 = vunpack.c.l.b16 %v2848
      %v3104 = vunpack.c.l.b16 %v2849
      %v3105 = vunpack.c.l.b16 %v2850
      %v3106 = vunpack.c.l.b16 %v2851
      %v3107 = vpack.c.b16 %v3092, %v3091
      %v3108 = vpack.c.b16 %v3094, %v3093
      %v3109 = vpack.c.b16 %v3096, %v3095
      %v3110 = vpack.c.b16 %v3098, %v3097
      %v3111 = vpack.c.b16 %v3100, %v3099
      %v3112 = vpack.c.b16 %v3102, %v3101
      %v3113 = vpack.c.b16 %v3104, %v3103
      %v3114 = vpack.c.b16 %v3106, %v3105
      %3123 = vmatprep.subr.bf16.mxu0 0
      %3124 = vmatpush1.bf16.msra.mxu0 %v3107
      %3125 = vmatprep.subr.bf16.mxu0 0
      %3126 = vmatpush1.bf16.msra.mxu0 %v3108
      %3127 = vmatprep.subr.bf16.mxu0 0
      %3128 = vmatpush1.bf16.msra.mxu0 %v3109
      %3129 = vmatprep.subr.bf16.mxu0 0
      %3130 = vmatpush1.bf16.msra.mxu0 %v3110
      %3131 = vmatprep.subr.bf16.mxu0 0
      %3132 = vmatpush1.bf16.msra.mxu0 %v3111
      %3133 = vmatprep.subr.bf16.mxu0 0
      %3134 = vmatpush1.bf16.msra.mxu0 %v3112
      %3135 = vmatprep.subr.bf16.mxu0 0
      %3136 = vmatpush1.bf16.msra.mxu0 %v3113
      %3137 = vmatprep.subr.bf16.mxu0 0
      %3138 = vmatpush1.bf16.msra.mxu0 %v3114
      %3139 = vmatprep.subr.bf16.mxu0 0
      %3140 = vmatpush1.bf16.msra.mxu0 0
      %3141 = vmatprep.subr.bf16.mxu0 0
      %3142 = vmatpush1.bf16.msra.mxu0 0
      %3143 = vmatprep.subr.bf16.mxu0 0
      %3144 = vmatpush1.bf16.msra.mxu0 0
      %3145 = vmatprep.subr.bf16.mxu0 0
      %3146 = vmatpush1.bf16.msra.mxu0 0
      %3147 = vmatprep.subr.bf16.mxu0 0
      %3148 = vmatpush1.bf16.msra.mxu0 0
      %3149 = vmatprep.subr.bf16.mxu0 0
      %3150 = vmatpush1.bf16.msra.mxu0 0
      %3151 = vmatprep.subr.bf16.mxu0 0
      %3152 = vmatpush1.bf16.msra.mxu0 0
      %3153 = vmatprep.subr.bf16.mxu0 0
      %3154 = vmatpush1.bf16.msra.mxu0 0
      %3155 = vmatprep.mubr.bf16.mxu0 0
      %3156 = vmatmul.mubr.bf16.gmra.mrb[0].mxu0 %v2820
      %v3157 = vpop.f32.mrb[0].mxu0
      %v3158 = vadd.f32 %v2951, %v3157
      %v3159 = vpop.f32.mrb[0].mxu0
      %v3160 = vpop.f32.mrb[0].mxu0
      %v3161 = vadd.f32 %v2954, %v3160
      %v3162 = vpop.f32.mrb[0].mxu0
      %3163 = vmatprep.mubr.bf16.mxu0 0
      %3164 = vmatmul.mubr.bf16.gmra.mrb[0].mxu0 %v2821
      %v3165 = vpop.f32.mrb[0].mxu0
      %v3166 = vadd.f32 %v2959, %v3165
      %v3167 = vpop.f32.mrb[0].mxu0
      %v3168 = vpop.f32.mrb[0].mxu0
      %v3169 = vadd.f32 %v2962, %v3168
      %v3170 = vpop.f32.mrb[0].mxu0
      %3171 = vmatprep.mubr.bf16.mxu0 0
      %3172 = vmatmul.mubr.bf16.gmra.mrb[0].mxu0 %v2822
      %v3173 = vpop.f32.mrb[0].mxu0
      %v3174 = vadd.f32 %v2967, %v3173
      %v3175 = vpop.f32.mrb[0].mxu0
      %v3176 = vpop.f32.mrb[0].mxu0
      %v3177 = vadd.f32 %v2970, %v3176
      %v3178 = vpop.f32.mrb[0].mxu0
      %3179 = vmatprep.mubr.bf16.mxu0 0
      %3180 = vmatmul.mubr.bf16.gmra.mrb[0].mxu0 %v2823
      %v3181 = vpop.f32.mrb[0].mxu0
      %v3182 = vadd.f32 %v2975, %v3181
      %v3183 = vpop.f32.mrb[0].mxu0
      %v3184 = vpop.f32.mrb[0].mxu0
      %v3185 = vadd.f32 %v2978, %v3184
      %v3186 = vpop.f32.mrb[0].mxu0
      %3187 = vmatprep.mubr.bf16.mxu0 0
      %3188 = vmatmul.mubr.bf16.gmra.mrb[0].mxu0 %v2824
      %v3189 = vpop.f32.mrb[0].mxu0
      %v3190 = vadd.f32 %v2983, %v3189
      %v3191 = vpop.f32.mrb[0].mxu0
      %v3192 = vpop.f32.mrb[0].mxu0
      %v3193 = vadd.f32 %v2986, %v3192
      %v3194 = vpop.f32.mrb[0].mxu0
      %3195 = vmatprep.mubr.bf16.mxu0 0
      %3196 = vmatmul.mubr.bf16.gmra.mrb[0].mxu0 %v2825
      %v3197 = vpop.f32.mrb[0].mxu0
      %v3198 = vadd.f32 %v2991, %v3197
      %v3199 = vpop.f32.mrb[0].mxu0
      %v3200 = vpop.f32.mrb[0].mxu0
      %v3201 = vadd.f32 %v2994, %v3200
      %v3202 = vpop.f32.mrb[0].mxu0
      %3203 = vmatprep.mubr.bf16.mxu0 0
      %3204 = vmatmul.mubr.bf16.gmra.mrb[0].mxu0 %v2826
      %v3205 = vpop.f32.mrb[0].mxu0
      %v3206 = vadd.f32 %v2999, %v3205
      %v3207 = vpop.f32.mrb[0].mxu0
      %v3208 = vpop.f32.mrb[0].mxu0
      %v3209 = vadd.f32 %v3002, %v3208
      %v3210 = vpop.f32.mrb[0].mxu0
      %3211 = vmatprep.mubr.bf16.mxu0 0
      %3212 = vmatmul.mubr.bf16.gmra.mrb[0].mxu0 %v2827
      %v3213 = vpop.f32.mrb[0].mxu0
      %v3214 = vadd.f32 %v3007, %v3213
      %v3215 = vpop.f32.mrb[0].mxu0
      %v3216 = vpop.f32.mrb[0].mxu0
      %v3217 = vadd.f32 %v3010, %v3216
      %v3218 = vpop.f32.mrb[0].mxu0
      %3219 = vmatprep.mubr.bf16.mxu0 0
      %3220 = vmatmul.mubr.bf16.gmra.mrb[0].mxu0 %v2828
      %v3221 = vpop.f32.mrb[0].mxu0
      %v3222 = vadd.f32 %v3015, %v3221
      %v3223 = vpop.f32.mrb[0].mxu0
      %v3224 = vpop.f32.mrb[0].mxu0
      %v3225 = vadd.f32 %v3018, %v3224
      %v3226 = vpop.f32.mrb[0].mxu0
      %3227 = vmatprep.mubr.bf16.mxu0 0
      %3228 = vmatmul.mubr.bf16.gmra.mrb[0].mxu0 %v2829
      %v3229 = vpop.f32.mrb[0].mxu0
      %v3230 = vadd.f32 %v3023, %v3229
      %v3231 = vpop.f32.mrb[0].mxu0
      %v3232 = vpop.f32.mrb[0].mxu0
      %v3233 = vadd.f32 %v3026, %v3232
      %v3234 = vpop.f32.mrb[0].mxu0
      %3235 = vmatprep.mubr.bf16.mxu0 0
      %3236 = vmatmul.mubr.bf16.gmra.mrb[0].mxu0 %v2830
      %v3237 = vpop.f32.mrb[0].mxu0
      %v3238 = vadd.f32 %v3031, %v3237
      %v3239 = vpop.f32.mrb[0].mxu0
      %v3240 = vpop.f32.mrb[0].mxu0
      %v3241 = vadd.f32 %v3034, %v3240
      %v3242 = vpop.f32.mrb[0].mxu0
      %3243 = vmatprep.mubr.bf16.mxu0 0
      %3244 = vmatmul.mubr.bf16.gmra.mrb[0].mxu0 %v2831
      %v3245 = vpop.f32.mrb[0].mxu0
      %v3246 = vadd.f32 %v3039, %v3245
      %v3247 = vpop.f32.mrb[0].mxu0
      %v3248 = vpop.f32.mrb[0].mxu0
      %v3249 = vadd.f32 %v3042, %v3248
      %v3250 = vpop.f32.mrb[0].mxu0
      %3251 = vmatprep.mubr.bf16.mxu0 0
      %3252 = vmatmul.mubr.bf16.gmra.mrb[0].mxu0 %v2832
      %v3253 = vpop.f32.mrb[0].mxu0
      %v3254 = vadd.f32 %v3047, %v3253
      %v3255 = vpop.f32.mrb[0].mxu0
      %v3256 = vpop.f32.mrb[0].mxu0
      %v3257 = vadd.f32 %v3050, %v3256
      %v3258 = vpop.f32.mrb[0].mxu0
      %3259 = vmatprep.mubr.bf16.mxu0 0
      %3260 = vmatmul.mubr.bf16.gmra.mrb[0].mxu0 %v2833
      %v3261 = vpop.f32.mrb[0].mxu0
      %v3262 = vadd.f32 %v3055, %v3261
      %v3263 = vpop.f32.mrb[0].mxu0
      %v3264 = vpop.f32.mrb[0].mxu0
      %v3265 = vadd.f32 %v3058, %v3264
      %v3266 = vpop.f32.mrb[0].mxu0
      %3267 = vmatprep.mubr.bf16.mxu0 0
      %3268 = vmatmul.mubr.bf16.gmra.mrb[0].mxu0 %v2834
      %v3269 = vpop.f32.mrb[0].mxu0
      %v3270 = vadd.f32 %v3063, %v3269
      %v3271 = vpop.f32.mrb[0].mxu0
      %v3272 = vpop.f32.mrb[0].mxu0
      %v3273 = vadd.f32 %v3066, %v3272
      %v3274 = vpop.f32.mrb[0].mxu0
      %3275 = vmatprep.mubr.bf16.mxu0 0
      %3276 = vmatmul.mubr.bf16.gmra.mrb[0].mxu0 %v2835
      %v3277 = vpop.f32.mrb[0].mxu0
      %v3278 = vpop.f32.mrb[0].mxu0
      %v3279 = vpop.f32.mrb[0].mxu0
      %v3280 = vpop.f32.mrb[0].mxu0
      %3281 = vdwg.mxu0
      %s3282 = scalar_lea.vmem %s5, 64
      %v3283 = vld [vmem:[%s3282] sm:$0xf]
      %v3284 = vld [vmem:[%s3282 + $0x4] sm:$0xf]
      %v3285 = vld [vmem:[%s3282 + $0x8] sm:$0xf]
      %v3286 = vld [vmem:[%s3282 + $0xc] sm:$0xf]
      %v3287 = vld [vmem:[%s3282 + $0x10] sm:$0xf]
      %v3288 = vld [vmem:[%s3282 + $0x14] sm:$0xf]
      %v3289 = vld [vmem:[%s3282 + $0x18] sm:$0xf]
      %v3290 = vld [vmem:[%s3282 + $0x1c] sm:$0xf]
      %v3291 = vld [vmem:[%s3282 + $0x20] sm:$0xf]
      %v3292 = vld [vmem:[%s3282 + $0x24] sm:$0xf]
      %v3293 = vld [vmem:[%s3282 + $0x28] sm:$0xf]
      %v3294 = vld [vmem:[%s3282 + $0x2c] sm:$0xf]
      %v3295 = vld [vmem:[%s3282 + $0x30] sm:$0xf]
      %v3296 = vld [vmem:[%s3282 + $0x34] sm:$0xf]
      %v3297 = vld [vmem:[%s3282 + $0x38] sm:$0xf]
      %v3298 = vld [vmem:[%s3282 + $0x3c] sm:$0xf]
      %s3299 = scalar_lea.vmem %s6, 64
      %v3300 = vld [vmem:[%s3299] sm:$0xf]
      %v3301 = vld [vmem:[%s3299 + $0x4] sm:$0xf]
      %v3302 = vld [vmem:[%s3299 + $0x8] sm:$0xf]
      %v3303 = vld [vmem:[%s3299 + $0xc] sm:$0xf]
      %v3304 = vld [vmem:[%s3299 + $0x10] sm:$0xf]
      %v3305 = vld [vmem:[%s3299 + $0x14] sm:$0xf]
      %v3306 = vld [vmem:[%s3299 + $0x18] sm:$0xf]
      %v3307 = vld [vmem:[%s3299 + $0x1c] sm:$0xf]
      %v3308 = vld [vmem:[%s3299 + $0x20] sm:$0xf]
      %v3309 = vld [vmem:[%s3299 + $0x24] sm:$0xf]
      %v3310 = vld [vmem:[%s3299 + $0x28] sm:$0xf]
      %v3311 = vld [vmem:[%s3299 + $0x2c] sm:$0xf]
      %v3312 = vld [vmem:[%s3299 + $0x30] sm:$0xf]
      %v3313 = vld [vmem:[%s3299 + $0x34] sm:$0xf]
      %v3314 = vld [vmem:[%s3299 + $0x38] sm:$0xf]
      %v3315 = vld [vmem:[%s3299 + $0x3c] sm:$0xf]
      %v3332 = vunpack.c.l.b16 %v3300
      %v3333 = vunpack.c.l.b16 %v3301
      %v3334 = vunpack.c.l.b16 %v3302
      %v3335 = vunpack.c.l.b16 %v3303
      %v3336 = vunpack.c.l.b16 %v3304
      %v3337 = vunpack.c.l.b16 %v3305
      %v3338 = vunpack.c.l.b16 %v3306
      %v3339 = vunpack.c.l.b16 %v3307
      %v3340 = vunpack.c.l.b16 %v3308
      %v3341 = vunpack.c.l.b16 %v3309
      %v3342 = vunpack.c.l.b16 %v3310
      %v3343 = vunpack.c.l.b16 %v3311
      %v3344 = vunpack.c.l.b16 %v3312
      %v3345 = vunpack.c.l.b16 %v3313
      %v3346 = vunpack.c.l.b16 %v3314
      %v3347 = vunpack.c.l.b16 %v3315
      %v3348 = vpack.c.b16 %v3333, %v3332
      %v3349 = vpack.c.b16 %v3335, %v3334
      %v3350 = vpack.c.b16 %v3337, %v3336
      %v3351 = vpack.c.b16 %v3339, %v3338
      %v3352 = vpack.c.b16 %v3341, %v3340
      %v3353 = vpack.c.b16 %v3343, %v3342
      %v3354 = vpack.c.b16 %v3345, %v3344
      %v3355 = vpack.c.b16 %v3347, %v3346
      %3364 = vmatprep.subr.bf16.mxu0 0
      %3365 = vmatpush1.bf16.msra.mxu0 %v3348
      %3366 = vmatprep.subr.bf16.mxu0 0
      %3367 = vmatpush1.bf16.msra.mxu0 %v3349
      %3368 = vmatprep.subr.bf16.mxu0 0
      %3369 = vmatpush1.bf16.msra.mxu0 %v3350
      %3370 = vmatprep.subr.bf16.mxu0 0
      %3371 = vmatpush1.bf16.msra.mxu0 %v3351
      %3372 = vmatprep.subr.bf16.mxu0 0
      %3373 = vmatpush1.bf16.msra.mxu0 %v3352
      %3374 = vmatprep.subr.bf16.mxu0 0
      %3375 = vmatpush1.bf16.msra.mxu0 %v3353
      %3376 = vmatprep.subr.bf16.mxu0 0
      %3377 = vmatpush1.bf16.msra.mxu0 %v3354
      %3378 = vmatprep.subr.bf16.mxu0 0
      %3379 = vmatpush1.bf16.msra.mxu0 %v3355
      %3380 = vmatprep.subr.bf16.mxu0 0
      %3381 = vmatpush1.bf16.msra.mxu0 0
      %3382 = vmatprep.subr.bf16.mxu0 0
      %3383 = vmatpush1.bf16.msra.mxu0 0
      %3384 = vmatprep.subr.bf16.mxu0 0
      %3385 = vmatpush1.bf16.msra.mxu0 0
      %3386 = vmatprep.subr.bf16.mxu0 0
      %3387 = vmatpush1.bf16.msra.mxu0 0
      %3388 = vmatprep.subr.bf16.mxu0 0
      %3389 = vmatpush1.bf16.msra.mxu0 0
      %3390 = vmatprep.subr.bf16.mxu0 0
      %3391 = vmatpush1.bf16.msra.mxu0 0
      %3392 = vmatprep.subr.bf16.mxu0 0
      %3393 = vmatpush1.bf16.msra.mxu0 0
      %3394 = vmatprep.subr.bf16.mxu0 0
      %3395 = vmatpush1.bf16.msra.mxu0 0
      %3396 = vmatprep.mubr.bf16.mxu0 0
      %3397 = vmatmul.mubr.bf16.gmra.mrb[0].mxu0 %v462
      %v3398 = vpop.f32.mrb[0].mxu0
      %v3399 = vadd.f32 0.0, %v3398
      %v3400 = vpop.f32.mrb[0].mxu0
      %v3401 = vpop.f32.mrb[0].mxu0
      %v3402 = vadd.f32 0.0, %v3401
      %v3403 = vpop.f32.mrb[0].mxu0
      %3404 = vmatprep.mubr.bf16.mxu0 0
      %3405 = vmatmul.mubr.bf16.gmra.mrb[0].mxu0 %v463
      %v3406 = vpop.f32.mrb[0].mxu0
      %v3407 = vadd.f32 0.0, %v3406
      %v3408 = vpop.f32.mrb[0].mxu0
      %v3409 = vpop.f32.mrb[0].mxu0
      %v3410 = vadd.f32 0.0, %v3409
      %v3411 = vpop.f32.mrb[0].mxu0
      %3412 = vmatprep.mubr.bf16.mxu0 0
      %3413 = vmatmul.mubr.bf16.gmra.mrb[0].mxu0 %v464
      %v3414 = vpop.f32.mrb[0].mxu0
      %v3415 = vadd.f32 0.0, %v3414
      %v3416 = vpop.f32.mrb[0].mxu0
      %v3417 = vpop.f32.mrb[0].mxu0
      %v3418 = vadd.f32 0.0, %v3417
      %v3419 = vpop.f32.mrb[0].mxu0
      %3420 = vmatprep.mubr.bf16.mxu0 0
      %3421 = vmatmul.mubr.bf16.gmra.mrb[0].mxu0 %v465
      %v3422 = vpop.f32.mrb[0].mxu0
      %v3423 = vadd.f32 0.0, %v3422
      %v3424 = vpop.f32.mrb[0].mxu0
      %v3425 = vpop.f32.mrb[0].mxu0
      %v3426 = vadd.f32 0.0, %v3425
      %v3427 = vpop.f32.mrb[0].mxu0
      %3428 = vmatprep.mubr.bf16.mxu0 0
      %3429 = vmatmul.mubr.bf16.gmra.mrb[0].mxu0 %v466
      %v3430 = vpop.f32.mrb[0].mxu0
      %v3431 = vadd.f32 0.0, %v3430
      %v3432 = vpop.f32.mrb[0].mxu0
      %v3433 = vpop.f32.mrb[0].mxu0
      %v3434 = vadd.f32 0.0, %v3433
      %v3435 = vpop.f32.mrb[0].mxu0
      %3436 = vmatprep.mubr.bf16.mxu0 0
      %3437 = vmatmul.mubr.bf16.gmra.mrb[0].mxu0 %v467
      %v3438 = vpop.f32.mrb[0].mxu0
      %v3439 = vadd.f32 0.0, %v3438
      %v3440 = vpop.f32.mrb[0].mxu0
      %v3441 = vpop.f32.mrb[0].mxu0
      %v3442 = vadd.f32 0.0, %v3441
      %v3443 = vpop.f32.mrb[0].mxu0
      %3444 = vmatprep.mubr.bf16.mxu0 0
      %3445 = vmatmul.mubr.bf16.gmra.mrb[0].mxu0 %v468
      %v3446 = vpop.f32.mrb[0].mxu0
      %v3447 = vadd.f32 0.0, %v3446
      %v3448 = vpop.f32.mrb[0].mxu0
      %v3449 = vpop.f32.mrb[0].mxu0
      %v3450 = vadd.f32 0.0, %v3449
      %v3451 = vpop.f32.mrb[0].mxu0
      %3452 = vmatprep.mubr.bf16.mxu0 0
      %3453 = vmatmul.mubr.bf16.gmra.mrb[0].mxu0 %v469
      %v3454 = vpop.f32.mrb[0].mxu0
      %v3455 = vadd.f32 0.0, %v3454
      %v3456 = vpop.f32.mrb[0].mxu0
      %v3457 = vpop.f32.mrb[0].mxu0
      %v3458 = vadd.f32 0.0, %v3457
      %v3459 = vpop.f32.mrb[0].mxu0
      %3460 = vmatprep.mubr.bf16.mxu0 0
      %3461 = vmatmul.mubr.bf16.gmra.mrb[0].mxu0 %v470
      %v3462 = vpop.f32.mrb[0].mxu0
      %v3463 = vadd.f32 0.0, %v3462
      %v3464 = vpop.f32.mrb[0].mxu0
      %v3465 = vpop.f32.mrb[0].mxu0
      %v3466 = vadd.f32 0.0, %v3465
      %v3467 = vpop.f32.mrb[0].mxu0
      %3468 = vmatprep.mubr.bf16.mxu0 0
      %3469 = vmatmul.mubr.bf16.gmra.mrb[0].mxu0 %v471
      %v3470 = vpop.f32.mrb[0].mxu0
      %v3471 = vadd.f32 0.0, %v3470
      %v3472 = vpop.f32.mrb[0].mxu0
      %v3473 = vpop.f32.mrb[0].mxu0
      %v3474 = vadd.f32 0.0, %v3473
      %v3475 = vpop.f32.mrb[0].mxu0
      %3476 = vmatprep.mubr.bf16.mxu0 0
      %3477 = vmatmul.mubr.bf16.gmra.mrb[0].mxu0 %v472
      %v3478 = vpop.f32.mrb[0].mxu0
      %v3479 = vadd.f32 0.0, %v3478
      %v3480 = vpop.f32.mrb[0].mxu0
      %v3481 = vpop.f32.mrb[0].mxu0
      %v3482 = vadd.f32 0.0, %v3481
      %v3483 = vpop.f32.mrb[0].mxu0
      %3484 = vmatprep.mubr.bf16.mxu0 0
      %3485 = vmatmul.mubr.bf16.gmra.mrb[0].mxu0 %v473
      %v3486 = vpop.f32.mrb[0].mxu0
      %v3487 = vadd.f32 0.0, %v3486
      %v3488 = vpop.f32.mrb[0].mxu0
      %v3489 = vpop.f32.mrb[0].mxu0
      %v3490 = vadd.f32 0.0, %v3489
      %v3491 = vpop.f32.mrb[0].mxu0
      %3492 = vmatprep.mubr.bf16.mxu0 0
      %3493 = vmatmul.mubr.bf16.gmra.mrb[0].mxu0 %v474
      %v3494 = vpop.f32.mrb[0].mxu0
      %v3495 = vadd.f32 0.0, %v3494
      %v3496 = vpop.f32.mrb[0].mxu0
      %v3497 = vpop.f32.mrb[0].mxu0
      %v3498 = vadd.f32 0.0, %v3497
      %v3499 = vpop.f32.mrb[0].mxu0
      %3500 = vmatprep.mubr.bf16.mxu0 0
      %3501 = vmatmul.mubr.bf16.gmra.mrb[0].mxu0 %v475
      %v3502 = vpop.f32.mrb[0].mxu0
      %v3503 = vadd.f32 0.0, %v3502
      %v3504 = vpop.f32.mrb[0].mxu0
      %v3505 = vpop.f32.mrb[0].mxu0
      %v3506 = vadd.f32 0.0, %v3505
      %v3507 = vpop.f32.mrb[0].mxu0
      %3508 = vmatprep.mubr.bf16.mxu0 0
      %3509 = vmatmul.mubr.bf16.gmra.mrb[0].mxu0 %v476
      %v3510 = vpop.f32.mrb[0].mxu0
      %v3511 = vadd.f32 0.0, %v3510
      %v3512 = vpop.f32.mrb[0].mxu0
      %v3513 = vpop.f32.mrb[0].mxu0
      %v3514 = vadd.f32 0.0, %v3513
      %v3515 = vpop.f32.mrb[0].mxu0
      %3516 = vmatprep.mubr.bf16.mxu0 0
      %3517 = vmatmul.mubr.bf16.gmra.mrb[0].mxu0 %v477
      %v3518 = vpop.f32.mrb[0].mxu0
      %v3519 = vadd.f32 0.0, %v3518
      %v3520 = vpop.f32.mrb[0].mxu0
      %v3521 = vpop.f32.mrb[0].mxu0
      %v3522 = vadd.f32 0.0, %v3521
      %v3523 = vpop.f32.mrb[0].mxu0
      %3524 = vdwg.mxu0
      %v3541 = vunpack.c.l.b16 %v3283
      %v3542 = vunpack.c.l.b16 %v3284
      %v3543 = vunpack.c.l.b16 %v3285
      %v3544 = vunpack.c.l.b16 %v3286
      %v3545 = vunpack.c.l.b16 %v3287
      %v3546 = vunpack.c.l.b16 %v3288
      %v3547 = vunpack.c.l.b16 %v3289
      %v3548 = vunpack.c.l.b16 %v3290
      %v3549 = vunpack.c.l.b16 %v3291
      %v3550 = vunpack.c.l.b16 %v3292
      %v3551 = vunpack.c.l.b16 %v3293
      %v3552 = vunpack.c.l.b16 %v3294
      %v3553 = vunpack.c.l.b16 %v3295
      %v3554 = vunpack.c.l.b16 %v3296
      %v3555 = vunpack.c.l.b16 %v3297
      %v3556 = vunpack.c.l.b16 %v3298
      %v3557 = vpack.c.b16 %v3542, %v3541
      %v3558 = vpack.c.b16 %v3544, %v3543
      %v3559 = vpack.c.b16 %v3546, %v3545
      %v3560 = vpack.c.b16 %v3548, %v3547
      %v3561 = vpack.c.b16 %v3550, %v3549
      %v3562 = vpack.c.b16 %v3552, %v3551
      %v3563 = vpack.c.b16 %v3554, %v3553
      %v3564 = vpack.c.b16 %v3556, %v3555
      %3573 = vmatprep.subr.bf16.mxu0 0
      %3574 = vmatpush1.bf16.msra.mxu0 %v3557
      %3575 = vmatprep.subr.bf16.mxu0 0
      %3576 = vmatpush1.bf16.msra.mxu0 %v3558
      %3577 = vmatprep.subr.bf16.mxu0 0
      %3578 = vmatpush1.bf16.msra.mxu0 %v3559
      %3579 = vmatprep.subr.bf16.mxu0 0
      %3580 = vmatpush1.bf16.msra.mxu0 %v3560
      %3581 = vmatprep.subr.bf16.mxu0 0
      %3582 = vmatpush1.bf16.msra.mxu0 %v3561
      %3583 = vmatprep.subr.bf16.mxu0 0
      %3584 = vmatpush1.bf16.msra.mxu0 %v3562
      %3585 = vmatprep.subr.bf16.mxu0 0
      %3586 = vmatpush1.bf16.msra.mxu0 %v3563
      %3587 = vmatprep.subr.bf16.mxu0 0
      %3588 = vmatpush1.bf16.msra.mxu0 %v3564
      %3589 = vmatprep.subr.bf16.mxu0 0
      %3590 = vmatpush1.bf16.msra.mxu0 0
      %3591 = vmatprep.subr.bf16.mxu0 0
      %3592 = vmatpush1.bf16.msra.mxu0 0
      %3593 = vmatprep.subr.bf16.mxu0 0
      %3594 = vmatpush1.bf16.msra.mxu0 0
      %3595 = vmatprep.subr.bf16.mxu0 0
      %3596 = vmatpush1.bf16.msra.mxu0 0
      %3597 = vmatprep.subr.bf16.mxu0 0
      %3598 = vmatpush1.bf16.msra.mxu0 0
      %3599 = vmatprep.subr.bf16.mxu0 0
      %3600 = vmatpush1.bf16.msra.mxu0 0
      %3601 = vmatprep.subr.bf16.mxu0 0
      %3602 = vmatpush1.bf16.msra.mxu0 0
      %3603 = vmatprep.subr.bf16.mxu0 0
      %3604 = vmatpush1.bf16.msra.mxu0 0
      %3605 = vmatprep.mubr.bf16.mxu0 0
      %3606 = vmatmul.mubr.bf16.gmra.mrb[0].mxu0 %v2820
      %v3607 = vpop.f32.mrb[0].mxu0
      %v3608 = vadd.f32 %v3399, %v3607
      %v3609 = vpop.f32.mrb[0].mxu0
      %v3610 = vpop.f32.mrb[0].mxu0
      %v3611 = vadd.f32 %v3402, %v3610
      %v3612 = vpop.f32.mrb[0].mxu0
      %3613 = vmatprep.mubr.bf16.mxu0 0
      %3614 = vmatmul.mubr.bf16.gmra.mrb[0].mxu0 %v2821
      %v3615 = vpop.f32.mrb[0].mxu0
      %v3616 = vadd.f32 %v3407, %v3615
      %v3617 = vpop.f32.mrb[0].mxu0
      %v3618 = vpop.f32.mrb[0].mxu0
      %v3619 = vadd.f32 %v3410, %v3618
      %v3620 = vpop.f32.mrb[0].mxu0
      %3621 = vmatprep.mubr.bf16.mxu0 0
      %3622 = vmatmul.mubr.bf16.gmra.mrb[0].mxu0 %v2822
      %v3623 = vpop.f32.mrb[0].mxu0
      %v3624 = vadd.f32 %v3415, %v3623
      %v3625 = vpop.f32.mrb[0].mxu0
      %v3626 = vpop.f32.mrb[0].mxu0
      %v3627 = vadd.f32 %v3418, %v3626
      %v3628 = vpop.f32.mrb[0].mxu0
      %3629 = vmatprep.mubr.bf16.mxu0 0
      %3630 = vmatmul.mubr.bf16.gmra.mrb[0].mxu0 %v2823
      %v3631 = vpop.f32.mrb[0].mxu0
      %v3632 = vadd.f32 %v3423, %v3631
      %v3633 = vpop.f32.mrb[0].mxu0
      %v3634 = vpop.f32.mrb[0].mxu0
      %v3635 = vadd.f32 %v3426, %v3634
      %v3636 = vpop.f32.mrb[0].mxu0
      %3637 = vmatprep.mubr.bf16.mxu0 0
      %3638 = vmatmul.mubr.bf16.gmra.mrb[0].mxu0 %v2824
      %v3639 = vpop.f32.mrb[0].mxu0
      %v3640 = vadd.f32 %v3431, %v3639
      %v3641 = vpop.f32.mrb[0].mxu0
      %v3642 = vpop.f32.mrb[0].mxu0
      %v3643 = vadd.f32 %v3434, %v3642
      %v3644 = vpop.f32.mrb[0].mxu0
      %3645 = vmatprep.mubr.bf16.mxu0 0
      %3646 = vmatmul.mubr.bf16.gmra.mrb[0].mxu0 %v2825
      %v3647 = vpop.f32.mrb[0].mxu0
      %v3648 = vadd.f32 %v3439, %v3647
      %v3649 = vpop.f32.mrb[0].mxu0
      %v3650 = vpop.f32.mrb[0].mxu0
      %v3651 = vadd.f32 %v3442, %v3650
      %v3652 = vpop.f32.mrb[0].mxu0
      %3653 = vmatprep.mubr.bf16.mxu0 0
      %3654 = vmatmul.mubr.bf16.gmra.mrb[0].mxu0 %v2826
      %v3655 = vpop.f32.mrb[0].mxu0
      %v3656 = vadd.f32 %v3447, %v3655
      %v3657 = vpop.f32.mrb[0].mxu0
      %v3658 = vpop.f32.mrb[0].mxu0
      %v3659 = vadd.f32 %v3450, %v3658
      %v3660 = vpop.f32.mrb[0].mxu0
      %3661 = vmatprep.mubr.bf16.mxu0 0
      %3662 = vmatmul.mubr.bf16.gmra.mrb[0].mxu0 %v2827
      %v3663 = vpop.f32.mrb[0].mxu0
      %v3664 = vadd.f32 %v3455, %v3663
      %v3665 = vpop.f32.mrb[0].mxu0
      %v3666 = vpop.f32.mrb[0].mxu0
      %v3667 = vadd.f32 %v3458, %v3666
      %v3668 = vpop.f32.mrb[0].mxu0
      %3669 = vmatprep.mubr.bf16.mxu0 0
      %3670 = vmatmul.mubr.bf16.gmra.mrb[0].mxu0 %v2828
      %v3671 = vpop.f32.mrb[0].mxu0
      %v3672 = vadd.f32 %v3463, %v3671
      %v3673 = vpop.f32.mrb[0].mxu0
      %v3674 = vpop.f32.mrb[0].mxu0
      %v3675 = vadd.f32 %v3466, %v3674
      %v3676 = vpop.f32.mrb[0].mxu0
      %3677 = vmatprep.mubr.bf16.mxu0 0
      %3678 = vmatmul.mubr.bf16.gmra.mrb[0].mxu0 %v2829
      %v3679 = vpop.f32.mrb[0].mxu0
      %v3680 = vadd.f32 %v3471, %v3679
      %v3681 = vpop.f32.mrb[0].mxu0
      %v3682 = vpop.f32.mrb[0].mxu0
      %v3683 = vadd.f32 %v3474, %v3682
      %v3684 = vpop.f32.mrb[0].mxu0
      %3685 = vmatprep.mubr.bf16.mxu0 0
      %3686 = vmatmul.mubr.bf16.gmra.mrb[0].mxu0 %v2830
      %v3687 = vpop.f32.mrb[0].mxu0
      %v3688 = vadd.f32 %v3479, %v3687
      %v3689 = vpop.f32.mrb[0].mxu0
      %v3690 = vpop.f32.mrb[0].mxu0
      %v3691 = vadd.f32 %v3482, %v3690
      %v3692 = vpop.f32.mrb[0].mxu0
      %3693 = vmatprep.mubr.bf16.mxu0 0
      %3694 = vmatmul.mubr.bf16.gmra.mrb[0].mxu0 %v2831
      %v3695 = vpop.f32.mrb[0].mxu0
      %v3696 = vadd.f32 %v3487, %v3695
      %v3697 = vpop.f32.mrb[0].mxu0
      %v3698 = vpop.f32.mrb[0].mxu0
      %v3699 = vadd.f32 %v3490, %v3698
      %v3700 = vpop.f32.mrb[0].mxu0
      %3701 = vmatprep.mubr.bf16.mxu0 0
      %3702 = vmatmul.mubr.bf16.gmra.mrb[0].mxu0 %v2832
      %v3703 = vpop.f32.mrb[0].mxu0
      %v3704 = vadd.f32 %v3495, %v3703
      %v3705 = vpop.f32.mrb[0].mxu0
      %v3706 = vpop.f32.mrb[0].mxu0
      %v3707 = vadd.f32 %v3498, %v3706
      %v3708 = vpop.f32.mrb[0].mxu0
      %3709 = vmatprep.mubr.bf16.mxu0 0
      %3710 = vmatmul.mubr.bf16.gmra.mrb[0].mxu0 %v2833
      %v3711 = vpop.f32.mrb[0].mxu0
      %v3712 = vadd.f32 %v3503, %v3711
      %v3713 = vpop.f32.mrb[0].mxu0
      %v3714 = vpop.f32.mrb[0].mxu0
      %v3715 = vadd.f32 %v3506, %v3714
      %v3716 = vpop.f32.mrb[0].mxu0
      %3717 = vmatprep.mubr.bf16.mxu0 0
      %3718 = vmatmul.mubr.bf16.gmra.mrb[0].mxu0 %v2834
      %v3719 = vpop.f32.mrb[0].mxu0
      %v3720 = vadd.f32 %v3511, %v3719
      %v3721 = vpop.f32.mrb[0].mxu0
      %v3722 = vpop.f32.mrb[0].mxu0
      %v3723 = vadd.f32 %v3514, %v3722
      %v3724 = vpop.f32.mrb[0].mxu0
      %3725 = vmatprep.mubr.bf16.mxu0 0
      %3726 = vmatmul.mubr.bf16.gmra.mrb[0].mxu0 %v2835
      %v3727 = vpop.f32.mrb[0].mxu0
      %v3728 = vadd.f32 %v3519, %v3727
      %v3729 = vpop.f32.mrb[0].mxu0
      %v3730 = vpop.f32.mrb[0].mxu0
      %v3731 = vadd.f32 %v3522, %v3730
      %v3732 = vpop.f32.mrb[0].mxu0
      %3733 = vdwg.mxu0
      %s3734 = scalar_lea.vmem %s5, 128
      %v3735 = vld [vmem:[%s3734] sm:$0xf]
      %v3736 = vld [vmem:[%s3734 + $0x4] sm:$0xf]
      %v3737 = vld [vmem:[%s3734 + $0x8] sm:$0xf]
      %v3738 = vld [vmem:[%s3734 + $0xc] sm:$0xf]
      %v3739 = vld [vmem:[%s3734 + $0x10] sm:$0xf]
      %v3740 = vld [vmem:[%s3734 + $0x14] sm:$0xf]
      %v3741 = vld [vmem:[%s3734 + $0x18] sm:$0xf]
      %v3742 = vld [vmem:[%s3734 + $0x1c] sm:$0xf]
      %v3743 = vld [vmem:[%s3734 + $0x20] sm:$0xf]
      %v3744 = vld [vmem:[%s3734 + $0x24] sm:$0xf]
      %v3745 = vld [vmem:[%s3734 + $0x28] sm:$0xf]
      %v3746 = vld [vmem:[%s3734 + $0x2c] sm:$0xf]
      %v3747 = vld [vmem:[%s3734 + $0x30] sm:$0xf]
      %v3748 = vld [vmem:[%s3734 + $0x34] sm:$0xf]
      %v3749 = vld [vmem:[%s3734 + $0x38] sm:$0xf]
      %v3750 = vld [vmem:[%s3734 + $0x3c] sm:$0xf]
      %s3751 = scalar_lea.vmem %s6, 128
      %v3752 = vld [vmem:[%s3751] sm:$0xf]
      %v3753 = vld [vmem:[%s3751 + $0x4] sm:$0xf]
      %v3754 = vld [vmem:[%s3751 + $0x8] sm:$0xf]
      %v3755 = vld [vmem:[%s3751 + $0xc] sm:$0xf]
      %v3756 = vld [vmem:[%s3751 + $0x10] sm:$0xf]
      %v3757 = vld [vmem:[%s3751 + $0x14] sm:$0xf]
      %v3758 = vld [vmem:[%s3751 + $0x18] sm:$0xf]
      %v3759 = vld [vmem:[%s3751 + $0x1c] sm:$0xf]
      %v3760 = vld [vmem:[%s3751 + $0x20] sm:$0xf]
      %v3761 = vld [vmem:[%s3751 + $0x24] sm:$0xf]
      %v3762 = vld [vmem:[%s3751 + $0x28] sm:$0xf]
      %v3763 = vld [vmem:[%s3751 + $0x2c] sm:$0xf]
      %v3764 = vld [vmem:[%s3751 + $0x30] sm:$0xf]
      %v3765 = vld [vmem:[%s3751 + $0x34] sm:$0xf]
      %v3766 = vld [vmem:[%s3751 + $0x38] sm:$0xf]
      %v3767 = vld [vmem:[%s3751 + $0x3c] sm:$0xf]
      %v3784 = vunpack.c.l.b16 %v3752
      %v3785 = vunpack.c.l.b16 %v3753
      %v3786 = vunpack.c.l.b16 %v3754
      %v3787 = vunpack.c.l.b16 %v3755
      %v3788 = vunpack.c.l.b16 %v3756
      %v3789 = vunpack.c.l.b16 %v3757
      %v3790 = vunpack.c.l.b16 %v3758
      %v3791 = vunpack.c.l.b16 %v3759
      %v3792 = vunpack.c.l.b16 %v3760
      %v3793 = vunpack.c.l.b16 %v3761
      %v3794 = vunpack.c.l.b16 %v3762
      %v3795 = vunpack.c.l.b16 %v3763
      %v3796 = vunpack.c.l.b16 %v3764
      %v3797 = vunpack.c.l.b16 %v3765
      %v3798 = vunpack.c.l.b16 %v3766
      %v3799 = vunpack.c.l.b16 %v3767
      %v3800 = vpack.c.b16 %v3785, %v3784
      %v3801 = vpack.c.b16 %v3787, %v3786
      %v3802 = vpack.c.b16 %v3789, %v3788
      %v3803 = vpack.c.b16 %v3791, %v3790
      %v3804 = vpack.c.b16 %v3793, %v3792
      %v3805 = vpack.c.b16 %v3795, %v3794
      %v3806 = vpack.c.b16 %v3797, %v3796
      %v3807 = vpack.c.b16 %v3799, %v3798
      %3816 = vmatprep.subr.bf16.mxu0 0
      %3817 = vmatpush1.bf16.msra.mxu0 %v3800
      %3818 = vmatprep.subr.bf16.mxu0 0
      %3819 = vmatpush1.bf16.msra.mxu0 %v3801
      %3820 = vmatprep.subr.bf16.mxu0 0
      %3821 = vmatpush1.bf16.msra.mxu0 %v3802
      %3822 = vmatprep.subr.bf16.mxu0 0
      %3823 = vmatpush1.bf16.msra.mxu0 %v3803
      %3824 = vmatprep.subr.bf16.mxu0 0
      %3825 = vmatpush1.bf16.msra.mxu0 %v3804
      %3826 = vmatprep.subr.bf16.mxu0 0
      %3827 = vmatpush1.bf16.msra.mxu0 %v3805
      %3828 = vmatprep.subr.bf16.mxu0 0
      %3829 = vmatpush1.bf16.msra.mxu0 %v3806
      %3830 = vmatprep.subr.bf16.mxu0 0
      %3831 = vmatpush1.bf16.msra.mxu0 %v3807
      %3832 = vmatprep.subr.bf16.mxu0 0
      %3833 = vmatpush1.bf16.msra.mxu0 0
      %3834 = vmatprep.subr.bf16.mxu0 0
      %3835 = vmatpush1.bf16.msra.mxu0 0
      %3836 = vmatprep.subr.bf16.mxu0 0
      %3837 = vmatpush1.bf16.msra.mxu0 0
      %3838 = vmatprep.subr.bf16.mxu0 0
      %3839 = vmatpush1.bf16.msra.mxu0 0
      %3840 = vmatprep.subr.bf16.mxu0 0
      %3841 = vmatpush1.bf16.msra.mxu0 0
      %3842 = vmatprep.subr.bf16.mxu0 0
      %3843 = vmatpush1.bf16.msra.mxu0 0
      %3844 = vmatprep.subr.bf16.mxu0 0
      %3845 = vmatpush1.bf16.msra.mxu0 0
      %3846 = vmatprep.subr.bf16.mxu0 0
      %3847 = vmatpush1.bf16.msra.mxu0 0
      %3848 = vmatprep.mubr.bf16.mxu0 0
      %3849 = vmatmul.mubr.bf16.gmra.mrb[0].mxu0 %v462
      %v3850 = vpop.f32.mrb[0].mxu0
      %v3851 = vpop.f32.mrb[0].mxu0
      %v3852 = vpop.f32.mrb[0].mxu0
      %v3853 = vpop.f32.mrb[0].mxu0
      %3854 = vmatprep.mubr.bf16.mxu0 0
      %3855 = vmatmul.mubr.bf16.gmra.mrb[0].mxu0 %v463
      %v3856 = vpop.f32.mrb[0].mxu0
      %v3857 = vadd.f32 0.0, %v3856
      %v3858 = vpop.f32.mrb[0].mxu0
      %v3859 = vpop.f32.mrb[0].mxu0
      %v3860 = vadd.f32 0.0, %v3859
      %v3861 = vpop.f32.mrb[0].mxu0
      %3862 = vmatprep.mubr.bf16.mxu0 0
      %3863 = vmatmul.mubr.bf16.gmra.mrb[0].mxu0 %v464
      %v3864 = vpop.f32.mrb[0].mxu0
      %v3865 = vadd.f32 0.0, %v3864
      %v3866 = vpop.f32.mrb[0].mxu0
      %v3867 = vpop.f32.mrb[0].mxu0
      %v3868 = vadd.f32 0.0, %v3867
      %v3869 = vpop.f32.mrb[0].mxu0
      %3870 = vmatprep.mubr.bf16.mxu0 0
      %3871 = vmatmul.mubr.bf16.gmra.mrb[0].mxu0 %v465
      %v3872 = vpop.f32.mrb[0].mxu0
      %v3873 = vadd.f32 0.0, %v3872
      %v3874 = vpop.f32.mrb[0].mxu0
      %v3875 = vpop.f32.mrb[0].mxu0
      %v3876 = vadd.f32 0.0, %v3875
      %v3877 = vpop.f32.mrb[0].mxu0
      %3878 = vmatprep.mubr.bf16.mxu0 0
      %3879 = vmatmul.mubr.bf16.gmra.mrb[0].mxu0 %v466
      %v3880 = vpop.f32.mrb[0].mxu0
      %v3881 = vadd.f32 0.0, %v3880
      %v3882 = vpop.f32.mrb[0].mxu0
      %v3883 = vpop.f32.mrb[0].mxu0
      %v3884 = vadd.f32 0.0, %v3883
      %v3885 = vpop.f32.mrb[0].mxu0
      %3886 = vmatprep.mubr.bf16.mxu0 0
      %3887 = vmatmul.mubr.bf16.gmra.mrb[0].mxu0 %v467
      %v3888 = vpop.f32.mrb[0].mxu0
      %v3889 = vadd.f32 0.0, %v3888
      %v3890 = vpop.f32.mrb[0].mxu0
      %v3891 = vpop.f32.mrb[0].mxu0
      %v3892 = vadd.f32 0.0, %v3891
      %v3893 = vpop.f32.mrb[0].mxu0
      %3894 = vmatprep.mubr.bf16.mxu0 0
      %3895 = vmatmul.mubr.bf16.gmra.mrb[0].mxu0 %v468
      %v3896 = vpop.f32.mrb[0].mxu0
      %v3897 = vadd.f32 0.0, %v3896
      %v3898 = vpop.f32.mrb[0].mxu0
      %v3899 = vpop.f32.mrb[0].mxu0
      %v3900 = vadd.f32 0.0, %v3899
      %v3901 = vpop.f32.mrb[0].mxu0
      %3902 = vmatprep.mubr.bf16.mxu0 0
      %3903 = vmatmul.mubr.bf16.gmra.mrb[0].mxu0 %v469
      %v3904 = vpop.f32.mrb[0].mxu0
      %v3905 = vadd.f32 0.0, %v3904
      %v3906 = vpop.f32.mrb[0].mxu0
      %v3907 = vpop.f32.mrb[0].mxu0
      %v3908 = vadd.f32 0.0, %v3907
      %v3909 = vpop.f32.mrb[0].mxu0
      %3910 = vmatprep.mubr.bf16.mxu0 0
      %3911 = vmatmul.mubr.bf16.gmra.mrb[0].mxu0 %v470
      %v3912 = vpop.f32.mrb[0].mxu0
      %v3913 = vadd.f32 0.0, %v3912
      %v3914 = vpop.f32.mrb[0].mxu0
      %v3915 = vpop.f32.mrb[0].mxu0
      %v3916 = vadd.f32 0.0, %v3915
      %v3917 = vpop.f32.mrb[0].mxu0
      %3918 = vmatprep.mubr.bf16.mxu0 0
      %3919 = vmatmul.mubr.bf16.gmra.mrb[0].mxu0 %v471
      %v3920 = vpop.f32.mrb[0].mxu0
      %v3921 = vadd.f32 0.0, %v3920
      %v3922 = vpop.f32.mrb[0].mxu0
      %v3923 = vpop.f32.mrb[0].mxu0
      %v3924 = vadd.f32 0.0, %v3923
      %v3925 = vpop.f32.mrb[0].mxu0
      %3926 = vmatprep.mubr.bf16.mxu0 0
      %3927 = vmatmul.mubr.bf16.gmra.mrb[0].mxu0 %v472
      %v3928 = vpop.f32.mrb[0].mxu0
      %v3929 = vadd.f32 0.0, %v3928
      %v3930 = vpop.f32.mrb[0].mxu0
      %v3931 = vpop.f32.mrb[0].mxu0
      %v3932 = vadd.f32 0.0, %v3931
      %v3933 = vpop.f32.mrb[0].mxu0
      %3934 = vmatprep.mubr.bf16.mxu0 0
      %3935 = vmatmul.mubr.bf16.gmra.mrb[0].mxu0 %v473
      %v3936 = vpop.f32.mrb[0].mxu0
      %v3937 = vadd.f32 0.0, %v3936
      %v3938 = vpop.f32.mrb[0].mxu0
      %v3939 = vpop.f32.mrb[0].mxu0
      %v3940 = vadd.f32 0.0, %v3939
      %v3941 = vpop.f32.mrb[0].mxu0
      %3942 = vmatprep.mubr.bf16.mxu0 0
      %3943 = vmatmul.mubr.bf16.gmra.mrb[0].mxu0 %v474
      %v3944 = vpop.f32.mrb[0].mxu0
      %v3945 = vadd.f32 0.0, %v3944
      %v3946 = vpop.f32.mrb[0].mxu0
      %v3947 = vpop.f32.mrb[0].mxu0
      %v3948 = vadd.f32 0.0, %v3947
      %v3949 = vpop.f32.mrb[0].mxu0
      %3950 = vmatprep.mubr.bf16.mxu0 0
      %3951 = vmatmul.mubr.bf16.gmra.mrb[0].mxu0 %v475
      %v3952 = vpop.f32.mrb[0].mxu0
      %v3953 = vadd.f32 0.0, %v3952
      %v3954 = vpop.f32.mrb[0].mxu0
      %v3955 = vpop.f32.mrb[0].mxu0
      %v3956 = vadd.f32 0.0, %v3955
      %v3957 = vpop.f32.mrb[0].mxu0
      %3958 = vmatprep.mubr.bf16.mxu0 0
      %3959 = vmatmul.mubr.bf16.gmra.mrb[0].mxu0 %v476
      %v3960 = vpop.f32.mrb[0].mxu0
      %v3961 = vadd.f32 0.0, %v3960
      %v3962 = vpop.f32.mrb[0].mxu0
      %v3963 = vpop.f32.mrb[0].mxu0
      %v3964 = vadd.f32 0.0, %v3963
      %v3965 = vpop.f32.mrb[0].mxu0
      %3966 = vmatprep.mubr.bf16.mxu0 0
      %3967 = vmatmul.mubr.bf16.gmra.mrb[0].mxu0 %v477
      %v3968 = vpop.f32.mrb[0].mxu0
      %v3969 = vadd.f32 0.0, %v3968
      %v3970 = vpop.f32.mrb[0].mxu0
      %v3971 = vpop.f32.mrb[0].mxu0
      %v3972 = vadd.f32 0.0, %v3971
      %v3973 = vpop.f32.mrb[0].mxu0
      %3974 = vdwg.mxu0
      %v3991 = vunpack.c.l.b16 %v3735
      %v3992 = vunpack.c.l.b16 %v3736
      %v3993 = vunpack.c.l.b16 %v3737
      %v3994 = vunpack.c.l.b16 %v3738
      %v3995 = vunpack.c.l.b16 %v3739
      %v3996 = vunpack.c.l.b16 %v3740
      %v3997 = vunpack.c.l.b16 %v3741
      %v3998 = vunpack.c.l.b16 %v3742
      %v3999 = vunpack.c.l.b16 %v3743
      %v4000 = vunpack.c.l.b16 %v3744
      %v4001 = vunpack.c.l.b16 %v3745
      %v4002 = vunpack.c.l.b16 %v3746
      %v4003 = vunpack.c.l.b16 %v3747
      %v4004 = vunpack.c.l.b16 %v3748
      %v4005 = vunpack.c.l.b16 %v3749
      %v4006 = vunpack.c.l.b16 %v3750
      %v4007 = vpack.c.b16 %v3992, %v3991
      %v4008 = vpack.c.b16 %v3994, %v3993
      %v4009 = vpack.c.b16 %v3996, %v3995
      %v4010 = vpack.c.b16 %v3998, %v3997
      %v4011 = vpack.c.b16 %v4000, %v3999
      %v4012 = vpack.c.b16 %v4002, %v4001
      %v4013 = vpack.c.b16 %v4004, %v4003
      %v4014 = vpack.c.b16 %v4006, %v4005
      %4023 = vmatprep.subr.bf16.mxu0 0
      %4024 = vmatpush1.bf16.msra.mxu0 %v4007
      %4025 = vmatprep.subr.bf16.mxu0 0
      %4026 = vmatpush1.bf16.msra.mxu0 %v4008
      %4027 = vmatprep.subr.bf16.mxu0 0
      %4028 = vmatpush1.bf16.msra.mxu0 %v4009
      %4029 = vmatprep.subr.bf16.mxu0 0
      %4030 = vmatpush1.bf16.msra.mxu0 %v4010
      %4031 = vmatprep.subr.bf16.mxu0 0
      %4032 = vmatpush1.bf16.msra.mxu0 %v4011
      %4033 = vmatprep.subr.bf16.mxu0 0
      %4034 = vmatpush1.bf16.msra.mxu0 %v4012
      %4035 = vmatprep.subr.bf16.mxu0 0
      %4036 = vmatpush1.bf16.msra.mxu0 %v4013
      %4037 = vmatprep.subr.bf16.mxu0 0
      %4038 = vmatpush1.bf16.msra.mxu0 %v4014
      %4039 = vmatprep.subr.bf16.mxu0 0
      %4040 = vmatpush1.bf16.msra.mxu0 0
      %4041 = vmatprep.subr.bf16.mxu0 0
      %4042 = vmatpush1.bf16.msra.mxu0 0
      %4043 = vmatprep.subr.bf16.mxu0 0
      %4044 = vmatpush1.bf16.msra.mxu0 0
      %4045 = vmatprep.subr.bf16.mxu0 0
      %4046 = vmatpush1.bf16.msra.mxu0 0
      %4047 = vmatprep.subr.bf16.mxu0 0
      %4048 = vmatpush1.bf16.msra.mxu0 0
      %4049 = vmatprep.subr.bf16.mxu0 0
      %4050 = vmatpush1.bf16.msra.mxu0 0
      %4051 = vmatprep.subr.bf16.mxu0 0
      %4052 = vmatpush1.bf16.msra.mxu0 0
      %4053 = vmatprep.subr.bf16.mxu0 0
      %4054 = vmatpush1.bf16.msra.mxu0 0
      %4055 = vmatprep.mubr.bf16.mxu0 0
      %4056 = vmatmul.mubr.bf16.gmra.mrb[0].mxu0 %v2820
      %v4057 = vpop.f32.mrb[0].mxu0
      %v4058 = vpop.f32.mrb[0].mxu0
      %v4059 = vpop.f32.mrb[0].mxu0
      %v4060 = vpop.f32.mrb[0].mxu0
      %4061 = vmatprep.mubr.bf16.mxu0 0
      %4062 = vmatmul.mubr.bf16.gmra.mrb[0].mxu0 %v2821
      %v4063 = vpop.f32.mrb[0].mxu0
      %v4064 = vadd.f32 %v3857, %v4063
      %v4065 = vpop.f32.mrb[0].mxu0
      %v4066 = vpop.f32.mrb[0].mxu0
      %v4067 = vadd.f32 %v3860, %v4066
      %v4068 = vpop.f32.mrb[0].mxu0
      %4069 = vmatprep.mubr.bf16.mxu0 0
      %4070 = vmatmul.mubr.bf16.gmra.mrb[0].mxu0 %v2822
      %v4071 = vpop.f32.mrb[0].mxu0
      %v4072 = vadd.f32 %v3865, %v4071
      %v4073 = vpop.f32.mrb[0].mxu0
      %v4074 = vpop.f32.mrb[0].mxu0
      %v4075 = vadd.f32 %v3868, %v4074
      %v4076 = vpop.f32.mrb[0].mxu0
      %4077 = vmatprep.mubr.bf16.mxu0 0
      %4078 = vmatmul.mubr.bf16.gmra.mrb[0].mxu0 %v2823
      %v4079 = vpop.f32.mrb[0].mxu0
      %v4080 = vadd.f32 %v3873, %v4079
      %v4081 = vpop.f32.mrb[0].mxu0
      %v4082 = vpop.f32.mrb[0].mxu0
      %v4083 = vadd.f32 %v3876, %v4082
      %v4084 = vpop.f32.mrb[0].mxu0
      %4085 = vmatprep.mubr.bf16.mxu0 0
      %4086 = vmatmul.mubr.bf16.gmra.mrb[0].mxu0 %v2824
      %v4087 = vpop.f32.mrb[0].mxu0
      %v4088 = vadd.f32 %v3881, %v4087
      %v4089 = vpop.f32.mrb[0].mxu0
      %v4090 = vpop.f32.mrb[0].mxu0
      %v4091 = vadd.f32 %v3884, %v4090
      %v4092 = vpop.f32.mrb[0].mxu0
      %4093 = vmatprep.mubr.bf16.mxu0 0
      %4094 = vmatmul.mubr.bf16.gmra.mrb[0].mxu0 %v2825
      %v4095 = vpop.f32.mrb[0].mxu0
      %v4096 = vadd.f32 %v3889, %v4095
      %v4097 = vpop.f32.mrb[0].mxu0
      %v4098 = vpop.f32.mrb[0].mxu0
      %v4099 = vadd.f32 %v3892, %v4098
      %v4100 = vpop.f32.mrb[0].mxu0
      %4101 = vmatprep.mubr.bf16.mxu0 0
      %4102 = vmatmul.mubr.bf16.gmra.mrb[0].mxu0 %v2826
      %v4103 = vpop.f32.mrb[0].mxu0
      %v4104 = vadd.f32 %v3897, %v4103
      %v4105 = vpop.f32.mrb[0].mxu0
      %v4106 = vpop.f32.mrb[0].mxu0
      %v4107 = vadd.f32 %v3900, %v4106
      %v4108 = vpop.f32.mrb[0].mxu0
      %4109 = vmatprep.mubr.bf16.mxu0 0
      %4110 = vmatmul.mubr.bf16.gmra.mrb[0].mxu0 %v2827
      %v4111 = vpop.f32.mrb[0].mxu0
      %v4112 = vadd.f32 %v3905, %v4111
      %v4113 = vpop.f32.mrb[0].mxu0
      %v4114 = vpop.f32.mrb[0].mxu0
      %v4115 = vadd.f32 %v3908, %v4114
      %v4116 = vpop.f32.mrb[0].mxu0
      %4117 = vmatprep.mubr.bf16.mxu0 0
      %4118 = vmatmul.mubr.bf16.gmra.mrb[0].mxu0 %v2828
      %v4119 = vpop.f32.mrb[0].mxu0
      %v4120 = vadd.f32 %v3913, %v4119
      %v4121 = vpop.f32.mrb[0].mxu0
      %v4122 = vpop.f32.mrb[0].mxu0
      %v4123 = vadd.f32 %v3916, %v4122
      %v4124 = vpop.f32.mrb[0].mxu0
      %4125 = vmatprep.mubr.bf16.mxu0 0
      %4126 = vmatmul.mubr.bf16.gmra.mrb[0].mxu0 %v2829
      %v4127 = vpop.f32.mrb[0].mxu0
      %v4128 = vadd.f32 %v3921, %v4127
      %v4129 = vpop.f32.mrb[0].mxu0
      %v4130 = vpop.f32.mrb[0].mxu0
      %v4131 = vadd.f32 %v3924, %v4130
      %v4132 = vpop.f32.mrb[0].mxu0
      %4133 = vmatprep.mubr.bf16.mxu0 0
      %4134 = vmatmul.mubr.bf16.gmra.mrb[0].mxu0 %v2830
      %v4135 = vpop.f32.mrb[0].mxu0
      %v4136 = vadd.f32 %v3929, %v4135
      %v4137 = vpop.f32.mrb[0].mxu0
      %v4138 = vpop.f32.mrb[0].mxu0
      %v4139 = vadd.f32 %v3932, %v4138
      %v4140 = vpop.f32.mrb[0].mxu0
      %4141 = vmatprep.mubr.bf16.mxu0 0
      %4142 = vmatmul.mubr.bf16.gmra.mrb[0].mxu0 %v2831
      %v4143 = vpop.f32.mrb[0].mxu0
      %v4144 = vadd.f32 %v3937, %v4143
      %v4145 = vpop.f32.mrb[0].mxu0
      %v4146 = vpop.f32.mrb[0].mxu0
      %v4147 = vadd.f32 %v3940, %v4146
      %v4148 = vpop.f32.mrb[0].mxu0
      %4149 = vmatprep.mubr.bf16.mxu0 0
      %4150 = vmatmul.mubr.bf16.gmra.mrb[0].mxu0 %v2832
      %v4151 = vpop.f32.mrb[0].mxu0
      %v4152 = vadd.f32 %v3945, %v4151
      %v4153 = vpop.f32.mrb[0].mxu0
      %v4154 = vpop.f32.mrb[0].mxu0
      %v4155 = vadd.f32 %v3948, %v4154
      %v4156 = vpop.f32.mrb[0].mxu0
      %4157 = vmatprep.mubr.bf16.mxu0 0
      %4158 = vmatmul.mubr.bf16.gmra.mrb[0].mxu0 %v2833
      %v4159 = vpop.f32.mrb[0].mxu0
      %v4160 = vadd.f32 %v3953, %v4159
      %v4161 = vpop.f32.mrb[0].mxu0
      %v4162 = vpop.f32.mrb[0].mxu0
      %v4163 = vadd.f32 %v3956, %v4162
      %v4164 = vpop.f32.mrb[0].mxu0
      %4165 = vmatprep.mubr.bf16.mxu0 0
      %4166 = vmatmul.mubr.bf16.gmra.mrb[0].mxu0 %v2834
      %v4167 = vpop.f32.mrb[0].mxu0
      %v4168 = vadd.f32 %v3961, %v4167
      %v4169 = vpop.f32.mrb[0].mxu0
      %v4170 = vpop.f32.mrb[0].mxu0
      %v4171 = vadd.f32 %v3964, %v4170
      %v4172 = vpop.f32.mrb[0].mxu0
      %4173 = vmatprep.mubr.bf16.mxu0 0
      %4174 = vmatmul.mubr.bf16.gmra.mrb[0].mxu0 %v2835
      %v4175 = vpop.f32.mrb[0].mxu0
      %v4176 = vadd.f32 %v3969, %v4175
      %v4177 = vpop.f32.mrb[0].mxu0
      %v4178 = vpop.f32.mrb[0].mxu0
      %v4179 = vadd.f32 %v3972, %v4178
      %v4180 = vpop.f32.mrb[0].mxu0
      %4181 = vdwg.mxu0
      %v4182 = vld [vmem:[%s7] sm:$0x1]
      %v4184 = vlaneseq
      %v4185 = vshrl.u32 %v4184, 7
      %v4186 = vsub.s32 0, %v4185
      %v4187 = vrot.slane %v4182, %v4186
      %v4189 = vadd.f32 %v3608, %v4187
      %v4190 = vadd.f32 %v3611, %v4187
      %v4191 = vadd.f32 %v3616, %v4187
      %v4192 = vadd.f32 %v3619, %v4187
      %v4193 = vadd.f32 %v3624, %v4187
      %v4194 = vadd.f32 %v3627, %v4187
      %v4195 = vadd.f32 %v3632, %v4187
      %v4196 = vadd.f32 %v3635, %v4187
      %v4197 = vadd.f32 %v3640, %v4187
      %v4198 = vadd.f32 %v3643, %v4187
      %v4199 = vadd.f32 %v3648, %v4187
      %v4200 = vadd.f32 %v3651, %v4187
      %v4201 = vadd.f32 %v3656, %v4187
      %v4202 = vadd.f32 %v3659, %v4187
      %v4203 = vadd.f32 %v3664, %v4187
      %v4204 = vadd.f32 %v3667, %v4187
      %v4205 = vadd.f32 %v3672, %v4187
      %v4206 = vadd.f32 %v3675, %v4187
      %v4207 = vadd.f32 %v3680, %v4187
      %v4208 = vadd.f32 %v3683, %v4187
      %v4209 = vadd.f32 %v3688, %v4187
      %v4210 = vadd.f32 %v3691, %v4187
      %v4211 = vadd.f32 %v3696, %v4187
      %v4212 = vadd.f32 %v3699, %v4187
      %v4213 = vadd.f32 %v3704, %v4187
      %v4214 = vadd.f32 %v3707, %v4187
      %v4215 = vadd.f32 %v3712, %v4187
      %v4216 = vadd.f32 %v3715, %v4187
      %v4217 = vadd.f32 %v3720, %v4187
      %v4218 = vadd.f32 %v3723, %v4187
      %v4219 = vadd.f32 %v3728, %v4187
      %v4220 = vadd.f32 %v3731, %v4187
      %v4221 = vadd.f32 %v4064, 0.0
      %v4222 = vadd.f32 %v4067, 0.0
      %v4223 = vadd.f32 %v3158, %v4072
      %v4224 = vadd.f32 %v3161, %v4075
      %v4225 = vadd.f32 %v3166, %v4080
      %v4226 = vadd.f32 %v3169, %v4083
      %v4227 = vadd.f32 %v3174, %v4088
      %v4228 = vadd.f32 %v3177, %v4091
      %v4229 = vadd.f32 %v3182, %v4096
      %v4230 = vadd.f32 %v3185, %v4099
      %v4231 = vadd.f32 %v3190, %v4104
      %v4232 = vadd.f32 %v3193, %v4107
      %v4233 = vadd.f32 %v3198, %v4112
      %v4234 = vadd.f32 %v3201, %v4115
      %v4235 = vadd.f32 %v3206, %v4120
      %v4236 = vadd.f32 %v3209, %v4123
      %v4237 = vadd.f32 %v3214, %v4128
      %v4238 = vadd.f32 %v3217, %v4131
      %v4239 = vadd.f32 %v3222, %v4136
      %v4240 = vadd.f32 %v3225, %v4139
      %v4241 = vadd.f32 %v3230, %v4144
      %v4242 = vadd.f32 %v3233, %v4147
      %v4243 = vadd.f32 %v3238, %v4152
      %v4244 = vadd.f32 %v3241, %v4155
      %v4245 = vadd.f32 %v3246, %v4160
      %v4246 = vadd.f32 %v3249, %v4163
      %v4247 = vadd.f32 %v3254, %v4168
      %v4248 = vadd.f32 %v3257, %v4171
      %v4249 = vadd.f32 %v3262, %v4176
      %v4250 = vadd.f32 %v3265, %v4179
      %v4251 = vadd.f32 %v3270, 0.0
      %v4252 = vadd.f32 %v3273, 0.0
      %v4253 = vadd.f32 %v4189, %v4221
      %v4254 = vadd.f32 %v4190, %v4222
      %v4255 = vadd.f32 %v4191, %v4223
      %v4256 = vadd.f32 %v4192, %v4224
      %v4257 = vadd.f32 %v4193, %v4225
      %v4258 = vadd.f32 %v4194, %v4226
      %v4259 = vadd.f32 %v4195, %v4227
      %v4260 = vadd.f32 %v4196, %v4228
      %v4261 = vadd.f32 %v4197, %v4229
      %v4262 = vadd.f32 %v4198, %v4230
      %v4263 = vadd.f32 %v4199, %v4231
      %v4264 = vadd.f32 %v4200, %v4232
      %v4265 = vadd.f32 %v4201, %v4233
      %v4266 = vadd.f32 %v4202, %v4234
      %v4267 = vadd.f32 %v4203, %v4235
      %v4268 = vadd.f32 %v4204, %v4236
      %v4269 = vadd.f32 %v4205, %v4237
      %v4270 = vadd.f32 %v4206, %v4238
      %v4271 = vadd.f32 %v4207, %v4239
      %v4272 = vadd.f32 %v4208, %v4240
      %v4273 = vadd.f32 %v4209, %v4241
      %v4274 = vadd.f32 %v4210, %v4242
      %v4275 = vadd.f32 %v4211, %v4243
      %v4276 = vadd.f32 %v4212, %v4244
      %v4277 = vadd.f32 %v4213, %v4245
      %v4278 = vadd.f32 %v4214, %v4246
      %v4279 = vadd.f32 %v4215, %v4247
      %v4280 = vadd.f32 %v4216, %v4248
      %v4281 = vadd.f32 %v4217, %v4249
      %v4282 = vadd.f32 %v4218, %v4250
      %v4283 = vadd.f32 %v4219, %v4251
      %v4284 = vadd.f32 %v4220, %v4252
      %v4285 = vtanh.pop %v4253
      %v4286 = vtanh.pop %v4254
      %v4287 = vtanh.pop %v4255
      %v4288 = vtanh.pop %v4256
      %v4289 = vtanh.pop %v4257
      %v4290 = vtanh.pop %v4258
      %v4291 = vtanh.pop %v4259
      %v4292 = vtanh.pop %v4260
      %v4293 = vtanh.pop %v4261
      %v4294 = vtanh.pop %v4262
      %v4295 = vtanh.pop %v4263
      %v4296 = vtanh.pop %v4264
      %v4297 = vtanh.pop %v4265
      %v4298 = vtanh.pop %v4266
      %v4299 = vtanh.pop %v4267
      %v4300 = vtanh.pop %v4268
      %v4301 = vtanh.pop %v4269
      %v4302 = vtanh.pop %v4270
      %v4303 = vtanh.pop %v4271
      %v4304 = vtanh.pop %v4272
      %v4305 = vtanh.pop %v4273
      %v4306 = vtanh.pop %v4274
      %v4307 = vtanh.pop %v4275
      %v4308 = vtanh.pop %v4276
      %v4309 = vtanh.pop %v4277
      %v4310 = vtanh.pop %v4278
      %v4311 = vtanh.pop %v4279
      %v4312 = vtanh.pop %v4280
      %v4313 = vtanh.pop %v4281
      %v4314 = vtanh.pop %v4282
      %v4315 = vtanh.pop %v4283
      %v4316 = vtanh.pop %v4284
      %v4317 = vsub.f32 %v4285, %v382
      %v4318 = vsub.f32 %v4286, %v383
      %v4319 = vsub.f32 %v4287, %v384
      %v4320 = vsub.f32 %v4288, %v385
      %v4321 = vsub.f32 %v4289, %v386
      %v4322 = vsub.f32 %v4290, %v387
      %v4323 = vsub.f32 %v4291, %v388
      %v4324 = vsub.f32 %v4292, %v389
      %v4325 = vsub.f32 %v4293, %v390
      %v4326 = vsub.f32 %v4294, %v391
      %v4327 = vsub.f32 %v4295, %v392
      %v4328 = vsub.f32 %v4296, %v393
      %v4329 = vsub.f32 %v4297, %v394
      %v4330 = vsub.f32 %v4298, %v395
      %v4331 = vsub.f32 %v4299, %v396
      %v4332 = vsub.f32 %v4300, %v397
      %v4333 = vsub.f32 %v4301, %v398
      %v4334 = vsub.f32 %v4302, %v399
      %v4335 = vsub.f32 %v4303, %v400
      %v4336 = vsub.f32 %v4304, %v401
      %v4337 = vsub.f32 %v4305, %v402
      %v4338 = vsub.f32 %v4306, %v403
      %v4339 = vsub.f32 %v4307, %v404
      %v4340 = vsub.f32 %v4308, %v405
      %v4341 = vsub.f32 %v4309, %v406
      %v4342 = vsub.f32 %v4310, %v407
      %v4343 = vsub.f32 %v4311, %v408
      %v4344 = vsub.f32 %v4312, %v409
      %v4345 = vsub.f32 %v4313, %v410
      %v4346 = vsub.f32 %v4314, %v411
      %v4347 = vsub.f32 %v4315, %v412
      %v4348 = vsub.f32 %v4316, %v413
      %v4349 = vmul.f32 %v2533, %v4317
      %v4350 = vmul.f32 %v2535, %v4318
      %v4351 = vmul.f32 %v2537, %v4319
      %v4352 = vmul.f32 %v2539, %v4320
      %v4353 = vmul.f32 %v2541, %v4321
      %v4354 = vmul.f32 %v2543, %v4322
      %v4355 = vmul.f32 %v2545, %v4323
      %v4356 = vmul.f32 %v2547, %v4324
      %v4357 = vmul.f32 %v2549, %v4325
      %v4358 = vmul.f32 %v2551, %v4326
      %v4359 = vmul.f32 %v2553, %v4327
      %v4360 = vmul.f32 %v2555, %v4328
      %v4361 = vmul.f32 %v2557, %v4329
      %v4362 = vmul.f32 %v2559, %v4330
      %v4363 = vmul.f32 %v2561, %v4331
      %v4364 = vmul.f32 %v2563, %v4332
      %v4365 = vmul.f32 %v2565, %v4333
      %v4366 = vmul.f32 %v2567, %v4334
      %v4367 = vmul.f32 %v2569, %v4335
      %v4368 = vmul.f32 %v2571, %v4336
      %v4369 = vmul.f32 %v2573, %v4337
      %v4370 = vmul.f32 %v2575, %v4338
      %v4371 = vmul.f32 %v2577, %v4339
      %v4372 = vmul.f32 %v2579, %v4340
      %v4373 = vmul.f32 %v2581, %v4341
      %v4374 = vmul.f32 %v2583, %v4342
      %v4375 = vmul.f32 %v2585, %v4343
      %v4376 = vmul.f32 %v2587, %v4344
      %v4377 = vmul.f32 %v2589, %v4345
      %v4378 = vmul.f32 %v2591, %v4346
      %v4379 = vmul.f32 %v2593, %v4347
      %v4380 = vmul.f32 %v2595, %v4348
      %v4381 = vadd.f32 %v382, %v4349
      %v4382 = vadd.f32 %v383, %v4350
      %v4383 = vadd.f32 %v384, %v4351
      %v4384 = vadd.f32 %v385, %v4352
      %v4385 = vadd.f32 %v386, %v4353
      %v4386 = vadd.f32 %v387, %v4354
      %v4387 = vadd.f32 %v388, %v4355
      %v4388 = vadd.f32 %v389, %v4356
      %v4389 = vadd.f32 %v390, %v4357
      %v4390 = vadd.f32 %v391, %v4358
      %v4391 = vadd.f32 %v392, %v4359
      %v4392 = vadd.f32 %v393, %v4360
      %v4393 = vadd.f32 %v394, %v4361
      %v4394 = vadd.f32 %v395, %v4362
      %v4395 = vadd.f32 %v396, %v4363
      %v4396 = vadd.f32 %v397, %v4364
      %v4397 = vadd.f32 %v398, %v4365
      %v4398 = vadd.f32 %v399, %v4366
      %v4399 = vadd.f32 %v400, %v4367
      %v4400 = vadd.f32 %v401, %v4368
      %v4401 = vadd.f32 %v402, %v4369
      %v4402 = vadd.f32 %v403, %v4370
      %v4403 = vadd.f32 %v404, %v4371
      %v4404 = vadd.f32 %v405, %v4372
      %v4405 = vadd.f32 %v406, %v4373
      %v4406 = vadd.f32 %v407, %v4374
      %v4407 = vadd.f32 %v408, %v4375
      %v4408 = vadd.f32 %v409, %v4376
      %v4409 = vadd.f32 %v410, %v4377
      %v4410 = vadd.f32 %v411, %v4378
      %v4411 = vadd.f32 %v412, %v4379
      %v4412 = vadd.f32 %v413, %v4380
      %4413 = vst [vmem:[%s379] sm:$0xff] %v4381
      %4414 = vst [vmem:[%s379 + $0x8] sm:$0xff] %v4382
      %4415 = vst [vmem:[%s379 + $0x10] sm:$0xff] %v4383
      %4416 = vst [vmem:[%s379 + $0x18] sm:$0xff] %v4384
      %4417 = vst [vmem:[%s379 + $0x20] sm:$0xff] %v4385
      %4418 = vst [vmem:[%s379 + $0x28] sm:$0xff] %v4386
      %4419 = vst [vmem:[%s379 + $0x30] sm:$0xff] %v4387
      %4420 = vst [vmem:[%s379 + $0x38] sm:$0xff] %v4388
      %4421 = vst [vmem:[%s379 + $0x40] sm:$0xff] %v4389
      %4422 = vst [vmem:[%s379 + $0x48] sm:$0xff] %v4390
      %4423 = vst [vmem:[%s379 + $0x50] sm:$0xff] %v4391
      %4424 = vst [vmem:[%s379 + $0x58] sm:$0xff] %v4392
      %4425 = vst [vmem:[%s379 + $0x60] sm:$0xff] %v4393
      %4426 = vst [vmem:[%s379 + $0x68] sm:$0xff] %v4394
      %4427 = vst [vmem:[%s379 + $0x70] sm:$0xff] %v4395
      %4428 = vst [vmem:[%s379 + $0x78] sm:$0xff] %v4396
      %4429 = vst [vmem:[%s379 + $0x80] sm:$0xff] %v4397
      %4430 = vst [vmem:[%s379 + $0x88] sm:$0xff] %v4398
      %4431 = vst [vmem:[%s379 + $0x90] sm:$0xff] %v4399
      %4432 = vst [vmem:[%s379 + $0x98] sm:$0xff] %v4400
      %4433 = vst [vmem:[%s379 + $0xa0] sm:$0xff] %v4401
      %4434 = vst [vmem:[%s379 + $0xa8] sm:$0xff] %v4402
      %4435 = vst [vmem:[%s379 + $0xb0] sm:$0xff] %v4403
      %4436 = vst [vmem:[%s379 + $0xb8] sm:$0xff] %v4404
      %4437 = vst [vmem:[%s379 + $0xc0] sm:$0xff] %v4405
      %4438 = vst [vmem:[%s379 + $0xc8] sm:$0xff] %v4406
      %4439 = vst [vmem:[%s379 + $0xd0] sm:$0xff] %v4407
      %4440 = vst [vmem:[%s379 + $0xd8] sm:$0xff] %v4408
      %4441 = vst [vmem:[%s379 + $0xe0] sm:$0xff] %v4409
      %4442 = vst [vmem:[%s379 + $0xe8] sm:$0xff] %v4410
      %4443 = vst [vmem:[%s379 + $0xf0] sm:$0xff] %v4411
      %4444 = vst [vmem:[%s379 + $0xf8] sm:$0xff] %v4412
      %s4445 = smul.u32 2, %s24
      %p4446 = scmp.lt.s32.totalorder %s23, 1
      %s4447 = scalar_select %p4446, %s23, 1
      %p4448 = scmp.lt.s32.totalorder %s4445, 1
      %s4449 = scalar_select %p4448, %s4445, 1
      %s4450 = smul.addr %s4447, 32
      %s4451 = sadd.s32 %s4449, %s4450
      %s4452 = smul.addr %s4451, 8
      %s4453 = scalar_lea.vmem %s8, %s4452
      // Predicated region
      $region53: #{sepconvgru_forward.3} parent=51 // pred_check
        %p4454 = pneg %p233
      $region54: #{sepconvgru_forward.3} parent=51 // pred_check_branch
        %4456 = sbr.rel (%p4454) target = $region56
      $region55: #{sepconvgru_forward.3} parent=51 // pred_region
        %s4457 = smul.u32 2, %s24
      $region56: #{sepconvgru_forward.3} parent=51 // pred_fallthru
        _
    $region52: #{sepconvgru_forward.3} parent=5 // pred_fallthru
      _
    %p4458 = scmp.le.s32.totalorder 2, %s14
    // Predicated region
    $region57: #{sepconvgru_forward.3} parent=5 // pred_check
      %p4459 = pneg %p4458
    $region58: #{sepconvgru_forward.3} parent=5 // pred_check_branch
      %4461 = sbr.rel (%p4459) target = $region60
    $region59: #{sepconvgru_forward.3} parent=5 // pred_region
      %s4462 = ssub.s32 %s14, 2
      // Predicated region
      $region61: #{sepconvgru_forward.3} parent=59 // pred_check
        %p4463 = pneg %p239
      $region62: #{sepconvgru_forward.3} parent=59 // pred_check_branch
        %4465 = sbr.rel (%p4463) target = $region64
      $region63: #{sepconvgru_forward.3} parent=59 // pred_region
        %s4466 = smul.u32 2, %s26
        %p4467 = scmp.lt.s32.totalorder %s25, 1
        %s4468 = scalar_select %p4467, %s25, 1
        %p4469 = scmp.lt.s32.totalorder %s4466, 1
        %s4470 = scalar_select %p4469, %s4466, 1
        %s4471 = smul.addr %s4468, 32
        %s4472 = sadd.s32 %s4470, %s4471
        %s4473 = smul.addr %s4472, 8
        %s4474 = scalar_lea.vmem %s8, %s4473
      $region64: #{sepconvgru_forward.3} parent=59 // pred_fallthru
        _
    $region60: #{sepconvgru_forward.3} parent=5 // pred_fallthru
      _
  $region6: #{sepconvgru_forward.3} parent=0 // loop_footer
    %s18 = sadd.s32 1, %s14
  $region7: #{sepconvgru_forward.3} parent=0 // loop_footer_branch
    %13 = sbr.rel target = $region3
  $region8: #{sepconvgru_forward.3} parent=0 // loop_exit
    _

// kernel: sepconvgru_forward.2
$region0: #{sepconvgru_forward.2}
  #allocation0 [shape = 'u32[]', space=smem, size = 0x4, offset = 0x4, fixed_abs, tag = 'smem constant byte address 0x4 - core index']
  #allocation1 [shape = 'u32[144,128]{1,0:T(1,128)}', space=vmem, size = 0x12000, scoped, tag = 'internal scratch']
  %s0 = inlined_call_operand.vmem [shape: f32[2,16,16,128], index: 0, kind: input, shape index: {}, may-alias: {0,8}]
  %s1 = inlined_call_operand.vmem [shape: f32[2,16,16,128], index: 1, kind: input, shape index: {}]
  %s2 = inlined_call_operand.vmem [shape: bf16[3,128,256], index: 2, kind: input, shape index: {}]
  %s3 = inlined_call_operand.vmem [shape: bf16[3,128,256], index: 3, kind: input, shape index: {}]
  %s4 = inlined_call_operand.vmem [shape: f32[1,256], index: 4, kind: input, shape index: {}]
  %s5 = inlined_call_operand.vmem [shape: bf16[3,128,128], index: 5, kind: input, shape index: {}]
  %s6 = inlined_call_operand.vmem [shape: bf16[3,128,128], index: 6, kind: input, shape index: {}]
  %s7 = inlined_call_operand.vmem [shape: f32[1,128], index: 7, kind: input, shape index: {}]
  %s8 = inlined_call_operand.vmem [shape: f32[2,16,16,128], index: 8, kind: output, shape index: {}, may-alias: {0,8}]
  %s9 = sld [smem:[#allocation0]]
  $region65: #{sepconvgru_forward.2} parent=0
    _
  %s11 = ssub.s32 1, %s9
  %s12 = scalar_select 0, %s11, %s9
  loop: start=0, step=1, limit=4
  $region2: #{sepconvgru_forward.2} parent=0 // loop_pre_header
    _
  $region3: #{sepconvgru_forward.2} parent=0 // loop_header
    %s14 = sphi 0, %s18
    %p15 = scmp.ge.s32.totalorder %s14, 4
    %s21 = sphi 0, %s33
    %s22 = sphi 0, %s29
    %s23 = sphi 0, %s21
    %s24 = sphi 0, %s22
    %s25 = sphi 0, %s23
    %s26 = sphi 0, %s24
    %s38 = sphi 0, %s40
    %s41 = sphi 0, %s38
    %s42 = sphi 0, %s41
    %s58 = sphi 0, %s42
    %s66 = sphi 0, %s68
    %s69 = sphi 0, %s66
    %s70 = sphi 0, %s69
    %s86 = sphi 0, %s70
    %s90 = sphi 0, %s90
    %s92 = sphi 0, %s90
    %s93 = sphi 0, %s92
    %s107 = sphi 0, %s93
    %s111 = sphi 0, %s111
    %s113 = sphi 0, %s111
    %s114 = sphi 0, %s113
    %s128 = sphi 0, %s114
    %s132 = sphi 0, %s132
    %s134 = sphi 0, %s132
    %s135 = sphi 0, %s134
    %s149 = sphi 0, %s135
    %s153 = sphi 0, %s153
    %s155 = sphi 0, %s153
    %s156 = sphi 0, %s155
    %s170 = sphi 0, %s156
    %s174 = sphi 0, %s174
    %s176 = sphi 0, %s174
    %s177 = sphi 0, %s176
    %s191 = sphi 0, %s177
    %s195 = sphi 0, %s195
    %s197 = sphi 0, %s195
    %s198 = sphi 0, %s197
    %s212 = sphi 0, %s198
    %s220 = sphi 0, %s222
    %s223 = sphi 0, %s220
    %s224 = sphi 0, %s223
    %s240 = sphi 0, %s224
  $region4: #{sepconvgru_forward.2} parent=0 // loop_header_branch
    %17 = sbr.rel (%p15) target = $region8
  $region5: #{sepconvgru_forward.2} parent=0 // loop_body
    %s19 = ssub.s32 %s14, 1
    %s20 = ssub.s32 %s14, 2
    %s27 = sadd.s32 1, %s22
    %p28 = scmp.ge.s32.totalorder %s27, 1
    %s29 = scalar_select %p28, 0, %s27
    %s30 = sadd.s32 1, %s21
    %s31 = scalar_select %p28, %s30, %s21
    %p32 = scmp.ge.s32.totalorder %s31, 2
    %s33 = scalar_select %p32, 0, %s31
    %s34 = ssub.s32 %s21, %s33
    %s35 = ssub.s32 %s22, %s29
    %s36 = sor.u32 %s34, %s35
    %p37 = scmp.eq.s32.totalorder %s36, 0
    %s39 = sadd.s32 %s38, 1
    %s40 = scalar_select %p37, %s38, %s39
    %p43 = pneg %p37
    %p44 = scmp.eq.s32.totalorder %s14, 1
    %p45 = por %p43, %p44
    %p46 = scmp.ne.s32.totalorder %s38, %s41
    %p47 = scmp.eq.s32.totalorder %s14, 0
    %p48 = por %p46, %p47
    %p49 = scmp.ne.s32.totalorder %s38, %s41
    %p50 = scmp.eq.s32.totalorder %s19, 1
    %p51 = por %p49, %p50
    %p52 = scmp.ne.s32.totalorder %s41, %s42
    %p53 = scmp.eq.s32.totalorder %s19, 0
    %p54 = por %p52, %p53
    %p55 = scmp.ne.s32.totalorder %s41, %s42
    %p56 = scmp.eq.s32.totalorder %s20, 1
    %p57 = por %p55, %p56
    %p59 = scmp.ne.s32.totalorder %s42, %s58
    %p60 = scmp.eq.s32.totalorder %s20, 0
    %p61 = por %p59, %p60
    %s62 = ssub.s32 %s21, %s33
    %s63 = ssub.s32 %s22, %s29
    %s64 = sor.u32 %s62, %s63
    %p65 = scmp.eq.s32.totalorder %s64, 0
    %s67 = sadd.s32 %s66, 1
    %s68 = scalar_select %p65, %s66, %s67
    %p71 = pneg %p65
    %p72 = scmp.eq.s32.totalorder %s14, 1
    %p73 = por %p71, %p72
    %p74 = scmp.ne.s32.totalorder %s66, %s69
    %p75 = scmp.eq.s32.totalorder %s14, 0
    %p76 = por %p74, %p75
    %p77 = scmp.ne.s32.totalorder %s66, %s69
    %p78 = scmp.eq.s32.totalorder %s19, 1
    %p79 = por %p77, %p78
    %p80 = scmp.ne.s32.totalorder %s69, %s70
    %p81 = scmp.eq.s32.totalorder %s19, 0
    %p82 = por %p80, %p81
    %p83 = scmp.ne.s32.totalorder %s69, %s70
    %p84 = scmp.eq.s32.totalorder %s20, 1
    %p85 = por %p83, %p84
    %p87 = scmp.ne.s32.totalorder %s70, %s86
    %p88 = scmp.eq.s32.totalorder %s20, 0
    %p89 = por %p87, %p88
    %s91 = sadd.s32 %s90, 1
    %p94 = scmp.eq.s32.totalorder %s14, 1
    %p95 = scmp.ne.s32.totalorder %s90, %s92
    %p96 = scmp.eq.s32.totalorder %s14, 0
    %p97 = por %p95, %p96
    %p98 = scmp.ne.s32.totalorder %s90, %s92
    %p99 = scmp.eq.s32.totalorder %s19, 1
    %p100 = por %p98, %p99
    %p101 = scmp.ne.s32.totalorder %s92, %s93
    %p102 = scmp.eq.s32.totalorder %s19, 0
    %p103 = por %p101, %p102
    %p104 = scmp.ne.s32.totalorder %s92, %s93
    %p105 = scmp.eq.s32.totalorder %s20, 1
    %p106 = por %p104, %p105
    %p108 = scmp.ne.s32.totalorder %s93, %s107
    %p109 = scmp.eq.s32.totalorder %s20, 0
    %p110 = por %p108, %p109
    %s112 = sadd.s32 %s111, 1
    %p115 = scmp.eq.s32.totalorder %s14, 1
    %p116 = scmp.ne.s32.totalorder %s111, %s113
    %p117 = scmp.eq.s32.totalorder %s14, 0
    %p118 = por %p116, %p117
    %p119 = scmp.ne.s32.totalorder %s111, %s113
    %p120 = scmp.eq.s32.totalorder %s19, 1
    %p121 = por %p119, %p120
    %p122 = scmp.ne.s32.totalorder %s113, %s114
    %p123 = scmp.eq.s32.totalorder %s19, 0
    %p124 = por %p122, %p123
    %p125 = scmp.ne.s32.totalorder %s113, %s114
    %p126 = scmp.eq.s32.totalorder %s20, 1
    %p127 = por %p125, %p126
    %p129 = scmp.ne.s32.totalorder %s114, %s128
    %p130 = scmp.eq.s32.totalorder %s20, 0
    %p131 = por %p129, %p130
    %s133 = sadd.s32 %s132, 1
    %p136 = scmp.eq.s32.totalorder %s14, 1
    %p137 = scmp.ne.s32.totalorder %s132, %s134
    %p138 = scmp.eq.s32.totalorder %s14, 0
    %p139 = por %p137, %p138
    %p140 = scmp.ne.s32.totalorder %s132, %s134
    %p141 = scmp.eq.s32.totalorder %s19, 1
    %p142 = por %p140, %p141
    %p143 = scmp.ne.s32.totalorder %s134, %s135
    %p144 = scmp.eq.s32.totalorder %s19, 0
    %p145 = por %p143, %p144
    %p146 = scmp.ne.s32.totalorder %s134, %s135
    %p147 = scmp.eq.s32.totalorder %s20, 1
    %p148 = por %p146, %p147
    %p150 = scmp.ne.s32.totalorder %s135, %s149
    %p151 = scmp.eq.s32.totalorder %s20, 0
    %p152 = por %p150, %p151
    %s154 = sadd.s32 %s153, 1
    %p157 = scmp.eq.s32.totalorder %s14, 1
    %p158 = scmp.ne.s32.totalorder %s153, %s155
    %p159 = scmp.eq.s32.totalorder %s14, 0
    %p160 = por %p158, %p159
    %p161 = scmp.ne.s32.totalorder %s153, %s155
    %p162 = scmp.eq.s32.totalorder %s19, 1
    %p163 = por %p161, %p162
    %p164 = scmp.ne.s32.totalorder %s155, %s156
    %p165 = scmp.eq.s32.totalorder %s19, 0
    %p166 = por %p164, %p165
    %p167 = scmp.ne.s32.totalorder %s155, %s156
    %p168 = scmp.eq.s32.totalorder %s20, 1
    %p169 = por %p167, %p168
    %p171 = scmp.ne.s32.totalorder %s156, %s170
    %p172 = scmp.eq.s32.totalorder %s20, 0
    %p173 = por %p171, %p172
    %s175 = sadd.s32 %s174, 1
    %p178 = scmp.eq.s32.totalorder %s14, 1
    %p179 = scmp.ne.s32.totalorder %s174, %s176
    %p180 = scmp.eq.s32.totalorder %s14, 0
    %p181 = por %p179, %p180
    %p182 = scmp.ne.s32.totalorder %s174, %s176
    %p183 = scmp.eq.s32.totalorder %s19, 1
    %p184 = por %p182, %p183
    %p185 = scmp.ne.s32.totalorder %s176, %s177
    %p186 = scmp.eq.s32.totalorder %s19, 0
    %p187 = por %p185, %p186
    %p188 = scmp.ne.s32.totalorder %s176, %s177
    %p189 = scmp.eq.s32.totalorder %s20, 1
    %p190 = por %p188, %p189
    %p192 = scmp.ne.s32.totalorder %s177, %s191
    %p193 = scmp.eq.s32.totalorder %s20, 0
    %p194 = por %p192, %p193
    %s196 = sadd.s32 %s195, 1
    %p199 = scmp.eq.s32.totalorder %s14, 1
    %p200 = scmp.ne.s32.totalorder %s195, %s197
    %p201 = scmp.eq.s32.totalorder %s14, 0
    %p202 = por %p200, %p201
    %p203 = scmp.ne.s32.totalorder %s195, %s197
    %p204 = scmp.eq.s32.totalorder %s19, 1
    %p205 = por %p203, %p204
    %p206 = scmp.ne.s32.totalorder %s197, %s198
    %p207 = scmp.eq.s32.totalorder %s19, 0
    %p208 = por %p206, %p207
    %p209 = scmp.ne.s32.totalorder %s197, %s198
    %p210 = scmp.eq.s32.totalorder %s20, 1
    %p211 = por %p209, %p210
    %p213 = scmp.ne.s32.totalorder %s198, %s212
    %p214 = scmp.eq.s32.totalorder %s20, 0
    %p215 = por %p213, %p214
    %s216 = ssub.s32 %s21, %s33
    %s217 = ssub.s32 %s22, %s29
    %s218 = sor.u32 %s216, %s217
    %p219 = scmp.eq.s32.totalorder %s218, 0
    %s221 = sadd.s32 %s220, 1
    %s222 = scalar_select %p219, %s220, %s221
    %p225 = pneg %p219
    %p226 = scmp.eq.s32.totalorder %s14, 1
    %p227 = por %p225, %p226
    %p228 = scmp.ne.s32.totalorder %s220, %s223
    %p229 = scmp.eq.s32.totalorder %s14, 0
    %p230 = por %p228, %p229
    %p231 = scmp.ne.s32.totalorder %s220, %s223
    %p232 = scmp.eq.s32.totalorder %s19, 1
    %p233 = por %p231, %p232
    %p234 = scmp.ne.s32.totalorder %s223, %s224
    %p235 = scmp.eq.s32.totalorder %s19, 0
    %p236 = por %p234, %p235
    %p237 = scmp.ne.s32.totalorder %s223, %s224
    %p238 = scmp.eq.s32.totalorder %s20, 1
    %p239 = por %p237, %p238
    %p241 = scmp.ne.s32.totalorder %s224, %s240
    %p242 = scmp.eq.s32.totalorder %s20, 0
    %p243 = por %p241, %p242
    %p244 = scmp.le.s32.totalorder 1, %s14
    %p245 = scmp.lt.s32.totalorder %s14, 3
    %p246 = pnand %p244, %p245
    %p247 = pneg %p246
    // Predicated region
    $region9: #{sepconvgru_forward.2} parent=5 // pred_check
      _
    $region10: #{sepconvgru_forward.2} parent=5 // pred_check_branch
      %249 = sbr.rel (%p246) target = $region12
    $region11: #{sepconvgru_forward.2} parent=5 // pred_region
      %s250 = ssub.s32 %s14, 1
      // Predicated region
      $region13: #{sepconvgru_forward.2} parent=11 // pred_check
        %p251 = pneg %p103
      $region14: #{sepconvgru_forward.2} parent=11 // pred_check_branch
        %253 = sbr.rel (%p251) target = $region16
      $region15: #{sepconvgru_forward.2} parent=11 // pred_region
        _
      $region16: #{sepconvgru_forward.2} parent=11 // pred_fallthru
        _
      // Predicated region
      $region17: #{sepconvgru_forward.2} parent=11 // pred_check
        %p254 = pneg %p124
      $region18: #{sepconvgru_forward.2} parent=11 // pred_check_branch
        %256 = sbr.rel (%p254) target = $region20
      $region19: #{sepconvgru_forward.2} parent=11 // pred_region
        _
      $region20: #{sepconvgru_forward.2} parent=11 // pred_fallthru
        _
      // Predicated region
      $region21: #{sepconvgru_forward.2} parent=11 // pred_check
        %p257 = pneg %p145
      $region22: #{sepconvgru_forward.2} parent=11 // pred_check_branch
        %259 = sbr.rel (%p257) target = $region24
      $region23: #{sepconvgru_forward.2} parent=11 // pred_region
        _
      $region24: #{sepconvgru_forward.2} parent=11 // pred_fallthru
        _
      // Predicated region
      $region25: #{sepconvgru_forward.2} parent=11 // pred_check
        %p260 = pneg %p166
      $region26: #{sepconvgru_forward.2} parent=11 // pred_check_branch
        %262 = sbr.rel (%p260) target = $region28
      $region27: #{sepconvgru_forward.2} parent=11 // pred_region
        _
      $region28: #{sepconvgru_forward.2} parent=11 // pred_fallthru
        _
      // Predicated region
      $region29: #{sepconvgru_forward.2} parent=11 // pred_check
        %p263 = pneg %p187
      $region30: #{sepconvgru_forward.2} parent=11 // pred_check_branch
        %265 = sbr.rel (%p263) target = $region32
      $region31: #{sepconvgru_forward.2} parent=11 // pred_region
        _
      $region32: #{sepconvgru_forward.2} parent=11 // pred_fallthru
        _
      // Predicated region
      $region33: #{sepconvgru_forward.2} parent=11 // pred_check
        %p266 = pneg %p208
      $region34: #{sepconvgru_forward.2} parent=11 // pred_check_branch
        %268 = sbr.rel (%p266) target = $region36
      $region35: #{sepconvgru_forward.2} parent=11 // pred_region
        _
      $region36: #{sepconvgru_forward.2} parent=11 // pred_fallthru
        _
    $region12: #{sepconvgru_forward.2} parent=5 // pred_fallthru
      _
    %p269 = scmp.lt.s32.totalorder %s14, 2
    // Predicated region
    $region37: #{sepconvgru_forward.2} parent=5 // pred_check
      %p270 = pneg %p269
    $region38: #{sepconvgru_forward.2} parent=5 // pred_check_branch
      %272 = sbr.rel (%p270) target = $region40
    $region39: #{sepconvgru_forward.2} parent=5 // pred_region
      // Predicated region
      $region41: #{sepconvgru_forward.2} parent=39 // pred_check
        %p273 = pneg %p48
      $region42: #{sepconvgru_forward.2} parent=39 // pred_check_branch
        %275 = sbr.rel (%p273) target = $region44
      $region43: #{sepconvgru_forward.2} parent=39 // pred_region
        %s276 = smul.u32 16, %s22
        %p277 = scmp.lt.s32.totalorder %s21, 1
        %s278 = scalar_select %p277, %s21, 1
        %p279 = scmp.lt.s32.totalorder %s276, 15
        %s280 = scalar_select %p279, %s276, 15
        %s281 = smul.addr %s280, 2
        %s282 = smul.addr %s278, 32
        %s283 = sadd.s32 %s281, %s282
        %s284 = smul.addr %s283, 8
        %s285 = scalar_lea.vmem %s0, %s284
        %s286 = smul.u32 16, %s22
      $region44: #{sepconvgru_forward.2} parent=39 // pred_fallthru
        _
      // Predicated region
      $region45: #{sepconvgru_forward.2} parent=39 // pred_check
        %p287 = pneg %p76
      $region46: #{sepconvgru_forward.2} parent=39 // pred_check_branch
        %289 = sbr.rel (%p287) target = $region48
      $region47: #{sepconvgru_forward.2} parent=39 // pred_region
        %s290 = smul.u32 16, %s22
        %p291 = scmp.lt.s32.totalorder %s21, 1
        %s292 = scalar_select %p291, %s21, 1
        %p293 = scmp.lt.s32.totalorder %s290, 15
        %s294 = scalar_select %p293, %s290, 15
        %s295 = smul.addr %s294, 2
        %s296 = smul.addr %s292, 32
        %s297 = sadd.s32 %s295, %s296
        %s298 = smul.addr %s297, 8
        %s299 = scalar_lea.vmem %s1, %s298
        %s300 = smul.u32 16, %s22
      $region48: #{sepconvgru_forward.2} parent=39 // pred_fallthru
        _
    $region40: #{sepconvgru_forward.2} parent=5 // pred_fallthru
      _
    %p301 = scmp.le.s32.totalorder 1, %s14
    %p302 = scmp.lt.s32.totalorder %s14, 3
    %p303 = pnand %p301, %p302
    %p304 = pneg %p303
    // Predicated region
    $region49: #{sepconvgru_forward.2} parent=5 // pred_check
      _
    $region50: #{sepconvgru_forward.2} parent=5 // pred_check_branch
      %306 = sbr.rel (%p303) target = $region52
    $region51: #{sepconvgru_forward.2} parent=5 // pred_region
      %s307 = ssub.s32 %s14, 1
      %s308 = smul.u32 16, %s24
      %p309 = scmp.lt.s32.totalorder %s23, 1
      %s310 = scalar_select %p309, %s23, 1
      %p311 = scmp.lt.s32.totalorder %s308, 15
      %s312 = scalar_select %p311, %s308, 15
      %s313 = smul.addr %s312, 2
      %s314 = smul.addr %s310, 32
      %s315 = sadd.s32 %s313, %s314
      %s316 = smul.addr %s315, 8
      %s317 = scalar_lea.vmem %s0, %s316
      %p318 = pneg %p54
      %p319 = pneg %p51
      %s320 = smul.u32 16, %s24
      %p321 = scmp.lt.s32.totalorder %s23, 1
      %s322 = scalar_select %p321, %s23, 1
      %p323 = scmp.lt.s32.totalorder %s320, 15
      %s324 = scalar_select %p323, %s320, 15
      %s325 = smul.addr %s324, 2
      %s326 = smul.addr %s322, 32
      %s327 = sadd.s32 %s325, %s326
      %s328 = smul.addr %s327, 8
      %s329 = scalar_lea.vmem %s1, %s328
      %p330 = pneg %p82
      %p331 = pneg %p79
      %p332 = pneg %p103
      %p333 = pneg %p100
      %p334 = pneg %p124
      %p335 = pneg %p121
      %p336 = pneg %p145
      %p337 = pneg %p142
      %p338 = pneg %p166
      %p339 = pneg %p163
      %p340 = pneg %p187
      %p341 = pneg %p184
      %p342 = pneg %p208
      %p343 = pneg %p205
      %p344 = pneg %p236
      %p345 = pneg %p233
      %s346 = smul.u32 16, %s24
      %p347 = scmp.lt.s32.totalorder %s23, 1
      %s348 = scalar_select %p347, %s23, 1
      %p349 = scmp.lt.s32.totalorder %s346, 15
      %s350 = scalar_select %p349, %s346, 15
      %s351 = smul.addr %s350, 2
      %s352 = smul.addr %s348, 32
      %s353 = sadd.s32 %s351, %s352
      %s354 = smul.addr %s353, 8
      %s355 = scalar_lea.vmem %s8, %s354
      %s356 = smul.u32 16, %s24
      %p357 = scmp.lt.s32.totalorder %s23, 1
      %s358 = scalar_select %p357, %s23, 1
      %p359 = scmp.lt.s32.totalorder %s356, 15
      %s360 = scalar_select %p359, %s356, 15
      %s361 = smul.addr %s360, 2
      %s362 = smul.addr %s358, 32
      %s363 = sadd.s32 %s361, %s362
      %s364 = smul.addr %s363, 8
      %s365 = scalar_lea.vmem %s0, %s364
      %s366 = smul.u32 16, %s24
      %s367 = smul.u32 16, %s24
      %p368 = scmp.lt.s32.totalorder %s23, 1
      %s369 = scalar_select %p368, %s23, 1
      %p370 = scmp.lt.s32.totalorder %s367, 15
      %s371 = scalar_select %p370, %s367, 15
      %s372 = smul.addr %s371, 2
      %s373 = smul.addr %s369, 32
      %s374 = sadd.s32 %s372, %s373
      %s375 = smul.addr %s374, 8
      %s376 = scalar_lea.vmem %s1, %s375
      %s377 = smul.u32 16, %s24
      %s378 = smul.u32 16, %s24
      %p379 = scmp.lt.s32.totalorder %s23, 1
      %s380 = scalar_select %p379, %s23, 1
      %p381 = scmp.lt.s32.totalorder %s378, 15
      %s382 = scalar_select %p381, %s378, 15
      %s383 = smul.addr %s382, 2
      %s384 = smul.addr %s380, 32
      %s385 = sadd.s32 %s383, %s384
      %s386 = smul.addr %s385, 8
      %s387 = scalar_lea.vmem %s8, %s386
      %s388 = smul.u32 16, %s24
      %v390 = vld [vmem:[%s365] sm:$0xff]
      %v391 = vld [vmem:[%s365 + $0x8] sm:$0xff]
      %v392 = vld [vmem:[%s365 + $0x10] sm:$0xff]
      %v393 = vld [vmem:[%s365 + $0x18] sm:$0xff]
      %v394 = vld [vmem:[%s365 + $0x20] sm:$0xff]
      %v395 = vld [vmem:[%s365 + $0x28] sm:$0xff]
      %v396 = vld [vmem:[%s365 + $0x30] sm:$0xff]
      %v397 = vld [vmem:[%s365 + $0x38] sm:$0xff]
      %v398 = vld [vmem:[%s365 + $0x40] sm:$0xff]
      %v399 = vld [vmem:[%s365 + $0x48] sm:$0xff]
      %v400 = vld [vmem:[%s365 + $0x50] sm:$0xff]
      %v401 = vld [vmem:[%s365 + $0x58] sm:$0xff]
      %v402 = vld [vmem:[%s365 + $0x60] sm:$0xff]
      %v403 = vld [vmem:[%s365 + $0x68] sm:$0xff]
      %v404 = vld [vmem:[%s365 + $0x70] sm:$0xff]
      %v405 = vld [vmem:[%s365 + $0x78] sm:$0xff]
      %v406 = vld [vmem:[%s365 + $0x80] sm:$0xff]
      %v407 = vld [vmem:[%s365 + $0x88] sm:$0xff]
      %v408 = vld [vmem:[%s365 + $0x90] sm:$0xff]
      %v409 = vld [vmem:[%s365 + $0x98] sm:$0xff]
      %v410 = vld [vmem:[%s365 + $0xa0] sm:$0xff]
      %v411 = vld [vmem:[%s365 + $0xa8] sm:$0xff]
      %v412 = vld [vmem:[%s365 + $0xb0] sm:$0xff]
      %v413 = vld [vmem:[%s365 + $0xb8] sm:$0xff]
      %v414 = vld [vmem:[%s365 + $0xc0] sm:$0xff]
      %v415 = vld [vmem:[%s365 + $0xc8] sm:$0xff]
      %v416 = vld [vmem:[%s365 + $0xd0] sm:$0xff]
      %v417 = vld [vmem:[%s365 + $0xd8] sm:$0xff]
      %v418 = vld [vmem:[%s365 + $0xe0] sm:$0xff]
      %v419 = vld [vmem:[%s365 + $0xe8] sm:$0xff]
      %v420 = vld [vmem:[%s365 + $0xf0] sm:$0xff]
      %v421 = vld [vmem:[%s365 + $0xf8] sm:$0xff]
      %v422 = vpack.c.bf16 %v391, %v390
      %v423 = vpack.c.bf16 %v393, %v392
      %v424 = vpack.c.bf16 %v395, %v394
      %v425 = vpack.c.bf16 %v397, %v396
      %v426 = vpack.c.bf16 %v399, %v398
      %v427 = vpack.c.bf16 %v401, %v400
      %v428 = vpack.c.bf16 %v403, %v402
      %v429 = vpack.c.bf16 %v405, %v404
      %v430 = vpack.c.bf16 %v407, %v406
      %v431 = vpack.c.bf16 %v409, %v408
      %v432 = vpack.c.bf16 %v411, %v410
      %v433 = vpack.c.bf16 %v413, %v412
      %v434 = vpack.c.bf16 %v415, %v414
      %v435 = vpack.c.bf16 %v417, %v416
      %v436 = vpack.c.bf16 %v419, %v418
      %v437 = vpack.c.bf16 %v421, %v420
      %v438 = vld [vmem:[%s376] sm:$0xff]
      %v439 = vld [vmem:[%s376 + $0x8] sm:$0xff]
      %v440 = vld [vmem:[%s376 + $0x10] sm:$0xff]
      %v441 = vld [vmem:[%s376 + $0x18] sm:$0xff]
      %v442 = vld [vmem:[%s376 + $0x20] sm:$0xff]
      %v443 = vld [vmem:[%s376 + $0x28] sm:$0xff]
      %v444 = vld [vmem:[%s376 + $0x30] sm:$0xff]
      %v445 = vld [vmem:[%s376 + $0x38] sm:$0xff]
      %v446 = vld [vmem:[%s376 + $0x40] sm:$0xff]
      %v447 = vld [vmem:[%s376 + $0x48] sm:$0xff]
      %v448 = vld [vmem:[%s376 + $0x50] sm:$0xff]
      %v449 = vld [vmem:[%s376 + $0x58] sm:$0xff]
      %v450 = vld [vmem:[%s376 + $0x60] sm:$0xff]
      %v451 = vld [vmem:[%s376 + $0x68] sm:$0xff]
      %v452 = vld [vmem:[%s376 + $0x70] sm:$0xff]
      %v453 = vld [vmem:[%s376 + $0x78] sm:$0xff]
      %v454 = vld [vmem:[%s376 + $0x80] sm:$0xff]
      %v455 = vld [vmem:[%s376 + $0x88] sm:$0xff]
      %v456 = vld [vmem:[%s376 + $0x90] sm:$0xff]
      %v457 = vld [vmem:[%s376 + $0x98] sm:$0xff]
      %v458 = vld [vmem:[%s376 + $0xa0] sm:$0xff]
      %v459 = vld [vmem:[%s376 + $0xa8] sm:$0xff]
      %v460 = vld [vmem:[%s376 + $0xb0] sm:$0xff]
      %v461 = vld [vmem:[%s376 + $0xb8] sm:$0xff]
      %v462 = vld [vmem:[%s376 + $0xc0] sm:$0xff]
      %v463 = vld [vmem:[%s376 + $0xc8] sm:$0xff]
      %v464 = vld [vmem:[%s376 + $0xd0] sm:$0xff]
      %v465 = vld [vmem:[%s376 + $0xd8] sm:$0xff]
      %v466 = vld [vmem:[%s376 + $0xe0] sm:$0xff]
      %v467 = vld [vmem:[%s376 + $0xe8] sm:$0xff]
      %v468 = vld [vmem:[%s376 + $0xf0] sm:$0xff]
      %v469 = vld [vmem:[%s376 + $0xf8] sm:$0xff]
      %v470 = vpack.c.bf16 %v439, %v438
      %v471 = vpack.c.bf16 %v441, %v440
      %v472 = vpack.c.bf16 %v443, %v442
      %v473 = vpack.c.bf16 %v445, %v444
      %v474 = vpack.c.bf16 %v447, %v446
      %v475 = vpack.c.bf16 %v449, %v448
      %v476 = vpack.c.bf16 %v451, %v450
      %v477 = vpack.c.bf16 %v453, %v452
      %v478 = vpack.c.bf16 %v455, %v454
      %v479 = vpack.c.bf16 %v457, %v456
      %v480 = vpack.c.bf16 %v459, %v458
      %v481 = vpack.c.bf16 %v461, %v460
      %v482 = vpack.c.bf16 %v463, %v462
      %v483 = vpack.c.bf16 %v465, %v464
      %v484 = vpack.c.bf16 %v467, %v466
      %v485 = vpack.c.bf16 %v469, %v468
      %v486 = vld [vmem:[%s2] sm:$0xff]
      %v487 = vld [vmem:[%s2 + $0x8] sm:$0xff]
      %v488 = vld [vmem:[%s2 + $0x10] sm:$0xff]
      %v489 = vld [vmem:[%s2 + $0x18] sm:$0xff]
      %v490 = vld [vmem:[%s2 + $0x20] sm:$0xff]
      %v491 = vld [vmem:[%s2 + $0x28] sm:$0xff]
      %v492 = vld [vmem:[%s2 + $0x30] sm:$0xff]
      %v493 = vld [vmem:[%s2 + $0x38] sm:$0xff]
      %v494 = vld [vmem:[%s2 + $0x40] sm:$0xff]
      %v495 = vld [vmem:[%s2 + $0x48] sm:$0xff]
      %v496 = vld [vmem:[%s2 + $0x50] sm:$0xff]
      %v497 = vld [vmem:[%s2 + $0x58] sm:$0xff]
      %v498 = vld [vmem:[%s2 + $0x60] sm:$0xff]
      %v499 = vld [vmem:[%s2 + $0x68] sm:$0xff]
      %v500 = vld [vmem:[%s2 + $0x70] sm:$0xff]
      %v501 = vld [vmem:[%s2 + $0x78] sm:$0xff]
      %v502 = vld [vmem:[%s3] sm:$0xff]
      %v503 = vld [vmem:[%s3 + $0x8] sm:$0xff]
      %v504 = vld [vmem:[%s3 + $0x10] sm:$0xff]
      %v505 = vld [vmem:[%s3 + $0x18] sm:$0xff]
      %v506 = vld [vmem:[%s3 + $0x20] sm:$0xff]
      %v507 = vld [vmem:[%s3 + $0x28] sm:$0xff]
      %v508 = vld [vmem:[%s3 + $0x30] sm:$0xff]
      %v509 = vld [vmem:[%s3 + $0x38] sm:$0xff]
      %v510 = vld [vmem:[%s3 + $0x40] sm:$0xff]
      %v511 = vld [vmem:[%s3 + $0x48] sm:$0xff]
      %v512 = vld [vmem:[%s3 + $0x50] sm:$0xff]
      %v513 = vld [vmem:[%s3 + $0x58] sm:$0xff]
      %v514 = vld [vmem:[%s3 + $0x60] sm:$0xff]
      %v515 = vld [vmem:[%s3 + $0x68] sm:$0xff]
      %v516 = vld [vmem:[%s3 + $0x70] sm:$0xff]
      %v517 = vld [vmem:[%s3 + $0x78] sm:$0xff]
      %v534 = vunpack.c.l.b16 %v502
      %v535 = vunpack.c.h.b16 %v502
      %v536 = vunpack.c.l.b16 %v503
      %v537 = vunpack.c.h.b16 %v503
      %v538 = vunpack.c.l.b16 %v504
      %v539 = vunpack.c.h.b16 %v504
      %v540 = vunpack.c.l.b16 %v505
      %v541 = vunpack.c.h.b16 %v505
      %v542 = vunpack.c.l.b16 %v506
      %v543 = vunpack.c.h.b16 %v506
      %v544 = vunpack.c.l.b16 %v507
      %v545 = vunpack.c.h.b16 %v507
      %v546 = vunpack.c.l.b16 %v508
      %v547 = vunpack.c.h.b16 %v508
      %v548 = vunpack.c.l.b16 %v509
      %v549 = vunpack.c.h.b16 %v509
      %v550 = vunpack.c.l.b16 %v510
      %v551 = vunpack.c.h.b16 %v510
      %v552 = vunpack.c.l.b16 %v511
      %v553 = vunpack.c.h.b16 %v511
      %v554 = vunpack.c.l.b16 %v512
      %v555 = vunpack.c.h.b16 %v512
      %v556 = vunpack.c.l.b16 %v513
      %v557 = vunpack.c.h.b16 %v513
      %v558 = vunpack.c.l.b16 %v514
      %v559 = vunpack.c.h.b16 %v514
      %v560 = vunpack.c.l.b16 %v515
      %v561 = vunpack.c.h.b16 %v515
      %v562 = vunpack.c.l.b16 %v516
      %v563 = vunpack.c.h.b16 %v516
      %v564 = vunpack.c.l.b16 %v517
      %v565 = vunpack.c.h.b16 %v517
      %v566 = vpack.c.b16 %v536, %v534
      %v567 = vpack.c.b16 %v537, %v535
      %v568 = vpack.c.b16 %v540, %v538
      %v569 = vpack.c.b16 %v541, %v539
      %v570 = vpack.c.b16 %v544, %v542
      %v571 = vpack.c.b16 %v545, %v543
      %v572 = vpack.c.b16 %v548, %v546
      %v573 = vpack.c.b16 %v549, %v547
      %v574 = vpack.c.b16 %v552, %v550
      %v575 = vpack.c.b16 %v553, %v551
      %v576 = vpack.c.b16 %v556, %v554
      %v577 = vpack.c.b16 %v557, %v555
      %v578 = vpack.c.b16 %v560, %v558
      %v579 = vpack.c.b16 %v561, %v559
      %v580 = vpack.c.b16 %v564, %v562
      %v581 = vpack.c.b16 %v565, %v563
      %598 = vmatprep.subr.bf16.mxu0 %v567
      %599 = vmatpush1.bf16.msra.mxu0 %v566
      %600 = vmatprep.subr.bf16.mxu0 %v569
      %601 = vmatpush1.bf16.msra.mxu0 %v568
      %602 = vmatprep.subr.bf16.mxu0 %v571
      %603 = vmatpush1.bf16.msra.mxu0 %v570
      %604 = vmatprep.subr.bf16.mxu0 %v573
      %605 = vmatpush1.bf16.msra.mxu0 %v572
      %606 = vmatprep.subr.bf16.mxu0 %v575
      %607 = vmatpush1.bf16.msra.mxu0 %v574
      %608 = vmatprep.subr.bf16.mxu0 %v577
      %609 = vmatpush1.bf16.msra.mxu0 %v576
      %610 = vmatprep.subr.bf16.mxu0 %v579
      %611 = vmatpush1.bf16.msra.mxu0 %v578
      %612 = vmatprep.subr.bf16.mxu0 %v581
      %613 = vmatpush1.bf16.msra.mxu0 %v580
      %614 = vmatprep.subr.bf16.mxu0 0
      %615 = vmatpush1.bf16.msra.mxu0 0
      %616 = vmatprep.subr.bf16.mxu0 0
      %617 = vmatpush1.bf16.msra.mxu0 0
      %618 = vmatprep.subr.bf16.mxu0 0
      %619 = vmatpush1.bf16.msra.mxu0 0
      %620 = vmatprep.subr.bf16.mxu0 0
      %621 = vmatpush1.bf16.msra.mxu0 0
      %622 = vmatprep.subr.bf16.mxu0 0
      %623 = vmatpush1.bf16.msra.mxu0 0
      %624 = vmatprep.subr.bf16.mxu0 0
      %625 = vmatpush1.bf16.msra.mxu0 0
      %626 = vmatprep.subr.bf16.mxu0 0
      %627 = vmatpush1.bf16.msra.mxu0 0
      %628 = vmatprep.subr.bf16.mxu0 0
      %629 = vmatpush1.bf16.msra.mxu0 0
      %630 = vmatprep.mubr.bf16.mxu0 0
      %631 = vmatmul.mubr.bf16.gmra.mrb[0].mxu0 %v470
      %v632 = vpop.f32.mrb[0].mxu0
      %v633 = vadd.f32 0.0, %v632
      %v634 = vpop.f32.mrb[0].mxu0
      %v635 = vadd.f32 0.0, %v634
      %v636 = vpop.f32.mrb[0].mxu0
      %v637 = vadd.f32 0.0, %v636
      %v638 = vpop.f32.mrb[0].mxu0
      %v639 = vadd.f32 0.0, %v638
      %640 = vmatprep.mubr.bf16.mxu0 0
      %641 = vmatmul.mubr.bf16.gmra.mrb[0].mxu0 %v471
      %v642 = vpop.f32.mrb[0].mxu0
      %v643 = vadd.f32 0.0, %v642
      %v644 = vpop.f32.mrb[0].mxu0
      %v645 = vadd.f32 0.0, %v644
      %v646 = vpop.f32.mrb[0].mxu0
      %v647 = vadd.f32 0.0, %v646
      %v648 = vpop.f32.mrb[0].mxu0
      %v649 = vadd.f32 0.0, %v648
      %650 = vmatprep.mubr.bf16.mxu0 0
      %651 = vmatmul.mubr.bf16.gmra.mrb[0].mxu0 %v472
      %v652 = vpop.f32.mrb[0].mxu0
      %v653 = vadd.f32 0.0, %v652
      %v654 = vpop.f32.mrb[0].mxu0
      %v655 = vadd.f32 0.0, %v654
      %v656 = vpop.f32.mrb[0].mxu0
      %v657 = vadd.f32 0.0, %v656
      %v658 = vpop.f32.mrb[0].mxu0
      %v659 = vadd.f32 0.0, %v658
      %660 = vmatprep.mubr.bf16.mxu0 0
      %661 = vmatmul.mubr.bf16.gmra.mrb[0].mxu0 %v473
      %v662 = vpop.f32.mrb[0].mxu0
      %v663 = vadd.f32 0.0, %v662
      %v664 = vpop.f32.mrb[0].mxu0
      %v665 = vadd.f32 0.0, %v664
      %v666 = vpop.f32.mrb[0].mxu0
      %v667 = vadd.f32 0.0, %v666
      %v668 = vpop.f32.mrb[0].mxu0
      %v669 = vadd.f32 0.0, %v668
      %670 = vmatprep.mubr.bf16.mxu0 0
      %671 = vmatmul.mubr.bf16.gmra.mrb[0].mxu0 %v474
      %v672 = vpop.f32.mrb[0].mxu0
      %v673 = vadd.f32 0.0, %v672
      %v674 = vpop.f32.mrb[0].mxu0
      %v675 = vadd.f32 0.0, %v674
      %v676 = vpop.f32.mrb[0].mxu0
      %v677 = vadd.f32 0.0, %v676
      %v678 = vpop.f32.mrb[0].mxu0
      %v679 = vadd.f32 0.0, %v678
      %680 = vmatprep.mubr.bf16.mxu0 0
      %681 = vmatmul.mubr.bf16.gmra.mrb[0].mxu0 %v475
      %v682 = vpop.f32.mrb[0].mxu0
      %v683 = vadd.f32 0.0, %v682
      %v684 = vpop.f32.mrb[0].mxu0
      %v685 = vadd.f32 0.0, %v684
      %v686 = vpop.f32.mrb[0].mxu0
      %v687 = vadd.f32 0.0, %v686
      %v688 = vpop.f32.mrb[0].mxu0
      %v689 = vadd.f32 0.0, %v688
      %690 = vmatprep.mubr.bf16.mxu0 0
      %691 = vmatmul.mubr.bf16.gmra.mrb[0].mxu0 %v476
      %v692 = vpop.f32.mrb[0].mxu0
      %v693 = vadd.f32 0.0, %v692
      %v694 = vpop.f32.mrb[0].mxu0
      %v695 = vadd.f32 0.0, %v694
      %v696 = vpop.f32.mrb[0].mxu0
      %v697 = vadd.f32 0.0, %v696
      %v698 = vpop.f32.mrb[0].mxu0
      %v699 = vadd.f32 0.0, %v698
      %700 = vmatprep.mubr.bf16.mxu0 0
      %701 = vmatmul.mubr.bf16.gmra.mrb[0].mxu0 %v477
      %v702 = vpop.f32.mrb[0].mxu0
      %v703 = vadd.f32 0.0, %v702
      %v704 = vpop.f32.mrb[0].mxu0
      %v705 = vadd.f32 0.0, %v704
      %v706 = vpop.f32.mrb[0].mxu0
      %v707 = vadd.f32 0.0, %v706
      %v708 = vpop.f32.mrb[0].mxu0
      %v709 = vadd.f32 0.0, %v708
      %710 = vmatprep.mubr.bf16.mxu0 0
      %711 = vmatmul.mubr.bf16.gmra.mrb[0].mxu0 %v478
      %v712 = vpop.f32.mrb[0].mxu0
      %v713 = vadd.f32 0.0, %v712
      %v714 = vpop.f32.mrb[0].mxu0
      %v715 = vadd.f32 0.0, %v714
      %v716 = vpop.f32.mrb[0].mxu0
      %v717 = vadd.f32 0.0, %v716
      %v718 = vpop.f32.mrb[0].mxu0
      %v719 = vadd.f32 0.0, %v718
      %720 = vmatprep.mubr.bf16.mxu0 0
      %721 = vmatmul.mubr.bf16.gmra.mrb[0].mxu0 %v479
      %v722 = vpop.f32.mrb[0].mxu0
      %v723 = vadd.f32 0.0, %v722
      %v724 = vpop.f32.mrb[0].mxu0
      %v725 = vadd.f32 0.0, %v724
      %v726 = vpop.f32.mrb[0].mxu0
      %v727 = vadd.f32 0.0, %v726
      %v728 = vpop.f32.mrb[0].mxu0
      %v729 = vadd.f32 0.0, %v728
      %730 = vmatprep.mubr.bf16.mxu0 0
      %731 = vmatmul.mubr.bf16.gmra.mrb[0].mxu0 %v480
      %v732 = vpop.f32.mrb[0].mxu0
      %v733 = vadd.f32 0.0, %v732
      %v734 = vpop.f32.mrb[0].mxu0
      %v735 = vadd.f32 0.0, %v734
      %v736 = vpop.f32.mrb[0].mxu0
      %v737 = vadd.f32 0.0, %v736
      %v738 = vpop.f32.mrb[0].mxu0
      %v739 = vadd.f32 0.0, %v738
      %740 = vmatprep.mubr.bf16.mxu0 0
      %741 = vmatmul.mubr.bf16.gmra.mrb[0].mxu0 %v481
      %v742 = vpop.f32.mrb[0].mxu0
      %v743 = vadd.f32 0.0, %v742
      %v744 = vpop.f32.mrb[0].mxu0
      %v745 = vadd.f32 0.0, %v744
      %v746 = vpop.f32.mrb[0].mxu0
      %v747 = vadd.f32 0.0, %v746
      %v748 = vpop.f32.mrb[0].mxu0
      %v749 = vadd.f32 0.0, %v748
      %750 = vmatprep.mubr.bf16.mxu0 0
      %751 = vmatmul.mubr.bf16.gmra.mrb[0].mxu0 %v482
      %v752 = vpop.f32.mrb[0].mxu0
      %v753 = vadd.f32 0.0, %v752
      %v754 = vpop.f32.mrb[0].mxu0
      %v755 = vadd.f32 0.0, %v754
      %v756 = vpop.f32.mrb[0].mxu0
      %v757 = vadd.f32 0.0, %v756
      %v758 = vpop.f32.mrb[0].mxu0
      %v759 = vadd.f32 0.0, %v758
      %760 = vmatprep.mubr.bf16.mxu0 0
      %761 = vmatmul.mubr.bf16.gmra.mrb[0].mxu0 %v483
      %v762 = vpop.f32.mrb[0].mxu0
      %v763 = vadd.f32 0.0, %v762
      %v764 = vpop.f32.mrb[0].mxu0
      %v765 = vadd.f32 0.0, %v764
      %v766 = vpop.f32.mrb[0].mxu0
      %v767 = vadd.f32 0.0, %v766
      %v768 = vpop.f32.mrb[0].mxu0
      %v769 = vadd.f32 0.0, %v768
      %770 = vmatprep.mubr.bf16.mxu0 0
      %771 = vmatmul.mubr.bf16.gmra.mrb[0].mxu0 %v484
      %v772 = vpop.f32.mrb[0].mxu0
      %v773 = vadd.f32 0.0, %v772
      %v774 = vpop.f32.mrb[0].mxu0
      %v775 = vadd.f32 0.0, %v774
      %v776 = vpop.f32.mrb[0].mxu0
      %v777 = vadd.f32 0.0, %v776
      %v778 = vpop.f32.mrb[0].mxu0
      %v779 = vadd.f32 0.0, %v778
      %780 = vmatprep.mubr.bf16.mxu0 0
      %781 = vmatmul.mubr.bf16.gmra.mrb[0].mxu0 %v485
      %v782 = vpop.f32.mrb[0].mxu0
      %v783 = vadd.f32 0.0, %v782
      %v784 = vpop.f32.mrb[0].mxu0
      %v785 = vadd.f32 0.0, %v784
      %v786 = vpop.f32.mrb[0].mxu0
      %v787 = vadd.f32 0.0, %v786
      %v788 = vpop.f32.mrb[0].mxu0
      %v789 = vadd.f32 0.0, %v788
      %790 = vdwg.mxu0
      %v807 = vunpack.c.l.b16 %v486
      %v808 = vunpack.c.h.b16 %v486
      %v809 = vunpack.c.l.b16 %v487
      %v810 = vunpack.c.h.b16 %v487
      %v811 = vunpack.c.l.b16 %v488
      %v812 = vunpack.c.h.b16 %v488
      %v813 = vunpack.c.l.b16 %v489
      %v814 = vunpack.c.h.b16 %v489
      %v815 = vunpack.c.l.b16 %v490
      %v816 = vunpack.c.h.b16 %v490
      %v817 = vunpack.c.l.b16 %v491
      %v818 = vunpack.c.h.b16 %v491
      %v819 = vunpack.c.l.b16 %v492
      %v820 = vunpack.c.h.b16 %v492
      %v821 = vunpack.c.l.b16 %v493
      %v822 = vunpack.c.h.b16 %v493
      %v823 = vunpack.c.l.b16 %v494
      %v824 = vunpack.c.h.b16 %v494
      %v825 = vunpack.c.l.b16 %v495
      %v826 = vunpack.c.h.b16 %v495
      %v827 = vunpack.c.l.b16 %v496
      %v828 = vunpack.c.h.b16 %v496
      %v829 = vunpack.c.l.b16 %v497
      %v830 = vunpack.c.h.b16 %v497
      %v831 = vunpack.c.l.b16 %v498
      %v832 = vunpack.c.h.b16 %v498
      %v833 = vunpack.c.l.b16 %v499
      %v834 = vunpack.c.h.b16 %v499
      %v835 = vunpack.c.l.b16 %v500
      %v836 = vunpack.c.h.b16 %v500
      %v837 = vunpack.c.l.b16 %v501
      %v838 = vunpack.c.h.b16 %v501
      %v839 = vpack.c.b16 %v809, %v807
      %v840 = vpack.c.b16 %v810, %v808
      %v841 = vpack.c.b16 %v813, %v811
      %v842 = vpack.c.b16 %v814, %v812
      %v843 = vpack.c.b16 %v817, %v815
      %v844 = vpack.c.b16 %v818, %v816
      %v845 = vpack.c.b16 %v821, %v819
      %v846 = vpack.c.b16 %v822, %v820
      %v847 = vpack.c.b16 %v825, %v823
      %v848 = vpack.c.b16 %v826, %v824
      %v849 = vpack.c.b16 %v829, %v827
      %v850 = vpack.c.b16 %v830, %v828
      %v851 = vpack.c.b16 %v833, %v831
      %v852 = vpack.c.b16 %v834, %v832
      %v853 = vpack.c.b16 %v837, %v835
      %v854 = vpack.c.b16 %v838, %v836
      %871 = vmatprep.subr.bf16.mxu0 %v840
      %872 = vmatpush1.bf16.msra.mxu0 %v839
      %873 = vmatprep.subr.bf16.mxu0 %v842
      %874 = vmatpush1.bf16.msra.mxu0 %v841
      %875 = vmatprep.subr.bf16.mxu0 %v844
      %876 = vmatpush1.bf16.msra.mxu0 %v843
      %877 = vmatprep.subr.bf16.mxu0 %v846
      %878 = vmatpush1.bf16.msra.mxu0 %v845
      %879 = vmatprep.subr.bf16.mxu0 %v848
      %880 = vmatpush1.bf16.msra.mxu0 %v847
      %881 = vmatprep.subr.bf16.mxu0 %v850
      %882 = vmatpush1.bf16.msra.mxu0 %v849
      %883 = vmatprep.subr.bf16.mxu0 %v852
      %884 = vmatpush1.bf16.msra.mxu0 %v851
      %885 = vmatprep.subr.bf16.mxu0 %v854
      %886 = vmatpush1.bf16.msra.mxu0 %v853
      %887 = vmatprep.subr.bf16.mxu0 0
      %888 = vmatpush1.bf16.msra.mxu0 0
      %889 = vmatprep.subr.bf16.mxu0 0
      %890 = vmatpush1.bf16.msra.mxu0 0
      %891 = vmatprep.subr.bf16.mxu0 0
      %892 = vmatpush1.bf16.msra.mxu0 0
      %893 = vmatprep.subr.bf16.mxu0 0
      %894 = vmatpush1.bf16.msra.mxu0 0
      %895 = vmatprep.subr.bf16.mxu0 0
      %896 = vmatpush1.bf16.msra.mxu0 0
      %897 = vmatprep.subr.bf16.mxu0 0
      %898 = vmatpush1.bf16.msra.mxu0 0
      %899 = vmatprep.subr.bf16.mxu0 0
      %900 = vmatpush1.bf16.msra.mxu0 0
      %901 = vmatprep.subr.bf16.mxu0 0
      %902 = vmatpush1.bf16.msra.mxu0 0
      %903 = vmatprep.mubr.bf16.mxu0 0
      %904 = vmatmul.mubr.bf16.gmra.mrb[0].mxu0 %v422
      %v905 = vpop.f32.mrb[0].mxu0
      %v906 = vadd.f32 %v633, %v905
      %v907 = vpop.f32.mrb[0].mxu0
      %v908 = vadd.f32 %v635, %v907
      %v909 = vpop.f32.mrb[0].mxu0
      %v910 = vadd.f32 %v637, %v909
      %v911 = vpop.f32.mrb[0].mxu0
      %v912 = vadd.f32 %v639, %v911
      %913 = vmatprep.mubr.bf16.mxu0 0
      %914 = vmatmul.mubr.bf16.gmra.mrb[0].mxu0 %v423
      %v915 = vpop.f32.mrb[0].mxu0
      %v916 = vadd.f32 %v643, %v915
      %v917 = vpop.f32.mrb[0].mxu0
      %v918 = vadd.f32 %v645, %v917
      %v919 = vpop.f32.mrb[0].mxu0
      %v920 = vadd.f32 %v647, %v919
      %v921 = vpop.f32.mrb[0].mxu0
      %v922 = vadd.f32 %v649, %v921
      %923 = vmatprep.mubr.bf16.mxu0 0
      %924 = vmatmul.mubr.bf16.gmra.mrb[0].mxu0 %v424
      %v925 = vpop.f32.mrb[0].mxu0
      %v926 = vadd.f32 %v653, %v925
      %v927 = vpop.f32.mrb[0].mxu0
      %v928 = vadd.f32 %v655, %v927
      %v929 = vpop.f32.mrb[0].mxu0
      %v930 = vadd.f32 %v657, %v929
      %v931 = vpop.f32.mrb[0].mxu0
      %v932 = vadd.f32 %v659, %v931
      %933 = vmatprep.mubr.bf16.mxu0 0
      %934 = vmatmul.mubr.bf16.gmra.mrb[0].mxu0 %v425
      %v935 = vpop.f32.mrb[0].mxu0
      %v936 = vadd.f32 %v663, %v935
      %v937 = vpop.f32.mrb[0].mxu0
      %v938 = vadd.f32 %v665, %v937
      %v939 = vpop.f32.mrb[0].mxu0
      %v940 = vadd.f32 %v667, %v939
      %v941 = vpop.f32.mrb[0].mxu0
      %v942 = vadd.f32 %v669, %v941
      %943 = vmatprep.mubr.bf16.mxu0 0
      %944 = vmatmul.mubr.bf16.gmra.mrb[0].mxu0 %v426
      %v945 = vpop.f32.mrb[0].mxu0
      %v946 = vadd.f32 %v673, %v945
      %v947 = vpop.f32.mrb[0].mxu0
      %v948 = vadd.f32 %v675, %v947
      %v949 = vpop.f32.mrb[0].mxu0
      %v950 = vadd.f32 %v677, %v949
      %v951 = vpop.f32.mrb[0].mxu0
      %v952 = vadd.f32 %v679, %v951
      %953 = vmatprep.mubr.bf16.mxu0 0
      %954 = vmatmul.mubr.bf16.gmra.mrb[0].mxu0 %v427
      %v955 = vpop.f32.mrb[0].mxu0
      %v956 = vadd.f32 %v683, %v955
      %v957 = vpop.f32.mrb[0].mxu0
      %v958 = vadd.f32 %v685, %v957
      %v959 = vpop.f32.mrb[0].mxu0
      %v960 = vadd.f32 %v687, %v959
      %v961 = vpop.f32.mrb[0].mxu0
      %v962 = vadd.f32 %v689, %v961
      %963 = vmatprep.mubr.bf16.mxu0 0
      %964 = vmatmul.mubr.bf16.gmra.mrb[0].mxu0 %v428
      %v965 = vpop.f32.mrb[0].mxu0
      %v966 = vadd.f32 %v693, %v965
      %v967 = vpop.f32.mrb[0].mxu0
      %v968 = vadd.f32 %v695, %v967
      %v969 = vpop.f32.mrb[0].mxu0
      %v970 = vadd.f32 %v697, %v969
      %v971 = vpop.f32.mrb[0].mxu0
      %v972 = vadd.f32 %v699, %v971
      %973 = vmatprep.mubr.bf16.mxu0 0
      %974 = vmatmul.mubr.bf16.gmra.mrb[0].mxu0 %v429
      %v975 = vpop.f32.mrb[0].mxu0
      %v976 = vadd.f32 %v703, %v975
      %v977 = vpop.f32.mrb[0].mxu0
      %v978 = vadd.f32 %v705, %v977
      %v979 = vpop.f32.mrb[0].mxu0
      %v980 = vadd.f32 %v707, %v979
      %v981 = vpop.f32.mrb[0].mxu0
      %v982 = vadd.f32 %v709, %v981
      %983 = vmatprep.mubr.bf16.mxu0 0
      %984 = vmatmul.mubr.bf16.gmra.mrb[0].mxu0 %v430
      %v985 = vpop.f32.mrb[0].mxu0
      %v986 = vadd.f32 %v713, %v985
      %v987 = vpop.f32.mrb[0].mxu0
      %v988 = vadd.f32 %v715, %v987
      %v989 = vpop.f32.mrb[0].mxu0
      %v990 = vadd.f32 %v717, %v989
      %v991 = vpop.f32.mrb[0].mxu0
      %v992 = vadd.f32 %v719, %v991
      %993 = vmatprep.mubr.bf16.mxu0 0
      %994 = vmatmul.mubr.bf16.gmra.mrb[0].mxu0 %v431
      %v995 = vpop.f32.mrb[0].mxu0
      %v996 = vadd.f32 %v723, %v995
      %v997 = vpop.f32.mrb[0].mxu0
      %v998 = vadd.f32 %v725, %v997
      %v999 = vpop.f32.mrb[0].mxu0
      %v1000 = vadd.f32 %v727, %v999
      %v1001 = vpop.f32.mrb[0].mxu0
      %v1002 = vadd.f32 %v729, %v1001
      %1003 = vmatprep.mubr.bf16.mxu0 0
      %1004 = vmatmul.mubr.bf16.gmra.mrb[0].mxu0 %v432
      %v1005 = vpop.f32.mrb[0].mxu0
      %v1006 = vadd.f32 %v733, %v1005
      %v1007 = vpop.f32.mrb[0].mxu0
      %v1008 = vadd.f32 %v735, %v1007
      %v1009 = vpop.f32.mrb[0].mxu0
      %v1010 = vadd.f32 %v737, %v1009
      %v1011 = vpop.f32.mrb[0].mxu0
      %v1012 = vadd.f32 %v739, %v1011
      %1013 = vmatprep.mubr.bf16.mxu0 0
      %1014 = vmatmul.mubr.bf16.gmra.mrb[0].mxu0 %v433
      %v1015 = vpop.f32.mrb[0].mxu0
      %v1016 = vadd.f32 %v743, %v1015
      %v1017 = vpop.f32.mrb[0].mxu0
      %v1018 = vadd.f32 %v745, %v1017
      %v1019 = vpop.f32.mrb[0].mxu0
      %v1020 = vadd.f32 %v747, %v1019
      %v1021 = vpop.f32.mrb[0].mxu0
      %v1022 = vadd.f32 %v749, %v1021
      %1023 = vmatprep.mubr.bf16.mxu0 0
      %1024 = vmatmul.mubr.bf16.gmra.mrb[0].mxu0 %v434
      %v1025 = vpop.f32.mrb[0].mxu0
      %v1026 = vadd.f32 %v753, %v1025
      %v1027 = vpop.f32.mrb[0].mxu0
      %v1028 = vadd.f32 %v755, %v1027
      %v1029 = vpop.f32.mrb[0].mxu0
      %v1030 = vadd.f32 %v757, %v1029
      %v1031 = vpop.f32.mrb[0].mxu0
      %v1032 = vadd.f32 %v759, %v1031
      %1033 = vmatprep.mubr.bf16.mxu0 0
      %1034 = vmatmul.mubr.bf16.gmra.mrb[0].mxu0 %v435
      %v1035 = vpop.f32.mrb[0].mxu0
      %v1036 = vadd.f32 %v763, %v1035
      %v1037 = vpop.f32.mrb[0].mxu0
      %v1038 = vadd.f32 %v765, %v1037
      %v1039 = vpop.f32.mrb[0].mxu0
      %v1040 = vadd.f32 %v767, %v1039
      %v1041 = vpop.f32.mrb[0].mxu0
      %v1042 = vadd.f32 %v769, %v1041
      %1043 = vmatprep.mubr.bf16.mxu0 0
      %1044 = vmatmul.mubr.bf16.gmra.mrb[0].mxu0 %v436
      %v1045 = vpop.f32.mrb[0].mxu0
      %v1046 = vadd.f32 %v773, %v1045
      %v1047 = vpop.f32.mrb[0].mxu0
      %v1048 = vadd.f32 %v775, %v1047
      %v1049 = vpop.f32.mrb[0].mxu0
      %v1050 = vadd.f32 %v777, %v1049
      %v1051 = vpop.f32.mrb[0].mxu0
      %v1052 = vadd.f32 %v779, %v1051
      %1053 = vmatprep.mubr.bf16.mxu0 0
      %1054 = vmatmul.mubr.bf16.gmra.mrb[0].mxu0 %v437
      %v1055 = vpop.f32.mrb[0].mxu0
      %v1056 = vadd.f32 %v783, %v1055
      %v1057 = vpop.f32.mrb[0].mxu0
      %v1058 = vadd.f32 %v785, %v1057
      %v1059 = vpop.f32.mrb[0].mxu0
      %v1060 = vadd.f32 %v787, %v1059
      %v1061 = vpop.f32.mrb[0].mxu0
      %v1062 = vadd.f32 %v789, %v1061
      %1063 = vdwg.mxu0
      %s1064 = scalar_lea.vmem %s2, 128
      %v1065 = vld [vmem:[%s1064] sm:$0xff]
      %v1066 = vld [vmem:[%s1064 + $0x8] sm:$0xff]
      %v1067 = vld [vmem:[%s1064 + $0x10] sm:$0xff]
      %v1068 = vld [vmem:[%s1064 + $0x18] sm:$0xff]
      %v1069 = vld [vmem:[%s1064 + $0x20] sm:$0xff]
      %v1070 = vld [vmem:[%s1064 + $0x28] sm:$0xff]
      %v1071 = vld [vmem:[%s1064 + $0x30] sm:$0xff]
      %v1072 = vld [vmem:[%s1064 + $0x38] sm:$0xff]
      %v1073 = vld [vmem:[%s1064 + $0x40] sm:$0xff]
      %v1074 = vld [vmem:[%s1064 + $0x48] sm:$0xff]
      %v1075 = vld [vmem:[%s1064 + $0x50] sm:$0xff]
      %v1076 = vld [vmem:[%s1064 + $0x58] sm:$0xff]
      %v1077 = vld [vmem:[%s1064 + $0x60] sm:$0xff]
      %v1078 = vld [vmem:[%s1064 + $0x68] sm:$0xff]
      %v1079 = vld [vmem:[%s1064 + $0x70] sm:$0xff]
      %v1080 = vld [vmem:[%s1064 + $0x78] sm:$0xff]
      %s1081 = scalar_lea.vmem %s3, 128
      %v1082 = vld [vmem:[%s1081] sm:$0xff]
      %v1083 = vld [vmem:[%s1081 + $0x8] sm:$0xff]
      %v1084 = vld [vmem:[%s1081 + $0x10] sm:$0xff]
      %v1085 = vld [vmem:[%s1081 + $0x18] sm:$0xff]
      %v1086 = vld [vmem:[%s1081 + $0x20] sm:$0xff]
      %v1087 = vld [vmem:[%s1081 + $0x28] sm:$0xff]
      %v1088 = vld [vmem:[%s1081 + $0x30] sm:$0xff]
      %v1089 = vld [vmem:[%s1081 + $0x38] sm:$0xff]
      %v1090 = vld [vmem:[%s1081 + $0x40] sm:$0xff]
      %v1091 = vld [vmem:[%s1081 + $0x48] sm:$0xff]
      %v1092 = vld [vmem:[%s1081 + $0x50] sm:$0xff]
      %v1093 = vld [vmem:[%s1081 + $0x58] sm:$0xff]
      %v1094 = vld [vmem:[%s1081 + $0x60] sm:$0xff]
      %v1095 = vld [vmem:[%s1081 + $0x68] sm:$0xff]
      %v1096 = vld [vmem:[%s1081 + $0x70] sm:$0xff]
      %v1097 = vld [vmem:[%s1081 + $0x78] sm:$0xff]
      %v1114 = vunpack.c.l.b16 %v1082
      %v1115 = vunpack.c.h.b16 %v1082
      %v1116 = vunpack.c.l.b16 %v1083
      %v1117 = vunpack.c.h.b16 %v1083
      %v1118 = vunpack.c.l.b16 %v1084
      %v1119 = vunpack.c.h.b16 %v1084
      %v1120 = vunpack.c.l.b16 %v1085
      %v1121 = vunpack.c.h.b16 %v1085
      %v1122 = vunpack.c.l.b16 %v1086
      %v1123 = vunpack.c.h.b16 %v1086
      %v1124 = vunpack.c.l.b16 %v1087
      %v1125 = vunpack.c.h.b16 %v1087
      %v1126 = vunpack.c.l.b16 %v1088
      %v1127 = vunpack.c.h.b16 %v1088
      %v1128 = vunpack.c.l.b16 %v1089
      %v1129 = vunpack.c.h.b16 %v1089
      %v1130 = vunpack.c.l.b16 %v1090
      %v1131 = vunpack.c.h.b16 %v1090
      %v1132 = vunpack.c.l.b16 %v1091
      %v1133 = vunpack.c.h.b16 %v1091
      %v1134 = vunpack.c.l.b16 %v1092
      %v1135 = vunpack.c.h.b16 %v1092
      %v1136 = vunpack.c.l.b16 %v1093
      %v1137 = vunpack.c.h.b16 %v1093
      %v1138 = vunpack.c.l.b16 %v1094
      %v1139 = vunpack.c.h.b16 %v1094
      %v1140 = vunpack.c.l.b16 %v1095
      %v1141 = vunpack.c.h.b16 %v1095
      %v1142 = vunpack.c.l.b16 %v1096
      %v1143 = vunpack.c.h.b16 %v1096
      %v1144 = vunpack.c.l.b16 %v1097
      %v1145 = vunpack.c.h.b16 %v1097
      %v1146 = vpack.c.b16 %v1116, %v1114
      %v1147 = vpack.c.b16 %v1117, %v1115
      %v1148 = vpack.c.b16 %v1120, %v1118
      %v1149 = vpack.c.b16 %v1121, %v1119
      %v1150 = vpack.c.b16 %v1124, %v1122
      %v1151 = vpack.c.b16 %v1125, %v1123
      %v1152 = vpack.c.b16 %v1128, %v1126
      %v1153 = vpack.c.b16 %v1129, %v1127
      %v1154 = vpack.c.b16 %v1132, %v1130
      %v1155 = vpack.c.b16 %v1133, %v1131
      %v1156 = vpack.c.b16 %v1136, %v1134
      %v1157 = vpack.c.b16 %v1137, %v1135
      %v1158 = vpack.c.b16 %v1140, %v1138
      %v1159 = vpack.c.b16 %v1141, %v1139
      %v1160 = vpack.c.b16 %v1144, %v1142
      %v1161 = vpack.c.b16 %v1145, %v1143
      %1178 = vmatprep.subr.bf16.mxu0 %v1147
      %1179 = vmatpush1.bf16.msra.mxu0 %v1146
      %1180 = vmatprep.subr.bf16.mxu0 %v1149
      %1181 = vmatpush1.bf16.msra.mxu0 %v1148
      %1182 = vmatprep.subr.bf16.mxu0 %v1151
      %1183 = vmatpush1.bf16.msra.mxu0 %v1150
      %1184 = vmatprep.subr.bf16.mxu0 %v1153
      %1185 = vmatpush1.bf16.msra.mxu0 %v1152
      %1186 = vmatprep.subr.bf16.mxu0 %v1155
      %1187 = vmatpush1.bf16.msra.mxu0 %v1154
      %1188 = vmatprep.subr.bf16.mxu0 %v1157
      %1189 = vmatpush1.bf16.msra.mxu0 %v1156
      %1190 = vmatprep.subr.bf16.mxu0 %v1159
      %1191 = vmatpush1.bf16.msra.mxu0 %v1158
      %1192 = vmatprep.subr.bf16.mxu0 %v1161
      %1193 = vmatpush1.bf16.msra.mxu0 %v1160
      %1194 = vmatprep.subr.bf16.mxu0 0
      %1195 = vmatpush1.bf16.msra.mxu0 0
      %1196 = vmatprep.subr.bf16.mxu0 0
      %1197 = vmatpush1.bf16.msra.mxu0 0
      %1198 = vmatprep.subr.bf16.mxu0 0
      %1199 = vmatpush1.bf16.msra.mxu0 0
      %1200 = vmatprep.subr.bf16.mxu0 0
      %1201 = vmatpush1.bf16.msra.mxu0 0
      %1202 = vmatprep.subr.bf16.mxu0 0
      %1203 = vmatpush1.bf16.msra.mxu0 0
      %1204 = vmatprep.subr.bf16.mxu0 0
      %1205 = vmatpush1.bf16.msra.mxu0 0
      %1206 = vmatprep.subr.bf16.mxu0 0
      %1207 = vmatpush1.bf16.msra.mxu0 0
      %1208 = vmatprep.subr.bf16.mxu0 0
      %1209 = vmatpush1.bf16.msra.mxu0 0
      %1210 = vmatprep.mubr.bf16.mxu0 0
      %1211 = vmatmul.mubr.bf16.gmra.mrb[0].mxu0 %v470
      %v1212 = vpop.f32.mrb[0].mxu0
      %v1213 = vadd.f32 0.0, %v1212
      %v1214 = vpop.f32.mrb[0].mxu0
      %v1215 = vadd.f32 0.0, %v1214
      %v1216 = vpop.f32.mrb[0].mxu0
      %v1217 = vadd.f32 0.0, %v1216
      %v1218 = vpop.f32.mrb[0].mxu0
      %v1219 = vadd.f32 0.0, %v1218
      %1220 = vmatprep.mubr.bf16.mxu0 0
      %1221 = vmatmul.mubr.bf16.gmra.mrb[0].mxu0 %v471
      %v1222 = vpop.f32.mrb[0].mxu0
      %v1223 = vadd.f32 0.0, %v1222
      %v1224 = vpop.f32.mrb[0].mxu0
      %v1225 = vadd.f32 0.0, %v1224
      %v1226 = vpop.f32.mrb[0].mxu0
      %v1227 = vadd.f32 0.0, %v1226
      %v1228 = vpop.f32.mrb[0].mxu0
      %v1229 = vadd.f32 0.0, %v1228
      %1230 = vmatprep.mubr.bf16.mxu0 0
      %1231 = vmatmul.mubr.bf16.gmra.mrb[0].mxu0 %v472
      %v1232 = vpop.f32.mrb[0].mxu0
      %v1233 = vadd.f32 0.0, %v1232
      %v1234 = vpop.f32.mrb[0].mxu0
      %v1235 = vadd.f32 0.0, %v1234
      %v1236 = vpop.f32.mrb[0].mxu0
      %v1237 = vadd.f32 0.0, %v1236
      %v1238 = vpop.f32.mrb[0].mxu0
      %v1239 = vadd.f32 0.0, %v1238
      %1240 = vmatprep.mubr.bf16.mxu0 0
      %1241 = vmatmul.mubr.bf16.gmra.mrb[0].mxu0 %v473
      %v1242 = vpop.f32.mrb[0].mxu0
      %v1243 = vadd.f32 0.0, %v1242
      %v1244 = vpop.f32.mrb[0].mxu0
      %v1245 = vadd.f32 0.0, %v1244
      %v1246 = vpop.f32.mrb[0].mxu0
      %v1247 = vadd.f32 0.0, %v1246
      %v1248 = vpop.f32.mrb[0].mxu0
      %v1249 = vadd.f32 0.0, %v1248
      %1250 = vmatprep.mubr.bf16.mxu0 0
      %1251 = vmatmul.mubr.bf16.gmra.mrb[0].mxu0 %v474
      %v1252 = vpop.f32.mrb[0].mxu0
      %v1253 = vadd.f32 0.0, %v1252
      %v1254 = vpop.f32.mrb[0].mxu0
      %v1255 = vadd.f32 0.0, %v1254
      %v1256 = vpop.f32.mrb[0].mxu0
      %v1257 = vadd.f32 0.0, %v1256
      %v1258 = vpop.f32.mrb[0].mxu0
      %v1259 = vadd.f32 0.0, %v1258
      %1260 = vmatprep.mubr.bf16.mxu0 0
      %1261 = vmatmul.mubr.bf16.gmra.mrb[0].mxu0 %v475
      %v1262 = vpop.f32.mrb[0].mxu0
      %v1263 = vadd.f32 0.0, %v1262
      %v1264 = vpop.f32.mrb[0].mxu0
      %v1265 = vadd.f32 0.0, %v1264
      %v1266 = vpop.f32.mrb[0].mxu0
      %v1267 = vadd.f32 0.0, %v1266
      %v1268 = vpop.f32.mrb[0].mxu0
      %v1269 = vadd.f32 0.0, %v1268
      %1270 = vmatprep.mubr.bf16.mxu0 0
      %1271 = vmatmul.mubr.bf16.gmra.mrb[0].mxu0 %v476
      %v1272 = vpop.f32.mrb[0].mxu0
      %v1273 = vadd.f32 0.0, %v1272
      %v1274 = vpop.f32.mrb[0].mxu0
      %v1275 = vadd.f32 0.0, %v1274
      %v1276 = vpop.f32.mrb[0].mxu0
      %v1277 = vadd.f32 0.0, %v1276
      %v1278 = vpop.f32.mrb[0].mxu0
      %v1279 = vadd.f32 0.0, %v1278
      %1280 = vmatprep.mubr.bf16.mxu0 0
      %1281 = vmatmul.mubr.bf16.gmra.mrb[0].mxu0 %v477
      %v1282 = vpop.f32.mrb[0].mxu0
      %v1283 = vadd.f32 0.0, %v1282
      %v1284 = vpop.f32.mrb[0].mxu0
      %v1285 = vadd.f32 0.0, %v1284
      %v1286 = vpop.f32.mrb[0].mxu0
      %v1287 = vadd.f32 0.0, %v1286
      %v1288 = vpop.f32.mrb[0].mxu0
      %v1289 = vadd.f32 0.0, %v1288
      %1290 = vmatprep.mubr.bf16.mxu0 0
      %1291 = vmatmul.mubr.bf16.gmra.mrb[0].mxu0 %v478
      %v1292 = vpop.f32.mrb[0].mxu0
      %v1293 = vadd.f32 0.0, %v1292
      %v1294 = vpop.f32.mrb[0].mxu0
      %v1295 = vadd.f32 0.0, %v1294
      %v1296 = vpop.f32.mrb[0].mxu0
      %v1297 = vadd.f32 0.0, %v1296
      %v1298 = vpop.f32.mrb[0].mxu0
      %v1299 = vadd.f32 0.0, %v1298
      %1300 = vmatprep.mubr.bf16.mxu0 0
      %1301 = vmatmul.mubr.bf16.gmra.mrb[0].mxu0 %v479
      %v1302 = vpop.f32.mrb[0].mxu0
      %v1303 = vadd.f32 0.0, %v1302
      %v1304 = vpop.f32.mrb[0].mxu0
      %v1305 = vadd.f32 0.0, %v1304
      %v1306 = vpop.f32.mrb[0].mxu0
      %v1307 = vadd.f32 0.0, %v1306
      %v1308 = vpop.f32.mrb[0].mxu0
      %v1309 = vadd.f32 0.0, %v1308
      %1310 = vmatprep.mubr.bf16.mxu0 0
      %1311 = vmatmul.mubr.bf16.gmra.mrb[0].mxu0 %v480
      %v1312 = vpop.f32.mrb[0].mxu0
      %v1313 = vadd.f32 0.0, %v1312
      %v1314 = vpop.f32.mrb[0].mxu0
      %v1315 = vadd.f32 0.0, %v1314
      %v1316 = vpop.f32.mrb[0].mxu0
      %v1317 = vadd.f32 0.0, %v1316
      %v1318 = vpop.f32.mrb[0].mxu0
      %v1319 = vadd.f32 0.0, %v1318
      %1320 = vmatprep.mubr.bf16.mxu0 0
      %1321 = vmatmul.mubr.bf16.gmra.mrb[0].mxu0 %v481
      %v1322 = vpop.f32.mrb[0].mxu0
      %v1323 = vadd.f32 0.0, %v1322
      %v1324 = vpop.f32.mrb[0].mxu0
      %v1325 = vadd.f32 0.0, %v1324
      %v1326 = vpop.f32.mrb[0].mxu0
      %v1327 = vadd.f32 0.0, %v1326
      %v1328 = vpop.f32.mrb[0].mxu0
      %v1329 = vadd.f32 0.0, %v1328
      %1330 = vmatprep.mubr.bf16.mxu0 0
      %1331 = vmatmul.mubr.bf16.gmra.mrb[0].mxu0 %v482
      %v1332 = vpop.f32.mrb[0].mxu0
      %v1333 = vadd.f32 0.0, %v1332
      %v1334 = vpop.f32.mrb[0].mxu0
      %v1335 = vadd.f32 0.0, %v1334
      %v1336 = vpop.f32.mrb[0].mxu0
      %v1337 = vadd.f32 0.0, %v1336
      %v1338 = vpop.f32.mrb[0].mxu0
      %v1339 = vadd.f32 0.0, %v1338
      %1340 = vmatprep.mubr.bf16.mxu0 0
      %1341 = vmatmul.mubr.bf16.gmra.mrb[0].mxu0 %v483
      %v1342 = vpop.f32.mrb[0].mxu0
      %v1343 = vadd.f32 0.0, %v1342
      %v1344 = vpop.f32.mrb[0].mxu0
      %v1345 = vadd.f32 0.0, %v1344
      %v1346 = vpop.f32.mrb[0].mxu0
      %v1347 = vadd.f32 0.0, %v1346
      %v1348 = vpop.f32.mrb[0].mxu0
      %v1349 = vadd.f32 0.0, %v1348
      %1350 = vmatprep.mubr.bf16.mxu0 0
      %1351 = vmatmul.mubr.bf16.gmra.mrb[0].mxu0 %v484
      %v1352 = vpop.f32.mrb[0].mxu0
      %v1353 = vadd.f32 0.0, %v1352
      %v1354 = vpop.f32.mrb[0].mxu0
      %v1355 = vadd.f32 0.0, %v1354
      %v1356 = vpop.f32.mrb[0].mxu0
      %v1357 = vadd.f32 0.0, %v1356
      %v1358 = vpop.f32.mrb[0].mxu0
      %v1359 = vadd.f32 0.0, %v1358
      %1360 = vmatprep.mubr.bf16.mxu0 0
      %1361 = vmatmul.mubr.bf16.gmra.mrb[0].mxu0 %v485
      %v1362 = vpop.f32.mrb[0].mxu0
      %v1363 = vadd.f32 0.0, %v1362
      %v1364 = vpop.f32.mrb[0].mxu0
      %v1365 = vadd.f32 0.0, %v1364
      %v1366 = vpop.f32.mrb[0].mxu0
      %v1367 = vadd.f32 0.0, %v1366
      %v1368 = vpop.f32.mrb[0].mxu0
      %v1369 = vadd.f32 0.0, %v1368
      %1370 = vdwg.mxu0
      %v1387 = vunpack.c.l.b16 %v1065
      %v1388 = vunpack.c.h.b16 %v1065
      %v1389 = vunpack.c.l.b16 %v1066
      %v1390 = vunpack.c.h.b16 %v1066
      %v1391 = vunpack.c.l.b16 %v1067
      %v1392 = vunpack.c.h.b16 %v1067
      %v1393 = vunpack.c.l.b16 %v1068
      %v1394 = vunpack.c.h.b16 %v1068
      %v1395 = vunpack.c.l.b16 %v1069
      %v1396 = vunpack.c.h.b16 %v1069
      %v1397 = vunpack.c.l.b16 %v1070
      %v1398 = vunpack.c.h.b16 %v1070
      %v1399 = vunpack.c.l.b16 %v1071
      %v1400 = vunpack.c.h.b16 %v1071
      %v1401 = vunpack.c.l.b16 %v1072
      %v1402 = vunpack.c.h.b16 %v1072
      %v1403 = vunpack.c.l.b16 %v1073
      %v1404 = vunpack.c.h.b16 %v1073
      %v1405 = vunpack.c.l.b16 %v1074
      %v1406 = vunpack.c.h.b16 %v1074
      %v1407 = vunpack.c.l.b16 %v1075
      %v1408 = vunpack.c.h.b16 %v1075
      %v1409 = vunpack.c.l.b16 %v1076
      %v1410 = vunpack.c.h.b16 %v1076
      %v1411 = vunpack.c.l.b16 %v1077
      %v1412 = vunpack.c.h.b16 %v1077
      %v1413 = vunpack.c.l.b16 %v1078
      %v1414 = vunpack.c.h.b16 %v1078
      %v1415 = vunpack.c.l.b16 %v1079
      %v1416 = vunpack.c.h.b16 %v1079
      %v1417 = vunpack.c.l.b16 %v1080
      %v1418 = vunpack.c.h.b16 %v1080
      %v1419 = vpack.c.b16 %v1389, %v1387
      %v1420 = vpack.c.b16 %v1390, %v1388
      %v1421 = vpack.c.b16 %v1393, %v1391
      %v1422 = vpack.c.b16 %v1394, %v1392
      %v1423 = vpack.c.b16 %v1397, %v1395
      %v1424 = vpack.c.b16 %v1398, %v1396
      %v1425 = vpack.c.b16 %v1401, %v1399
      %v1426 = vpack.c.b16 %v1402, %v1400
      %v1427 = vpack.c.b16 %v1405, %v1403
      %v1428 = vpack.c.b16 %v1406, %v1404
      %v1429 = vpack.c.b16 %v1409, %v1407
      %v1430 = vpack.c.b16 %v1410, %v1408
      %v1431 = vpack.c.b16 %v1413, %v1411
      %v1432 = vpack.c.b16 %v1414, %v1412
      %v1433 = vpack.c.b16 %v1417, %v1415
      %v1434 = vpack.c.b16 %v1418, %v1416
      %1451 = vmatprep.subr.bf16.mxu0 %v1420
      %1452 = vmatpush1.bf16.msra.mxu0 %v1419
      %1453 = vmatprep.subr.bf16.mxu0 %v1422
      %1454 = vmatpush1.bf16.msra.mxu0 %v1421
      %1455 = vmatprep.subr.bf16.mxu0 %v1424
      %1456 = vmatpush1.bf16.msra.mxu0 %v1423
      %1457 = vmatprep.subr.bf16.mxu0 %v1426
      %1458 = vmatpush1.bf16.msra.mxu0 %v1425
      %1459 = vmatprep.subr.bf16.mxu0 %v1428
      %1460 = vmatpush1.bf16.msra.mxu0 %v1427
      %1461 = vmatprep.subr.bf16.mxu0 %v1430
      %1462 = vmatpush1.bf16.msra.mxu0 %v1429
      %1463 = vmatprep.subr.bf16.mxu0 %v1432
      %1464 = vmatpush1.bf16.msra.mxu0 %v1431
      %1465 = vmatprep.subr.bf16.mxu0 %v1434
      %1466 = vmatpush1.bf16.msra.mxu0 %v1433
      %1467 = vmatprep.subr.bf16.mxu0 0
      %1468 = vmatpush1.bf16.msra.mxu0 0
      %1469 = vmatprep.subr.bf16.mxu0 0
      %1470 = vmatpush1.bf16.msra.mxu0 0
      %1471 = vmatprep.subr.bf16.mxu0 0
      %1472 = vmatpush1.bf16.msra.mxu0 0
      %1473 = vmatprep.subr.bf16.mxu0 0
      %1474 = vmatpush1.bf16.msra.mxu0 0
      %1475 = vmatprep.subr.bf16.mxu0 0
      %1476 = vmatpush1.bf16.msra.mxu0 0
      %1477 = vmatprep.subr.bf16.mxu0 0
      %1478 = vmatpush1.bf16.msra.mxu0 0
      %1479 = vmatprep.subr.bf16.mxu0 0
      %1480 = vmatpush1.bf16.msra.mxu0 0
      %1481 = vmatprep.subr.bf16.mxu0 0
      %1482 = vmatpush1.bf16.msra.mxu0 0
      %1483 = vmatprep.mubr.bf16.mxu0 0
      %1484 = vmatmul.mubr.bf16.gmra.mrb[0].mxu0 %v422
      %v1485 = vpop.f32.mrb[0].mxu0
      %v1486 = vadd.f32 %v1213, %v1485
      %v1487 = vpop.f32.mrb[0].mxu0
      %v1488 = vadd.f32 %v1215, %v1487
      %v1489 = vpop.f32.mrb[0].mxu0
      %v1490 = vadd.f32 %v1217, %v1489
      %v1491 = vpop.f32.mrb[0].mxu0
      %v1492 = vadd.f32 %v1219, %v1491
      %1493 = vmatprep.mubr.bf16.mxu0 0
      %1494 = vmatmul.mubr.bf16.gmra.mrb[0].mxu0 %v423
      %v1495 = vpop.f32.mrb[0].mxu0
      %v1496 = vadd.f32 %v1223, %v1495
      %v1497 = vpop.f32.mrb[0].mxu0
      %v1498 = vadd.f32 %v1225, %v1497
      %v1499 = vpop.f32.mrb[0].mxu0
      %v1500 = vadd.f32 %v1227, %v1499
      %v1501 = vpop.f32.mrb[0].mxu0
      %v1502 = vadd.f32 %v1229, %v1501
      %1503 = vmatprep.mubr.bf16.mxu0 0
      %1504 = vmatmul.mubr.bf16.gmra.mrb[0].mxu0 %v424
      %v1505 = vpop.f32.mrb[0].mxu0
      %v1506 = vadd.f32 %v1233, %v1505
      %v1507 = vpop.f32.mrb[0].mxu0
      %v1508 = vadd.f32 %v1235, %v1507
      %v1509 = vpop.f32.mrb[0].mxu0
      %v1510 = vadd.f32 %v1237, %v1509
      %v1511 = vpop.f32.mrb[0].mxu0
      %v1512 = vadd.f32 %v1239, %v1511
      %1513 = vmatprep.mubr.bf16.mxu0 0
      %1514 = vmatmul.mubr.bf16.gmra.mrb[0].mxu0 %v425
      %v1515 = vpop.f32.mrb[0].mxu0
      %v1516 = vadd.f32 %v1243, %v1515
      %v1517 = vpop.f32.mrb[0].mxu0
      %v1518 = vadd.f32 %v1245, %v1517
      %v1519 = vpop.f32.mrb[0].mxu0
      %v1520 = vadd.f32 %v1247, %v1519
      %v1521 = vpop.f32.mrb[0].mxu0
      %v1522 = vadd.f32 %v1249, %v1521
      %1523 = vmatprep.mubr.bf16.mxu0 0
      %1524 = vmatmul.mubr.bf16.gmra.mrb[0].mxu0 %v426
      %v1525 = vpop.f32.mrb[0].mxu0
      %v1526 = vadd.f32 %v1253, %v1525
      %v1527 = vpop.f32.mrb[0].mxu0
      %v1528 = vadd.f32 %v1255, %v1527
      %v1529 = vpop.f32.mrb[0].mxu0
      %v1530 = vadd.f32 %v1257, %v1529
      %v1531 = vpop.f32.mrb[0].mxu0
      %v1532 = vadd.f32 %v1259, %v1531
      %1533 = vmatprep.mubr.bf16.mxu0 0
      %1534 = vmatmul.mubr.bf16.gmra.mrb[0].mxu0 %v427
      %v1535 = vpop.f32.mrb[0].mxu0
      %v1536 = vadd.f32 %v1263, %v1535
      %v1537 = vpop.f32.mrb[0].mxu0
      %v1538 = vadd.f32 %v1265, %v1537
      %v1539 = vpop.f32.mrb[0].mxu0
      %v1540 = vadd.f32 %v1267, %v1539
      %v1541 = vpop.f32.mrb[0].mxu0
      %v1542 = vadd.f32 %v1269, %v1541
      %1543 = vmatprep.mubr.bf16.mxu0 0
      %1544 = vmatmul.mubr.bf16.gmra.mrb[0].mxu0 %v428
      %v1545 = vpop.f32.mrb[0].mxu0
      %v1546 = vadd.f32 %v1273, %v1545
      %v1547 = vpop.f32.mrb[0].mxu0
      %v1548 = vadd.f32 %v1275, %v1547
      %v1549 = vpop.f32.mrb[0].mxu0
      %v1550 = vadd.f32 %v1277, %v1549
      %v1551 = vpop.f32.mrb[0].mxu0
      %v1552 = vadd.f32 %v1279, %v1551
      %1553 = vmatprep.mubr.bf16.mxu0 0
      %1554 = vmatmul.mubr.bf16.gmra.mrb[0].mxu0 %v429
      %v1555 = vpop.f32.mrb[0].mxu0
      %v1556 = vadd.f32 %v1283, %v1555
      %v1557 = vpop.f32.mrb[0].mxu0
      %v1558 = vadd.f32 %v1285, %v1557
      %v1559 = vpop.f32.mrb[0].mxu0
      %v1560 = vadd.f32 %v1287, %v1559
      %v1561 = vpop.f32.mrb[0].mxu0
      %v1562 = vadd.f32 %v1289, %v1561
      %1563 = vmatprep.mubr.bf16.mxu0 0
      %1564 = vmatmul.mubr.bf16.gmra.mrb[0].mxu0 %v430
      %v1565 = vpop.f32.mrb[0].mxu0
      %v1566 = vadd.f32 %v1293, %v1565
      %v1567 = vpop.f32.mrb[0].mxu0
      %v1568 = vadd.f32 %v1295, %v1567
      %v1569 = vpop.f32.mrb[0].mxu0
      %v1570 = vadd.f32 %v1297, %v1569
      %v1571 = vpop.f32.mrb[0].mxu0
      %v1572 = vadd.f32 %v1299, %v1571
      %1573 = vmatprep.mubr.bf16.mxu0 0
      %1574 = vmatmul.mubr.bf16.gmra.mrb[0].mxu0 %v431
      %v1575 = vpop.f32.mrb[0].mxu0
      %v1576 = vadd.f32 %v1303, %v1575
      %v1577 = vpop.f32.mrb[0].mxu0
      %v1578 = vadd.f32 %v1305, %v1577
      %v1579 = vpop.f32.mrb[0].mxu0
      %v1580 = vadd.f32 %v1307, %v1579
      %v1581 = vpop.f32.mrb[0].mxu0
      %v1582 = vadd.f32 %v1309, %v1581
      %1583 = vmatprep.mubr.bf16.mxu0 0
      %1584 = vmatmul.mubr.bf16.gmra.mrb[0].mxu0 %v432
      %v1585 = vpop.f32.mrb[0].mxu0
      %v1586 = vadd.f32 %v1313, %v1585
      %v1587 = vpop.f32.mrb[0].mxu0
      %v1588 = vadd.f32 %v1315, %v1587
      %v1589 = vpop.f32.mrb[0].mxu0
      %v1590 = vadd.f32 %v1317, %v1589
      %v1591 = vpop.f32.mrb[0].mxu0
      %v1592 = vadd.f32 %v1319, %v1591
      %1593 = vmatprep.mubr.bf16.mxu0 0
      %1594 = vmatmul.mubr.bf16.gmra.mrb[0].mxu0 %v433
      %v1595 = vpop.f32.mrb[0].mxu0
      %v1596 = vadd.f32 %v1323, %v1595
      %v1597 = vpop.f32.mrb[0].mxu0
      %v1598 = vadd.f32 %v1325, %v1597
      %v1599 = vpop.f32.mrb[0].mxu0
      %v1600 = vadd.f32 %v1327, %v1599
      %v1601 = vpop.f32.mrb[0].mxu0
      %v1602 = vadd.f32 %v1329, %v1601
      %1603 = vmatprep.mubr.bf16.mxu0 0
      %1604 = vmatmul.mubr.bf16.gmra.mrb[0].mxu0 %v434
      %v1605 = vpop.f32.mrb[0].mxu0
      %v1606 = vadd.f32 %v1333, %v1605
      %v1607 = vpop.f32.mrb[0].mxu0
      %v1608 = vadd.f32 %v1335, %v1607
      %v1609 = vpop.f32.mrb[0].mxu0
      %v1610 = vadd.f32 %v1337, %v1609
      %v1611 = vpop.f32.mrb[0].mxu0
      %v1612 = vadd.f32 %v1339, %v1611
      %1613 = vmatprep.mubr.bf16.mxu0 0
      %1614 = vmatmul.mubr.bf16.gmra.mrb[0].mxu0 %v435
      %v1615 = vpop.f32.mrb[0].mxu0
      %v1616 = vadd.f32 %v1343, %v1615
      %v1617 = vpop.f32.mrb[0].mxu0
      %v1618 = vadd.f32 %v1345, %v1617
      %v1619 = vpop.f32.mrb[0].mxu0
      %v1620 = vadd.f32 %v1347, %v1619
      %v1621 = vpop.f32.mrb[0].mxu0
      %v1622 = vadd.f32 %v1349, %v1621
      %1623 = vmatprep.mubr.bf16.mxu0 0
      %1624 = vmatmul.mubr.bf16.gmra.mrb[0].mxu0 %v436
      %v1625 = vpop.f32.mrb[0].mxu0
      %v1626 = vadd.f32 %v1353, %v1625
      %v1627 = vpop.f32.mrb[0].mxu0
      %v1628 = vadd.f32 %v1355, %v1627
      %v1629 = vpop.f32.mrb[0].mxu0
      %v1630 = vadd.f32 %v1357, %v1629
      %v1631 = vpop.f32.mrb[0].mxu0
      %v1632 = vadd.f32 %v1359, %v1631
      %1633 = vmatprep.mubr.bf16.mxu0 0
      %1634 = vmatmul.mubr.bf16.gmra.mrb[0].mxu0 %v437
      %v1635 = vpop.f32.mrb[0].mxu0
      %v1636 = vadd.f32 %v1363, %v1635
      %v1637 = vpop.f32.mrb[0].mxu0
      %v1638 = vadd.f32 %v1365, %v1637
      %v1639 = vpop.f32.mrb[0].mxu0
      %v1640 = vadd.f32 %v1367, %v1639
      %v1641 = vpop.f32.mrb[0].mxu0
      %v1642 = vadd.f32 %v1369, %v1641
      %1643 = vdwg.mxu0
      %s1644 = scalar_lea.vmem %s2, 256
      %v1645 = vld [vmem:[%s1644] sm:$0xff]
      %v1646 = vld [vmem:[%s1644 + $0x8] sm:$0xff]
      %v1647 = vld [vmem:[%s1644 + $0x10] sm:$0xff]
      %v1648 = vld [vmem:[%s1644 + $0x18] sm:$0xff]
      %v1649 = vld [vmem:[%s1644 + $0x20] sm:$0xff]
      %v1650 = vld [vmem:[%s1644 + $0x28] sm:$0xff]
      %v1651 = vld [vmem:[%s1644 + $0x30] sm:$0xff]
      %v1652 = vld [vmem:[%s1644 + $0x38] sm:$0xff]
      %v1653 = vld [vmem:[%s1644 + $0x40] sm:$0xff]
      %v1654 = vld [vmem:[%s1644 + $0x48] sm:$0xff]
      %v1655 = vld [vmem:[%s1644 + $0x50] sm:$0xff]
      %v1656 = vld [vmem:[%s1644 + $0x58] sm:$0xff]
      %v1657 = vld [vmem:[%s1644 + $0x60] sm:$0xff]
      %v1658 = vld [vmem:[%s1644 + $0x68] sm:$0xff]
      %v1659 = vld [vmem:[%s1644 + $0x70] sm:$0xff]
      %v1660 = vld [vmem:[%s1644 + $0x78] sm:$0xff]
      %s1661 = scalar_lea.vmem %s3, 256
      %v1662 = vld [vmem:[%s1661] sm:$0xff]
      %v1663 = vld [vmem:[%s1661 + $0x8] sm:$0xff]
      %v1664 = vld [vmem:[%s1661 + $0x10] sm:$0xff]
      %v1665 = vld [vmem:[%s1661 + $0x18] sm:$0xff]
      %v1666 = vld [vmem:[%s1661 + $0x20] sm:$0xff]
      %v1667 = vld [vmem:[%s1661 + $0x28] sm:$0xff]
      %v1668 = vld [vmem:[%s1661 + $0x30] sm:$0xff]
      %v1669 = vld [vmem:[%s1661 + $0x38] sm:$0xff]
      %v1670 = vld [vmem:[%s1661 + $0x40] sm:$0xff]
      %v1671 = vld [vmem:[%s1661 + $0x48] sm:$0xff]
      %v1672 = vld [vmem:[%s1661 + $0x50] sm:$0xff]
      %v1673 = vld [vmem:[%s1661 + $0x58] sm:$0xff]
      %v1674 = vld [vmem:[%s1661 + $0x60] sm:$0xff]
      %v1675 = vld [vmem:[%s1661 + $0x68] sm:$0xff]
      %v1676 = vld [vmem:[%s1661 + $0x70] sm:$0xff]
      %v1677 = vld [vmem:[%s1661 + $0x78] sm:$0xff]
      %v1694 = vunpack.c.l.b16 %v1662
      %v1695 = vunpack.c.h.b16 %v1662
      %v1696 = vunpack.c.l.b16 %v1663
      %v1697 = vunpack.c.h.b16 %v1663
      %v1698 = vunpack.c.l.b16 %v1664
      %v1699 = vunpack.c.h.b16 %v1664
      %v1700 = vunpack.c.l.b16 %v1665
      %v1701 = vunpack.c.h.b16 %v1665
      %v1702 = vunpack.c.l.b16 %v1666
      %v1703 = vunpack.c.h.b16 %v1666
      %v1704 = vunpack.c.l.b16 %v1667
      %v1705 = vunpack.c.h.b16 %v1667
      %v1706 = vunpack.c.l.b16 %v1668
      %v1707 = vunpack.c.h.b16 %v1668
      %v1708 = vunpack.c.l.b16 %v1669
      %v1709 = vunpack.c.h.b16 %v1669
      %v1710 = vunpack.c.l.b16 %v1670
      %v1711 = vunpack.c.h.b16 %v1670
      %v1712 = vunpack.c.l.b16 %v1671
      %v1713 = vunpack.c.h.b16 %v1671
      %v1714 = vunpack.c.l.b16 %v1672
      %v1715 = vunpack.c.h.b16 %v1672
      %v1716 = vunpack.c.l.b16 %v1673
      %v1717 = vunpack.c.h.b16 %v1673
      %v1718 = vunpack.c.l.b16 %v1674
      %v1719 = vunpack.c.h.b16 %v1674
      %v1720 = vunpack.c.l.b16 %v1675
      %v1721 = vunpack.c.h.b16 %v1675
      %v1722 = vunpack.c.l.b16 %v1676
      %v1723 = vunpack.c.h.b16 %v1676
      %v1724 = vunpack.c.l.b16 %v1677
      %v1725 = vunpack.c.h.b16 %v1677
      %v1726 = vpack.c.b16 %v1696, %v1694
      %v1727 = vpack.c.b16 %v1697, %v1695
      %v1728 = vpack.c.b16 %v1700, %v1698
      %v1729 = vpack.c.b16 %v1701, %v1699
      %v1730 = vpack.c.b16 %v1704, %v1702
      %v1731 = vpack.c.b16 %v1705, %v1703
      %v1732 = vpack.c.b16 %v1708, %v1706
      %v1733 = vpack.c.b16 %v1709, %v1707
      %v1734 = vpack.c.b16 %v1712, %v1710
      %v1735 = vpack.c.b16 %v1713, %v1711
      %v1736 = vpack.c.b16 %v1716, %v1714
      %v1737 = vpack.c.b16 %v1717, %v1715
      %v1738 = vpack.c.b16 %v1720, %v1718
      %v1739 = vpack.c.b16 %v1721, %v1719
      %v1740 = vpack.c.b16 %v1724, %v1722
      %v1741 = vpack.c.b16 %v1725, %v1723
      %1758 = vmatprep.subr.bf16.mxu0 %v1727
      %1759 = vmatpush1.bf16.msra.mxu0 %v1726
      %1760 = vmatprep.subr.bf16.mxu0 %v1729
      %1761 = vmatpush1.bf16.msra.mxu0 %v1728
      %1762 = vmatprep.subr.bf16.mxu0 %v1731
      %1763 = vmatpush1.bf16.msra.mxu0 %v1730
      %1764 = vmatprep.subr.bf16.mxu0 %v1733
      %1765 = vmatpush1.bf16.msra.mxu0 %v1732
      %1766 = vmatprep.subr.bf16.mxu0 %v1735
      %1767 = vmatpush1.bf16.msra.mxu0 %v1734
      %1768 = vmatprep.subr.bf16.mxu0 %v1737
      %1769 = vmatpush1.bf16.msra.mxu0 %v1736
      %1770 = vmatprep.subr.bf16.mxu0 %v1739
      %1771 = vmatpush1.bf16.msra.mxu0 %v1738
      %1772 = vmatprep.subr.bf16.mxu0 %v1741
      %1773 = vmatpush1.bf16.msra.mxu0 %v1740
      %1774 = vmatprep.subr.bf16.mxu0 0
      %1775 = vmatpush1.bf16.msra.mxu0 0
      %1776 = vmatprep.subr.bf16.mxu0 0
      %1777 = vmatpush1.bf16.msra.mxu0 0
      %1778 = vmatprep.subr.bf16.mxu0 0
      %1779 = vmatpush1.bf16.msra.mxu0 0
      %1780 = vmatprep.subr.bf16.mxu0 0
      %1781 = vmatpush1.bf16.msra.mxu0 0
      %1782 = vmatprep.subr.bf16.mxu0 0
      %1783 = vmatpush1.bf16.msra.mxu0 0
      %1784 = vmatprep.subr.bf16.mxu0 0
      %1785 = vmatpush1.bf16.msra.mxu0 0
      %1786 = vmatprep.subr.bf16.mxu0 0
      %1787 = vmatpush1.bf16.msra.mxu0 0
      %1788 = vmatprep.subr.bf16.mxu0 0
      %1789 = vmatpush1.bf16.msra.mxu0 0
      %1790 = vmatprep.mubr.bf16.mxu0 0
      %1791 = vmatmul.mubr.bf16.gmra.mrb[0].mxu0 %v470
      %v1792 = vpop.f32.mrb[0].mxu0
      %v1793 = vadd.f32 0.0, %v1792
      %v1794 = vpop.f32.mrb[0].mxu0
      %v1795 = vadd.f32 0.0, %v1794
      %v1796 = vpop.f32.mrb[0].mxu0
      %v1797 = vadd.f32 0.0, %v1796
      %v1798 = vpop.f32.mrb[0].mxu0
      %v1799 = vadd.f32 0.0, %v1798
      %1800 = vmatprep.mubr.bf16.mxu0 0
      %1801 = vmatmul.mubr.bf16.gmra.mrb[0].mxu0 %v471
      %v1802 = vpop.f32.mrb[0].mxu0
      %v1803 = vadd.f32 0.0, %v1802
      %v1804 = vpop.f32.mrb[0].mxu0
      %v1805 = vadd.f32 0.0, %v1804
      %v1806 = vpop.f32.mrb[0].mxu0
      %v1807 = vadd.f32 0.0, %v1806
      %v1808 = vpop.f32.mrb[0].mxu0
      %v1809 = vadd.f32 0.0, %v1808
      %1810 = vmatprep.mubr.bf16.mxu0 0
      %1811 = vmatmul.mubr.bf16.gmra.mrb[0].mxu0 %v472
      %v1812 = vpop.f32.mrb[0].mxu0
      %v1813 = vadd.f32 0.0, %v1812
      %v1814 = vpop.f32.mrb[0].mxu0
      %v1815 = vadd.f32 0.0, %v1814
      %v1816 = vpop.f32.mrb[0].mxu0
      %v1817 = vadd.f32 0.0, %v1816
      %v1818 = vpop.f32.mrb[0].mxu0
      %v1819 = vadd.f32 0.0, %v1818
      %1820 = vmatprep.mubr.bf16.mxu0 0
      %1821 = vmatmul.mubr.bf16.gmra.mrb[0].mxu0 %v473
      %v1822 = vpop.f32.mrb[0].mxu0
      %v1823 = vadd.f32 0.0, %v1822
      %v1824 = vpop.f32.mrb[0].mxu0
      %v1825 = vadd.f32 0.0, %v1824
      %v1826 = vpop.f32.mrb[0].mxu0
      %v1827 = vadd.f32 0.0, %v1826
      %v1828 = vpop.f32.mrb[0].mxu0
      %v1829 = vadd.f32 0.0, %v1828
      %1830 = vmatprep.mubr.bf16.mxu0 0
      %1831 = vmatmul.mubr.bf16.gmra.mrb[0].mxu0 %v474
      %v1832 = vpop.f32.mrb[0].mxu0
      %v1833 = vadd.f32 0.0, %v1832
      %v1834 = vpop.f32.mrb[0].mxu0
      %v1835 = vadd.f32 0.0, %v1834
      %v1836 = vpop.f32.mrb[0].mxu0
      %v1837 = vadd.f32 0.0, %v1836
      %v1838 = vpop.f32.mrb[0].mxu0
      %v1839 = vadd.f32 0.0, %v1838
      %1840 = vmatprep.mubr.bf16.mxu0 0
      %1841 = vmatmul.mubr.bf16.gmra.mrb[0].mxu0 %v475
      %v1842 = vpop.f32.mrb[0].mxu0
      %v1843 = vadd.f32 0.0, %v1842
      %v1844 = vpop.f32.mrb[0].mxu0
      %v1845 = vadd.f32 0.0, %v1844
      %v1846 = vpop.f32.mrb[0].mxu0
      %v1847 = vadd.f32 0.0, %v1846
      %v1848 = vpop.f32.mrb[0].mxu0
      %v1849 = vadd.f32 0.0, %v1848
      %1850 = vmatprep.mubr.bf16.mxu0 0
      %1851 = vmatmul.mubr.bf16.gmra.mrb[0].mxu0 %v476
      %v1852 = vpop.f32.mrb[0].mxu0
      %v1853 = vadd.f32 0.0, %v1852
      %v1854 = vpop.f32.mrb[0].mxu0
      %v1855 = vadd.f32 0.0, %v1854
      %v1856 = vpop.f32.mrb[0].mxu0
      %v1857 = vadd.f32 0.0, %v1856
      %v1858 = vpop.f32.mrb[0].mxu0
      %v1859 = vadd.f32 0.0, %v1858
      %1860 = vmatprep.mubr.bf16.mxu0 0
      %1861 = vmatmul.mubr.bf16.gmra.mrb[0].mxu0 %v477
      %v1862 = vpop.f32.mrb[0].mxu0
      %v1863 = vadd.f32 0.0, %v1862
      %v1864 = vpop.f32.mrb[0].mxu0
      %v1865 = vadd.f32 0.0, %v1864
      %v1866 = vpop.f32.mrb[0].mxu0
      %v1867 = vadd.f32 0.0, %v1866
      %v1868 = vpop.f32.mrb[0].mxu0
      %v1869 = vadd.f32 0.0, %v1868
      %1870 = vmatprep.mubr.bf16.mxu0 0
      %1871 = vmatmul.mubr.bf16.gmra.mrb[0].mxu0 %v478
      %v1872 = vpop.f32.mrb[0].mxu0
      %v1873 = vadd.f32 0.0, %v1872
      %v1874 = vpop.f32.mrb[0].mxu0
      %v1875 = vadd.f32 0.0, %v1874
      %v1876 = vpop.f32.mrb[0].mxu0
      %v1877 = vadd.f32 0.0, %v1876
      %v1878 = vpop.f32.mrb[0].mxu0
      %v1879 = vadd.f32 0.0, %v1878
      %1880 = vmatprep.mubr.bf16.mxu0 0
      %1881 = vmatmul.mubr.bf16.gmra.mrb[0].mxu0 %v479
      %v1882 = vpop.f32.mrb[0].mxu0
      %v1883 = vadd.f32 0.0, %v1882
      %v1884 = vpop.f32.mrb[0].mxu0
      %v1885 = vadd.f32 0.0, %v1884
      %v1886 = vpop.f32.mrb[0].mxu0
      %v1887 = vadd.f32 0.0, %v1886
      %v1888 = vpop.f32.mrb[0].mxu0
      %v1889 = vadd.f32 0.0, %v1888
      %1890 = vmatprep.mubr.bf16.mxu0 0
      %1891 = vmatmul.mubr.bf16.gmra.mrb[0].mxu0 %v480
      %v1892 = vpop.f32.mrb[0].mxu0
      %v1893 = vadd.f32 0.0, %v1892
      %v1894 = vpop.f32.mrb[0].mxu0
      %v1895 = vadd.f32 0.0, %v1894
      %v1896 = vpop.f32.mrb[0].mxu0
      %v1897 = vadd.f32 0.0, %v1896
      %v1898 = vpop.f32.mrb[0].mxu0
      %v1899 = vadd.f32 0.0, %v1898
      %1900 = vmatprep.mubr.bf16.mxu0 0
      %1901 = vmatmul.mubr.bf16.gmra.mrb[0].mxu0 %v481
      %v1902 = vpop.f32.mrb[0].mxu0
      %v1903 = vadd.f32 0.0, %v1902
      %v1904 = vpop.f32.mrb[0].mxu0
      %v1905 = vadd.f32 0.0, %v1904
      %v1906 = vpop.f32.mrb[0].mxu0
      %v1907 = vadd.f32 0.0, %v1906
      %v1908 = vpop.f32.mrb[0].mxu0
      %v1909 = vadd.f32 0.0, %v1908
      %1910 = vmatprep.mubr.bf16.mxu0 0
      %1911 = vmatmul.mubr.bf16.gmra.mrb[0].mxu0 %v482
      %v1912 = vpop.f32.mrb[0].mxu0
      %v1913 = vadd.f32 0.0, %v1912
      %v1914 = vpop.f32.mrb[0].mxu0
      %v1915 = vadd.f32 0.0, %v1914
      %v1916 = vpop.f32.mrb[0].mxu0
      %v1917 = vadd.f32 0.0, %v1916
      %v1918 = vpop.f32.mrb[0].mxu0
      %v1919 = vadd.f32 0.0, %v1918
      %1920 = vmatprep.mubr.bf16.mxu0 0
      %1921 = vmatmul.mubr.bf16.gmra.mrb[0].mxu0 %v483
      %v1922 = vpop.f32.mrb[0].mxu0
      %v1923 = vadd.f32 0.0, %v1922
      %v1924 = vpop.f32.mrb[0].mxu0
      %v1925 = vadd.f32 0.0, %v1924
      %v1926 = vpop.f32.mrb[0].mxu0
      %v1927 = vadd.f32 0.0, %v1926
      %v1928 = vpop.f32.mrb[0].mxu0
      %v1929 = vadd.f32 0.0, %v1928
      %1930 = vmatprep.mubr.bf16.mxu0 0
      %1931 = vmatmul.mubr.bf16.gmra.mrb[0].mxu0 %v484
      %v1932 = vpop.f32.mrb[0].mxu0
      %v1933 = vadd.f32 0.0, %v1932
      %v1934 = vpop.f32.mrb[0].mxu0
      %v1935 = vadd.f32 0.0, %v1934
      %v1936 = vpop.f32.mrb[0].mxu0
      %v1937 = vadd.f32 0.0, %v1936
      %v1938 = vpop.f32.mrb[0].mxu0
      %v1939 = vadd.f32 0.0, %v1938
      %1940 = vmatprep.mubr.bf16.mxu0 0
      %1941 = vmatmul.mubr.bf16.gmra.mrb[0].mxu0 %v485
      %v1942 = vpop.f32.mrb[0].mxu0
      %v1943 = vadd.f32 0.0, %v1942
      %v1944 = vpop.f32.mrb[0].mxu0
      %v1945 = vadd.f32 0.0, %v1944
      %v1946 = vpop.f32.mrb[0].mxu0
      %v1947 = vadd.f32 0.0, %v1946
      %v1948 = vpop.f32.mrb[0].mxu0
      %v1949 = vadd.f32 0.0, %v1948
      %1950 = vdwg.mxu0
      %v1967 = vunpack.c.l.b16 %v1645
      %v1968 = vunpack.c.h.b16 %v1645
      %v1969 = vunpack.c.l.b16 %v1646
      %v1970 = vunpack.c.h.b16 %v1646
      %v1971 = vunpack.c.l.b16 %v1647
      %v1972 = vunpack.c.h.b16 %v1647
      %v1973 = vunpack.c.l.b16 %v1648
      %v1974 = vunpack.c.h.b16 %v1648
      %v1975 = vunpack.c.l.b16 %v1649
      %v1976 = vunpack.c.h.b16 %v1649
      %v1977 = vunpack.c.l.b16 %v1650
      %v1978 = vunpack.c.h.b16 %v1650
      %v1979 = vunpack.c.l.b16 %v1651
      %v1980 = vunpack.c.h.b16 %v1651
      %v1981 = vunpack.c.l.b16 %v1652
      %v1982 = vunpack.c.h.b16 %v1652
      %v1983 = vunpack.c.l.b16 %v1653
      %v1984 = vunpack.c.h.b16 %v1653
      %v1985 = vunpack.c.l.b16 %v1654
      %v1986 = vunpack.c.h.b16 %v1654
      %v1987 = vunpack.c.l.b16 %v1655
      %v1988 = vunpack.c.h.b16 %v1655
      %v1989 = vunpack.c.l.b16 %v1656
      %v1990 = vunpack.c.h.b16 %v1656
      %v1991 = vunpack.c.l.b16 %v1657
      %v1992 = vunpack.c.h.b16 %v1657
      %v1993 = vunpack.c.l.b16 %v1658
      %v1994 = vunpack.c.h.b16 %v1658
      %v1995 = vunpack.c.l.b16 %v1659
      %v1996 = vunpack.c.h.b16 %v1659
      %v1997 = vunpack.c.l.b16 %v1660
      %v1998 = vunpack.c.h.b16 %v1660
      %v1999 = vpack.c.b16 %v1969, %v1967
      %v2000 = vpack.c.b16 %v1970, %v1968
      %v2001 = vpack.c.b16 %v1973, %v1971
      %v2002 = vpack.c.b16 %v1974, %v1972
      %v2003 = vpack.c.b16 %v1977, %v1975
      %v2004 = vpack.c.b16 %v1978, %v1976
      %v2005 = vpack.c.b16 %v1981, %v1979
      %v2006 = vpack.c.b16 %v1982, %v1980
      %v2007 = vpack.c.b16 %v1985, %v1983
      %v2008 = vpack.c.b16 %v1986, %v1984
      %v2009 = vpack.c.b16 %v1989, %v1987
      %v2010 = vpack.c.b16 %v1990, %v1988
      %v2011 = vpack.c.b16 %v1993, %v1991
      %v2012 = vpack.c.b16 %v1994, %v1992
      %v2013 = vpack.c.b16 %v1997, %v1995
      %v2014 = vpack.c.b16 %v1998, %v1996
      %2031 = vmatprep.subr.bf16.mxu0 %v2000
      %2032 = vmatpush1.bf16.msra.mxu0 %v1999
      %2033 = vmatprep.subr.bf16.mxu0 %v2002
      %2034 = vmatpush1.bf16.msra.mxu0 %v2001
      %2035 = vmatprep.subr.bf16.mxu0 %v2004
      %2036 = vmatpush1.bf16.msra.mxu0 %v2003
      %2037 = vmatprep.subr.bf16.mxu0 %v2006
      %2038 = vmatpush1.bf16.msra.mxu0 %v2005
      %2039 = vmatprep.subr.bf16.mxu0 %v2008
      %2040 = vmatpush1.bf16.msra.mxu0 %v2007
      %2041 = vmatprep.subr.bf16.mxu0 %v2010
      %2042 = vmatpush1.bf16.msra.mxu0 %v2009
      %2043 = vmatprep.subr.bf16.mxu0 %v2012
      %2044 = vmatpush1.bf16.msra.mxu0 %v2011
      %2045 = vmatprep.subr.bf16.mxu0 %v2014
      %2046 = vmatpush1.bf16.msra.mxu0 %v2013
      %2047 = vmatprep.subr.bf16.mxu0 0
      %2048 = vmatpush1.bf16.msra.mxu0 0
      %2049 = vmatprep.subr.bf16.mxu0 0
      %2050 = vmatpush1.bf16.msra.mxu0 0
      %2051 = vmatprep.subr.bf16.mxu0 0
      %2052 = vmatpush1.bf16.msra.mxu0 0
      %2053 = vmatprep.subr.bf16.mxu0 0
      %2054 = vmatpush1.bf16.msra.mxu0 0
      %2055 = vmatprep.subr.bf16.mxu0 0
      %2056 = vmatpush1.bf16.msra.mxu0 0
      %2057 = vmatprep.subr.bf16.mxu0 0
      %2058 = vmatpush1.bf16.msra.mxu0 0
      %2059 = vmatprep.subr.bf16.mxu0 0
      %2060 = vmatpush1.bf16.msra.mxu0 0
      %2061 = vmatprep.subr.bf16.mxu0 0
      %2062 = vmatpush1.bf16.msra.mxu0 0
      %2063 = vmatprep.mubr.bf16.mxu0 0
      %2064 = vmatmul.mubr.bf16.gmra.mrb[0].mxu0 %v422
      %v2065 = vpop.f32.mrb[0].mxu0
      %v2066 = vadd.f32 %v1793, %v2065
      %v2067 = vpop.f32.mrb[0].mxu0
      %v2068 = vadd.f32 %v1795, %v2067
      %v2069 = vpop.f32.mrb[0].mxu0
      %v2070 = vadd.f32 %v1797, %v2069
      %v2071 = vpop.f32.mrb[0].mxu0
      %v2072 = vadd.f32 %v1799, %v2071
      %2073 = vmatprep.mubr.bf16.mxu0 0
      %2074 = vmatmul.mubr.bf16.gmra.mrb[0].mxu0 %v423
      %v2075 = vpop.f32.mrb[0].mxu0
      %v2076 = vadd.f32 %v1803, %v2075
      %v2077 = vpop.f32.mrb[0].mxu0
      %v2078 = vadd.f32 %v1805, %v2077
      %v2079 = vpop.f32.mrb[0].mxu0
      %v2080 = vadd.f32 %v1807, %v2079
      %v2081 = vpop.f32.mrb[0].mxu0
      %v2082 = vadd.f32 %v1809, %v2081
      %2083 = vmatprep.mubr.bf16.mxu0 0
      %2084 = vmatmul.mubr.bf16.gmra.mrb[0].mxu0 %v424
      %v2085 = vpop.f32.mrb[0].mxu0
      %v2086 = vadd.f32 %v1813, %v2085
      %v2087 = vpop.f32.mrb[0].mxu0
      %v2088 = vadd.f32 %v1815, %v2087
      %v2089 = vpop.f32.mrb[0].mxu0
      %v2090 = vadd.f32 %v1817, %v2089
      %v2091 = vpop.f32.mrb[0].mxu0
      %v2092 = vadd.f32 %v1819, %v2091
      %2093 = vmatprep.mubr.bf16.mxu0 0
      %2094 = vmatmul.mubr.bf16.gmra.mrb[0].mxu0 %v425
      %v2095 = vpop.f32.mrb[0].mxu0
      %v2096 = vadd.f32 %v1823, %v2095
      %v2097 = vpop.f32.mrb[0].mxu0
      %v2098 = vadd.f32 %v1825, %v2097
      %v2099 = vpop.f32.mrb[0].mxu0
      %v2100 = vadd.f32 %v1827, %v2099
      %v2101 = vpop.f32.mrb[0].mxu0
      %v2102 = vadd.f32 %v1829, %v2101
      %2103 = vmatprep.mubr.bf16.mxu0 0
      %2104 = vmatmul.mubr.bf16.gmra.mrb[0].mxu0 %v426
      %v2105 = vpop.f32.mrb[0].mxu0
      %v2106 = vadd.f32 %v1833, %v2105
      %v2107 = vpop.f32.mrb[0].mxu0
      %v2108 = vadd.f32 %v1835, %v2107
      %v2109 = vpop.f32.mrb[0].mxu0
      %v2110 = vadd.f32 %v1837, %v2109
      %v2111 = vpop.f32.mrb[0].mxu0
      %v2112 = vadd.f32 %v1839, %v2111
      %2113 = vmatprep.mubr.bf16.mxu0 0
      %2114 = vmatmul.mubr.bf16.gmra.mrb[0].mxu0 %v427
      %v2115 = vpop.f32.mrb[0].mxu0
      %v2116 = vadd.f32 %v1843, %v2115
      %v2117 = vpop.f32.mrb[0].mxu0
      %v2118 = vadd.f32 %v1845, %v2117
      %v2119 = vpop.f32.mrb[0].mxu0
      %v2120 = vadd.f32 %v1847, %v2119
      %v2121 = vpop.f32.mrb[0].mxu0
      %v2122 = vadd.f32 %v1849, %v2121
      %2123 = vmatprep.mubr.bf16.mxu0 0
      %2124 = vmatmul.mubr.bf16.gmra.mrb[0].mxu0 %v428
      %v2125 = vpop.f32.mrb[0].mxu0
      %v2126 = vadd.f32 %v1853, %v2125
      %v2127 = vpop.f32.mrb[0].mxu0
      %v2128 = vadd.f32 %v1855, %v2127
      %v2129 = vpop.f32.mrb[0].mxu0
      %v2130 = vadd.f32 %v1857, %v2129
      %v2131 = vpop.f32.mrb[0].mxu0
      %v2132 = vadd.f32 %v1859, %v2131
      %2133 = vmatprep.mubr.bf16.mxu0 0
      %2134 = vmatmul.mubr.bf16.gmra.mrb[0].mxu0 %v429
      %v2135 = vpop.f32.mrb[0].mxu0
      %v2136 = vadd.f32 %v1863, %v2135
      %v2137 = vpop.f32.mrb[0].mxu0
      %v2138 = vadd.f32 %v1865, %v2137
      %v2139 = vpop.f32.mrb[0].mxu0
      %v2140 = vadd.f32 %v1867, %v2139
      %v2141 = vpop.f32.mrb[0].mxu0
      %v2142 = vadd.f32 %v1869, %v2141
      %2143 = vmatprep.mubr.bf16.mxu0 0
      %2144 = vmatmul.mubr.bf16.gmra.mrb[0].mxu0 %v430
      %v2145 = vpop.f32.mrb[0].mxu0
      %v2146 = vadd.f32 %v1873, %v2145
      %v2147 = vpop.f32.mrb[0].mxu0
      %v2148 = vadd.f32 %v1875, %v2147
      %v2149 = vpop.f32.mrb[0].mxu0
      %v2150 = vadd.f32 %v1877, %v2149
      %v2151 = vpop.f32.mrb[0].mxu0
      %v2152 = vadd.f32 %v1879, %v2151
      %2153 = vmatprep.mubr.bf16.mxu0 0
      %2154 = vmatmul.mubr.bf16.gmra.mrb[0].mxu0 %v431
      %v2155 = vpop.f32.mrb[0].mxu0
      %v2156 = vadd.f32 %v1883, %v2155
      %v2157 = vpop.f32.mrb[0].mxu0
      %v2158 = vadd.f32 %v1885, %v2157
      %v2159 = vpop.f32.mrb[0].mxu0
      %v2160 = vadd.f32 %v1887, %v2159
      %v2161 = vpop.f32.mrb[0].mxu0
      %v2162 = vadd.f32 %v1889, %v2161
      %2163 = vmatprep.mubr.bf16.mxu0 0
      %2164 = vmatmul.mubr.bf16.gmra.mrb[0].mxu0 %v432
      %v2165 = vpop.f32.mrb[0].mxu0
      %v2166 = vadd.f32 %v1893, %v2165
      %v2167 = vpop.f32.mrb[0].mxu0
      %v2168 = vadd.f32 %v1895, %v2167
      %v2169 = vpop.f32.mrb[0].mxu0
      %v2170 = vadd.f32 %v1897, %v2169
      %v2171 = vpop.f32.mrb[0].mxu0
      %v2172 = vadd.f32 %v1899, %v2171
      %2173 = vmatprep.mubr.bf16.mxu0 0
      %2174 = vmatmul.mubr.bf16.gmra.mrb[0].mxu0 %v433
      %v2175 = vpop.f32.mrb[0].mxu0
      %v2176 = vadd.f32 %v1903, %v2175
      %v2177 = vpop.f32.mrb[0].mxu0
      %v2178 = vadd.f32 %v1905, %v2177
      %v2179 = vpop.f32.mrb[0].mxu0
      %v2180 = vadd.f32 %v1907, %v2179
      %v2181 = vpop.f32.mrb[0].mxu0
      %v2182 = vadd.f32 %v1909, %v2181
      %2183 = vmatprep.mubr.bf16.mxu0 0
      %2184 = vmatmul.mubr.bf16.gmra.mrb[0].mxu0 %v434
      %v2185 = vpop.f32.mrb[0].mxu0
      %v2186 = vadd.f32 %v1913, %v2185
      %v2187 = vpop.f32.mrb[0].mxu0
      %v2188 = vadd.f32 %v1915, %v2187
      %v2189 = vpop.f32.mrb[0].mxu0
      %v2190 = vadd.f32 %v1917, %v2189
      %v2191 = vpop.f32.mrb[0].mxu0
      %v2192 = vadd.f32 %v1919, %v2191
      %2193 = vmatprep.mubr.bf16.mxu0 0
      %2194 = vmatmul.mubr.bf16.gmra.mrb[0].mxu0 %v435
      %v2195 = vpop.f32.mrb[0].mxu0
      %v2196 = vadd.f32 %v1923, %v2195
      %v2197 = vpop.f32.mrb[0].mxu0
      %v2198 = vadd.f32 %v1925, %v2197
      %v2199 = vpop.f32.mrb[0].mxu0
      %v2200 = vadd.f32 %v1927, %v2199
      %v2201 = vpop.f32.mrb[0].mxu0
      %v2202 = vadd.f32 %v1929, %v2201
      %2203 = vmatprep.mubr.bf16.mxu0 0
      %2204 = vmatmul.mubr.bf16.gmra.mrb[0].mxu0 %v436
      %v2205 = vpop.f32.mrb[0].mxu0
      %v2206 = vadd.f32 %v1933, %v2205
      %v2207 = vpop.f32.mrb[0].mxu0
      %v2208 = vadd.f32 %v1935, %v2207
      %v2209 = vpop.f32.mrb[0].mxu0
      %v2210 = vadd.f32 %v1937, %v2209
      %v2211 = vpop.f32.mrb[0].mxu0
      %v2212 = vadd.f32 %v1939, %v2211
      %2213 = vmatprep.mubr.bf16.mxu0 0
      %2214 = vmatmul.mubr.bf16.gmra.mrb[0].mxu0 %v437
      %v2215 = vpop.f32.mrb[0].mxu0
      %v2216 = vadd.f32 %v1943, %v2215
      %v2217 = vpop.f32.mrb[0].mxu0
      %v2218 = vadd.f32 %v1945, %v2217
      %v2219 = vpop.f32.mrb[0].mxu0
      %v2220 = vadd.f32 %v1947, %v2219
      %v2221 = vpop.f32.mrb[0].mxu0
      %v2222 = vadd.f32 %v1949, %v2221
      %2223 = vdwg.mxu0
      %vm2288 = vcmask 1040384
      %v2289 = vrot.slane %v906, 7
      %v2290 = vrot.slane %v908, 7
      %v2291 = vrot.slane %v910, 7
      %v2292 = vsel %vm2288, %v2289, %v2291
      %v2293 = vrot.slane %v912, 7
      %v2294 = vsel %vm2288, %v2290, %v2293
      %v2295 = vrot.slane %v916, 7
      %v2296 = vrot.slane %v918, 7
      %v2297 = vrot.slane %v920, 7
      %v2298 = vsel %vm2288, %v2295, %v2297
      %v2299 = vrot.slane %v922, 7
      %v2300 = vsel %vm2288, %v2296, %v2299
      %v2301 = vrot.slane %v926, 7
      %v2302 = vrot.slane %v928, 7
      %v2303 = vrot.slane %v930, 7
      %v2304 = vsel %vm2288, %v2301, %v2303
      %v2305 = vrot.slane %v932, 7
      %v2306 = vsel %vm2288, %v2302, %v2305
      %v2307 = vrot.slane %v936, 7
      %v2308 = vrot.slane %v938, 7
      %v2309 = vrot.slane %v940, 7
      %v2310 = vsel %vm2288, %v2307, %v2309
      %v2311 = vrot.slane %v942, 7
      %v2312 = vsel %vm2288, %v2308, %v2311
      %v2313 = vrot.slane %v946, 7
      %v2314 = vrot.slane %v948, 7
      %v2315 = vrot.slane %v950, 7
      %v2316 = vsel %vm2288, %v2313, %v2315
      %v2317 = vrot.slane %v952, 7
      %v2318 = vsel %vm2288, %v2314, %v2317
      %v2319 = vrot.slane %v956, 7
      %v2320 = vrot.slane %v958, 7
      %v2321 = vrot.slane %v960, 7
      %v2322 = vsel %vm2288, %v2319, %v2321
      %v2323 = vrot.slane %v962, 7
      %v2324 = vsel %vm2288, %v2320, %v2323
      %v2325 = vrot.slane %v966, 7
      %v2326 = vrot.slane %v968, 7
      %v2327 = vrot.slane %v970, 7
      %v2328 = vsel %vm2288, %v2325, %v2327
      %v2329 = vrot.slane %v972, 7
      %v2330 = vsel %vm2288, %v2326, %v2329
      %v2331 = vrot.slane %v976, 7
      %v2332 = vrot.slane %v978, 7
      %v2333 = vrot.slane %v980, 7
      %v2334 = vsel %vm2288, %v2331, %v2333
      %v2335 = vrot.slane %v982, 7
      %v2336 = vsel %vm2288, %v2332, %v2335
      %v2337 = vrot.slane %v986, 7
      %v2338 = vrot.slane %v988, 7
      %v2339 = vrot.slane %v990, 7
      %v2340 = vsel %vm2288, %v2337, %v2339
      %v2341 = vrot.slane %v992, 7
      %v2342 = vsel %vm2288, %v2338, %v2341
      %v2343 = vrot.slane %v996, 7
      %v2344 = vrot.slane %v998, 7
      %v2345 = vrot.slane %v1000, 7
      %v2346 = vsel %vm2288, %v2343, %v2345
      %v2347 = vrot.slane %v1002, 7
      %v2348 = vsel %vm2288, %v2344, %v2347
      %v2349 = vrot.slane %v1006, 7
      %v2350 = vrot.slane %v1008, 7
      %v2351 = vrot.slane %v1010, 7
      %v2352 = vsel %vm2288, %v2349, %v2351
      %v2353 = vrot.slane %v1012, 7
      %v2354 = vsel %vm2288, %v2350, %v2353
      %v2355 = vrot.slane %v1016, 7
      %v2356 = vrot.slane %v1018, 7
      %v2357 = vrot.slane %v1020, 7
      %v2358 = vsel %vm2288, %v2355, %v2357
      %v2359 = vrot.slane %v1022, 7
      %v2360 = vsel %vm2288, %v2356, %v2359
      %v2361 = vrot.slane %v1026, 7
      %v2362 = vrot.slane %v1028, 7
      %v2363 = vrot.slane %v1030, 7
      %v2364 = vsel %vm2288, %v2361, %v2363
      %v2365 = vrot.slane %v1032, 7
      %v2366 = vsel %vm2288, %v2362, %v2365
      %v2367 = vrot.slane %v1036, 7
      %v2368 = vrot.slane %v1038, 7
      %v2369 = vrot.slane %v1040, 7
      %v2370 = vsel %vm2288, %v2367, %v2369
      %v2371 = vrot.slane %v1042, 7
      %v2372 = vsel %vm2288, %v2368, %v2371
      %v2373 = vrot.slane %v1046, 7
      %v2374 = vrot.slane %v1048, 7
      %v2375 = vrot.slane %v1050, 7
      %v2376 = vsel %vm2288, %v2373, %v2375
      %v2377 = vrot.slane %v1052, 7
      %v2378 = vsel %vm2288, %v2374, %v2377
      %v2379 = vrot.slane %v1056, 7
      %v2380 = vrot.slane %v1058, 7
      %v2381 = vrot.slane %v1060, 7
      %v2382 = vsel %vm2288, %v2379, %v2381
      %v2383 = vrot.slane %v1062, 7
      %v2384 = vsel %vm2288, %v2380, %v2383
      %v2449 = vsel %vm2288, 0.0, %v2289
      %v2450 = vsel %vm2288, 0.0, %v2290
      %v2451 = vsel %vm2288, 0.0, %v2295
      %v2452 = vsel %vm2288, 0.0, %v2296
      %v2453 = vsel %vm2288, 0.0, %v2301
      %v2454 = vsel %vm2288, 0.0, %v2302
      %v2455 = vsel %vm2288, 0.0, %v2307
      %v2456 = vsel %vm2288, 0.0, %v2308
      %v2457 = vsel %vm2288, 0.0, %v2313
      %v2458 = vsel %vm2288, 0.0, %v2314
      %v2459 = vsel %vm2288, 0.0, %v2319
      %v2460 = vsel %vm2288, 0.0, %v2320
      %v2461 = vsel %vm2288, 0.0, %v2325
      %v2462 = vsel %vm2288, 0.0, %v2326
      %v2463 = vsel %vm2288, 0.0, %v2331
      %v2464 = vsel %vm2288, 0.0, %v2332
      %v2465 = vsel %vm2288, 0.0, %v2337
      %v2466 = vsel %vm2288, 0.0, %v2338
      %v2467 = vsel %vm2288, 0.0, %v2343
      %v2468 = vsel %vm2288, 0.0, %v2344
      %v2469 = vsel %vm2288, 0.0, %v2349
      %v2470 = vsel %vm2288, 0.0, %v2350
      %v2471 = vsel %vm2288, 0.0, %v2355
      %v2472 = vsel %vm2288, 0.0, %v2356
      %v2473 = vsel %vm2288, 0.0, %v2361
      %v2474 = vsel %vm2288, 0.0, %v2362
      %v2475 = vsel %vm2288, 0.0, %v2367
      %v2476 = vsel %vm2288, 0.0, %v2368
      %v2477 = vsel %vm2288, 0.0, %v2373
      %v2478 = vsel %vm2288, 0.0, %v2374
      %v2479 = vsel %vm2288, 0.0, %v2379
      %v2480 = vsel %vm2288, 0.0, %v2380
      %vm2545 = vcmask 1046528
      %v2546 = vrot.slane %v2066, 1
      %v2547 = vrot.slane %v2070, 1
      %v2548 = vsel %vm2545, %v2546, %v2547
      %v2549 = vrot.slane %v2068, 1
      %v2550 = vrot.slane %v2072, 1
      %v2551 = vsel %vm2545, %v2549, %v2550
      %v2552 = vrot.slane %v2076, 1
      %v2553 = vrot.slane %v2080, 1
      %v2554 = vsel %vm2545, %v2552, %v2553
      %v2555 = vrot.slane %v2078, 1
      %v2556 = vrot.slane %v2082, 1
      %v2557 = vsel %vm2545, %v2555, %v2556
      %v2558 = vrot.slane %v2086, 1
      %v2559 = vrot.slane %v2090, 1
      %v2560 = vsel %vm2545, %v2558, %v2559
      %v2561 = vrot.slane %v2088, 1
      %v2562 = vrot.slane %v2092, 1
      %v2563 = vsel %vm2545, %v2561, %v2562
      %v2564 = vrot.slane %v2096, 1
      %v2565 = vrot.slane %v2100, 1
      %v2566 = vsel %vm2545, %v2564, %v2565
      %v2567 = vrot.slane %v2098, 1
      %v2568 = vrot.slane %v2102, 1
      %v2569 = vsel %vm2545, %v2567, %v2568
      %v2570 = vrot.slane %v2106, 1
      %v2571 = vrot.slane %v2110, 1
      %v2572 = vsel %vm2545, %v2570, %v2571
      %v2573 = vrot.slane %v2108, 1
      %v2574 = vrot.slane %v2112, 1
      %v2575 = vsel %vm2545, %v2573, %v2574
      %v2576 = vrot.slane %v2116, 1
      %v2577 = vrot.slane %v2120, 1
      %v2578 = vsel %vm2545, %v2576, %v2577
      %v2579 = vrot.slane %v2118, 1
      %v2580 = vrot.slane %v2122, 1
      %v2581 = vsel %vm2545, %v2579, %v2580
      %v2582 = vrot.slane %v2126, 1
      %v2583 = vrot.slane %v2130, 1
      %v2584 = vsel %vm2545, %v2582, %v2583
      %v2585 = vrot.slane %v2128, 1
      %v2586 = vrot.slane %v2132, 1
      %v2587 = vsel %vm2545, %v2585, %v2586
      %v2588 = vrot.slane %v2136, 1
      %v2589 = vrot.slane %v2140, 1
      %v2590 = vsel %vm2545, %v2588, %v2589
      %v2591 = vrot.slane %v2138, 1
      %v2592 = vrot.slane %v2142, 1
      %v2593 = vsel %vm2545, %v2591, %v2592
      %v2594 = vrot.slane %v2146, 1
      %v2595 = vrot.slane %v2150, 1
      %v2596 = vsel %vm2545, %v2594, %v2595
      %v2597 = vrot.slane %v2148, 1
      %v2598 = vrot.slane %v2152, 1
      %v2599 = vsel %vm2545, %v2597, %v2598
      %v2600 = vrot.slane %v2156, 1
      %v2601 = vrot.slane %v2160, 1
      %v2602 = vsel %vm2545, %v2600, %v2601
      %v2603 = vrot.slane %v2158, 1
      %v2604 = vrot.slane %v2162, 1
      %v2605 = vsel %vm2545, %v2603, %v2604
      %v2606 = vrot.slane %v2166, 1
      %v2607 = vrot.slane %v2170, 1
      %v2608 = vsel %vm2545, %v2606, %v2607
      %v2609 = vrot.slane %v2168, 1
      %v2610 = vrot.slane %v2172, 1
      %v2611 = vsel %vm2545, %v2609, %v2610
      %v2612 = vrot.slane %v2176, 1
      %v2613 = vrot.slane %v2180, 1
      %v2614 = vsel %vm2545, %v2612, %v2613
      %v2615 = vrot.slane %v2178, 1
      %v2616 = vrot.slane %v2182, 1
      %v2617 = vsel %vm2545, %v2615, %v2616
      %v2618 = vrot.slane %v2186, 1
      %v2619 = vrot.slane %v2190, 1
      %v2620 = vsel %vm2545, %v2618, %v2619
      %v2621 = vrot.slane %v2188, 1
      %v2622 = vrot.slane %v2192, 1
      %v2623 = vsel %vm2545, %v2621, %v2622
      %v2624 = vrot.slane %v2196, 1
      %v2625 = vrot.slane %v2200, 1
      %v2626 = vsel %vm2545, %v2624, %v2625
      %v2627 = vrot.slane %v2198, 1
      %v2628 = vrot.slane %v2202, 1
      %v2629 = vsel %vm2545, %v2627, %v2628
      %v2630 = vrot.slane %v2206, 1
      %v2631 = vrot.slane %v2210, 1
      %v2632 = vsel %vm2545, %v2630, %v2631
      %v2633 = vrot.slane %v2208, 1
      %v2634 = vrot.slane %v2212, 1
      %v2635 = vsel %vm2545, %v2633, %v2634
      %v2636 = vrot.slane %v2216, 1
      %v2637 = vrot.slane %v2220, 1
      %v2638 = vsel %vm2545, %v2636, %v2637
      %v2639 = vrot.slane %v2218, 1
      %v2640 = vrot.slane %v2222, 1
      %v2641 = vsel %vm2545, %v2639, %v2640
      %v2706 = vsel %vm2545, %v2547, 0.0
      %v2707 = vsel %vm2545, %v2550, 0.0
      %v2708 = vsel %vm2545, %v2553, 0.0
      %v2709 = vsel %vm2545, %v2556, 0.0
      %v2710 = vsel %vm2545, %v2559, 0.0
      %v2711 = vsel %vm2545, %v2562, 0.0
      %v2712 = vsel %vm2545, %v2565, 0.0
      %v2713 = vsel %vm2545, %v2568, 0.0
      %v2714 = vsel %vm2545, %v2571, 0.0
      %v2715 = vsel %vm2545, %v2574, 0.0
      %v2716 = vsel %vm2545, %v2577, 0.0
      %v2717 = vsel %vm2545, %v2580, 0.0
      %v2718 = vsel %vm2545, %v2583, 0.0
      %v2719 = vsel %vm2545, %v2586, 0.0
      %v2720 = vsel %vm2545, %v2589, 0.0
      %v2721 = vsel %vm2545, %v2592, 0.0
      %v2722 = vsel %vm2545, %v2595, 0.0
      %v2723 = vsel %vm2545, %v2598, 0.0
      %v2724 = vsel %vm2545, %v2601, 0.0
      %v2725 = vsel %vm2545, %v2604, 0.0
      %v2726 = vsel %vm2545, %v2607, 0.0
      %v2727 = vsel %vm2545, %v2610, 0.0
      %v2728 = vsel %vm2545, %v2613, 0.0
      %v2729 = vsel %vm2545, %v2616, 0.0
      %v2730 = vsel %vm2545, %v2619, 0.0
      %v2731 = vsel %vm2545, %v2622, 0.0
      %v2732 = vsel %vm2545, %v2625, 0.0
      %v2733 = vsel %vm2545, %v2628, 0.0
      %v2734 = vsel %vm2545, %v2631, 0.0
      %v2735 = vsel %vm2545, %v2634, 0.0
      %v2736 = vsel %vm2545, %v2637, 0.0
      %v2737 = vsel %vm2545, %v2640, 0.0
      %v2738 = vld [vmem:[%s4] sm:$0x3]
      %v2740 = vlaneseq
      %v2741 = vshrl.u32 %v2740, 7
      %v2742 = vsub.s32 0, %v2741
      %v2743 = vrot.slane %v2738, %v2742
      %v2744 = vlaneseq
      %v2745 = vshrl.u32 %v2744, 7
      %v2746 = vsub.s32 1, %v2745
      %v2747 = vrot.slane %v2738, %v2746
      %v2750 = vadd.f32 %v1486, %v2743
      %v2751 = vadd.f32 %v1488, %v2747
      %v2752 = vadd.f32 %v1490, %v2743
      %v2753 = vadd.f32 %v1492, %v2747
      %v2754 = vadd.f32 %v1496, %v2743
      %v2755 = vadd.f32 %v1498, %v2747
      %v2756 = vadd.f32 %v1500, %v2743
      %v2757 = vadd.f32 %v1502, %v2747
      %v2758 = vadd.f32 %v1506, %v2743
      %v2759 = vadd.f32 %v1508, %v2747
      %v2760 = vadd.f32 %v1510, %v2743
      %v2761 = vadd.f32 %v1512, %v2747
      %v2762 = vadd.f32 %v1516, %v2743
      %v2763 = vadd.f32 %v1518, %v2747
      %v2764 = vadd.f32 %v1520, %v2743
      %v2765 = vadd.f32 %v1522, %v2747
      %v2766 = vadd.f32 %v1526, %v2743
      %v2767 = vadd.f32 %v1528, %v2747
      %v2768 = vadd.f32 %v1530, %v2743
      %v2769 = vadd.f32 %v1532, %v2747
      %v2770 = vadd.f32 %v1536, %v2743
      %v2771 = vadd.f32 %v1538, %v2747
      %v2772 = vadd.f32 %v1540, %v2743
      %v2773 = vadd.f32 %v1542, %v2747
      %v2774 = vadd.f32 %v1546, %v2743
      %v2775 = vadd.f32 %v1548, %v2747
      %v2776 = vadd.f32 %v1550, %v2743
      %v2777 = vadd.f32 %v1552, %v2747
      %v2778 = vadd.f32 %v1556, %v2743
      %v2779 = vadd.f32 %v1558, %v2747
      %v2780 = vadd.f32 %v1560, %v2743
      %v2781 = vadd.f32 %v1562, %v2747
      %v2782 = vadd.f32 %v1566, %v2743
      %v2783 = vadd.f32 %v1568, %v2747
      %v2784 = vadd.f32 %v1570, %v2743
      %v2785 = vadd.f32 %v1572, %v2747
      %v2786 = vadd.f32 %v1576, %v2743
      %v2787 = vadd.f32 %v1578, %v2747
      %v2788 = vadd.f32 %v1580, %v2743
      %v2789 = vadd.f32 %v1582, %v2747
      %v2790 = vadd.f32 %v1586, %v2743
      %v2791 = vadd.f32 %v1588, %v2747
      %v2792 = vadd.f32 %v1590, %v2743
      %v2793 = vadd.f32 %v1592, %v2747
      %v2794 = vadd.f32 %v1596, %v2743
      %v2795 = vadd.f32 %v1598, %v2747
      %v2796 = vadd.f32 %v1600, %v2743
      %v2797 = vadd.f32 %v1602, %v2747
      %v2798 = vadd.f32 %v1606, %v2743
      %v2799 = vadd.f32 %v1608, %v2747
      %v2800 = vadd.f32 %v1610, %v2743
      %v2801 = vadd.f32 %v1612, %v2747
      %v2802 = vadd.f32 %v1616, %v2743
      %v2803 = vadd.f32 %v1618, %v2747
      %v2804 = vadd.f32 %v1620, %v2743
      %v2805 = vadd.f32 %v1622, %v2747
      %v2806 = vadd.f32 %v1626, %v2743
      %v2807 = vadd.f32 %v1628, %v2747
      %v2808 = vadd.f32 %v1630, %v2743
      %v2809 = vadd.f32 %v1632, %v2747
      %v2810 = vadd.f32 %v1636, %v2743
      %v2811 = vadd.f32 %v1638, %v2747
      %v2812 = vadd.f32 %v1640, %v2743
      %v2813 = vadd.f32 %v1642, %v2747
      %v2814 = vadd.f32 %v2449, %v2548
      %v2815 = vadd.f32 %v2450, %v2551
      %v2816 = vadd.f32 %v2292, %v2706
      %v2817 = vadd.f32 %v2294, %v2707
      %v2818 = vadd.f32 %v2451, %v2554
      %v2819 = vadd.f32 %v2452, %v2557
      %v2820 = vadd.f32 %v2298, %v2708
      %v2821 = vadd.f32 %v2300, %v2709
      %v2822 = vadd.f32 %v2453, %v2560
      %v2823 = vadd.f32 %v2454, %v2563
      %v2824 = vadd.f32 %v2304, %v2710
      %v2825 = vadd.f32 %v2306, %v2711
      %v2826 = vadd.f32 %v2455, %v2566
      %v2827 = vadd.f32 %v2456, %v2569
      %v2828 = vadd.f32 %v2310, %v2712
      %v2829 = vadd.f32 %v2312, %v2713
      %v2830 = vadd.f32 %v2457, %v2572
      %v2831 = vadd.f32 %v2458, %v2575
      %v2832 = vadd.f32 %v2316, %v2714
      %v2833 = vadd.f32 %v2318, %v2715
      %v2834 = vadd.f32 %v2459, %v2578
      %v2835 = vadd.f32 %v2460, %v2581
      %v2836 = vadd.f32 %v2322, %v2716
      %v2837 = vadd.f32 %v2324, %v2717
      %v2838 = vadd.f32 %v2461, %v2584
      %v2839 = vadd.f32 %v2462, %v2587
      %v2840 = vadd.f32 %v2328, %v2718
      %v2841 = vadd.f32 %v2330, %v2719
      %v2842 = vadd.f32 %v2463, %v2590
      %v2843 = vadd.f32 %v2464, %v2593
      %v2844 = vadd.f32 %v2334, %v2720
      %v2845 = vadd.f32 %v2336, %v2721
      %v2846 = vadd.f32 %v2465, %v2596
      %v2847 = vadd.f32 %v2466, %v2599
      %v2848 = vadd.f32 %v2340, %v2722
      %v2849 = vadd.f32 %v2342, %v2723
      %v2850 = vadd.f32 %v2467, %v2602
      %v2851 = vadd.f32 %v2468, %v2605
      %v2852 = vadd.f32 %v2346, %v2724
      %v2853 = vadd.f32 %v2348, %v2725
      %v2854 = vadd.f32 %v2469, %v2608
      %v2855 = vadd.f32 %v2470, %v2611
      %v2856 = vadd.f32 %v2352, %v2726
      %v2857 = vadd.f32 %v2354, %v2727
      %v2858 = vadd.f32 %v2471, %v2614
      %v2859 = vadd.f32 %v2472, %v2617
      %v2860 = vadd.f32 %v2358, %v2728
      %v2861 = vadd.f32 %v2360, %v2729
      %v2862 = vadd.f32 %v2473, %v2620
      %v2863 = vadd.f32 %v2474, %v2623
      %v2864 = vadd.f32 %v2364, %v2730
      %v2865 = vadd.f32 %v2366, %v2731
      %v2866 = vadd.f32 %v2475, %v2626
      %v2867 = vadd.f32 %v2476, %v2629
      %v2868 = vadd.f32 %v2370, %v2732
      %v2869 = vadd.f32 %v2372, %v2733
      %v2870 = vadd.f32 %v2477, %v2632
      %v2871 = vadd.f32 %v2478, %v2635
      %v2872 = vadd.f32 %v2376, %v2734
      %v2873 = vadd.f32 %v2378, %v2735
      %v2874 = vadd.f32 %v2479, %v2638
      %v2875 = vadd.f32 %v2480, %v2641
      %v2876 = vadd.f32 %v2382, %v2736
      %v2877 = vadd.f32 %v2384, %v2737
      %v2878 = vadd.f32 %v2750, %v2814
      %v2879 = vadd.f32 %v2751, %v2815
      %v2880 = vadd.f32 %v2752, %v2816
      %v2881 = vadd.f32 %v2753, %v2817
      %v2882 = vadd.f32 %v2754, %v2818
      %v2883 = vadd.f32 %v2755, %v2819
      %v2884 = vadd.f32 %v2756, %v2820
      %v2885 = vadd.f32 %v2757, %v2821
      %v2886 = vadd.f32 %v2758, %v2822
      %v2887 = vadd.f32 %v2759, %v2823
      %v2888 = vadd.f32 %v2760, %v2824
      %v2889 = vadd.f32 %v2761, %v2825
      %v2890 = vadd.f32 %v2762, %v2826
      %v2891 = vadd.f32 %v2763, %v2827
      %v2892 = vadd.f32 %v2764, %v2828
      %v2893 = vadd.f32 %v2765, %v2829
      %v2894 = vadd.f32 %v2766, %v2830
      %v2895 = vadd.f32 %v2767, %v2831
      %v2896 = vadd.f32 %v2768, %v2832
      %v2897 = vadd.f32 %v2769, %v2833
      %v2898 = vadd.f32 %v2770, %v2834
      %v2899 = vadd.f32 %v2771, %v2835
      %v2900 = vadd.f32 %v2772, %v2836
      %v2901 = vadd.f32 %v2773, %v2837
      %v2902 = vadd.f32 %v2774, %v2838
      %v2903 = vadd.f32 %v2775, %v2839
      %v2904 = vadd.f32 %v2776, %v2840
      %v2905 = vadd.f32 %v2777, %v2841
      %v2906 = vadd.f32 %v2778, %v2842
      %v2907 = vadd.f32 %v2779, %v2843
      %v2908 = vadd.f32 %v2780, %v2844
      %v2909 = vadd.f32 %v2781, %v2845
      %v2910 = vadd.f32 %v2782, %v2846
      %v2911 = vadd.f32 %v2783, %v2847
      %v2912 = vadd.f32 %v2784, %v2848
      %v2913 = vadd.f32 %v2785, %v2849
      %v2914 = vadd.f32 %v2786, %v2850
      %v2915 = vadd.f32 %v2787, %v2851
      %v2916 = vadd.f32 %v2788, %v2852
      %v2917 = vadd.f32 %v2789, %v2853
      %v2918 = vadd.f32 %v2790, %v2854
      %v2919 = vadd.f32 %v2791, %v2855
      %v2920 = vadd.f32 %v2792, %v2856
      %v2921 = vadd.f32 %v2793, %v2857
      %v2922 = vadd.f32 %v2794, %v2858
      %v2923 = vadd.f32 %v2795, %v2859
      %v2924 = vadd.f32 %v2796, %v2860
      %v2925 = vadd.f32 %v2797, %v2861
      %v2926 = vadd.f32 %v2798, %v2862
      %v2927 = vadd.f32 %v2799, %v2863
      %v2928 = vadd.f32 %v2800, %v2864
      %v2929 = vadd.f32 %v2801, %v2865
      %v2930 = vadd.f32 %v2802, %v2866
      %v2931 = vadd.f32 %v2803, %v2867
      %v2932 = vadd.f32 %v2804, %v2868
      %v2933 = vadd.f32 %v2805, %v2869
      %v2934 = vadd.f32 %v2806, %v2870
      %v2935 = vadd.f32 %v2807, %v2871
      %v2936 = vadd.f32 %v2808, %v2872
      %v2937 = vadd.f32 %v2809, %v2873
      %v2938 = vadd.f32 %v2810, %v2874
      %v2939 = vadd.f32 %v2811, %v2875
      %v2940 = vadd.f32 %v2812, %v2876
      %v2941 = vadd.f32 %v2813, %v2877
      %v2942 = vxor.u32 %v2878, 2147483648
      %v2943 = vxor.u32 %v2880, 2147483648
      %v2944 = vxor.u32 %v2882, 2147483648
      %v2945 = vxor.u32 %v2884, 2147483648
      %v2946 = vxor.u32 %v2886, 2147483648
      %v2947 = vxor.u32 %v2888, 2147483648
      %v2948 = vxor.u32 %v2890, 2147483648
      %v2949 = vxor.u32 %v2892, 2147483648
      %v2950 = vxor.u32 %v2894, 2147483648
      %v2951 = vxor.u32 %v2896, 2147483648
      %v2952 = vxor.u32 %v2898, 2147483648
      %v2953 = vxor.u32 %v2900, 2147483648
      %v2954 = vxor.u32 %v2902, 2147483648
      %v2955 = vxor.u32 %v2904, 2147483648
      %v2956 = vxor.u32 %v2906, 2147483648
      %v2957 = vxor.u32 %v2908, 2147483648
      %v2958 = vxor.u32 %v2910, 2147483648
      %v2959 = vxor.u32 %v2912, 2147483648
      %v2960 = vxor.u32 %v2914, 2147483648
      %v2961 = vxor.u32 %v2916, 2147483648
      %v2962 = vxor.u32 %v2918, 2147483648
      %v2963 = vxor.u32 %v2920, 2147483648
      %v2964 = vxor.u32 %v2922, 2147483648
      %v2965 = vxor.u32 %v2924, 2147483648
      %v2966 = vxor.u32 %v2926, 2147483648
      %v2967 = vxor.u32 %v2928, 2147483648
      %v2968 = vxor.u32 %v2930, 2147483648
      %v2969 = vxor.u32 %v2932, 2147483648
      %v2970 = vxor.u32 %v2934, 2147483648
      %v2971 = vxor.u32 %v2936, 2147483648
      %v2972 = vxor.u32 %v2938, 2147483648
      %v2973 = vxor.u32 %v2940, 2147483648
      %v2974 = vmul.f32 %v2942, 1.442695
      %v2975 = vpow.pop %v2974
      %v2976 = vmul.f32 %v2943, 1.442695
      %v2977 = vpow.pop %v2976
      %v2978 = vmul.f32 %v2944, 1.442695
      %v2979 = vpow.pop %v2978
      %v2980 = vmul.f32 %v2945, 1.442695
      %v2981 = vpow.pop %v2980
      %v2982 = vmul.f32 %v2946, 1.442695
      %v2983 = vpow.pop %v2982
      %v2984 = vmul.f32 %v2947, 1.442695
      %v2985 = vpow.pop %v2984
      %v2986 = vmul.f32 %v2948, 1.442695
      %v2987 = vpow.pop %v2986
      %v2988 = vmul.f32 %v2949, 1.442695
      %v2989 = vpow.pop %v2988
      %v2990 = vmul.f32 %v2950, 1.442695
      %v2991 = vpow.pop %v2990
      %v2992 = vmul.f32 %v2951, 1.442695
      %v2993 = vpow.pop %v2992
      %v2994 = vmul.f32 %v2952, 1.442695
      %v2995 = vpow.pop %v2994
      %v2996 = vmul.f32 %v2953, 1.442695
      %v2997 = vpow.pop %v2996
      %v2998 = vmul.f32 %v2954, 1.442695
      %v2999 = vpow.pop %v2998
      %v3000 = vmul.f32 %v2955, 1.442695
      %v3001 = vpow.pop %v3000
      %v3002 = vmul.f32 %v2956, 1.442695
      %v3003 = vpow.pop %v3002
      %v3004 = vmul.f32 %v2957, 1.442695
      %v3005 = vpow.pop %v3004
      %v3006 = vmul.f32 %v2958, 1.442695
      %v3007 = vpow.pop %v3006
      %v3008 = vmul.f32 %v2959, 1.442695
      %v3009 = vpow.pop %v3008
      %v3010 = vmul.f32 %v2960, 1.442695
      %v3011 = vpow.pop %v3010
      %v3012 = vmul.f32 %v2961, 1.442695
      %v3013 = vpow.pop %v3012
      %v3014 = vmul.f32 %v2962, 1.442695
      %v3015 = vpow.pop %v3014
      %v3016 = vmul.f32 %v2963, 1.442695
      %v3017 = vpow.pop %v3016
      %v3018 = vmul.f32 %v2964, 1.442695
      %v3019 = vpow.pop %v3018
      %v3020 = vmul.f32 %v2965, 1.442695
      %v3021 = vpow.pop %v3020
      %v3022 = vmul.f32 %v2966, 1.442695
      %v3023 = vpow.pop %v3022
      %v3024 = vmul.f32 %v2967, 1.442695
      %v3025 = vpow.pop %v3024
      %v3026 = vmul.f32 %v2968, 1.442695
      %v3027 = vpow.pop %v3026
      %v3028 = vmul.f32 %v2969, 1.442695
      %v3029 = vpow.pop %v3028
      %v3030 = vmul.f32 %v2970, 1.442695
      %v3031 = vpow.pop %v3030
      %v3032 = vmul.f32 %v2971, 1.442695
      %v3033 = vpow.pop %v3032
      %v3034 = vmul.f32 %v2972, 1.442695
      %v3035 = vpow.pop %v3034
      %v3036 = vmul.f32 %v2973, 1.442695
      %v3037 = vpow.pop %v3036
      %v3038 = vadd.f32 %v2975, 1.0
      %v3039 = vadd.f32 %v2977, 1.0
      %v3040 = vadd.f32 %v2979, 1.0
      %v3041 = vadd.f32 %v2981, 1.0
      %v3042 = vadd.f32 %v2983, 1.0
      %v3043 = vadd.f32 %v2985, 1.0
      %v3044 = vadd.f32 %v2987, 1.0
      %v3045 = vadd.f32 %v2989, 1.0
      %v3046 = vadd.f32 %v2991, 1.0
      %v3047 = vadd.f32 %v2993, 1.0
      %v3048 = vadd.f32 %v2995, 1.0
      %v3049 = vadd.f32 %v2997, 1.0
      %v3050 = vadd.f32 %v2999, 1.0
      %v3051 = vadd.f32 %v3001, 1.0
      %v3052 = vadd.f32 %v3003, 1.0
      %v3053 = vadd.f32 %v3005, 1.0
      %v3054 = vadd.f32 %v3007, 1.0
      %v3055 = vadd.f32 %v3009, 1.0
      %v3056 = vadd.f32 %v3011, 1.0
      %v3057 = vadd.f32 %v3013, 1.0
      %v3058 = vadd.f32 %v3015, 1.0
      %v3059 = vadd.f32 %v3017, 1.0
      %v3060 = vadd.f32 %v3019, 1.0
      %v3061 = vadd.f32 %v3021, 1.0
      %v3062 = vadd.f32 %v3023, 1.0
      %v3063 = vadd.f32 %v3025, 1.0
      %v3064 = vadd.f32 %v3027, 1.0
      %v3065 = vadd.f32 %v3029, 1.0
      %v3066 = vadd.f32 %v3031, 1.0
      %v3067 = vadd.f32 %v3033, 1.0
      %v3068 = vadd.f32 %v3035, 1.0
      %v3069 = vadd.f32 %v3037, 1.0
      %v3070 = vrcp.pop %v3038
      %v3071 = vmul.f32 1.0, %v3070
      %v3072 = vrcp.pop %v3039
      %v3073 = vmul.f32 1.0, %v3072
      %v3074 = vrcp.pop %v3040
      %v3075 = vmul.f32 1.0, %v3074
      %v3076 = vrcp.pop %v3041
      %v3077 = vmul.f32 1.0, %v3076
      %v3078 = vrcp.pop %v3042
      %v3079 = vmul.f32 1.0, %v3078
      %v3080 = vrcp.pop %v3043
      %v3081 = vmul.f32 1.0, %v3080
      %v3082 = vrcp.pop %v3044
      %v3083 = vmul.f32 1.0, %v3082
      %v3084 = vrcp.pop %v3045
      %v3085 = vmul.f32 1.0, %v3084
      %v3086 = vrcp.pop %v3046
      %v3087 = vmul.f32 1.0, %v3086
      %v3088 = vrcp.pop %v3047
      %v3089 = vmul.f32 1.0, %v3088
      %v3090 = vrcp.pop %v3048
      %v3091 = vmul.f32 1.0, %v3090
      %v3092 = vrcp.pop %v3049
      %v3093 = vmul.f32 1.0, %v3092
      %v3094 = vrcp.pop %v3050
      %v3095 = vmul.f32 1.0, %v3094
      %v3096 = vrcp.pop %v3051
      %v3097 = vmul.f32 1.0, %v3096
      %v3098 = vrcp.pop %v3052
      %v3099 = vmul.f32 1.0, %v3098
      %v3100 = vrcp.pop %v3053
      %v3101 = vmul.f32 1.0, %v3100
      %v3102 = vrcp.pop %v3054
      %v3103 = vmul.f32 1.0, %v3102
      %v3104 = vrcp.pop %v3055
      %v3105 = vmul.f32 1.0, %v3104
      %v3106 = vrcp.pop %v3056
      %v3107 = vmul.f32 1.0, %v3106
      %v3108 = vrcp.pop %v3057
      %v3109 = vmul.f32 1.0, %v3108
      %v3110 = vrcp.pop %v3058
      %v3111 = vmul.f32 1.0, %v3110
      %v3112 = vrcp.pop %v3059
      %v3113 = vmul.f32 1.0, %v3112
      %v3114 = vrcp.pop %v3060
      %v3115 = vmul.f32 1.0, %v3114
      %v3116 = vrcp.pop %v3061
      %v3117 = vmul.f32 1.0, %v3116
      %v3118 = vrcp.pop %v3062
      %v3119 = vmul.f32 1.0, %v3118
      %v3120 = vrcp.pop %v3063
      %v3121 = vmul.f32 1.0, %v3120
      %v3122 = vrcp.pop %v3064
      %v3123 = vmul.f32 1.0, %v3122
      %v3124 = vrcp.pop %v3065
      %v3125 = vmul.f32 1.0, %v3124
      %v3126 = vrcp.pop %v3066
      %v3127 = vmul.f32 1.0, %v3126
      %v3128 = vrcp.pop %v3067
      %v3129 = vmul.f32 1.0, %v3128
      %v3130 = vrcp.pop %v3068
      %v3131 = vmul.f32 1.0, %v3130
      %v3132 = vrcp.pop %v3069
      %v3133 = vmul.f32 1.0, %v3132
      %v3134 = vxor.u32 %v2879, 2147483648
      %v3135 = vxor.u32 %v2881, 2147483648
      %v3136 = vxor.u32 %v2883, 2147483648
      %v3137 = vxor.u32 %v2885, 2147483648
      %v3138 = vxor.u32 %v2887, 2147483648
      %v3139 = vxor.u32 %v2889, 2147483648
      %v3140 = vxor.u32 %v2891, 2147483648
      %v3141 = vxor.u32 %v2893, 2147483648
      %v3142 = vxor.u32 %v2895, 2147483648
      %v3143 = vxor.u32 %v2897, 2147483648
      %v3144 = vxor.u32 %v2899, 2147483648
      %v3145 = vxor.u32 %v2901, 2147483648
      %v3146 = vxor.u32 %v2903, 2147483648
      %v3147 = vxor.u32 %v2905, 2147483648
      %v3148 = vxor.u32 %v2907, 2147483648
      %v3149 = vxor.u32 %v2909, 2147483648
      %v3150 = vxor.u32 %v2911, 2147483648
      %v3151 = vxor.u32 %v2913, 2147483648
      %v3152 = vxor.u32 %v2915, 2147483648
      %v3153 = vxor.u32 %v2917, 2147483648
      %v3154 = vxor.u32 %v2919, 2147483648
      %v3155 = vxor.u32 %v2921, 2147483648
      %v3156 = vxor.u32 %v2923, 2147483648
      %v3157 = vxor.u32 %v2925, 2147483648
      %v3158 = vxor.u32 %v2927, 2147483648
      %v3159 = vxor.u32 %v2929, 2147483648
      %v3160 = vxor.u32 %v2931, 2147483648
      %v3161 = vxor.u32 %v2933, 2147483648
      %v3162 = vxor.u32 %v2935, 2147483648
      %v3163 = vxor.u32 %v2937, 2147483648
      %v3164 = vxor.u32 %v2939, 2147483648
      %v3165 = vxor.u32 %v2941, 2147483648
      %v3166 = vmul.f32 %v3134, 1.442695
      %v3167 = vpow.pop %v3166
      %v3168 = vmul.f32 %v3135, 1.442695
      %v3169 = vpow.pop %v3168
      %v3170 = vmul.f32 %v3136, 1.442695
      %v3171 = vpow.pop %v3170
      %v3172 = vmul.f32 %v3137, 1.442695
      %v3173 = vpow.pop %v3172
      %v3174 = vmul.f32 %v3138, 1.442695
      %v3175 = vpow.pop %v3174
      %v3176 = vmul.f32 %v3139, 1.442695
      %v3177 = vpow.pop %v3176
      %v3178 = vmul.f32 %v3140, 1.442695
      %v3179 = vpow.pop %v3178
      %v3180 = vmul.f32 %v3141, 1.442695
      %v3181 = vpow.pop %v3180
      %v3182 = vmul.f32 %v3142, 1.442695
      %v3183 = vpow.pop %v3182
      %v3184 = vmul.f32 %v3143, 1.442695
      %v3185 = vpow.pop %v3184
      %v3186 = vmul.f32 %v3144, 1.442695
      %v3187 = vpow.pop %v3186
      %v3188 = vmul.f32 %v3145, 1.442695
      %v3189 = vpow.pop %v3188
      %v3190 = vmul.f32 %v3146, 1.442695
      %v3191 = vpow.pop %v3190
      %v3192 = vmul.f32 %v3147, 1.442695
      %v3193 = vpow.pop %v3192
      %v3194 = vmul.f32 %v3148, 1.442695
      %v3195 = vpow.pop %v3194
      %v3196 = vmul.f32 %v3149, 1.442695
      %v3197 = vpow.pop %v3196
      %v3198 = vmul.f32 %v3150, 1.442695
      %v3199 = vpow.pop %v3198
      %v3200 = vmul.f32 %v3151, 1.442695
      %v3201 = vpow.pop %v3200
      %v3202 = vmul.f32 %v3152, 1.442695
      %v3203 = vpow.pop %v3202
      %v3204 = vmul.f32 %v3153, 1.442695
      %v3205 = vpow.pop %v3204
      %v3206 = vmul.f32 %v3154, 1.442695
      %v3207 = vpow.pop %v3206
      %v3208 = vmul.f32 %v3155, 1.442695
      %v3209 = vpow.pop %v3208
      %v3210 = vmul.f32 %v3156, 1.442695
      %v3211 = vpow.pop %v3210
      %v3212 = vmul.f32 %v3157, 1.442695
      %v3213 = vpow.pop %v3212
      %v3214 = vmul.f32 %v3158, 1.442695
      %v3215 = vpow.pop %v3214
      %v3216 = vmul.f32 %v3159, 1.442695
      %v3217 = vpow.pop %v3216
      %v3218 = vmul.f32 %v3160, 1.442695
      %v3219 = vpow.pop %v3218
      %v3220 = vmul.f32 %v3161, 1.442695
      %v3221 = vpow.pop %v3220
      %v3222 = vmul.f32 %v3162, 1.442695
      %v3223 = vpow.pop %v3222
      %v3224 = vmul.f32 %v3163, 1.442695
      %v3225 = vpow.pop %v3224
      %v3226 = vmul.f32 %v3164, 1.442695
      %v3227 = vpow.pop %v3226
      %v3228 = vmul.f32 %v3165, 1.442695
      %v3229 = vpow.pop %v3228
      %v3230 = vadd.f32 %v3167, 1.0
      %v3231 = vadd.f32 %v3169, 1.0
      %v3232 = vadd.f32 %v3171, 1.0
      %v3233 = vadd.f32 %v3173, 1.0
      %v3234 = vadd.f32 %v3175, 1.0
      %v3235 = vadd.f32 %v3177, 1.0
      %v3236 = vadd.f32 %v3179, 1.0
      %v3237 = vadd.f32 %v3181, 1.0
      %v3238 = vadd.f32 %v3183, 1.0
      %v3239 = vadd.f32 %v3185, 1.0
      %v3240 = vadd.f32 %v3187, 1.0
      %v3241 = vadd.f32 %v3189, 1.0
      %v3242 = vadd.f32 %v3191, 1.0
      %v3243 = vadd.f32 %v3193, 1.0
      %v3244 = vadd.f32 %v3195, 1.0
      %v3245 = vadd.f32 %v3197, 1.0
      %v3246 = vadd.f32 %v3199, 1.0
      %v3247 = vadd.f32 %v3201, 1.0
      %v3248 = vadd.f32 %v3203, 1.0
      %v3249 = vadd.f32 %v3205, 1.0
      %v3250 = vadd.f32 %v3207, 1.0
      %v3251 = vadd.f32 %v3209, 1.0
      %v3252 = vadd.f32 %v3211, 1.0
      %v3253 = vadd.f32 %v3213, 1.0
      %v3254 = vadd.f32 %v3215, 1.0
      %v3255 = vadd.f32 %v3217, 1.0
      %v3256 = vadd.f32 %v3219, 1.0
      %v3257 = vadd.f32 %v3221, 1.0
      %v3258 = vadd.f32 %v3223, 1.0
      %v3259 = vadd.f32 %v3225, 1.0
      %v3260 = vadd.f32 %v3227, 1.0
      %v3261 = vadd.f32 %v3229, 1.0
      %v3262 = vrcp.pop %v3230
      %v3263 = vmul.f32 1.0, %v3262
      %v3264 = vrcp.pop %v3231
      %v3265 = vmul.f32 1.0, %v3264
      %v3266 = vrcp.pop %v3232
      %v3267 = vmul.f32 1.0, %v3266
      %v3268 = vrcp.pop %v3233
      %v3269 = vmul.f32 1.0, %v3268
      %v3270 = vrcp.pop %v3234
      %v3271 = vmul.f32 1.0, %v3270
      %v3272 = vrcp.pop %v3235
      %v3273 = vmul.f32 1.0, %v3272
      %v3274 = vrcp.pop %v3236
      %v3275 = vmul.f32 1.0, %v3274
      %v3276 = vrcp.pop %v3237
      %v3277 = vmul.f32 1.0, %v3276
      %v3278 = vrcp.pop %v3238
      %v3279 = vmul.f32 1.0, %v3278
      %v3280 = vrcp.pop %v3239
      %v3281 = vmul.f32 1.0, %v3280
      %v3282 = vrcp.pop %v3240
      %v3283 = vmul.f32 1.0, %v3282
      %v3284 = vrcp.pop %v3241
      %v3285 = vmul.f32 1.0, %v3284
      %v3286 = vrcp.pop %v3242
      %v3287 = vmul.f32 1.0, %v3286
      %v3288 = vrcp.pop %v3243
      %v3289 = vmul.f32 1.0, %v3288
      %v3290 = vrcp.pop %v3244
      %v3291 = vmul.f32 1.0, %v3290
      %v3292 = vrcp.pop %v3245
      %v3293 = vmul.f32 1.0, %v3292
      %v3294 = vrcp.pop %v3246
      %v3295 = vmul.f32 1.0, %v3294
      %v3296 = vrcp.pop %v3247
      %v3297 = vmul.f32 1.0, %v3296
      %v3298 = vrcp.pop %v3248
      %v3299 = vmul.f32 1.0, %v3298
      %v3300 = vrcp.pop %v3249
      %v3301 = vmul.f32 1.0, %v3300
      %v3302 = vrcp.pop %v3250
      %v3303 = vmul.f32 1.0, %v3302
      %v3304 = vrcp.pop %v3251
      %v3305 = vmul.f32 1.0, %v3304
      %v3306 = vrcp.pop %v3252
      %v3307 = vmul.f32 1.0, %v3306
      %v3308 = vrcp.pop %v3253
      %v3309 = vmul.f32 1.0, %v3308
      %v3310 = vrcp.pop %v3254
      %v3311 = vmul.f32 1.0, %v3310
      %v3312 = vrcp.pop %v3255
      %v3313 = vmul.f32 1.0, %v3312
      %v3314 = vrcp.pop %v3256
      %v3315 = vmul.f32 1.0, %v3314
      %v3316 = vrcp.pop %v3257
      %v3317 = vmul.f32 1.0, %v3316
      %v3318 = vrcp.pop %v3258
      %v3319 = vmul.f32 1.0, %v3318
      %v3320 = vrcp.pop %v3259
      %v3321 = vmul.f32 1.0, %v3320
      %v3322 = vrcp.pop %v3260
      %v3323 = vmul.f32 1.0, %v3322
      %v3324 = vrcp.pop %v3261
      %v3325 = vmul.f32 1.0, %v3324
      %v3326 = vmul.f32 %v3263, %v390
      %v3327 = vmul.f32 %v3265, %v391
      %v3328 = vmul.f32 %v3267, %v392
      %v3329 = vmul.f32 %v3269, %v393
      %v3330 = vmul.f32 %v3271, %v394
      %v3331 = vmul.f32 %v3273, %v395
      %v3332 = vmul.f32 %v3275, %v396
      %v3333 = vmul.f32 %v3277, %v397
      %v3334 = vmul.f32 %v3279, %v398
      %v3335 = vmul.f32 %v3281, %v399
      %v3336 = vmul.f32 %v3283, %v400
      %v3337 = vmul.f32 %v3285, %v401
      %v3338 = vmul.f32 %v3287, %v402
      %v3339 = vmul.f32 %v3289, %v403
      %v3340 = vmul.f32 %v3291, %v404
      %v3341 = vmul.f32 %v3293, %v405
      %v3342 = vmul.f32 %v3295, %v406
      %v3343 = vmul.f32 %v3297, %v407
      %v3344 = vmul.f32 %v3299, %v408
      %v3345 = vmul.f32 %v3301, %v409
      %v3346 = vmul.f32 %v3303, %v410
      %v3347 = vmul.f32 %v3305, %v411
      %v3348 = vmul.f32 %v3307, %v412
      %v3349 = vmul.f32 %v3309, %v413
      %v3350 = vmul.f32 %v3311, %v414
      %v3351 = vmul.f32 %v3313, %v415
      %v3352 = vmul.f32 %v3315, %v416
      %v3353 = vmul.f32 %v3317, %v417
      %v3354 = vmul.f32 %v3319, %v418
      %v3355 = vmul.f32 %v3321, %v419
      %v3356 = vmul.f32 %v3323, %v420
      %v3357 = vmul.f32 %v3325, %v421
      %v3358 = vpack.c.bf16 %v3327, %v3326
      %v3359 = vpack.c.bf16 %v3329, %v3328
      %v3360 = vpack.c.bf16 %v3331, %v3330
      %v3361 = vpack.c.bf16 %v3333, %v3332
      %v3362 = vpack.c.bf16 %v3335, %v3334
      %v3363 = vpack.c.bf16 %v3337, %v3336
      %v3364 = vpack.c.bf16 %v3339, %v3338
      %v3365 = vpack.c.bf16 %v3341, %v3340
      %v3366 = vpack.c.bf16 %v3343, %v3342
      %v3367 = vpack.c.bf16 %v3345, %v3344
      %v3368 = vpack.c.bf16 %v3347, %v3346
      %v3369 = vpack.c.bf16 %v3349, %v3348
      %v3370 = vpack.c.bf16 %v3351, %v3350
      %v3371 = vpack.c.bf16 %v3353, %v3352
      %v3372 = vpack.c.bf16 %v3355, %v3354
      %v3373 = vpack.c.bf16 %v3357, %v3356
      %v3374 = vld [vmem:[%s5] sm:$0xf]
      %v3375 = vld [vmem:[%s5 + $0x4] sm:$0xf]
      %v3376 = vld [vmem:[%s5 + $0x8] sm:$0xf]
      %v3377 = vld [vmem:[%s5 + $0xc] sm:$0xf]
      %v3378 = vld [vmem:[%s5 + $0x10] sm:$0xf]
      %v3379 = vld [vmem:[%s5 + $0x14] sm:$0xf]
      %v3380 = vld [vmem:[%s5 + $0x18] sm:$0xf]
      %v3381 = vld [vmem:[%s5 + $0x1c] sm:$0xf]
      %v3382 = vld [vmem:[%s5 + $0x20] sm:$0xf]
      %v3383 = vld [vmem:[%s5 + $0x24] sm:$0xf]
      %v3384 = vld [vmem:[%s5 + $0x28] sm:$0xf]
      %v3385 = vld [vmem:[%s5 + $0x2c] sm:$0xf]
      %v3386 = vld [vmem:[%s5 + $0x30] sm:$0xf]
      %v3387 = vld [vmem:[%s5 + $0x34] sm:$0xf]
      %v3388 = vld [vmem:[%s5 + $0x38] sm:$0xf]
      %v3389 = vld [vmem:[%s5 + $0x3c] sm:$0xf]
      %v3390 = vld [vmem:[%s6] sm:$0xf]
      %v3391 = vld [vmem:[%s6 + $0x4] sm:$0xf]
      %v3392 = vld [vmem:[%s6 + $0x8] sm:$0xf]
      %v3393 = vld [vmem:[%s6 + $0xc] sm:$0xf]
      %v3394 = vld [vmem:[%s6 + $0x10] sm:$0xf]
      %v3395 = vld [vmem:[%s6 + $0x14] sm:$0xf]
      %v3396 = vld [vmem:[%s6 + $0x18] sm:$0xf]
      %v3397 = vld [vmem:[%s6 + $0x1c] sm:$0xf]
      %v3398 = vld [vmem:[%s6 + $0x20] sm:$0xf]
      %v3399 = vld [vmem:[%s6 + $0x24] sm:$0xf]
      %v3400 = vld [vmem:[%s6 + $0x28] sm:$0xf]
      %v3401 = vld [vmem:[%s6 + $0x2c] sm:$0xf]
      %v3402 = vld [vmem:[%s6 + $0x30] sm:$0xf]
      %v3403 = vld [vmem:[%s6 + $0x34] sm:$0xf]
      %v3404 = vld [vmem:[%s6 + $0x38] sm:$0xf]
      %v3405 = vld [vmem:[%s6 + $0x3c] sm:$0xf]
      %v3422 = vunpack.c.l.b16 %v3390
      %v3423 = vunpack.c.l.b16 %v3391
      %v3424 = vunpack.c.l.b16 %v3392
      %v3425 = vunpack.c.l.b16 %v3393
      %v3426 = vunpack.c.l.b16 %v3394
      %v3427 = vunpack.c.l.b16 %v3395
      %v3428 = vunpack.c.l.b16 %v3396
      %v3429 = vunpack.c.l.b16 %v3397
      %v3430 = vunpack.c.l.b16 %v3398
      %v3431 = vunpack.c.l.b16 %v3399
      %v3432 = vunpack.c.l.b16 %v3400
      %v3433 = vunpack.c.l.b16 %v3401
      %v3434 = vunpack.c.l.b16 %v3402
      %v3435 = vunpack.c.l.b16 %v3403
      %v3436 = vunpack.c.l.b16 %v3404
      %v3437 = vunpack.c.l.b16 %v3405
      %v3438 = vpack.c.b16 %v3423, %v3422
      %v3439 = vpack.c.b16 %v3425, %v3424
      %v3440 = vpack.c.b16 %v3427, %v3426
      %v3441 = vpack.c.b16 %v3429, %v3428
      %v3442 = vpack.c.b16 %v3431, %v3430
      %v3443 = vpack.c.b16 %v3433, %v3432
      %v3444 = vpack.c.b16 %v3435, %v3434
      %v3445 = vpack.c.b16 %v3437, %v3436
      %3454 = vmatprep.subr.bf16.mxu0 0
      %3455 = vmatpush1.bf16.msra.mxu0 %v3438
      %3456 = vmatprep.subr.bf16.mxu0 0
      %3457 = vmatpush1.bf16.msra.mxu0 %v3439
      %3458 = vmatprep.subr.bf16.mxu0 0
      %3459 = vmatpush1.bf16.msra.mxu0 %v3440
      %3460 = vmatprep.subr.bf16.mxu0 0
      %3461 = vmatpush1.bf16.msra.mxu0 %v3441
      %3462 = vmatprep.subr.bf16.mxu0 0
      %3463 = vmatpush1.bf16.msra.mxu0 %v3442
      %3464 = vmatprep.subr.bf16.mxu0 0
      %3465 = vmatpush1.bf16.msra.mxu0 %v3443
      %3466 = vmatprep.subr.bf16.mxu0 0
      %3467 = vmatpush1.bf16.msra.mxu0 %v3444
      %3468 = vmatprep.subr.bf16.mxu0 0
      %3469 = vmatpush1.bf16.msra.mxu0 %v3445
      %3470 = vmatprep.subr.bf16.mxu0 0
      %3471 = vmatpush1.bf16.msra.mxu0 0
      %3472 = vmatprep.subr.bf16.mxu0 0
      %3473 = vmatpush1.bf16.msra.mxu0 0
      %3474 = vmatprep.subr.bf16.mxu0 0
      %3475 = vmatpush1.bf16.msra.mxu0 0
      %3476 = vmatprep.subr.bf16.mxu0 0
      %3477 = vmatpush1.bf16.msra.mxu0 0
      %3478 = vmatprep.subr.bf16.mxu0 0
      %3479 = vmatpush1.bf16.msra.mxu0 0
      %3480 = vmatprep.subr.bf16.mxu0 0
      %3481 = vmatpush1.bf16.msra.mxu0 0
      %3482 = vmatprep.subr.bf16.mxu0 0
      %3483 = vmatpush1.bf16.msra.mxu0 0
      %3484 = vmatprep.subr.bf16.mxu0 0
      %3485 = vmatpush1.bf16.msra.mxu0 0
      %3486 = vmatprep.mubr.bf16.mxu0 0
      %3487 = vmatmul.mubr.bf16.gmra.mrb[0].mxu0 %v470
      %v3488 = vpop.f32.mrb[0].mxu0
      %v3489 = vadd.f32 0.0, %v3488
      %v3490 = vpop.f32.mrb[0].mxu0
      %v3491 = vpop.f32.mrb[0].mxu0
      %v3492 = vadd.f32 0.0, %v3491
      %v3493 = vpop.f32.mrb[0].mxu0
      %3494 = vmatprep.mubr.bf16.mxu0 0
      %3495 = vmatmul.mubr.bf16.gmra.mrb[0].mxu0 %v471
      %v3496 = vpop.f32.mrb[0].mxu0
      %v3497 = vadd.f32 0.0, %v3496
      %v3498 = vpop.f32.mrb[0].mxu0
      %v3499 = vpop.f32.mrb[0].mxu0
      %v3500 = vadd.f32 0.0, %v3499
      %v3501 = vpop.f32.mrb[0].mxu0
      %3502 = vmatprep.mubr.bf16.mxu0 0
      %3503 = vmatmul.mubr.bf16.gmra.mrb[0].mxu0 %v472
      %v3504 = vpop.f32.mrb[0].mxu0
      %v3505 = vadd.f32 0.0, %v3504
      %v3506 = vpop.f32.mrb[0].mxu0
      %v3507 = vpop.f32.mrb[0].mxu0
      %v3508 = vadd.f32 0.0, %v3507
      %v3509 = vpop.f32.mrb[0].mxu0
      %3510 = vmatprep.mubr.bf16.mxu0 0
      %3511 = vmatmul.mubr.bf16.gmra.mrb[0].mxu0 %v473
      %v3512 = vpop.f32.mrb[0].mxu0
      %v3513 = vadd.f32 0.0, %v3512
      %v3514 = vpop.f32.mrb[0].mxu0
      %v3515 = vpop.f32.mrb[0].mxu0
      %v3516 = vadd.f32 0.0, %v3515
      %v3517 = vpop.f32.mrb[0].mxu0
      %3518 = vmatprep.mubr.bf16.mxu0 0
      %3519 = vmatmul.mubr.bf16.gmra.mrb[0].mxu0 %v474
      %v3520 = vpop.f32.mrb[0].mxu0
      %v3521 = vadd.f32 0.0, %v3520
      %v3522 = vpop.f32.mrb[0].mxu0
      %v3523 = vpop.f32.mrb[0].mxu0
      %v3524 = vadd.f32 0.0, %v3523
      %v3525 = vpop.f32.mrb[0].mxu0
      %3526 = vmatprep.mubr.bf16.mxu0 0
      %3527 = vmatmul.mubr.bf16.gmra.mrb[0].mxu0 %v475
      %v3528 = vpop.f32.mrb[0].mxu0
      %v3529 = vadd.f32 0.0, %v3528
      %v3530 = vpop.f32.mrb[0].mxu0
      %v3531 = vpop.f32.mrb[0].mxu0
      %v3532 = vadd.f32 0.0, %v3531
      %v3533 = vpop.f32.mrb[0].mxu0
      %3534 = vmatprep.mubr.bf16.mxu0 0
      %3535 = vmatmul.mubr.bf16.gmra.mrb[0].mxu0 %v476
      %v3536 = vpop.f32.mrb[0].mxu0
      %v3537 = vadd.f32 0.0, %v3536
      %v3538 = vpop.f32.mrb[0].mxu0
      %v3539 = vpop.f32.mrb[0].mxu0
      %v3540 = vadd.f32 0.0, %v3539
      %v3541 = vpop.f32.mrb[0].mxu0
      %3542 = vmatprep.mubr.bf16.mxu0 0
      %3543 = vmatmul.mubr.bf16.gmra.mrb[0].mxu0 %v477
      %v3544 = vpop.f32.mrb[0].mxu0
      %v3545 = vadd.f32 0.0, %v3544
      %v3546 = vpop.f32.mrb[0].mxu0
      %v3547 = vpop.f32.mrb[0].mxu0
      %v3548 = vadd.f32 0.0, %v3547
      %v3549 = vpop.f32.mrb[0].mxu0
      %3550 = vmatprep.mubr.bf16.mxu0 0
      %3551 = vmatmul.mubr.bf16.gmra.mrb[0].mxu0 %v478
      %v3552 = vpop.f32.mrb[0].mxu0
      %v3553 = vadd.f32 0.0, %v3552
      %v3554 = vpop.f32.mrb[0].mxu0
      %v3555 = vpop.f32.mrb[0].mxu0
      %v3556 = vadd.f32 0.0, %v3555
      %v3557 = vpop.f32.mrb[0].mxu0
      %3558 = vmatprep.mubr.bf16.mxu0 0
      %3559 = vmatmul.mubr.bf16.gmra.mrb[0].mxu0 %v479
      %v3560 = vpop.f32.mrb[0].mxu0
      %v3561 = vadd.f32 0.0, %v3560
      %v3562 = vpop.f32.mrb[0].mxu0
      %v3563 = vpop.f32.mrb[0].mxu0
      %v3564 = vadd.f32 0.0, %v3563
      %v3565 = vpop.f32.mrb[0].mxu0
      %3566 = vmatprep.mubr.bf16.mxu0 0
      %3567 = vmatmul.mubr.bf16.gmra.mrb[0].mxu0 %v480
      %v3568 = vpop.f32.mrb[0].mxu0
      %v3569 = vadd.f32 0.0, %v3568
      %v3570 = vpop.f32.mrb[0].mxu0
      %v3571 = vpop.f32.mrb[0].mxu0
      %v3572 = vadd.f32 0.0, %v3571
      %v3573 = vpop.f32.mrb[0].mxu0
      %3574 = vmatprep.mubr.bf16.mxu0 0
      %3575 = vmatmul.mubr.bf16.gmra.mrb[0].mxu0 %v481
      %v3576 = vpop.f32.mrb[0].mxu0
      %v3577 = vadd.f32 0.0, %v3576
      %v3578 = vpop.f32.mrb[0].mxu0
      %v3579 = vpop.f32.mrb[0].mxu0
      %v3580 = vadd.f32 0.0, %v3579
      %v3581 = vpop.f32.mrb[0].mxu0
      %3582 = vmatprep.mubr.bf16.mxu0 0
      %3583 = vmatmul.mubr.bf16.gmra.mrb[0].mxu0 %v482
      %v3584 = vpop.f32.mrb[0].mxu0
      %v3585 = vadd.f32 0.0, %v3584
      %v3586 = vpop.f32.mrb[0].mxu0
      %v3587 = vpop.f32.mrb[0].mxu0
      %v3588 = vadd.f32 0.0, %v3587
      %v3589 = vpop.f32.mrb[0].mxu0
      %3590 = vmatprep.mubr.bf16.mxu0 0
      %3591 = vmatmul.mubr.bf16.gmra.mrb[0].mxu0 %v483
      %v3592 = vpop.f32.mrb[0].mxu0
      %v3593 = vadd.f32 0.0, %v3592
      %v3594 = vpop.f32.mrb[0].mxu0
      %v3595 = vpop.f32.mrb[0].mxu0
      %v3596 = vadd.f32 0.0, %v3595
      %v3597 = vpop.f32.mrb[0].mxu0
      %3598 = vmatprep.mubr.bf16.mxu0 0
      %3599 = vmatmul.mubr.bf16.gmra.mrb[0].mxu0 %v484
      %v3600 = vpop.f32.mrb[0].mxu0
      %v3601 = vadd.f32 0.0, %v3600
      %v3602 = vpop.f32.mrb[0].mxu0
      %v3603 = vpop.f32.mrb[0].mxu0
      %v3604 = vadd.f32 0.0, %v3603
      %v3605 = vpop.f32.mrb[0].mxu0
      %3606 = vmatprep.mubr.bf16.mxu0 0
      %3607 = vmatmul.mubr.bf16.gmra.mrb[0].mxu0 %v485
      %v3608 = vpop.f32.mrb[0].mxu0
      %v3609 = vadd.f32 0.0, %v3608
      %v3610 = vpop.f32.mrb[0].mxu0
      %v3611 = vpop.f32.mrb[0].mxu0
      %v3612 = vadd.f32 0.0, %v3611
      %v3613 = vpop.f32.mrb[0].mxu0
      %3614 = vdwg.mxu0
      %v3631 = vunpack.c.l.b16 %v3374
      %v3632 = vunpack.c.l.b16 %v3375
      %v3633 = vunpack.c.l.b16 %v3376
      %v3634 = vunpack.c.l.b16 %v3377
      %v3635 = vunpack.c.l.b16 %v3378
      %v3636 = vunpack.c.l.b16 %v3379
      %v3637 = vunpack.c.l.b16 %v3380
      %v3638 = vunpack.c.l.b16 %v3381
      %v3639 = vunpack.c.l.b16 %v3382
      %v3640 = vunpack.c.l.b16 %v3383
      %v3641 = vunpack.c.l.b16 %v3384
      %v3642 = vunpack.c.l.b16 %v3385
      %v3643 = vunpack.c.l.b16 %v3386
      %v3644 = vunpack.c.l.b16 %v3387
      %v3645 = vunpack.c.l.b16 %v3388
      %v3646 = vunpack.c.l.b16 %v3389
      %v3647 = vpack.c.b16 %v3632, %v3631
      %v3648 = vpack.c.b16 %v3634, %v3633
      %v3649 = vpack.c.b16 %v3636, %v3635
      %v3650 = vpack.c.b16 %v3638, %v3637
      %v3651 = vpack.c.b16 %v3640, %v3639
      %v3652 = vpack.c.b16 %v3642, %v3641
      %v3653 = vpack.c.b16 %v3644, %v3643
      %v3654 = vpack.c.b16 %v3646, %v3645
      %3663 = vmatprep.subr.bf16.mxu0 0
      %3664 = vmatpush1.bf16.msra.mxu0 %v3647
      %3665 = vmatprep.subr.bf16.mxu0 0
      %3666 = vmatpush1.bf16.msra.mxu0 %v3648
      %3667 = vmatprep.subr.bf16.mxu0 0
      %3668 = vmatpush1.bf16.msra.mxu0 %v3649
      %3669 = vmatprep.subr.bf16.mxu0 0
      %3670 = vmatpush1.bf16.msra.mxu0 %v3650
      %3671 = vmatprep.subr.bf16.mxu0 0
      %3672 = vmatpush1.bf16.msra.mxu0 %v3651
      %3673 = vmatprep.subr.bf16.mxu0 0
      %3674 = vmatpush1.bf16.msra.mxu0 %v3652
      %3675 = vmatprep.subr.bf16.mxu0 0
      %3676 = vmatpush1.bf16.msra.mxu0 %v3653
      %3677 = vmatprep.subr.bf16.mxu0 0
      %3678 = vmatpush1.bf16.msra.mxu0 %v3654
      %3679 = vmatprep.subr.bf16.mxu0 0
      %3680 = vmatpush1.bf16.msra.mxu0 0
      %3681 = vmatprep.subr.bf16.mxu0 0
      %3682 = vmatpush1.bf16.msra.mxu0 0
      %3683 = vmatprep.subr.bf16.mxu0 0
      %3684 = vmatpush1.bf16.msra.mxu0 0
      %3685 = vmatprep.subr.bf16.mxu0 0
      %3686 = vmatpush1.bf16.msra.mxu0 0
      %3687 = vmatprep.subr.bf16.mxu0 0
      %3688 = vmatpush1.bf16.msra.mxu0 0
      %3689 = vmatprep.subr.bf16.mxu0 0
      %3690 = vmatpush1.bf16.msra.mxu0 0
      %3691 = vmatprep.subr.bf16.mxu0 0
      %3692 = vmatpush1.bf16.msra.mxu0 0
      %3693 = vmatprep.subr.bf16.mxu0 0
      %3694 = vmatpush1.bf16.msra.mxu0 0
      %3695 = vmatprep.mubr.bf16.mxu0 0
      %3696 = vmatmul.mubr.bf16.gmra.mrb[0].mxu0 %v3358
      %v3697 = vpop.f32.mrb[0].mxu0
      %v3698 = vadd.f32 %v3489, %v3697
      %v3699 = vpop.f32.mrb[0].mxu0
      %v3700 = vpop.f32.mrb[0].mxu0
      %v3701 = vadd.f32 %v3492, %v3700
      %v3702 = vpop.f32.mrb[0].mxu0
      %3703 = vmatprep.mubr.bf16.mxu0 0
      %3704 = vmatmul.mubr.bf16.gmra.mrb[0].mxu0 %v3359
      %v3705 = vpop.f32.mrb[0].mxu0
      %v3706 = vadd.f32 %v3497, %v3705
      %v3707 = vpop.f32.mrb[0].mxu0
      %v3708 = vpop.f32.mrb[0].mxu0
      %v3709 = vadd.f32 %v3500, %v3708
      %v3710 = vpop.f32.mrb[0].mxu0
      %3711 = vmatprep.mubr.bf16.mxu0 0
      %3712 = vmatmul.mubr.bf16.gmra.mrb[0].mxu0 %v3360
      %v3713 = vpop.f32.mrb[0].mxu0
      %v3714 = vadd.f32 %v3505, %v3713
      %v3715 = vpop.f32.mrb[0].mxu0
      %v3716 = vpop.f32.mrb[0].mxu0
      %v3717 = vadd.f32 %v3508, %v3716
      %v3718 = vpop.f32.mrb[0].mxu0
      %3719 = vmatprep.mubr.bf16.mxu0 0
      %3720 = vmatmul.mubr.bf16.gmra.mrb[0].mxu0 %v3361
      %v3721 = vpop.f32.mrb[0].mxu0
      %v3722 = vadd.f32 %v3513, %v3721
      %v3723 = vpop.f32.mrb[0].mxu0
      %v3724 = vpop.f32.mrb[0].mxu0
      %v3725 = vadd.f32 %v3516, %v3724
      %v3726 = vpop.f32.mrb[0].mxu0
      %3727 = vmatprep.mubr.bf16.mxu0 0
      %3728 = vmatmul.mubr.bf16.gmra.mrb[0].mxu0 %v3362
      %v3729 = vpop.f32.mrb[0].mxu0
      %v3730 = vadd.f32 %v3521, %v3729
      %v3731 = vpop.f32.mrb[0].mxu0
      %v3732 = vpop.f32.mrb[0].mxu0
      %v3733 = vadd.f32 %v3524, %v3732
      %v3734 = vpop.f32.mrb[0].mxu0
      %3735 = vmatprep.mubr.bf16.mxu0 0
      %3736 = vmatmul.mubr.bf16.gmra.mrb[0].mxu0 %v3363
      %v3737 = vpop.f32.mrb[0].mxu0
      %v3738 = vadd.f32 %v3529, %v3737
      %v3739 = vpop.f32.mrb[0].mxu0
      %v3740 = vpop.f32.mrb[0].mxu0
      %v3741 = vadd.f32 %v3532, %v3740
      %v3742 = vpop.f32.mrb[0].mxu0
      %3743 = vmatprep.mubr.bf16.mxu0 0
      %3744 = vmatmul.mubr.bf16.gmra.mrb[0].mxu0 %v3364
      %v3745 = vpop.f32.mrb[0].mxu0
      %v3746 = vadd.f32 %v3537, %v3745
      %v3747 = vpop.f32.mrb[0].mxu0
      %v3748 = vpop.f32.mrb[0].mxu0
      %v3749 = vadd.f32 %v3540, %v3748
      %v3750 = vpop.f32.mrb[0].mxu0
      %3751 = vmatprep.mubr.bf16.mxu0 0
      %3752 = vmatmul.mubr.bf16.gmra.mrb[0].mxu0 %v3365
      %v3753 = vpop.f32.mrb[0].mxu0
      %v3754 = vadd.f32 %v3545, %v3753
      %v3755 = vpop.f32.mrb[0].mxu0
      %v3756 = vpop.f32.mrb[0].mxu0
      %v3757 = vadd.f32 %v3548, %v3756
      %v3758 = vpop.f32.mrb[0].mxu0
      %3759 = vmatprep.mubr.bf16.mxu0 0
      %3760 = vmatmul.mubr.bf16.gmra.mrb[0].mxu0 %v3366
      %v3761 = vpop.f32.mrb[0].mxu0
      %v3762 = vadd.f32 %v3553, %v3761
      %v3763 = vpop.f32.mrb[0].mxu0
      %v3764 = vpop.f32.mrb[0].mxu0
      %v3765 = vadd.f32 %v3556, %v3764
      %v3766 = vpop.f32.mrb[0].mxu0
      %3767 = vmatprep.mubr.bf16.mxu0 0
      %3768 = vmatmul.mubr.bf16.gmra.mrb[0].mxu0 %v3367
      %v3769 = vpop.f32.mrb[0].mxu0
      %v3770 = vadd.f32 %v3561, %v3769
      %v3771 = vpop.f32.mrb[0].mxu0
      %v3772 = vpop.f32.mrb[0].mxu0
      %v3773 = vadd.f32 %v3564, %v3772
      %v3774 = vpop.f32.mrb[0].mxu0
      %3775 = vmatprep.mubr.bf16.mxu0 0
      %3776 = vmatmul.mubr.bf16.gmra.mrb[0].mxu0 %v3368
      %v3777 = vpop.f32.mrb[0].mxu0
      %v3778 = vadd.f32 %v3569, %v3777
      %v3779 = vpop.f32.mrb[0].mxu0
      %v3780 = vpop.f32.mrb[0].mxu0
      %v3781 = vadd.f32 %v3572, %v3780
      %v3782 = vpop.f32.mrb[0].mxu0
      %3783 = vmatprep.mubr.bf16.mxu0 0
      %3784 = vmatmul.mubr.bf16.gmra.mrb[0].mxu0 %v3369
      %v3785 = vpop.f32.mrb[0].mxu0
      %v3786 = vadd.f32 %v3577, %v3785
      %v3787 = vpop.f32.mrb[0].mxu0
      %v3788 = vpop.f32.mrb[0].mxu0
      %v3789 = vadd.f32 %v3580, %v3788
      %v3790 = vpop.f32.mrb[0].mxu0
      %3791 = vmatprep.mubr.bf16.mxu0 0
      %3792 = vmatmul.mubr.bf16.gmra.mrb[0].mxu0 %v3370
      %v3793 = vpop.f32.mrb[0].mxu0
      %v3794 = vadd.f32 %v3585, %v3793
      %v3795 = vpop.f32.mrb[0].mxu0
      %v3796 = vpop.f32.mrb[0].mxu0
      %v3797 = vadd.f32 %v3588, %v3796
      %v3798 = vpop.f32.mrb[0].mxu0
      %3799 = vmatprep.mubr.bf16.mxu0 0
      %3800 = vmatmul.mubr.bf16.gmra.mrb[0].mxu0 %v3371
      %v3801 = vpop.f32.mrb[0].mxu0
      %v3802 = vadd.f32 %v3593, %v3801
      %v3803 = vpop.f32.mrb[0].mxu0
      %v3804 = vpop.f32.mrb[0].mxu0
      %v3805 = vadd.f32 %v3596, %v3804
      %v3806 = vpop.f32.mrb[0].mxu0
      %3807 = vmatprep.mubr.bf16.mxu0 0
      %3808 = vmatmul.mubr.bf16.gmra.mrb[0].mxu0 %v3372
      %v3809 = vpop.f32.mrb[0].mxu0
      %v3810 = vadd.f32 %v3601, %v3809
      %v3811 = vpop.f32.mrb[0].mxu0
      %v3812 = vpop.f32.mrb[0].mxu0
      %v3813 = vadd.f32 %v3604, %v3812
      %v3814 = vpop.f32.mrb[0].mxu0
      %3815 = vmatprep.mubr.bf16.mxu0 0
      %3816 = vmatmul.mubr.bf16.gmra.mrb[0].mxu0 %v3373
      %v3817 = vpop.f32.mrb[0].mxu0
      %v3818 = vadd.f32 %v3609, %v3817
      %v3819 = vpop.f32.mrb[0].mxu0
      %v3820 = vpop.f32.mrb[0].mxu0
      %v3821 = vadd.f32 %v3612, %v3820
      %v3822 = vpop.f32.mrb[0].mxu0
      %3823 = vdwg.mxu0
      %s3824 = scalar_lea.vmem %s5, 64
      %v3825 = vld [vmem:[%s3824] sm:$0xf]
      %v3826 = vld [vmem:[%s3824 + $0x4] sm:$0xf]
      %v3827 = vld [vmem:[%s3824 + $0x8] sm:$0xf]
      %v3828 = vld [vmem:[%s3824 + $0xc] sm:$0xf]
      %v3829 = vld [vmem:[%s3824 + $0x10] sm:$0xf]
      %v3830 = vld [vmem:[%s3824 + $0x14] sm:$0xf]
      %v3831 = vld [vmem:[%s3824 + $0x18] sm:$0xf]
      %v3832 = vld [vmem:[%s3824 + $0x1c] sm:$0xf]
      %v3833 = vld [vmem:[%s3824 + $0x20] sm:$0xf]
      %v3834 = vld [vmem:[%s3824 + $0x24] sm:$0xf]
      %v3835 = vld [vmem:[%s3824 + $0x28] sm:$0xf]
      %v3836 = vld [vmem:[%s3824 + $0x2c] sm:$0xf]
      %v3837 = vld [vmem:[%s3824 + $0x30] sm:$0xf]
      %v3838 = vld [vmem:[%s3824 + $0x34] sm:$0xf]
      %v3839 = vld [vmem:[%s3824 + $0x38] sm:$0xf]
      %v3840 = vld [vmem:[%s3824 + $0x3c] sm:$0xf]
      %s3841 = scalar_lea.vmem %s6, 64
      %v3842 = vld [vmem:[%s3841] sm:$0xf]
      %v3843 = vld [vmem:[%s3841 + $0x4] sm:$0xf]
      %v3844 = vld [vmem:[%s3841 + $0x8] sm:$0xf]
      %v3845 = vld [vmem:[%s3841 + $0xc] sm:$0xf]
      %v3846 = vld [vmem:[%s3841 + $0x10] sm:$0xf]
      %v3847 = vld [vmem:[%s3841 + $0x14] sm:$0xf]
      %v3848 = vld [vmem:[%s3841 + $0x18] sm:$0xf]
      %v3849 = vld [vmem:[%s3841 + $0x1c] sm:$0xf]
      %v3850 = vld [vmem:[%s3841 + $0x20] sm:$0xf]
      %v3851 = vld [vmem:[%s3841 + $0x24] sm:$0xf]
      %v3852 = vld [vmem:[%s3841 + $0x28] sm:$0xf]
      %v3853 = vld [vmem:[%s3841 + $0x2c] sm:$0xf]
      %v3854 = vld [vmem:[%s3841 + $0x30] sm:$0xf]
      %v3855 = vld [vmem:[%s3841 + $0x34] sm:$0xf]
      %v3856 = vld [vmem:[%s3841 + $0x38] sm:$0xf]
      %v3857 = vld [vmem:[%s3841 + $0x3c] sm:$0xf]
      %v3874 = vunpack.c.l.b16 %v3842
      %v3875 = vunpack.c.l.b16 %v3843
      %v3876 = vunpack.c.l.b16 %v3844
      %v3877 = vunpack.c.l.b16 %v3845
      %v3878 = vunpack.c.l.b16 %v3846
      %v3879 = vunpack.c.l.b16 %v3847
      %v3880 = vunpack.c.l.b16 %v3848
      %v3881 = vunpack.c.l.b16 %v3849
      %v3882 = vunpack.c.l.b16 %v3850
      %v3883 = vunpack.c.l.b16 %v3851
      %v3884 = vunpack.c.l.b16 %v3852
      %v3885 = vunpack.c.l.b16 %v3853
      %v3886 = vunpack.c.l.b16 %v3854
      %v3887 = vunpack.c.l.b16 %v3855
      %v3888 = vunpack.c.l.b16 %v3856
      %v3889 = vunpack.c.l.b16 %v3857
      %v3890 = vpack.c.b16 %v3875, %v3874
      %v3891 = vpack.c.b16 %v3877, %v3876
      %v3892 = vpack.c.b16 %v3879, %v3878
      %v3893 = vpack.c.b16 %v3881, %v3880
      %v3894 = vpack.c.b16 %v3883, %v3882
      %v3895 = vpack.c.b16 %v3885, %v3884
      %v3896 = vpack.c.b16 %v3887, %v3886
      %v3897 = vpack.c.b16 %v3889, %v3888
      %3906 = vmatprep.subr.bf16.mxu0 0
      %3907 = vmatpush1.bf16.msra.mxu0 %v3890
      %3908 = vmatprep.subr.bf16.mxu0 0
      %3909 = vmatpush1.bf16.msra.mxu0 %v3891
      %3910 = vmatprep.subr.bf16.mxu0 0
      %3911 = vmatpush1.bf16.msra.mxu0 %v3892
      %3912 = vmatprep.subr.bf16.mxu0 0
      %3913 = vmatpush1.bf16.msra.mxu0 %v3893
      %3914 = vmatprep.subr.bf16.mxu0 0
      %3915 = vmatpush1.bf16.msra.mxu0 %v3894
      %3916 = vmatprep.subr.bf16.mxu0 0
      %3917 = vmatpush1.bf16.msra.mxu0 %v3895
      %3918 = vmatprep.subr.bf16.mxu0 0
      %3919 = vmatpush1.bf16.msra.mxu0 %v3896
      %3920 = vmatprep.subr.bf16.mxu0 0
      %3921 = vmatpush1.bf16.msra.mxu0 %v3897
      %3922 = vmatprep.subr.bf16.mxu0 0
      %3923 = vmatpush1.bf16.msra.mxu0 0
      %3924 = vmatprep.subr.bf16.mxu0 0
      %3925 = vmatpush1.bf16.msra.mxu0 0
      %3926 = vmatprep.subr.bf16.mxu0 0
      %3927 = vmatpush1.bf16.msra.mxu0 0
      %3928 = vmatprep.subr.bf16.mxu0 0
      %3929 = vmatpush1.bf16.msra.mxu0 0
      %3930 = vmatprep.subr.bf16.mxu0 0
      %3931 = vmatpush1.bf16.msra.mxu0 0
      %3932 = vmatprep.subr.bf16.mxu0 0
      %3933 = vmatpush1.bf16.msra.mxu0 0
      %3934 = vmatprep.subr.bf16.mxu0 0
      %3935 = vmatpush1.bf16.msra.mxu0 0
      %3936 = vmatprep.subr.bf16.mxu0 0
      %3937 = vmatpush1.bf16.msra.mxu0 0
      %3938 = vmatprep.mubr.bf16.mxu0 0
      %3939 = vmatmul.mubr.bf16.gmra.mrb[0].mxu0 %v470
      %v3940 = vpop.f32.mrb[0].mxu0
      %v3941 = vadd.f32 0.0, %v3940
      %v3942 = vpop.f32.mrb[0].mxu0
      %v3943 = vpop.f32.mrb[0].mxu0
      %v3944 = vadd.f32 0.0, %v3943
      %v3945 = vpop.f32.mrb[0].mxu0
      %3946 = vmatprep.mubr.bf16.mxu0 0
      %3947 = vmatmul.mubr.bf16.gmra.mrb[0].mxu0 %v471
      %v3948 = vpop.f32.mrb[0].mxu0
      %v3949 = vadd.f32 0.0, %v3948
      %v3950 = vpop.f32.mrb[0].mxu0
      %v3951 = vpop.f32.mrb[0].mxu0
      %v3952 = vadd.f32 0.0, %v3951
      %v3953 = vpop.f32.mrb[0].mxu0
      %3954 = vmatprep.mubr.bf16.mxu0 0
      %3955 = vmatmul.mubr.bf16.gmra.mrb[0].mxu0 %v472
      %v3956 = vpop.f32.mrb[0].mxu0
      %v3957 = vadd.f32 0.0, %v3956
      %v3958 = vpop.f32.mrb[0].mxu0
      %v3959 = vpop.f32.mrb[0].mxu0
      %v3960 = vadd.f32 0.0, %v3959
      %v3961 = vpop.f32.mrb[0].mxu0
      %3962 = vmatprep.mubr.bf16.mxu0 0
      %3963 = vmatmul.mubr.bf16.gmra.mrb[0].mxu0 %v473
      %v3964 = vpop.f32.mrb[0].mxu0
      %v3965 = vadd.f32 0.0, %v3964
      %v3966 = vpop.f32.mrb[0].mxu0
      %v3967 = vpop.f32.mrb[0].mxu0
      %v3968 = vadd.f32 0.0, %v3967
      %v3969 = vpop.f32.mrb[0].mxu0
      %3970 = vmatprep.mubr.bf16.mxu0 0
      %3971 = vmatmul.mubr.bf16.gmra.mrb[0].mxu0 %v474
      %v3972 = vpop.f32.mrb[0].mxu0
      %v3973 = vadd.f32 0.0, %v3972
      %v3974 = vpop.f32.mrb[0].mxu0
      %v3975 = vpop.f32.mrb[0].mxu0
      %v3976 = vadd.f32 0.0, %v3975
      %v3977 = vpop.f32.mrb[0].mxu0
      %3978 = vmatprep.mubr.bf16.mxu0 0
      %3979 = vmatmul.mubr.bf16.gmra.mrb[0].mxu0 %v475
      %v3980 = vpop.f32.mrb[0].mxu0
      %v3981 = vadd.f32 0.0, %v3980
      %v3982 = vpop.f32.mrb[0].mxu0
      %v3983 = vpop.f32.mrb[0].mxu0
      %v3984 = vadd.f32 0.0, %v3983
      %v3985 = vpop.f32.mrb[0].mxu0
      %3986 = vmatprep.mubr.bf16.mxu0 0
      %3987 = vmatmul.mubr.bf16.gmra.mrb[0].mxu0 %v476
      %v3988 = vpop.f32.mrb[0].mxu0
      %v3989 = vadd.f32 0.0, %v3988
      %v3990 = vpop.f32.mrb[0].mxu0
      %v3991 = vpop.f32.mrb[0].mxu0
      %v3992 = vadd.f32 0.0, %v3991
      %v3993 = vpop.f32.mrb[0].mxu0
      %3994 = vmatprep.mubr.bf16.mxu0 0
      %3995 = vmatmul.mubr.bf16.gmra.mrb[0].mxu0 %v477
      %v3996 = vpop.f32.mrb[0].mxu0
      %v3997 = vadd.f32 0.0, %v3996
      %v3998 = vpop.f32.mrb[0].mxu0
      %v3999 = vpop.f32.mrb[0].mxu0
      %v4000 = vadd.f32 0.0, %v3999
      %v4001 = vpop.f32.mrb[0].mxu0
      %4002 = vmatprep.mubr.bf16.mxu0 0
      %4003 = vmatmul.mubr.bf16.gmra.mrb[0].mxu0 %v478
      %v4004 = vpop.f32.mrb[0].mxu0
      %v4005 = vadd.f32 0.0, %v4004
      %v4006 = vpop.f32.mrb[0].mxu0
      %v4007 = vpop.f32.mrb[0].mxu0
      %v4008 = vadd.f32 0.0, %v4007
      %v4009 = vpop.f32.mrb[0].mxu0
      %4010 = vmatprep.mubr.bf16.mxu0 0
      %4011 = vmatmul.mubr.bf16.gmra.mrb[0].mxu0 %v479
      %v4012 = vpop.f32.mrb[0].mxu0
      %v4013 = vadd.f32 0.0, %v4012
      %v4014 = vpop.f32.mrb[0].mxu0
      %v4015 = vpop.f32.mrb[0].mxu0
      %v4016 = vadd.f32 0.0, %v4015
      %v4017 = vpop.f32.mrb[0].mxu0
      %4018 = vmatprep.mubr.bf16.mxu0 0
      %4019 = vmatmul.mubr.bf16.gmra.mrb[0].mxu0 %v480
      %v4020 = vpop.f32.mrb[0].mxu0
      %v4021 = vadd.f32 0.0, %v4020
      %v4022 = vpop.f32.mrb[0].mxu0
      %v4023 = vpop.f32.mrb[0].mxu0
      %v4024 = vadd.f32 0.0, %v4023
      %v4025 = vpop.f32.mrb[0].mxu0
      %4026 = vmatprep.mubr.bf16.mxu0 0
      %4027 = vmatmul.mubr.bf16.gmra.mrb[0].mxu0 %v481
      %v4028 = vpop.f32.mrb[0].mxu0
      %v4029 = vadd.f32 0.0, %v4028
      %v4030 = vpop.f32.mrb[0].mxu0
      %v4031 = vpop.f32.mrb[0].mxu0
      %v4032 = vadd.f32 0.0, %v4031
      %v4033 = vpop.f32.mrb[0].mxu0
      %4034 = vmatprep.mubr.bf16.mxu0 0
      %4035 = vmatmul.mubr.bf16.gmra.mrb[0].mxu0 %v482
      %v4036 = vpop.f32.mrb[0].mxu0
      %v4037 = vadd.f32 0.0, %v4036
      %v4038 = vpop.f32.mrb[0].mxu0
      %v4039 = vpop.f32.mrb[0].mxu0
      %v4040 = vadd.f32 0.0, %v4039
      %v4041 = vpop.f32.mrb[0].mxu0
      %4042 = vmatprep.mubr.bf16.mxu0 0
      %4043 = vmatmul.mubr.bf16.gmra.mrb[0].mxu0 %v483
      %v4044 = vpop.f32.mrb[0].mxu0
      %v4045 = vadd.f32 0.0, %v4044
      %v4046 = vpop.f32.mrb[0].mxu0
      %v4047 = vpop.f32.mrb[0].mxu0
      %v4048 = vadd.f32 0.0, %v4047
      %v4049 = vpop.f32.mrb[0].mxu0
      %4050 = vmatprep.mubr.bf16.mxu0 0
      %4051 = vmatmul.mubr.bf16.gmra.mrb[0].mxu0 %v484
      %v4052 = vpop.f32.mrb[0].mxu0
      %v4053 = vadd.f32 0.0, %v4052
      %v4054 = vpop.f32.mrb[0].mxu0
      %v4055 = vpop.f32.mrb[0].mxu0
      %v4056 = vadd.f32 0.0, %v4055
      %v4057 = vpop.f32.mrb[0].mxu0
      %4058 = vmatprep.mubr.bf16.mxu0 0
      %4059 = vmatmul.mubr.bf16.gmra.mrb[0].mxu0 %v485
      %v4060 = vpop.f32.mrb[0].mxu0
      %v4061 = vadd.f32 0.0, %v4060
      %v4062 = vpop.f32.mrb[0].mxu0
      %v4063 = vpop.f32.mrb[0].mxu0
      %v4064 = vadd.f32 0.0, %v4063
      %v4065 = vpop.f32.mrb[0].mxu0
      %4066 = vdwg.mxu0
      %v4083 = vunpack.c.l.b16 %v3825
      %v4084 = vunpack.c.l.b16 %v3826
      %v4085 = vunpack.c.l.b16 %v3827
      %v4086 = vunpack.c.l.b16 %v3828
      %v4087 = vunpack.c.l.b16 %v3829
      %v4088 = vunpack.c.l.b16 %v3830
      %v4089 = vunpack.c.l.b16 %v3831
      %v4090 = vunpack.c.l.b16 %v3832
      %v4091 = vunpack.c.l.b16 %v3833
      %v4092 = vunpack.c.l.b16 %v3834
      %v4093 = vunpack.c.l.b16 %v3835
      %v4094 = vunpack.c.l.b16 %v3836
      %v4095 = vunpack.c.l.b16 %v3837
      %v4096 = vunpack.c.l.b16 %v3838
      %v4097 = vunpack.c.l.b16 %v3839
      %v4098 = vunpack.c.l.b16 %v3840
      %v4099 = vpack.c.b16 %v4084, %v4083
      %v4100 = vpack.c.b16 %v4086, %v4085
      %v4101 = vpack.c.b16 %v4088, %v4087
      %v4102 = vpack.c.b16 %v4090, %v4089
      %v4103 = vpack.c.b16 %v4092, %v4091
      %v4104 = vpack.c.b16 %v4094, %v4093
      %v4105 = vpack.c.b16 %v4096, %v4095
      %v4106 = vpack.c.b16 %v4098, %v4097
      %4115 = vmatprep.subr.bf16.mxu0 0
      %4116 = vmatpush1.bf16.msra.mxu0 %v4099
      %4117 = vmatprep.subr.bf16.mxu0 0
      %4118 = vmatpush1.bf16.msra.mxu0 %v4100
      %4119 = vmatprep.subr.bf16.mxu0 0
      %4120 = vmatpush1.bf16.msra.mxu0 %v4101
      %4121 = vmatprep.subr.bf16.mxu0 0
      %4122 = vmatpush1.bf16.msra.mxu0 %v4102
      %4123 = vmatprep.subr.bf16.mxu0 0
      %4124 = vmatpush1.bf16.msra.mxu0 %v4103
      %4125 = vmatprep.subr.bf16.mxu0 0
      %4126 = vmatpush1.bf16.msra.mxu0 %v4104
      %4127 = vmatprep.subr.bf16.mxu0 0
      %4128 = vmatpush1.bf16.msra.mxu0 %v4105
      %4129 = vmatprep.subr.bf16.mxu0 0
      %4130 = vmatpush1.bf16.msra.mxu0 %v4106
      %4131 = vmatprep.subr.bf16.mxu0 0
      %4132 = vmatpush1.bf16.msra.mxu0 0
      %4133 = vmatprep.subr.bf16.mxu0 0
      %4134 = vmatpush1.bf16.msra.mxu0 0
      %4135 = vmatprep.subr.bf16.mxu0 0
      %4136 = vmatpush1.bf16.msra.mxu0 0
      %4137 = vmatprep.subr.bf16.mxu0 0
      %4138 = vmatpush1.bf16.msra.mxu0 0
      %4139 = vmatprep.subr.bf16.mxu0 0
      %4140 = vmatpush1.bf16.msra.mxu0 0
      %4141 = vmatprep.subr.bf16.mxu0 0
      %4142 = vmatpush1.bf16.msra.mxu0 0
      %4143 = vmatprep.subr.bf16.mxu0 0
      %4144 = vmatpush1.bf16.msra.mxu0 0
      %4145 = vmatprep.subr.bf16.mxu0 0
      %4146 = vmatpush1.bf16.msra.mxu0 0
      %4147 = vmatprep.mubr.bf16.mxu0 0
      %4148 = vmatmul.mubr.bf16.gmra.mrb[0].mxu0 %v3358
      %v4149 = vpop.f32.mrb[0].mxu0
      %v4150 = vadd.f32 %v3941, %v4149
      %v4151 = vpop.f32.mrb[0].mxu0
      %v4152 = vpop.f32.mrb[0].mxu0
      %v4153 = vadd.f32 %v3944, %v4152
      %v4154 = vpop.f32.mrb[0].mxu0
      %4155 = vmatprep.mubr.bf16.mxu0 0
      %4156 = vmatmul.mubr.bf16.gmra.mrb[0].mxu0 %v3359
      %v4157 = vpop.f32.mrb[0].mxu0
      %v4158 = vadd.f32 %v3949, %v4157
      %v4159 = vpop.f32.mrb[0].mxu0
      %v4160 = vpop.f32.mrb[0].mxu0
      %v4161 = vadd.f32 %v3952, %v4160
      %v4162 = vpop.f32.mrb[0].mxu0
      %4163 = vmatprep.mubr.bf16.mxu0 0
      %4164 = vmatmul.mubr.bf16.gmra.mrb[0].mxu0 %v3360
      %v4165 = vpop.f32.mrb[0].mxu0
      %v4166 = vadd.f32 %v3957, %v4165
      %v4167 = vpop.f32.mrb[0].mxu0
      %v4168 = vpop.f32.mrb[0].mxu0
      %v4169 = vadd.f32 %v3960, %v4168
      %v4170 = vpop.f32.mrb[0].mxu0
      %4171 = vmatprep.mubr.bf16.mxu0 0
      %4172 = vmatmul.mubr.bf16.gmra.mrb[0].mxu0 %v3361
      %v4173 = vpop.f32.mrb[0].mxu0
      %v4174 = vadd.f32 %v3965, %v4173
      %v4175 = vpop.f32.mrb[0].mxu0
      %v4176 = vpop.f32.mrb[0].mxu0
      %v4177 = vadd.f32 %v3968, %v4176
      %v4178 = vpop.f32.mrb[0].mxu0
      %4179 = vmatprep.mubr.bf16.mxu0 0
      %4180 = vmatmul.mubr.bf16.gmra.mrb[0].mxu0 %v3362
      %v4181 = vpop.f32.mrb[0].mxu0
      %v4182 = vadd.f32 %v3973, %v4181
      %v4183 = vpop.f32.mrb[0].mxu0
      %v4184 = vpop.f32.mrb[0].mxu0
      %v4185 = vadd.f32 %v3976, %v4184
      %v4186 = vpop.f32.mrb[0].mxu0
      %4187 = vmatprep.mubr.bf16.mxu0 0
      %4188 = vmatmul.mubr.bf16.gmra.mrb[0].mxu0 %v3363
      %v4189 = vpop.f32.mrb[0].mxu0
      %v4190 = vadd.f32 %v3981, %v4189
      %v4191 = vpop.f32.mrb[0].mxu0
      %v4192 = vpop.f32.mrb[0].mxu0
      %v4193 = vadd.f32 %v3984, %v4192
      %v4194 = vpop.f32.mrb[0].mxu0
      %4195 = vmatprep.mubr.bf16.mxu0 0
      %4196 = vmatmul.mubr.bf16.gmra.mrb[0].mxu0 %v3364
      %v4197 = vpop.f32.mrb[0].mxu0
      %v4198 = vadd.f32 %v3989, %v4197
      %v4199 = vpop.f32.mrb[0].mxu0
      %v4200 = vpop.f32.mrb[0].mxu0
      %v4201 = vadd.f32 %v3992, %v4200
      %v4202 = vpop.f32.mrb[0].mxu0
      %4203 = vmatprep.mubr.bf16.mxu0 0
      %4204 = vmatmul.mubr.bf16.gmra.mrb[0].mxu0 %v3365
      %v4205 = vpop.f32.mrb[0].mxu0
      %v4206 = vadd.f32 %v3997, %v4205
      %v4207 = vpop.f32.mrb[0].mxu0
      %v4208 = vpop.f32.mrb[0].mxu0
      %v4209 = vadd.f32 %v4000, %v4208
      %v4210 = vpop.f32.mrb[0].mxu0
      %4211 = vmatprep.mubr.bf16.mxu0 0
      %4212 = vmatmul.mubr.bf16.gmra.mrb[0].mxu0 %v3366
      %v4213 = vpop.f32.mrb[0].mxu0
      %v4214 = vadd.f32 %v4005, %v4213
      %v4215 = vpop.f32.mrb[0].mxu0
      %v4216 = vpop.f32.mrb[0].mxu0
      %v4217 = vadd.f32 %v4008, %v4216
      %v4218 = vpop.f32.mrb[0].mxu0
      %4219 = vmatprep.mubr.bf16.mxu0 0
      %4220 = vmatmul.mubr.bf16.gmra.mrb[0].mxu0 %v3367
      %v4221 = vpop.f32.mrb[0].mxu0
      %v4222 = vadd.f32 %v4013, %v4221
      %v4223 = vpop.f32.mrb[0].mxu0
      %v4224 = vpop.f32.mrb[0].mxu0
      %v4225 = vadd.f32 %v4016, %v4224
      %v4226 = vpop.f32.mrb[0].mxu0
      %4227 = vmatprep.mubr.bf16.mxu0 0
      %4228 = vmatmul.mubr.bf16.gmra.mrb[0].mxu0 %v3368
      %v4229 = vpop.f32.mrb[0].mxu0
      %v4230 = vadd.f32 %v4021, %v4229
      %v4231 = vpop.f32.mrb[0].mxu0
      %v4232 = vpop.f32.mrb[0].mxu0
      %v4233 = vadd.f32 %v4024, %v4232
      %v4234 = vpop.f32.mrb[0].mxu0
      %4235 = vmatprep.mubr.bf16.mxu0 0
      %4236 = vmatmul.mubr.bf16.gmra.mrb[0].mxu0 %v3369
      %v4237 = vpop.f32.mrb[0].mxu0
      %v4238 = vadd.f32 %v4029, %v4237
      %v4239 = vpop.f32.mrb[0].mxu0
      %v4240 = vpop.f32.mrb[0].mxu0
      %v4241 = vadd.f32 %v4032, %v4240
      %v4242 = vpop.f32.mrb[0].mxu0
      %4243 = vmatprep.mubr.bf16.mxu0 0
      %4244 = vmatmul.mubr.bf16.gmra.mrb[0].mxu0 %v3370
      %v4245 = vpop.f32.mrb[0].mxu0
      %v4246 = vadd.f32 %v4037, %v4245
      %v4247 = vpop.f32.mrb[0].mxu0
      %v4248 = vpop.f32.mrb[0].mxu0
      %v4249 = vadd.f32 %v4040, %v4248
      %v4250 = vpop.f32.mrb[0].mxu0
      %4251 = vmatprep.mubr.bf16.mxu0 0
      %4252 = vmatmul.mubr.bf16.gmra.mrb[0].mxu0 %v3371
      %v4253 = vpop.f32.mrb[0].mxu0
      %v4254 = vadd.f32 %v4045, %v4253
      %v4255 = vpop.f32.mrb[0].mxu0
      %v4256 = vpop.f32.mrb[0].mxu0
      %v4257 = vadd.f32 %v4048, %v4256
      %v4258 = vpop.f32.mrb[0].mxu0
      %4259 = vmatprep.mubr.bf16.mxu0 0
      %4260 = vmatmul.mubr.bf16.gmra.mrb[0].mxu0 %v3372
      %v4261 = vpop.f32.mrb[0].mxu0
      %v4262 = vadd.f32 %v4053, %v4261
      %v4263 = vpop.f32.mrb[0].mxu0
      %v4264 = vpop.f32.mrb[0].mxu0
      %v4265 = vadd.f32 %v4056, %v4264
      %v4266 = vpop.f32.mrb[0].mxu0
      %4267 = vmatprep.mubr.bf16.mxu0 0
      %4268 = vmatmul.mubr.bf16.gmra.mrb[0].mxu0 %v3373
      %v4269 = vpop.f32.mrb[0].mxu0
      %v4270 = vadd.f32 %v4061, %v4269
      %v4271 = vpop.f32.mrb[0].mxu0
      %v4272 = vpop.f32.mrb[0].mxu0
      %v4273 = vadd.f32 %v4064, %v4272
      %v4274 = vpop.f32.mrb[0].mxu0
      %4275 = vdwg.mxu0
      %s4276 = scalar_lea.vmem %s5, 128
      %v4277 = vld [vmem:[%s4276] sm:$0xf]
      %v4278 = vld [vmem:[%s4276 + $0x4] sm:$0xf]
      %v4279 = vld [vmem:[%s4276 + $0x8] sm:$0xf]
      %v4280 = vld [vmem:[%s4276 + $0xc] sm:$0xf]
      %v4281 = vld [vmem:[%s4276 + $0x10] sm:$0xf]
      %v4282 = vld [vmem:[%s4276 + $0x14] sm:$0xf]
      %v4283 = vld [vmem:[%s4276 + $0x18] sm:$0xf]
      %v4284 = vld [vmem:[%s4276 + $0x1c] sm:$0xf]
      %v4285 = vld [vmem:[%s4276 + $0x20] sm:$0xf]
      %v4286 = vld [vmem:[%s4276 + $0x24] sm:$0xf]
      %v4287 = vld [vmem:[%s4276 + $0x28] sm:$0xf]
      %v4288 = vld [vmem:[%s4276 + $0x2c] sm:$0xf]
      %v4289 = vld [vmem:[%s4276 + $0x30] sm:$0xf]
      %v4290 = vld [vmem:[%s4276 + $0x34] sm:$0xf]
      %v4291 = vld [vmem:[%s4276 + $0x38] sm:$0xf]
      %v4292 = vld [vmem:[%s4276 + $0x3c] sm:$0xf]
      %s4293 = scalar_lea.vmem %s6, 128
      %v4294 = vld [vmem:[%s4293] sm:$0xf]
      %v4295 = vld [vmem:[%s4293 + $0x4] sm:$0xf]
      %v4296 = vld [vmem:[%s4293 + $0x8] sm:$0xf]
      %v4297 = vld [vmem:[%s4293 + $0xc] sm:$0xf]
      %v4298 = vld [vmem:[%s4293 + $0x10] sm:$0xf]
      %v4299 = vld [vmem:[%s4293 + $0x14] sm:$0xf]
      %v4300 = vld [vmem:[%s4293 + $0x18] sm:$0xf]
      %v4301 = vld [vmem:[%s4293 + $0x1c] sm:$0xf]
      %v4302 = vld [vmem:[%s4293 + $0x20] sm:$0xf]
      %v4303 = vld [vmem:[%s4293 + $0x24] sm:$0xf]
      %v4304 = vld [vmem:[%s4293 + $0x28] sm:$0xf]
      %v4305 = vld [vmem:[%s4293 + $0x2c] sm:$0xf]
      %v4306 = vld [vmem:[%s4293 + $0x30] sm:$0xf]
      %v4307 = vld [vmem:[%s4293 + $0x34] sm:$0xf]
      %v4308 = vld [vmem:[%s4293 + $0x38] sm:$0xf]
      %v4309 = vld [vmem:[%s4293 + $0x3c] sm:$0xf]
      %v4326 = vunpack.c.l.b16 %v4294
      %v4327 = vunpack.c.l.b16 %v4295
      %v4328 = vunpack.c.l.b16 %v4296
      %v4329 = vunpack.c.l.b16 %v4297
      %v4330 = vunpack.c.l.b16 %v4298
      %v4331 = vunpack.c.l.b16 %v4299
      %v4332 = vunpack.c.l.b16 %v4300
      %v4333 = vunpack.c.l.b16 %v4301
      %v4334 = vunpack.c.l.b16 %v4302
      %v4335 = vunpack.c.l.b16 %v4303
      %v4336 = vunpack.c.l.b16 %v4304
      %v4337 = vunpack.c.l.b16 %v4305
      %v4338 = vunpack.c.l.b16 %v4306
      %v4339 = vunpack.c.l.b16 %v4307
      %v4340 = vunpack.c.l.b16 %v4308
      %v4341 = vunpack.c.l.b16 %v4309
      %v4342 = vpack.c.b16 %v4327, %v4326
      %v4343 = vpack.c.b16 %v4329, %v4328
      %v4344 = vpack.c.b16 %v4331, %v4330
      %v4345 = vpack.c.b16 %v4333, %v4332
      %v4346 = vpack.c.b16 %v4335, %v4334
      %v4347 = vpack.c.b16 %v4337, %v4336
      %v4348 = vpack.c.b16 %v4339, %v4338
      %v4349 = vpack.c.b16 %v4341, %v4340
      %4358 = vmatprep.subr.bf16.mxu0 0
      %4359 = vmatpush1.bf16.msra.mxu0 %v4342
      %4360 = vmatprep.subr.bf16.mxu0 0
      %4361 = vmatpush1.bf16.msra.mxu0 %v4343
      %4362 = vmatprep.subr.bf16.mxu0 0
      %4363 = vmatpush1.bf16.msra.mxu0 %v4344
      %4364 = vmatprep.subr.bf16.mxu0 0
      %4365 = vmatpush1.bf16.msra.mxu0 %v4345
      %4366 = vmatprep.subr.bf16.mxu0 0
      %4367 = vmatpush1.bf16.msra.mxu0 %v4346
      %4368 = vmatprep.subr.bf16.mxu0 0
      %4369 = vmatpush1.bf16.msra.mxu0 %v4347
      %4370 = vmatprep.subr.bf16.mxu0 0
      %4371 = vmatpush1.bf16.msra.mxu0 %v4348
      %4372 = vmatprep.subr.bf16.mxu0 0
      %4373 = vmatpush1.bf16.msra.mxu0 %v4349
      %4374 = vmatprep.subr.bf16.mxu0 0
      %4375 = vmatpush1.bf16.msra.mxu0 0
      %4376 = vmatprep.subr.bf16.mxu0 0
      %4377 = vmatpush1.bf16.msra.mxu0 0
      %4378 = vmatprep.subr.bf16.mxu0 0
      %4379 = vmatpush1.bf16.msra.mxu0 0
      %4380 = vmatprep.subr.bf16.mxu0 0
      %4381 = vmatpush1.bf16.msra.mxu0 0
      %4382 = vmatprep.subr.bf16.mxu0 0
      %4383 = vmatpush1.bf16.msra.mxu0 0
      %4384 = vmatprep.subr.bf16.mxu0 0
      %4385 = vmatpush1.bf16.msra.mxu0 0
      %4386 = vmatprep.subr.bf16.mxu0 0
      %4387 = vmatpush1.bf16.msra.mxu0 0
      %4388 = vmatprep.subr.bf16.mxu0 0
      %4389 = vmatpush1.bf16.msra.mxu0 0
      %4390 = vmatprep.mubr.bf16.mxu0 0
      %4391 = vmatmul.mubr.bf16.gmra.mrb[0].mxu0 %v470
      %v4392 = vpop.f32.mrb[0].mxu0
      %v4393 = vadd.f32 0.0, %v4392
      %v4394 = vpop.f32.mrb[0].mxu0
      %v4395 = vpop.f32.mrb[0].mxu0
      %v4396 = vadd.f32 0.0, %v4395
      %v4397 = vpop.f32.mrb[0].mxu0
      %4398 = vmatprep.mubr.bf16.mxu0 0
      %4399 = vmatmul.mubr.bf16.gmra.mrb[0].mxu0 %v471
      %v4400 = vpop.f32.mrb[0].mxu0
      %v4401 = vadd.f32 0.0, %v4400
      %v4402 = vpop.f32.mrb[0].mxu0
      %v4403 = vpop.f32.mrb[0].mxu0
      %v4404 = vadd.f32 0.0, %v4403
      %v4405 = vpop.f32.mrb[0].mxu0
      %4406 = vmatprep.mubr.bf16.mxu0 0
      %4407 = vmatmul.mubr.bf16.gmra.mrb[0].mxu0 %v472
      %v4408 = vpop.f32.mrb[0].mxu0
      %v4409 = vadd.f32 0.0, %v4408
      %v4410 = vpop.f32.mrb[0].mxu0
      %v4411 = vpop.f32.mrb[0].mxu0
      %v4412 = vadd.f32 0.0, %v4411
      %v4413 = vpop.f32.mrb[0].mxu0
      %4414 = vmatprep.mubr.bf16.mxu0 0
      %4415 = vmatmul.mubr.bf16.gmra.mrb[0].mxu0 %v473
      %v4416 = vpop.f32.mrb[0].mxu0
      %v4417 = vadd.f32 0.0, %v4416
      %v4418 = vpop.f32.mrb[0].mxu0
      %v4419 = vpop.f32.mrb[0].mxu0
      %v4420 = vadd.f32 0.0, %v4419
      %v4421 = vpop.f32.mrb[0].mxu0
      %4422 = vmatprep.mubr.bf16.mxu0 0
      %4423 = vmatmul.mubr.bf16.gmra.mrb[0].mxu0 %v474
      %v4424 = vpop.f32.mrb[0].mxu0
      %v4425 = vadd.f32 0.0, %v4424
      %v4426 = vpop.f32.mrb[0].mxu0
      %v4427 = vpop.f32.mrb[0].mxu0
      %v4428 = vadd.f32 0.0, %v4427
      %v4429 = vpop.f32.mrb[0].mxu0
      %4430 = vmatprep.mubr.bf16.mxu0 0
      %4431 = vmatmul.mubr.bf16.gmra.mrb[0].mxu0 %v475
      %v4432 = vpop.f32.mrb[0].mxu0
      %v4433 = vadd.f32 0.0, %v4432
      %v4434 = vpop.f32.mrb[0].mxu0
      %v4435 = vpop.f32.mrb[0].mxu0
      %v4436 = vadd.f32 0.0, %v4435
      %v4437 = vpop.f32.mrb[0].mxu0
      %4438 = vmatprep.mubr.bf16.mxu0 0
      %4439 = vmatmul.mubr.bf16.gmra.mrb[0].mxu0 %v476
      %v4440 = vpop.f32.mrb[0].mxu0
      %v4441 = vadd.f32 0.0, %v4440
      %v4442 = vpop.f32.mrb[0].mxu0
      %v4443 = vpop.f32.mrb[0].mxu0
      %v4444 = vadd.f32 0.0, %v4443
      %v4445 = vpop.f32.mrb[0].mxu0
      %4446 = vmatprep.mubr.bf16.mxu0 0
      %4447 = vmatmul.mubr.bf16.gmra.mrb[0].mxu0 %v477
      %v4448 = vpop.f32.mrb[0].mxu0
      %v4449 = vadd.f32 0.0, %v4448
      %v4450 = vpop.f32.mrb[0].mxu0
      %v4451 = vpop.f32.mrb[0].mxu0
      %v4452 = vadd.f32 0.0, %v4451
      %v4453 = vpop.f32.mrb[0].mxu0
      %4454 = vmatprep.mubr.bf16.mxu0 0
      %4455 = vmatmul.mubr.bf16.gmra.mrb[0].mxu0 %v478
      %v4456 = vpop.f32.mrb[0].mxu0
      %v4457 = vadd.f32 0.0, %v4456
      %v4458 = vpop.f32.mrb[0].mxu0
      %v4459 = vpop.f32.mrb[0].mxu0
      %v4460 = vadd.f32 0.0, %v4459
      %v4461 = vpop.f32.mrb[0].mxu0
      %4462 = vmatprep.mubr.bf16.mxu0 0
      %4463 = vmatmul.mubr.bf16.gmra.mrb[0].mxu0 %v479
      %v4464 = vpop.f32.mrb[0].mxu0
      %v4465 = vadd.f32 0.0, %v4464
      %v4466 = vpop.f32.mrb[0].mxu0
      %v4467 = vpop.f32.mrb[0].mxu0
      %v4468 = vadd.f32 0.0, %v4467
      %v4469 = vpop.f32.mrb[0].mxu0
      %4470 = vmatprep.mubr.bf16.mxu0 0
      %4471 = vmatmul.mubr.bf16.gmra.mrb[0].mxu0 %v480
      %v4472 = vpop.f32.mrb[0].mxu0
      %v4473 = vadd.f32 0.0, %v4472
      %v4474 = vpop.f32.mrb[0].mxu0
      %v4475 = vpop.f32.mrb[0].mxu0
      %v4476 = vadd.f32 0.0, %v4475
      %v4477 = vpop.f32.mrb[0].mxu0
      %4478 = vmatprep.mubr.bf16.mxu0 0
      %4479 = vmatmul.mubr.bf16.gmra.mrb[0].mxu0 %v481
      %v4480 = vpop.f32.mrb[0].mxu0
      %v4481 = vadd.f32 0.0, %v4480
      %v4482 = vpop.f32.mrb[0].mxu0
      %v4483 = vpop.f32.mrb[0].mxu0
      %v4484 = vadd.f32 0.0, %v4483
      %v4485 = vpop.f32.mrb[0].mxu0
      %4486 = vmatprep.mubr.bf16.mxu0 0
      %4487 = vmatmul.mubr.bf16.gmra.mrb[0].mxu0 %v482
      %v4488 = vpop.f32.mrb[0].mxu0
      %v4489 = vadd.f32 0.0, %v4488
      %v4490 = vpop.f32.mrb[0].mxu0
      %v4491 = vpop.f32.mrb[0].mxu0
      %v4492 = vadd.f32 0.0, %v4491
      %v4493 = vpop.f32.mrb[0].mxu0
      %4494 = vmatprep.mubr.bf16.mxu0 0
      %4495 = vmatmul.mubr.bf16.gmra.mrb[0].mxu0 %v483
      %v4496 = vpop.f32.mrb[0].mxu0
      %v4497 = vadd.f32 0.0, %v4496
      %v4498 = vpop.f32.mrb[0].mxu0
      %v4499 = vpop.f32.mrb[0].mxu0
      %v4500 = vadd.f32 0.0, %v4499
      %v4501 = vpop.f32.mrb[0].mxu0
      %4502 = vmatprep.mubr.bf16.mxu0 0
      %4503 = vmatmul.mubr.bf16.gmra.mrb[0].mxu0 %v484
      %v4504 = vpop.f32.mrb[0].mxu0
      %v4505 = vadd.f32 0.0, %v4504
      %v4506 = vpop.f32.mrb[0].mxu0
      %v4507 = vpop.f32.mrb[0].mxu0
      %v4508 = vadd.f32 0.0, %v4507
      %v4509 = vpop.f32.mrb[0].mxu0
      %4510 = vmatprep.mubr.bf16.mxu0 0
      %4511 = vmatmul.mubr.bf16.gmra.mrb[0].mxu0 %v485
      %v4512 = vpop.f32.mrb[0].mxu0
      %v4513 = vadd.f32 0.0, %v4512
      %v4514 = vpop.f32.mrb[0].mxu0
      %v4515 = vpop.f32.mrb[0].mxu0
      %v4516 = vadd.f32 0.0, %v4515
      %v4517 = vpop.f32.mrb[0].mxu0
      %4518 = vdwg.mxu0
      %v4535 = vunpack.c.l.b16 %v4277
      %v4536 = vunpack.c.l.b16 %v4278
      %v4537 = vunpack.c.l.b16 %v4279
      %v4538 = vunpack.c.l.b16 %v4280
      %v4539 = vunpack.c.l.b16 %v4281
      %v4540 = vunpack.c.l.b16 %v4282
      %v4541 = vunpack.c.l.b16 %v4283
      %v4542 = vunpack.c.l.b16 %v4284
      %v4543 = vunpack.c.l.b16 %v4285
      %v4544 = vunpack.c.l.b16 %v4286
      %v4545 = vunpack.c.l.b16 %v4287
      %v4546 = vunpack.c.l.b16 %v4288
      %v4547 = vunpack.c.l.b16 %v4289
      %v4548 = vunpack.c.l.b16 %v4290
      %v4549 = vunpack.c.l.b16 %v4291
      %v4550 = vunpack.c.l.b16 %v4292
      %v4551 = vpack.c.b16 %v4536, %v4535
      %v4552 = vpack.c.b16 %v4538, %v4537
      %v4553 = vpack.c.b16 %v4540, %v4539
      %v4554 = vpack.c.b16 %v4542, %v4541
      %v4555 = vpack.c.b16 %v4544, %v4543
      %v4556 = vpack.c.b16 %v4546, %v4545
      %v4557 = vpack.c.b16 %v4548, %v4547
      %v4558 = vpack.c.b16 %v4550, %v4549
      %4567 = vmatprep.subr.bf16.mxu0 0
      %4568 = vmatpush1.bf16.msra.mxu0 %v4551
      %4569 = vmatprep.subr.bf16.mxu0 0
      %4570 = vmatpush1.bf16.msra.mxu0 %v4552
      %4571 = vmatprep.subr.bf16.mxu0 0
      %4572 = vmatpush1.bf16.msra.mxu0 %v4553
      %4573 = vmatprep.subr.bf16.mxu0 0
      %4574 = vmatpush1.bf16.msra.mxu0 %v4554
      %4575 = vmatprep.subr.bf16.mxu0 0
      %4576 = vmatpush1.bf16.msra.mxu0 %v4555
      %4577 = vmatprep.subr.bf16.mxu0 0
      %4578 = vmatpush1.bf16.msra.mxu0 %v4556
      %4579 = vmatprep.subr.bf16.mxu0 0
      %4580 = vmatpush1.bf16.msra.mxu0 %v4557
      %4581 = vmatprep.subr.bf16.mxu0 0
      %4582 = vmatpush1.bf16.msra.mxu0 %v4558
      %4583 = vmatprep.subr.bf16.mxu0 0
      %4584 = vmatpush1.bf16.msra.mxu0 0
      %4585 = vmatprep.subr.bf16.mxu0 0
      %4586 = vmatpush1.bf16.msra.mxu0 0
      %4587 = vmatprep.subr.bf16.mxu0 0
      %4588 = vmatpush1.bf16.msra.mxu0 0
      %4589 = vmatprep.subr.bf16.mxu0 0
      %4590 = vmatpush1.bf16.msra.mxu0 0
      %4591 = vmatprep.subr.bf16.mxu0 0
      %4592 = vmatpush1.bf16.msra.mxu0 0
      %4593 = vmatprep.subr.bf16.mxu0 0
      %4594 = vmatpush1.bf16.msra.mxu0 0
      %4595 = vmatprep.subr.bf16.mxu0 0
      %4596 = vmatpush1.bf16.msra.mxu0 0
      %4597 = vmatprep.subr.bf16.mxu0 0
      %4598 = vmatpush1.bf16.msra.mxu0 0
      %4599 = vmatprep.mubr.bf16.mxu0 0
      %4600 = vmatmul.mubr.bf16.gmra.mrb[0].mxu0 %v3358
      %v4601 = vpop.f32.mrb[0].mxu0
      %v4602 = vadd.f32 %v4393, %v4601
      %v4603 = vpop.f32.mrb[0].mxu0
      %v4604 = vpop.f32.mrb[0].mxu0
      %v4605 = vadd.f32 %v4396, %v4604
      %v4606 = vpop.f32.mrb[0].mxu0
      %4607 = vmatprep.mubr.bf16.mxu0 0
      %4608 = vmatmul.mubr.bf16.gmra.mrb[0].mxu0 %v3359
      %v4609 = vpop.f32.mrb[0].mxu0
      %v4610 = vadd.f32 %v4401, %v4609
      %v4611 = vpop.f32.mrb[0].mxu0
      %v4612 = vpop.f32.mrb[0].mxu0
      %v4613 = vadd.f32 %v4404, %v4612
      %v4614 = vpop.f32.mrb[0].mxu0
      %4615 = vmatprep.mubr.bf16.mxu0 0
      %4616 = vmatmul.mubr.bf16.gmra.mrb[0].mxu0 %v3360
      %v4617 = vpop.f32.mrb[0].mxu0
      %v4618 = vadd.f32 %v4409, %v4617
      %v4619 = vpop.f32.mrb[0].mxu0
      %v4620 = vpop.f32.mrb[0].mxu0
      %v4621 = vadd.f32 %v4412, %v4620
      %v4622 = vpop.f32.mrb[0].mxu0
      %4623 = vmatprep.mubr.bf16.mxu0 0
      %4624 = vmatmul.mubr.bf16.gmra.mrb[0].mxu0 %v3361
      %v4625 = vpop.f32.mrb[0].mxu0
      %v4626 = vadd.f32 %v4417, %v4625
      %v4627 = vpop.f32.mrb[0].mxu0
      %v4628 = vpop.f32.mrb[0].mxu0
      %v4629 = vadd.f32 %v4420, %v4628
      %v4630 = vpop.f32.mrb[0].mxu0
      %4631 = vmatprep.mubr.bf16.mxu0 0
      %4632 = vmatmul.mubr.bf16.gmra.mrb[0].mxu0 %v3362
      %v4633 = vpop.f32.mrb[0].mxu0
      %v4634 = vadd.f32 %v4425, %v4633
      %v4635 = vpop.f32.mrb[0].mxu0
      %v4636 = vpop.f32.mrb[0].mxu0
      %v4637 = vadd.f32 %v4428, %v4636
      %v4638 = vpop.f32.mrb[0].mxu0
      %4639 = vmatprep.mubr.bf16.mxu0 0
      %4640 = vmatmul.mubr.bf16.gmra.mrb[0].mxu0 %v3363
      %v4641 = vpop.f32.mrb[0].mxu0
      %v4642 = vadd.f32 %v4433, %v4641
      %v4643 = vpop.f32.mrb[0].mxu0
      %v4644 = vpop.f32.mrb[0].mxu0
      %v4645 = vadd.f32 %v4436, %v4644
      %v4646 = vpop.f32.mrb[0].mxu0
      %4647 = vmatprep.mubr.bf16.mxu0 0
      %4648 = vmatmul.mubr.bf16.gmra.mrb[0].mxu0 %v3364
      %v4649 = vpop.f32.mrb[0].mxu0
      %v4650 = vadd.f32 %v4441, %v4649
      %v4651 = vpop.f32.mrb[0].mxu0
      %v4652 = vpop.f32.mrb[0].mxu0
      %v4653 = vadd.f32 %v4444, %v4652
      %v4654 = vpop.f32.mrb[0].mxu0
      %4655 = vmatprep.mubr.bf16.mxu0 0
      %4656 = vmatmul.mubr.bf16.gmra.mrb[0].mxu0 %v3365
      %v4657 = vpop.f32.mrb[0].mxu0
      %v4658 = vadd.f32 %v4449, %v4657
      %v4659 = vpop.f32.mrb[0].mxu0
      %v4660 = vpop.f32.mrb[0].mxu0
      %v4661 = vadd.f32 %v4452, %v4660
      %v4662 = vpop.f32.mrb[0].mxu0
      %4663 = vmatprep.mubr.bf16.mxu0 0
      %4664 = vmatmul.mubr.bf16.gmra.mrb[0].mxu0 %v3366
      %v4665 = vpop.f32.mrb[0].mxu0
      %v4666 = vadd.f32 %v4457, %v4665
      %v4667 = vpop.f32.mrb[0].mxu0
      %v4668 = vpop.f32.mrb[0].mxu0
      %v4669 = vadd.f32 %v4460, %v4668
      %v4670 = vpop.f32.mrb[0].mxu0
      %4671 = vmatprep.mubr.bf16.mxu0 0
      %4672 = vmatmul.mubr.bf16.gmra.mrb[0].mxu0 %v3367
      %v4673 = vpop.f32.mrb[0].mxu0
      %v4674 = vadd.f32 %v4465, %v4673
      %v4675 = vpop.f32.mrb[0].mxu0
      %v4676 = vpop.f32.mrb[0].mxu0
      %v4677 = vadd.f32 %v4468, %v4676
      %v4678 = vpop.f32.mrb[0].mxu0
      %4679 = vmatprep.mubr.bf16.mxu0 0
      %4680 = vmatmul.mubr.bf16.gmra.mrb[0].mxu0 %v3368
      %v4681 = vpop.f32.mrb[0].mxu0
      %v4682 = vadd.f32 %v4473, %v4681
      %v4683 = vpop.f32.mrb[0].mxu0
      %v4684 = vpop.f32.mrb[0].mxu0
      %v4685 = vadd.f32 %v4476, %v4684
      %v4686 = vpop.f32.mrb[0].mxu0
      %4687 = vmatprep.mubr.bf16.mxu0 0
      %4688 = vmatmul.mubr.bf16.gmra.mrb[0].mxu0 %v3369
      %v4689 = vpop.f32.mrb[0].mxu0
      %v4690 = vadd.f32 %v4481, %v4689
      %v4691 = vpop.f32.mrb[0].mxu0
      %v4692 = vpop.f32.mrb[0].mxu0
      %v4693 = vadd.f32 %v4484, %v4692
      %v4694 = vpop.f32.mrb[0].mxu0
      %4695 = vmatprep.mubr.bf16.mxu0 0
      %4696 = vmatmul.mubr.bf16.gmra.mrb[0].mxu0 %v3370
      %v4697 = vpop.f32.mrb[0].mxu0
      %v4698 = vadd.f32 %v4489, %v4697
      %v4699 = vpop.f32.mrb[0].mxu0
      %v4700 = vpop.f32.mrb[0].mxu0
      %v4701 = vadd.f32 %v4492, %v4700
      %v4702 = vpop.f32.mrb[0].mxu0
      %4703 = vmatprep.mubr.bf16.mxu0 0
      %4704 = vmatmul.mubr.bf16.gmra.mrb[0].mxu0 %v3371
      %v4705 = vpop.f32.mrb[0].mxu0
      %v4706 = vadd.f32 %v4497, %v4705
      %v4707 = vpop.f32.mrb[0].mxu0
      %v4708 = vpop.f32.mrb[0].mxu0
      %v4709 = vadd.f32 %v4500, %v4708
      %v4710 = vpop.f32.mrb[0].mxu0
      %4711 = vmatprep.mubr.bf16.mxu0 0
      %4712 = vmatmul.mubr.bf16.gmra.mrb[0].mxu0 %v3372
      %v4713 = vpop.f32.mrb[0].mxu0
      %v4714 = vadd.f32 %v4505, %v4713
      %v4715 = vpop.f32.mrb[0].mxu0
      %v4716 = vpop.f32.mrb[0].mxu0
      %v4717 = vadd.f32 %v4508, %v4716
      %v4718 = vpop.f32.mrb[0].mxu0
      %4719 = vmatprep.mubr.bf16.mxu0 0
      %4720 = vmatmul.mubr.bf16.gmra.mrb[0].mxu0 %v3373
      %v4721 = vpop.f32.mrb[0].mxu0
      %v4722 = vadd.f32 %v4513, %v4721
      %v4723 = vpop.f32.mrb[0].mxu0
      %v4724 = vpop.f32.mrb[0].mxu0
      %v4725 = vadd.f32 %v4516, %v4724
      %v4726 = vpop.f32.mrb[0].mxu0
      %4727 = vdwg.mxu0
      %v4760 = vrot.slane %v3698, 7
      %v4761 = vrot.slane %v3701, 7
      %v4762 = vsel %vm2288, %v4760, %v4761
      %v4763 = vrot.slane %v3706, 7
      %v4764 = vrot.slane %v3709, 7
      %v4765 = vsel %vm2288, %v4763, %v4764
      %v4766 = vrot.slane %v3714, 7
      %v4767 = vrot.slane %v3717, 7
      %v4768 = vsel %vm2288, %v4766, %v4767
      %v4769 = vrot.slane %v3722, 7
      %v4770 = vrot.slane %v3725, 7
      %v4771 = vsel %vm2288, %v4769, %v4770
      %v4772 = vrot.slane %v3730, 7
      %v4773 = vrot.slane %v3733, 7
      %v4774 = vsel %vm2288, %v4772, %v4773
      %v4775 = vrot.slane %v3738, 7
      %v4776 = vrot.slane %v3741, 7
      %v4777 = vsel %vm2288, %v4775, %v4776
      %v4778 = vrot.slane %v3746, 7
      %v4779 = vrot.slane %v3749, 7
      %v4780 = vsel %vm2288, %v4778, %v4779
      %v4781 = vrot.slane %v3754, 7
      %v4782 = vrot.slane %v3757, 7
      %v4783 = vsel %vm2288, %v4781, %v4782
      %v4784 = vrot.slane %v3762, 7
      %v4785 = vrot.slane %v3765, 7
      %v4786 = vsel %vm2288, %v4784, %v4785
      %v4787 = vrot.slane %v3770, 7
      %v4788 = vrot.slane %v3773, 7
      %v4789 = vsel %vm2288, %v4787, %v4788
      %v4790 = vrot.slane %v3778, 7
      %v4791 = vrot.slane %v3781, 7
      %v4792 = vsel %vm2288, %v4790, %v4791
      %v4793 = vrot.slane %v3786, 7
      %v4794 = vrot.slane %v3789, 7
      %v4795 = vsel %vm2288, %v4793, %v4794
      %v4796 = vrot.slane %v3794, 7
      %v4797 = vrot.slane %v3797, 7
      %v4798 = vsel %vm2288, %v4796, %v4797
      %v4799 = vrot.slane %v3802, 7
      %v4800 = vrot.slane %v3805, 7
      %v4801 = vsel %vm2288, %v4799, %v4800
      %v4802 = vrot.slane %v3810, 7
      %v4803 = vrot.slane %v3813, 7
      %v4804 = vsel %vm2288, %v4802, %v4803
      %v4805 = vrot.slane %v3818, 7
      %v4806 = vrot.slane %v3821, 7
      %v4807 = vsel %vm2288, %v4805, %v4806
      %v4840 = vsel %vm2288, 0.0, %v4760
      %v4841 = vsel %vm2288, 0.0, %v4763
      %v4842 = vsel %vm2288, 0.0, %v4766
      %v4843 = vsel %vm2288, 0.0, %v4769
      %v4844 = vsel %vm2288, 0.0, %v4772
      %v4845 = vsel %vm2288, 0.0, %v4775
      %v4846 = vsel %vm2288, 0.0, %v4778
      %v4847 = vsel %vm2288, 0.0, %v4781
      %v4848 = vsel %vm2288, 0.0, %v4784
      %v4849 = vsel %vm2288, 0.0, %v4787
      %v4850 = vsel %vm2288, 0.0, %v4790
      %v4851 = vsel %vm2288, 0.0, %v4793
      %v4852 = vsel %vm2288, 0.0, %v4796
      %v4853 = vsel %vm2288, 0.0, %v4799
      %v4854 = vsel %vm2288, 0.0, %v4802
      %v4855 = vsel %vm2288, 0.0, %v4805
      %v4888 = vrot.slane %v4602, 1
      %v4889 = vrot.slane %v4605, 1
      %v4890 = vsel %vm2545, %v4888, %v4889
      %v4891 = vrot.slane %v4610, 1
      %v4892 = vrot.slane %v4613, 1
      %v4893 = vsel %vm2545, %v4891, %v4892
      %v4894 = vrot.slane %v4618, 1
      %v4895 = vrot.slane %v4621, 1
      %v4896 = vsel %vm2545, %v4894, %v4895
      %v4897 = vrot.slane %v4626, 1
      %v4898 = vrot.slane %v4629, 1
      %v4899 = vsel %vm2545, %v4897, %v4898
      %v4900 = vrot.slane %v4634, 1
      %v4901 = vrot.slane %v4637, 1
      %v4902 = vsel %vm2545, %v4900, %v4901
      %v4903 = vrot.slane %v4642, 1
      %v4904 = vrot.slane %v4645, 1
      %v4905 = vsel %vm2545, %v4903, %v4904
      %v4906 = vrot.slane %v4650, 1
      %v4907 = vrot.slane %v4653, 1
      %v4908 = vsel %vm2545, %v4906, %v4907
      %v4909 = vrot.slane %v4658, 1
      %v4910 = vrot.slane %v4661, 1
      %v4911 = vsel %vm2545, %v4909, %v4910
      %v4912 = vrot.slane %v4666, 1
      %v4913 = vrot.slane %v4669, 1
      %v4914 = vsel %vm2545, %v4912, %v4913
      %v4915 = vrot.slane %v4674, 1
      %v4916 = vrot.slane %v4677, 1
      %v4917 = vsel %vm2545, %v4915, %v4916
      %v4918 = vrot.slane %v4682, 1
      %v4919 = vrot.slane %v4685, 1
      %v4920 = vsel %vm2545, %v4918, %v4919
      %v4921 = vrot.slane %v4690, 1
      %v4922 = vrot.slane %v4693, 1
      %v4923 = vsel %vm2545, %v4921, %v4922
      %v4924 = vrot.slane %v4698, 1
      %v4925 = vrot.slane %v4701, 1
      %v4926 = vsel %vm2545, %v4924, %v4925
      %v4927 = vrot.slane %v4706, 1
      %v4928 = vrot.slane %v4709, 1
      %v4929 = vsel %vm2545, %v4927, %v4928
      %v4930 = vrot.slane %v4714, 1
      %v4931 = vrot.slane %v4717, 1
      %v4932 = vsel %vm2545, %v4930, %v4931
      %v4933 = vrot.slane %v4722, 1
      %v4934 = vrot.slane %v4725, 1
      %v4935 = vsel %vm2545, %v4933, %v4934
      %v4968 = vsel %vm2545, %v4889, 0.0
      %v4969 = vsel %vm2545, %v4892, 0.0
      %v4970 = vsel %vm2545, %v4895, 0.0
      %v4971 = vsel %vm2545, %v4898, 0.0
      %v4972 = vsel %vm2545, %v4901, 0.0
      %v4973 = vsel %vm2545, %v4904, 0.0
      %v4974 = vsel %vm2545, %v4907, 0.0
      %v4975 = vsel %vm2545, %v4910, 0.0
      %v4976 = vsel %vm2545, %v4913, 0.0
      %v4977 = vsel %vm2545, %v4916, 0.0
      %v4978 = vsel %vm2545, %v4919, 0.0
      %v4979 = vsel %vm2545, %v4922, 0.0
      %v4980 = vsel %vm2545, %v4925, 0.0
      %v4981 = vsel %vm2545, %v4928, 0.0
      %v4982 = vsel %vm2545, %v4931, 0.0
      %v4983 = vsel %vm2545, %v4934, 0.0
      %v4984 = vld [vmem:[%s7] sm:$0x1]
      %v4986 = vlaneseq
      %v4987 = vshrl.u32 %v4986, 7
      %v4988 = vsub.s32 0, %v4987
      %v4989 = vrot.slane %v4984, %v4988
      %v4991 = vadd.f32 %v4150, %v4989
      %v4992 = vadd.f32 %v4153, %v4989
      %v4993 = vadd.f32 %v4158, %v4989
      %v4994 = vadd.f32 %v4161, %v4989
      %v4995 = vadd.f32 %v4166, %v4989
      %v4996 = vadd.f32 %v4169, %v4989
      %v4997 = vadd.f32 %v4174, %v4989
      %v4998 = vadd.f32 %v4177, %v4989
      %v4999 = vadd.f32 %v4182, %v4989
      %v5000 = vadd.f32 %v4185, %v4989
      %v5001 = vadd.f32 %v4190, %v4989
      %v5002 = vadd.f32 %v4193, %v4989
      %v5003 = vadd.f32 %v4198, %v4989
      %v5004 = vadd.f32 %v4201, %v4989
      %v5005 = vadd.f32 %v4206, %v4989
      %v5006 = vadd.f32 %v4209, %v4989
      %v5007 = vadd.f32 %v4214, %v4989
      %v5008 = vadd.f32 %v4217, %v4989
      %v5009 = vadd.f32 %v4222, %v4989
      %v5010 = vadd.f32 %v4225, %v4989
      %v5011 = vadd.f32 %v4230, %v4989
      %v5012 = vadd.f32 %v4233, %v4989
      %v5013 = vadd.f32 %v4238, %v4989
      %v5014 = vadd.f32 %v4241, %v4989
      %v5015 = vadd.f32 %v4246, %v4989
      %v5016 = vadd.f32 %v4249, %v4989
      %v5017 = vadd.f32 %v4254, %v4989
      %v5018 = vadd.f32 %v4257, %v4989
      %v5019 = vadd.f32 %v4262, %v4989
      %v5020 = vadd.f32 %v4265, %v4989
      %v5021 = vadd.f32 %v4270, %v4989
      %v5022 = vadd.f32 %v4273, %v4989
      %v5023 = vadd.f32 %v4840, %v4890
      %v5024 = vadd.f32 %v4762, %v4968
      %v5025 = vadd.f32 %v4841, %v4893
      %v5026 = vadd.f32 %v4765, %v4969
      %v5027 = vadd.f32 %v4842, %v4896
      %v5028 = vadd.f32 %v4768, %v4970
      %v5029 = vadd.f32 %v4843, %v4899
      %v5030 = vadd.f32 %v4771, %v4971
      %v5031 = vadd.f32 %v4844, %v4902
      %v5032 = vadd.f32 %v4774, %v4972
      %v5033 = vadd.f32 %v4845, %v4905
      %v5034 = vadd.f32 %v4777, %v4973
      %v5035 = vadd.f32 %v4846, %v4908
      %v5036 = vadd.f32 %v4780, %v4974
      %v5037 = vadd.f32 %v4847, %v4911
      %v5038 = vadd.f32 %v4783, %v4975
      %v5039 = vadd.f32 %v4848, %v4914
      %v5040 = vadd.f32 %v4786, %v4976
      %v5041 = vadd.f32 %v4849, %v4917
      %v5042 = vadd.f32 %v4789, %v4977
      %v5043 = vadd.f32 %v4850, %v4920
      %v5044 = vadd.f32 %v4792, %v4978
      %v5045 = vadd.f32 %v4851, %v4923
      %v5046 = vadd.f32 %v4795, %v4979
      %v5047 = vadd.f32 %v4852, %v4926
      %v5048 = vadd.f32 %v4798, %v4980
      %v5049 = vadd.f32 %v4853, %v4929
      %v5050 = vadd.f32 %v4801, %v4981
      %v5051 = vadd.f32 %v4854, %v4932
      %v5052 = vadd.f32 %v4804, %v4982
      %v5053 = vadd.f32 %v4855, %v4935
      %v5054 = vadd.f32 %v4807, %v4983
      %v5055 = vadd.f32 %v4991, %v5023
      %v5056 = vadd.f32 %v4992, %v5024
      %v5057 = vadd.f32 %v4993, %v5025
      %v5058 = vadd.f32 %v4994, %v5026
      %v5059 = vadd.f32 %v4995, %v5027
      %v5060 = vadd.f32 %v4996, %v5028
      %v5061 = vadd.f32 %v4997, %v5029
      %v5062 = vadd.f32 %v4998, %v5030
      %v5063 = vadd.f32 %v4999, %v5031
      %v5064 = vadd.f32 %v5000, %v5032
      %v5065 = vadd.f32 %v5001, %v5033
      %v5066 = vadd.f32 %v5002, %v5034
      %v5067 = vadd.f32 %v5003, %v5035
      %v5068 = vadd.f32 %v5004, %v5036
      %v5069 = vadd.f32 %v5005, %v5037
      %v5070 = vadd.f32 %v5006, %v5038
      %v5071 = vadd.f32 %v5007, %v5039
      %v5072 = vadd.f32 %v5008, %v5040
      %v5073 = vadd.f32 %v5009, %v5041
      %v5074 = vadd.f32 %v5010, %v5042
      %v5075 = vadd.f32 %v5011, %v5043
      %v5076 = vadd.f32 %v5012, %v5044
      %v5077 = vadd.f32 %v5013, %v5045
      %v5078 = vadd.f32 %v5014, %v5046
      %v5079 = vadd.f32 %v5015, %v5047
      %v5080 = vadd.f32 %v5016, %v5048
      %v5081 = vadd.f32 %v5017, %v5049
      %v5082 = vadd.f32 %v5018, %v5050
      %v5083 = vadd.f32 %v5019, %v5051
      %v5084 = vadd.f32 %v5020, %v5052
      %v5085 = vadd.f32 %v5021, %v5053
      %v5086 = vadd.f32 %v5022, %v5054
      %v5087 = vtanh.pop %v5055
      %v5088 = vtanh.pop %v5056
      %v5089 = vtanh.pop %v5057
      %v5090 = vtanh.pop %v5058
      %v5091 = vtanh.pop %v5059
      %v5092 = vtanh.pop %v5060
      %v5093 = vtanh.pop %v5061
      %v5094 = vtanh.pop %v5062
      %v5095 = vtanh.pop %v5063
      %v5096 = vtanh.pop %v5064
      %v5097 = vtanh.pop %v5065
      %v5098 = vtanh.pop %v5066
      %v5099 = vtanh.pop %v5067
      %v5100 = vtanh.pop %v5068
      %v5101 = vtanh.pop %v5069
      %v5102 = vtanh.pop %v5070
      %v5103 = vtanh.pop %v5071
      %v5104 = vtanh.pop %v5072
      %v5105 = vtanh.pop %v5073
      %v5106 = vtanh.pop %v5074
      %v5107 = vtanh.pop %v5075
      %v5108 = vtanh.pop %v5076
      %v5109 = vtanh.pop %v5077
      %v5110 = vtanh.pop %v5078
      %v5111 = vtanh.pop %v5079
      %v5112 = vtanh.pop %v5080
      %v5113 = vtanh.pop %v5081
      %v5114 = vtanh.pop %v5082
      %v5115 = vtanh.pop %v5083
      %v5116 = vtanh.pop %v5084
      %v5117 = vtanh.pop %v5085
      %v5118 = vtanh.pop %v5086
      %v5119 = vsub.f32 %v5087, %v390
      %v5120 = vsub.f32 %v5088, %v391
      %v5121 = vsub.f32 %v5089, %v392
      %v5122 = vsub.f32 %v5090, %v393
      %v5123 = vsub.f32 %v5091, %v394
      %v5124 = vsub.f32 %v5092, %v395
      %v5125 = vsub.f32 %v5093, %v396
      %v5126 = vsub.f32 %v5094, %v397
      %v5127 = vsub.f32 %v5095, %v398
      %v5128 = vsub.f32 %v5096, %v399
      %v5129 = vsub.f32 %v5097, %v400
      %v5130 = vsub.f32 %v5098, %v401
      %v5131 = vsub.f32 %v5099, %v402
      %v5132 = vsub.f32 %v5100, %v403
      %v5133 = vsub.f32 %v5101, %v404
      %v5134 = vsub.f32 %v5102, %v405
      %v5135 = vsub.f32 %v5103, %v406
      %v5136 = vsub.f32 %v5104, %v407
      %v5137 = vsub.f32 %v5105, %v408
      %v5138 = vsub.f32 %v5106, %v409
      %v5139 = vsub.f32 %v5107, %v410
      %v5140 = vsub.f32 %v5108, %v411
      %v5141 = vsub.f32 %v5109, %v412
      %v5142 = vsub.f32 %v5110, %v413
      %v5143 = vsub.f32 %v5111, %v414
      %v5144 = vsub.f32 %v5112, %v415
      %v5145 = vsub.f32 %v5113, %v416
      %v5146 = vsub.f32 %v5114, %v417
      %v5147 = vsub.f32 %v5115, %v418
      %v5148 = vsub.f32 %v5116, %v419
      %v5149 = vsub.f32 %v5117, %v420
      %v5150 = vsub.f32 %v5118, %v421
      %v5151 = vmul.f32 %v3071, %v5119
      %v5152 = vmul.f32 %v3073, %v5120
      %v5153 = vmul.f32 %v3075, %v5121
      %v5154 = vmul.f32 %v3077, %v5122
      %v5155 = vmul.f32 %v3079, %v5123
      %v5156 = vmul.f32 %v3081, %v5124
      %v5157 = vmul.f32 %v3083, %v5125
      %v5158 = vmul.f32 %v3085, %v5126
      %v5159 = vmul.f32 %v3087, %v5127
      %v5160 = vmul.f32 %v3089, %v5128
      %v5161 = vmul.f32 %v3091, %v5129
      %v5162 = vmul.f32 %v3093, %v5130
      %v5163 = vmul.f32 %v3095, %v5131
      %v5164 = vmul.f32 %v3097, %v5132
      %v5165 = vmul.f32 %v3099, %v5133
      %v5166 = vmul.f32 %v3101, %v5134
      %v5167 = vmul.f32 %v3103, %v5135
      %v5168 = vmul.f32 %v3105, %v5136
      %v5169 = vmul.f32 %v3107, %v5137
      %v5170 = vmul.f32 %v3109, %v5138
      %v5171 = vmul.f32 %v3111, %v5139
      %v5172 = vmul.f32 %v3113, %v5140
      %v5173 = vmul.f32 %v3115, %v5141
      %v5174 = vmul.f32 %v3117, %v5142
      %v5175 = vmul.f32 %v3119, %v5143
      %v5176 = vmul.f32 %v3121, %v5144
      %v5177 = vmul.f32 %v3123, %v5145
      %v5178 = vmul.f32 %v3125, %v5146
      %v5179 = vmul.f32 %v3127, %v5147
      %v5180 = vmul.f32 %v3129, %v5148
      %v5181 = vmul.f32 %v3131, %v5149
      %v5182 = vmul.f32 %v3133, %v5150
      %v5183 = vadd.f32 %v390, %v5151
      %v5184 = vadd.f32 %v391, %v5152
      %v5185 = vadd.f32 %v392, %v5153
      %v5186 = vadd.f32 %v393, %v5154
      %v5187 = vadd.f32 %v394, %v5155
      %v5188 = vadd.f32 %v395, %v5156
      %v5189 = vadd.f32 %v396, %v5157
      %v5190 = vadd.f32 %v397, %v5158
      %v5191 = vadd.f32 %v398, %v5159
      %v5192 = vadd.f32 %v399, %v5160
      %v5193 = vadd.f32 %v400, %v5161
      %v5194 = vadd.f32 %v401, %v5162
      %v5195 = vadd.f32 %v402, %v5163
      %v5196 = vadd.f32 %v403, %v5164
      %v5197 = vadd.f32 %v404, %v5165
      %v5198 = vadd.f32 %v405, %v5166
      %v5199 = vadd.f32 %v406, %v5167
      %v5200 = vadd.f32 %v407, %v5168
      %v5201 = vadd.f32 %v408, %v5169
      %v5202 = vadd.f32 %v409, %v5170
      %v5203 = vadd.f32 %v410, %v5171
      %v5204 = vadd.f32 %v411, %v5172
      %v5205 = vadd.f32 %v412, %v5173
      %v5206 = vadd.f32 %v413, %v5174
      %v5207 = vadd.f32 %v414, %v5175
      %v5208 = vadd.f32 %v415, %v5176
      %v5209 = vadd.f32 %v416, %v5177
      %v5210 = vadd.f32 %v417, %v5178
      %v5211 = vadd.f32 %v418, %v5179
      %v5212 = vadd.f32 %v419, %v5180
      %v5213 = vadd.f32 %v420, %v5181
      %v5214 = vadd.f32 %v421, %v5182
      %5215 = vst [vmem:[%s387] sm:$0xff] %v5183
      %5216 = vst [vmem:[%s387 + $0x8] sm:$0xff] %v5184
      %5217 = vst [vmem:[%s387 + $0x10] sm:$0xff] %v5185
      %5218 = vst [vmem:[%s387 + $0x18] sm:$0xff] %v5186
      %5219 = vst [vmem:[%s387 + $0x20] sm:$0xff] %v5187
      %5220 = vst [vmem:[%s387 + $0x28] sm:$0xff] %v5188
      %5221 = vst [vmem:[%s387 + $0x30] sm:$0xff] %v5189
      %5222 = vst [vmem:[%s387 + $0x38] sm:$0xff] %v5190
      %5223 = vst [vmem:[%s387 + $0x40] sm:$0xff] %v5191
      %5224 = vst [vmem:[%s387 + $0x48] sm:$0xff] %v5192
      %5225 = vst [vmem:[%s387 + $0x50] sm:$0xff] %v5193
      %5226 = vst [vmem:[%s387 + $0x58] sm:$0xff] %v5194
      %5227 = vst [vmem:[%s387 + $0x60] sm:$0xff] %v5195
      %5228 = vst [vmem:[%s387 + $0x68] sm:$0xff] %v5196
      %5229 = vst [vmem:[%s387 + $0x70] sm:$0xff] %v5197
      %5230 = vst [vmem:[%s387 + $0x78] sm:$0xff] %v5198
      %5231 = vst [vmem:[%s387 + $0x80] sm:$0xff] %v5199
      %5232 = vst [vmem:[%s387 + $0x88] sm:$0xff] %v5200
      %5233 = vst [vmem:[%s387 + $0x90] sm:$0xff] %v5201
      %5234 = vst [vmem:[%s387 + $0x98] sm:$0xff] %v5202
      %5235 = vst [vmem:[%s387 + $0xa0] sm:$0xff] %v5203
      %5236 = vst [vmem:[%s387 + $0xa8] sm:$0xff] %v5204
      %5237 = vst [vmem:[%s387 + $0xb0] sm:$0xff] %v5205
      %5238 = vst [vmem:[%s387 + $0xb8] sm:$0xff] %v5206
      %5239 = vst [vmem:[%s387 + $0xc0] sm:$0xff] %v5207
      %5240 = vst [vmem:[%s387 + $0xc8] sm:$0xff] %v5208
      %5241 = vst [vmem:[%s387 + $0xd0] sm:$0xff] %v5209
      %5242 = vst [vmem:[%s387 + $0xd8] sm:$0xff] %v5210
      %5243 = vst [vmem:[%s387 + $0xe0] sm:$0xff] %v5211
      %5244 = vst [vmem:[%s387 + $0xe8] sm:$0xff] %v5212
      %5245 = vst [vmem:[%s387 + $0xf0] sm:$0xff] %v5213
      %5246 = vst [vmem:[%s387 + $0xf8] sm:$0xff] %v5214
      %s5247 = smul.u32 16, %s24
      %p5248 = scmp.lt.s32.totalorder %s23, 1
      %s5249 = scalar_select %p5248, %s23, 1
      %p5250 = scmp.lt.s32.totalorder %s5247, 15
      %s5251 = scalar_select %p5250, %s5247, 15
      %s5252 = smul.addr %s5251, 2
      %s5253 = smul.addr %s5249, 32
      %s5254 = sadd.s32 %s5252, %s5253
      %s5255 = smul.addr %s5254, 8
      %s5256 = scalar_lea.vmem %s8, %s5255
      // Predicated region
      $region53: #{sepconvgru_forward.2} parent=51 // pred_check
        %p5257 = pneg %p233
      $region54: #{sepconvgru_forward.2} parent=51 // pred_check_branch
        %5259 = sbr.rel (%p5257) target = $region56
      $region55: #{sepconvgru_forward.2} parent=51 // pred_region
        %s5260 = smul.u32 16, %s24
      $region56: #{sepconvgru_forward.2} parent=51 // pred_fallthru
        _
    $region52: #{sepconvgru_forward.2} parent=5 // pred_fallthru
      _
    %p5261 = scmp.le.s32.totalorder 2, %s14
    // Predicated region
    $region57: #{sepconvgru_forward.2} parent=5 // pred_check
      %p5262 = pneg %p5261
    $region58: #{sepconvgru_forward.2} parent=5 // pred_check_branch
      %5264 = sbr.rel (%p5262) target = $region60
    $region59: #{sepconvgru_forward.2} parent=5 // pred_region
      %s5265 = ssub.s32 %s14, 2
      // Predicated region
      $region61: #{sepconvgru_forward.2} parent=59 // pred_check
        %p5266 = pneg %p239
      $region62: #{sepconvgru_forward.2} parent=59 // pred_check_branch
        %5268 = sbr.rel (%p5266) target = $region64
      $region63: #{sepconvgru_forward.2} parent=59 // pred_region
        %s5269 = smul.u32 16, %s26
        %p5270 = scmp.lt.s32.totalorder %s25, 1
        %s5271 = scalar_select %p5270, %s25, 1
        %p5272 = scmp.lt.s32.totalorder %s5269, 15
        %s5273 = scalar_select %p5272, %s5269, 15
        %s5274 = smul.addr %s5273, 2
        %s5275 = smul.addr %s5271, 32
        %s5276 = sadd.s32 %s5274, %s5275
        %s5277 = smul.addr %s5276, 8
        %s5278 = scalar_lea.vmem %s8, %s5277
      $region64: #{sepconvgru_forward.2} parent=59 // pred_fallthru
        _
    $region60: #{sepconvgru_forward.2} parent=5 // pred_fallthru
      _
  $region6: #{sepconvgru_forward.2} parent=0 // loop_footer
    %s18 = sadd.s32 1, %s14
  $region7: #{sepconvgru_forward.2} parent=0 // loop_footer_branch
    %13 = sbr.rel target = $region3
  $region8: #{sepconvgru_forward.2} parent=0 // loop_exit
    _

</llo_original>
